<compile_context>
chip_gen: v7x
topology: tpu7x:2x2x1
jax: 0.10.0
libtpu: 0.0.40
codegen_flags: <defaults>
</compile_context>

<pallas_src>
import functools

import jax
import jax.numpy as jnp
import numpy as np
from jax import lax
from jax.experimental import pallas as pl
from jax.experimental.pallas import tpu as pltpu


def _round_up(a, m):
    return (a + m - 1) // m * m


# Raise v5e's 16 MiB scoped-VMEM default; equals the v6e/v7x default. Raise
# further (and tile the gate axis / keep weights in HBM) for very large H.
_VMEM_LIMIT = 32 * 1024 * 1024


# ---------------------------------------------------------------------------
# M-tiled matmul + bias kernel (layer-0 input projection & Linear head).
# Caller pads N to a multiple of 128 so stores are lane-dense (no vst.msk);
# the M axis is tiled with a "parallel" grid so large T*B never needs to fit
# VMEM as a single block.
# ---------------------------------------------------------------------------
def _matmul_bias_kernel(x_ref, w_ref, b_ref, o_ref):
    acc = jnp.dot(x_ref[...], w_ref[...], preferred_element_type=jnp.float32)
    o_ref[...] = (acc + b_ref[...]).astype(o_ref.dtype)


def _matmul_bias(x, w, b, *, out_dtype=jnp.float32, block_m=512):
    M, K = x.shape
    _, N = w.shape
    bm = min(block_m, _round_up(M, 8))
    MP = _round_up(M, bm)
    if MP != M:
        x = jnp.pad(x, ((0, MP - M), (0, 0)))
    out = pl.pallas_call(
        _matmul_bias_kernel,
        out_shape=jax.ShapeDtypeStruct((MP, N), out_dtype),
        grid=(MP // bm,),
        in_specs=[pl.BlockSpec((bm, K), lambda i: (i, 0)),
                  pl.BlockSpec((K, N), lambda i: (0, 0)),
                  pl.BlockSpec((1, N), lambda i: (0, 0))],
        out_specs=pl.BlockSpec((bm, N), lambda i: (i, 0)),
        compiler_params=pltpu.CompilerParams(
            dimension_semantics=("parallel",),
            vmem_limit_bytes=_VMEM_LIMIT),
    )(x, w, b)
    return out[:M]


# ---------------------------------------------------------------------------
# Sequential 2-layer LSTM recurrence. One grid step = TT timesteps.
# Scratch: h01 = [h0 | h1] in bf16 (matmul operand layout), c0/c1 in f32.
# ---------------------------------------------------------------------------
def _lstm_recurrence_kernel(gx0_ref, whh0_ref, w1_ref, b1_ref,
                            h1_out_ref,
                            h01_ref, c0_ref, c1_ref,
                            *, seq_len=None):
    chunk = pl.program_id(0)
    TT, BP, _ = gx0_ref.shape
    HP = c0_ref.shape[-1]

    @pl.when(chunk == 0)
    def _():
        h01_ref[...] = jnp.zeros_like(h01_ref)
        c0_ref[...] = jnp.zeros_like(c0_ref)
        c1_ref[...] = jnp.zeros_like(c1_ref)

    # Hoist only the bias broadcast (JAX does not CSE broadcast_in_dim across
    # loop iterations). Weights are read from their VMEM refs inside the step
    # so Mosaic does not keep 3x(HP,4HP) of weight vregs live across the
    # unrolled loop (avoids spills on the serial path).
    b1 = jnp.broadcast_to(b1_ref[...], (BP, 4 * HP))
    mm_dtype = h01_ref.dtype

    def activate(gates, c_prev):
        # HP is a multiple of 128, so every gate slice is lane-group aligned.
        i_g = jax.nn.sigmoid(gates[:, 0 * HP:1 * HP])
        f_g = jax.nn.sigmoid(gates[:, 1 * HP:2 * HP])
        g_g = jnp.tanh(gates[:, 2 * HP:3 * HP])
        o_g = jax.nn.sigmoid(gates[:, 3 * HP:4 * HP])
        c_new = f_g * c_prev + i_g * g_g
        h_new = o_g * jnp.tanh(c_new)
        return h_new, c_new

    def do_step(tt):
        # Layer 0: x projection (incl. both biases) was precomputed outside the
        # recurrence; only the (BP,HP)@(HP,4HP) recurrent matmul is serial.
        g0 = (jnp.dot(h01_ref[:, :HP], whh0_ref[...],
                      preferred_element_type=jnp.float32)
              + gx0_ref[tt].astype(jnp.float32))
        h0_new, c0_new = activate(g0, c0_ref[...])
        c0_ref[...] = c0_new
        h01_ref[:, :HP] = h0_new.astype(mm_dtype)

        # Layer 1: single fused matmul  [h0_new ; h1_prev] @ [Wih1^T ; Whh1^T].
        g1 = (jnp.dot(h01_ref[...], w1_ref[...],
                      preferred_element_type=jnp.float32)
              + b1)
        h1_new, c1_new = activate(g1, c1_ref[...])
        c1_ref[...] = c1_new
        h01_ref[:, HP:] = h1_new.astype(mm_dtype)

        # Lane-dense (BP, HP) store; the narrow (H, C) head runs outside.
        h1_out_ref[tt] = h1_new.astype(h1_out_ref.dtype)

    def loop_body(tt, carry):
        if seq_len is None:            # TT divides T: no padded steps exist.
            do_step(tt)
        else:                          # Skip serial work on padded timesteps.
            @pl.when(chunk * TT + tt < seq_len)
            def _():
                do_step(tt)
        return carry

    lax.fori_loop(0, TT, loop_body, 0, unroll=True)


# ---------------------------------------------------------------------------
# Weight padding helpers: pad each of the [i, f, g, o] gate blocks separately
# so gate boundaries land at multiples of HP.  Padded hidden units get zero
# weights and zero biases -> their c and h stay exactly 0.
# ---------------------------------------------------------------------------
def _pad_gate_weight(w, H, HP, kin, kin_pad):
    w4 = w.reshape(4, H, kin)
    w4 = jnp.pad(w4, ((0, 0), (0, HP - H), (0, kin_pad - kin)))
    return w4.reshape(4 * HP, kin_pad)


def _pad_gate_bias(b, H, HP):
    return jnp.pad(b.reshape(4, H), ((0, 0), (0, HP - H))).reshape(1, 4 * HP)


def lstm_try_forward(x, params, *, time_chunk=32, matmul_dtype=jnp.bfloat16,
                     single_buffer_weights=False):
    """x: (B, T, I) float32.  Returns (B, T, num_classes) float32.

    single_buffer_weights: set True on v7x (64 MiB VMEM) / large H to keep the
    grid-invariant weight BlockSpecs single-buffered (pl.Buffered(1)).
    """
    B, T, I = x.shape
    H = params["whh0"].shape[1]
    C = params["wl"].shape[0]

    BP = _round_up(B, 8)        # sublane alignment (batch is the free MXU M axis)
    HP = _round_up(H, 128)      # lane alignment (per gate)
    CP = _round_up(C, 128)      # lane-dense head output
    TT = min(time_chunk, T)     # timesteps per grid step
    TP = _round_up(T, TT)

    # --- Glue: pad + pre-transpose weights once (fuse layer-1 weights) ------
    wih0_t = _pad_gate_weight(params["wih0"], H, HP, I, I).T                # (I, 4HP) f32
    b0 = _pad_gate_bias(params["bih0"] + params["bhh0"], H, HP)             # (1, 4HP)
    whh0_t = _pad_gate_weight(params["whh0"], H, HP, H, HP).T.astype(matmul_dtype)
    w1_cat = jnp.concatenate(
        [_pad_gate_weight(params["wih1"], H, HP, H, HP).T,
         _pad_gate_weight(params["whh1"], H, HP, H, HP).T],
        axis=0).astype(matmul_dtype)                                        # (2HP, 4HP)
    b1 = _pad_gate_bias(params["bih1"] + params["bhh1"], H, HP)             # (1, 4HP)
    wl_t = jnp.pad(params["wl"].T, ((0, HP - H), (0, CP - C))).astype(matmul_dtype)
    bl = jnp.pad(params["bl"], (0, CP - C)).reshape(1, CP)

    # Time-major, batch/time padded input.
    x_tbi = jnp.transpose(x, (1, 0, 2))                                     # (T, B, I)
    x_tbi = jnp.pad(x_tbi, ((0, TP - T), (0, BP - B), (0, 0)))              # (TP, BP, I)

    # --- 1) Hoisted layer-0 input projection (parallel, bf16 streamed) ------
    gx0 = _matmul_bias(x_tbi.reshape(TP * BP, I), wih0_t, b0,
                       out_dtype=matmul_dtype)
    gx0 = gx0.reshape(TP, BP, 4 * HP)

    # --- 2) Sequential recurrence over TT-sized time chunks -----------------
    full = lambda t: (0, 0)
    if single_buffer_weights:
        w_spec = lambda shape: pl.BlockSpec(shape, full, pipeline_mode=pl.Buffered(1))
    else:
        w_spec = lambda shape: pl.BlockSpec(shape, full)

    kernel = functools.partial(_lstm_recurrence_kernel,
                               seq_len=(T if TP != T else None))
    h1_all = pl.pallas_call(
        kernel,
        out_shape=jax.ShapeDtypeStruct((TP, BP, HP), matmul_dtype),
        grid_spec=pltpu.PrefetchScalarGridSpec(
            num_scalar_prefetch=0,
            grid=(TP // TT,),
            in_specs=[
                pl.BlockSpec((TT, BP, 4 * HP), lambda t: (t, 0, 0)),  # gx0 chunk (bf16)
                w_spec((HP, 4 * HP)),                                 # Whh0^T  (bf16)
                w_spec((2 * HP, 4 * HP)),                             # [Wih1;Whh1]^T (bf16)
                w_spec((1, 4 * HP)),                                  # b1
            ],
            out_specs=pl.BlockSpec((TT, BP, HP), lambda t: (t, 0, 0)),
            scratch_shapes=[pltpu.VMEM((BP, 2 * HP), matmul_dtype),   # [h0 | h1]
                            pltpu.VMEM((BP, HP), jnp.float32),        # c0
                            pltpu.VMEM((BP, HP), jnp.float32)],       # c1
        ),
        compiler_params=pltpu.CompilerParams(
            # Recurrence carried in VMEM scratch -> the time axis MUST stay
            # sequential; never mark it "parallel".
            dimension_semantics=("arbitrary",),
            vmem_limit_bytes=_VMEM_LIMIT,
            # v7x note: when BP >= 16, add a leading batch grid axis marked
            # "parallel" (scratch sized BP//2, init keyed on program_id(1)==0)
            # to split the recurrence across the two TensorCores; for very
            # large H keep weights in HBM (memory_space=pl.ANY) and prefetch
            # gate blocks manually.
        ),
    )(gx0, whh0_t, w1_cat, b1)

    # --- 3) Linear head as one big matmul over all timesteps ----------------
    out = _matmul_bias(h1_all.reshape(TP * BP, HP), wl_t, bl,
                       out_dtype=jnp.float32)                               # (TP*BP, CP)
    out = out.reshape(TP, BP, CP)[:T, :B, :C]
    return jnp.transpose(out, (1, 0, 2))                                    # (B, T, C)


def init_params(key, input_size, hidden_size, num_classes):
    """Deterministic init mirroring PyTorch's default uniform(-1/sqrt(H), 1/sqrt(H))."""
    H = hidden_size
    k_lstm = 1.0 / np.sqrt(H)
    k_lin = 1.0 / np.sqrt(H)
    keys = jax.random.split(key, 10)
    u = lambda k, shape, bound: jax.random.uniform(
        k, shape, jnp.float32, minval=-bound, maxval=bound)
    return {
        "wih0": u(keys[0], (4 * H, input_size), k_lstm),
        "whh0": u(keys[1], (4 * H, H), k_lstm),
        "bih0": u(keys[2], (4 * H,), k_lstm),
        "bhh0": u(keys[3], (4 * H,), k_lstm),
        "wih1": u(keys[4], (4 * H, H), k_lstm),
        "whh1": u(keys[5], (4 * H, H), k_lstm),
        "bih1": u(keys[6], (4 * H,), k_lstm),
        "bhh1": u(keys[7], (4 * H,), k_lstm),
        "wl": u(keys[8], (num_classes, H), k_lin),
        "bl": u(keys[9], (num_classes,), k_lin),
    }


def _reference_forward(x, params):
    """Plain-JAX f32 reference of the PyTorch LSTMtry forward."""
    B, T, I = x.shape
    H = params["whh0"].shape[1]

    def cell(x_in, h, c, wih, whh, bih, bhh):
        g = x_in @ wih.T + h @ whh.T + bih + bhh
        i, f, gg, o = jnp.split(g, 4, axis=-1)
        i, f, o = jax.nn.sigmoid(i), jax.nn.sigmoid(f), jax.nn.sigmoid(o)
        gg = jnp.tanh(gg)
        c = f * c + i * gg
        h = o * jnp.tanh(c)
        return h, c

    h0 = jnp.zeros((B, H), jnp.float32)
    c0 = jnp.zeros((B, H), jnp.float32)
    h1 = jnp.zeros((B, H), jnp.float32)
    c1 = jnp.zeros((B, H), jnp.float32)
    outs = []
    for t in range(T):
        h0, c0 = cell(x[:, t], h0, c0, params["wih0"], params["whh0"],
                      params["bih0"], params["bhh0"])
        h1, c1 = cell(h0, h1, c1, params["wih1"], params["whh1"],
                      params["bih1"], params["bhh1"])
        outs.append(h1 @ params["wl"].T + params["bl"])
    return jnp.stack(outs, axis=1)


if __name__ == "__main__":
    B, T = 2, 8
    input_size, hidden_size, num_classes = 16, 32, 4

    key = jax.random.PRNGKey(0)
    k_x, k_p = jax.random.split(key)
    x = jax.random.normal(k_x, (B, T, input_size), dtype=jnp.float32)
    params = init_params(k_p, input_size, hidden_size, num_classes)

    fwd = jax.jit(functools.partial(lstm_try_forward))
    out = jax.block_until_ready(fwd(x, params))
    assert out.shape == (B, T, num_classes)

    ref = jax.block_until_ready(_reference_forward(x, params))
    # Recurrent matmuls / streamed activations run in bf16 (f32 accumulation),
    # so tolerance is slightly looser than a pure-f32 comparison.
    np.testing.assert_allclose(np.asarray(out), np.asarray(ref),
                               rtol=2e-2, atol=2e-2)

    print("KERNEL_OK")
</pallas_src>

<mosaic_0001>
module attributes {stable_mosaic.version = 11 : i64} {
  func.func @_matmul_bias_kernel(%arg0: i32, %arg1: memref<64x16xf32, #tpu.memory_space<vmem>>, %arg2: memref<16x512xf32, #tpu.memory_space<vmem>>, %arg3: memref<1x512xf32, #tpu.memory_space<vmem>>, %arg4: memref<64x512xbf16, #tpu.memory_space<vmem>>) attributes {dimension_semantics = [#tpu.dimension_semantics<parallel>], iteration_bounds = array<i64: 1>, scalar_prefetch = 0 : i64, scratch_operands = 0 : i64, tpu.core_type = #tpu.core_type<tc>, window_params = [{transform_indices = @transform_0, window_bounds = array<i64: 64, 16>}, {pipeline_mode = #tpu.pipeline_mode<synchronous>, transform_indices = @transform_1, window_bounds = array<i64: 16, 512>}, {pipeline_mode = #tpu.pipeline_mode<synchronous>, transform_indices = @transform_2, window_bounds = array<i64: 1, 512>}, {transform_indices = @transform_3, window_bounds = array<i64: 64, 512>}]} {
    %c0 = arith.constant 0 : index
    %c0_0 = arith.constant 0 : index
    %0 = vector.load %arg1[%c0, %c0_0] : memref<64x16xf32, #tpu.memory_space<vmem>>, vector<64x16xf32>
    %c0_1 = arith.constant 0 : index
    %c0_2 = arith.constant 0 : index
    %1 = vector.load %arg2[%c0_1, %c0_2] : memref<16x512xf32, #tpu.memory_space<vmem>>, vector<16x512xf32>
    %cst = arith.constant dense<0.000000e+00> : vector<64x512xf32>
    %2 = tpu.matmul %0, %1, %cst {dimension_numbers = #tpu.dot_dimension_numbers<[1], [0], [0], [1], [0, 0, 1, 1], [], []>} : vector<64x16xf32>, vector<16x512xf32>, vector<64x512xf32> -> vector<64x512xf32>
    %c0_3 = arith.constant 0 : index
    %c0_4 = arith.constant 0 : index
    %3 = vector.load %arg3[%c0_3, %c0_4] : memref<1x512xf32, #tpu.memory_space<vmem>>, vector<1x512xf32>
    %4 = vector.broadcast %3 : vector<1x512xf32> to vector<64x512xf32>
    %5 = arith.addf %2, %4 : vector<64x512xf32>
    %6 = arith.truncf %5 : vector<64x512xf32> to vector<64x512xbf16>
    %c0_5 = arith.constant 0 : index
    %c0_6 = arith.constant 0 : index
    %7 = vector.load %arg4[%c0_5, %c0_6] : memref<64x512xbf16, #tpu.memory_space<vmem>>, vector<64x512xbf16>
    tpu.vector_store %arg4[%c0_5, %c0_6], %6 {strides = array<i32>} : memref<64x512xbf16, #tpu.memory_space<vmem>>, vector<64x512xbf16>,
    return
  }
  func.func @transform_0(%arg0: i32) -> (i32, i32) {
    %c0_i32 = arith.constant 0 : i32
    %c0_i32_0 = arith.constant 0 : i32
    return %arg0, %c0_i32 : i32, i32
  }
  func.func @transform_1(%arg0: i32) -> (i32, i32) {
    %c0_i32 = arith.constant 0 : i32
    %c0_i32_0 = arith.constant 0 : i32
    %c0_i32_1 = arith.constant 0 : i32
    return %c0_i32, %c0_i32_0 : i32, i32
  }
  func.func @transform_2(%arg0: i32) -> (i32, i32) {
    %c0_i32 = arith.constant 0 : i32
    %c0_i32_0 = arith.constant 0 : i32
    %c0_i32_1 = arith.constant 0 : i32
    return %c0_i32, %c0_i32_0 : i32, i32
  }
  func.func @transform_3(%arg0: i32) -> (i32, i32) {
    %c0_i32 = arith.constant 0 : i32
    %c0_i32_0 = arith.constant 0 : i32
    return %arg0, %c0_i32 : i32, i32
  }
}

module attributes {stable_mosaic.version = 11 : i64} {
  func.func @_matmul_bias_kernel(%arg0: i32, %arg1: memref<64x128xbf16, #tpu.memory_space<vmem>>, %arg2: memref<128x128xbf16, #tpu.memory_space<vmem>>, %arg3: memref<1x128xf32, #tpu.memory_space<vmem>>, %arg4: memref<64x128xf32, #tpu.memory_space<vmem>>) attributes {dimension_semantics = [#tpu.dimension_semantics<parallel>], iteration_bounds = array<i64: 1>, scalar_prefetch = 0 : i64, scratch_operands = 0 : i64, tpu.core_type = #tpu.core_type<tc>, window_params = [{transform_indices = @transform_0, window_bounds = array<i64: 64, 128>}, {pipeline_mode = #tpu.pipeline_mode<synchronous>, transform_indices = @transform_1, window_bounds = array<i64: 128, 128>}, {pipeline_mode = #tpu.pipeline_mode<synchronous>, transform_indices = @transform_2, window_bounds = array<i64: 1, 128>}, {transform_indices = @transform_3, window_bounds = array<i64: 64, 128>}]} {
    %c0 = arith.constant 0 : index
    %c0_0 = arith.constant 0 : index
    %0 = vector.load %arg1[%c0, %c0_0] : memref<64x128xbf16, #tpu.memory_space<vmem>>, vector<64x128xbf16>
    %c0_1 = arith.constant 0 : index
    %c0_2 = arith.constant 0 : index
    %1 = vector.load %arg2[%c0_1, %c0_2] : memref<128x128xbf16, #tpu.memory_space<vmem>>, vector<128x128xbf16>
    %cst = arith.constant dense<0.000000e+00> : vector<64x128xf32>
    %2 = tpu.matmul %0, %1, %cst {dimension_numbers = #tpu.dot_dimension_numbers<[1], [0], [0], [1], [0, 0, 1, 1], [], []>} : vector<64x128xbf16>, vector<128x128xbf16>, vector<64x128xf32> -> vector<64x128xf32>
    %c0_3 = arith.constant 0 : index
    %c0_4 = arith.constant 0 : index
    %3 = vector.load %arg3[%c0_3, %c0_4] : memref<1x128xf32, #tpu.memory_space<vmem>>, vector<1x128xf32>
    %4 = vector.broadcast %3 : vector<1x128xf32> to vector<64x128xf32>
    %5 = arith.addf %2, %4 : vector<64x128xf32>
    %c0_5 = arith.constant 0 : index
    %c0_6 = arith.constant 0 : index
    %6 = vector.load %arg4[%c0_5, %c0_6] : memref<64x128xf32, #tpu.memory_space<vmem>>, vector<64x128xf32>
    tpu.vector_store %arg4[%c0_5, %c0_6], %5 {strides = array<i32>} : memref<64x128xf32, #tpu.memory_space<vmem>>, vector<64x128xf32>,
    return
  }
  func.func @transform_0(%arg0: i32) -> (i32, i32) {
    %c0_i32 = arith.constant 0 : i32
    %c0_i32_0 = arith.constant 0 : i32
    return %arg0, %c0_i32 : i32, i32
  }
  func.func @transform_1(%arg0: i32) -> (i32, i32) {
    %c0_i32 = arith.constant 0 : i32
    %c0_i32_0 = arith.constant 0 : i32
    %c0_i32_1 = arith.constant 0 : i32
    return %c0_i32, %c0_i32_0 : i32, i32
  }
  func.func @transform_2(%arg0: i32) -> (i32, i32) {
    %c0_i32 = arith.constant 0 : i32
    %c0_i32_0 = arith.constant 0 : i32
    %c0_i32_1 = arith.constant 0 : i32
    return %c0_i32, %c0_i32_0 : i32, i32
  }
  func.func @transform_3(%arg0: i32) -> (i32, i32) {
    %c0_i32 = arith.constant 0 : i32
    %c0_i32_0 = arith.constant 0 : i32
    return %arg0, %c0_i32 : i32, i32
  }
}

module attributes {stable_mosaic.version = 11 : i64} {
  func.func @_lstm_recurrence_kernel(%arg0: i32, %arg1: memref<8x8x512xbf16, #tpu.memory_space<vmem>>, %arg2: memref<128x512xbf16, #tpu.memory_space<vmem>>, %arg3: memref<256x512xbf16, #tpu.memory_space<vmem>>, %arg4: memref<1x512xf32, #tpu.memory_space<vmem>>, %arg5: memref<8x8x128xbf16, #tpu.memory_space<vmem>>, %arg6: memref<8x256xbf16, #tpu.memory_space<vmem>>, %arg7: memref<8x128xf32, #tpu.memory_space<vmem>>, %arg8: memref<8x128xf32, #tpu.memory_space<vmem>>) attributes {dimension_semantics = [#tpu.dimension_semantics<arbitrary>], iteration_bounds = array<i64: 1>, scalar_prefetch = 0 : i64, scratch_operands = 3 : i64, tpu.core_type = #tpu.core_type<tc>, window_params = [{transform_indices = @transform_0, window_bounds = array<i64: 8, 8, 512>}, {pipeline_mode = #tpu.pipeline_mode<synchronous>, transform_indices = @transform_1, window_bounds = array<i64: 128, 512>}, {pipeline_mode = #tpu.pipeline_mode<synchronous>, transform_indices = @transform_2, window_bounds = array<i64: 256, 512>}, {pipeline_mode = #tpu.pipeline_mode<synchronous>, transform_indices = @transform_3, window_bounds = array<i64: 1, 512>}, {transform_indices = @transform_4, window_bounds = array<i64: 8, 8, 128>}]} {
    %c0_i32 = arith.constant 0 : i32
    %0 = arith.cmpi eq, %arg0, %c0_i32 : i32
    %1 = arith.extui %0 : i1 to i32
    %c0_i32_0 = arith.constant 0 : i32
    %2 = arith.cmpi ne, %1, %c0_i32_0 : i32
    scf.if %2 {
      %cst_257 = arith.constant 0.000000e+00 : bf16
      %606 = vector.broadcast %cst_257 : bf16 to vector<8x256xbf16>
      %c0_258 = arith.constant 0 : index
      %c0_259 = arith.constant 0 : index
      %607 = vector.load %arg6[%c0_258, %c0_259] : memref<8x256xbf16, #tpu.memory_space<vmem>>, vector<8x256xbf16>
      tpu.vector_store %arg6[%c0_258, %c0_259], %606 {strides = array<i32>} : memref<8x256xbf16, #tpu.memory_space<vmem>>, vector<8x256xbf16>,
      %cst_260 = arith.constant 0.000000e+00 : f32
      %608 = vector.broadcast %cst_260 : f32 to vector<8x128xf32>
      %c0_261 = arith.constant 0 : index
      %c0_262 = arith.constant 0 : index
      %609 = vector.load %arg7[%c0_261, %c0_262] : memref<8x128xf32, #tpu.memory_space<vmem>>, vector<8x128xf32>
      tpu.vector_store %arg7[%c0_261, %c0_262], %608 {strides = array<i32>} : memref<8x128xf32, #tpu.memory_space<vmem>>, vector<8x128xf32>,
      %cst_263 = arith.constant 0.000000e+00 : f32
      %610 = vector.broadcast %cst_263 : f32 to vector<8x128xf32>
      %c0_264 = arith.constant 0 : index
      %c0_265 = arith.constant 0 : index
      %611 = vector.load %arg8[%c0_264, %c0_265] : memref<8x128xf32, #tpu.memory_space<vmem>>, vector<8x128xf32>
      tpu.vector_store %arg8[%c0_264, %c0_265], %610 {strides = array<i32>} : memref<8x128xf32, #tpu.memory_space<vmem>>, vector<8x128xf32>,
    } else {
    }
    %c0 = arith.constant 0 : index
    %c0_1 = arith.constant 0 : index
    %3 = vector.load %arg4[%c0, %c0_1] : memref<1x512xf32, #tpu.memory_space<vmem>>, vector<1x512xf32>
    %4 = vector.shape_cast %3 : vector<1x512xf32> to vector<1x512xf32>
    %5 = vector.broadcast %4 : vector<1x512xf32> to vector<8x512xf32>
    %c0_i32_2 = arith.constant 0 : i32
    %c0_3 = arith.constant 0 : index
    %c0_4 = arith.constant 0 : index
    %6 = vector.load %arg6[%c0_3, %c0_4] : memref<8x256xbf16, #tpu.memory_space<vmem>>, vector<8x128xbf16>
    %c0_5 = arith.constant 0 : index
    %c0_6 = arith.constant 0 : index
    %7 = vector.load %arg2[%c0_5, %c0_6] : memref<128x512xbf16, #tpu.memory_space<vmem>>, vector<128x512xbf16>
    %cst = arith.constant dense<0.000000e+00> : vector<8x512xf32>
    %8 = tpu.matmul %6, %7, %cst {dimension_numbers = #tpu.dot_dimension_numbers<[1], [0], [0], [1], [0, 0, 1, 1], [], []>} : vector<8x128xbf16>, vector<128x512xbf16>, vector<8x512xf32> -> vector<8x512xf32>
    %9 = arith.index_cast %c0_i32_2 : i32 to index
    %c0_7 = arith.constant 0 : index
    %c0_8 = arith.constant 0 : index
    %10 = vector.load %arg1[%9, %c0_7, %c0_8] : memref<8x8x512xbf16, #tpu.memory_space<vmem>>, vector<1x8x512xbf16>
    %11 = vector.shape_cast %10 : vector<1x8x512xbf16> to vector<8x512xbf16>
    %12 = arith.extf %11 : vector<8x512xbf16> to vector<8x512xf32>
    %13 = arith.addf %8, %12 : vector<8x512xf32>
    %c0_9 = arith.constant 0 : index
    %c0_10 = arith.constant 0 : index
    %14 = vector.load %arg7[%c0_9, %c0_10] : memref<8x128xf32, #tpu.memory_space<vmem>>, vector<8x128xf32>
    %15 = vector.extract_strided_slice %13 {offsets = [0, 0], sizes = [8, 128], strides = [1, 1]} : vector<8x512xf32> to vector<8x128xf32>
    %16 = arith.negf %15 : vector<8x128xf32>
    %17 = math.exp %16 : vector<8x128xf32>
    %cst_11 = arith.constant 1.000000e+00 : f32
    %18 = vector.broadcast %cst_11 : f32 to vector<8x128xf32>
    %19 = arith.addf %18, %17 : vector<8x128xf32>
    %20 = arith.divf %18, %19 : vector<8x128xf32>
    %21 = vector.extract_strided_slice %13 {offsets = [0, 128], sizes = [8, 128], strides = [1, 1]} : vector<8x512xf32> to vector<8x128xf32>
    %22 = arith.negf %21 : vector<8x128xf32>
    %23 = math.exp %22 : vector<8x128xf32>
    %cst_12 = arith.constant 1.000000e+00 : f32
    %24 = vector.broadcast %cst_12 : f32 to vector<8x128xf32>
    %25 = arith.addf %24, %23 : vector<8x128xf32>
    %26 = arith.divf %24, %25 : vector<8x128xf32>
    %27 = vector.extract_strided_slice %13 {offsets = [0, 256], sizes = [8, 128], strides = [1, 1]} : vector<8x512xf32> to vector<8x128xf32>
    %28 = math.tanh %27 : vector<8x128xf32>
    %29 = vector.extract_strided_slice %13 {offsets = [0, 384], sizes = [8, 128], strides = [1, 1]} : vector<8x512xf32> to vector<8x128xf32>
    %30 = arith.negf %29 : vector<8x128xf32>
    %31 = math.exp %30 : vector<8x128xf32>
    %cst_13 = arith.constant 1.000000e+00 : f32
    %32 = vector.broadcast %cst_13 : f32 to vector<8x128xf32>
    %33 = arith.addf %32, %31 : vector<8x128xf32>
    %34 = arith.divf %32, %33 : vector<8x128xf32>
    %35 = arith.mulf %26, %14 : vector<8x128xf32>
    %36 = arith.mulf %20, %28 : vector<8x128xf32>
    %37 = arith.addf %35, %36 : vector<8x128xf32>
    %38 = math.tanh %37 : vector<8x128xf32>
    %39 = arith.mulf %34, %38 : vector<8x128xf32>
    %c0_14 = arith.constant 0 : index
    %c0_15 = arith.constant 0 : index
    %40 = vector.load %arg7[%c0_14, %c0_15] : memref<8x128xf32, #tpu.memory_space<vmem>>, vector<8x128xf32>
    tpu.vector_store %arg7[%c0_14, %c0_15], %37 {strides = array<i32>} : memref<8x128xf32, #tpu.memory_space<vmem>>, vector<8x128xf32>,
    %41 = arith.truncf %39 : vector<8x128xf32> to vector<8x128xbf16>
    %c0_16 = arith.constant 0 : index
    %c0_17 = arith.constant 0 : index
    %42 = vector.load %arg6[%c0_16, %c0_17] : memref<8x256xbf16, #tpu.memory_space<vmem>>, vector<8x128xbf16>
    tpu.vector_store %arg6[%c0_16, %c0_17], %41 {strides = array<i32>} : memref<8x256xbf16, #tpu.memory_space<vmem>>, vector<8x128xbf16>,
    %c0_18 = arith.constant 0 : index
    %c0_19 = arith.constant 0 : index
    %43 = vector.load %arg6[%c0_18, %c0_19] : memref<8x256xbf16, #tpu.memory_space<vmem>>, vector<8x256xbf16>
    %c0_20 = arith.constant 0 : index
    %c0_21 = arith.constant 0 : index
    %44 = vector.load %arg3[%c0_20, %c0_21] : memref<256x512xbf16, #tpu.memory_space<vmem>>, vector<256x512xbf16>
    %cst_22 = arith.constant dense<0.000000e+00> : vector<8x512xf32>
    %45 = tpu.matmul %43, %44, %cst_22 {dimension_numbers = #tpu.dot_dimension_numbers<[1], [0], [0], [1], [0, 0, 1, 1], [], []>} : vector<8x256xbf16>, vector<256x512xbf16>, vector<8x512xf32> -> vector<8x512xf32>
    %46 = arith.addf %45, %5 : vector<8x512xf32>
    %c0_23 = arith.constant 0 : index
    %c0_24 = arith.constant 0 : index
    %47 = vector.load %arg8[%c0_23, %c0_24] : memref<8x128xf32, #tpu.memory_space<vmem>>, vector<8x128xf32>
    %48 = vector.extract_strided_slice %46 {offsets = [0, 0], sizes = [8, 128], strides = [1, 1]} : vector<8x512xf32> to vector<8x128xf32>
    %49 = arith.negf %48 : vector<8x128xf32>
    %50 = math.exp %49 : vector<8x128xf32>
    %cst_25 = arith.constant 1.000000e+00 : f32
    %51 = vector.broadcast %cst_25 : f32 to vector<8x128xf32>
    %52 = arith.addf %51, %50 : vector<8x128xf32>
    %53 = arith.divf %51, %52 : vector<8x128xf32>
    %54 = vector.extract_strided_slice %46 {offsets = [0, 128], sizes = [8, 128], strides = [1, 1]} : vector<8x512xf32> to vector<8x128xf32>
    %55 = arith.negf %54 : vector<8x128xf32>
    %56 = math.exp %55 : vector<8x128xf32>
    %cst_26 = arith.constant 1.000000e+00 : f32
    %57 = vector.broadcast %cst_26 : f32 to vector<8x128xf32>
    %58 = arith.addf %57, %56 : vector<8x128xf32>
    %59 = arith.divf %57, %58 : vector<8x128xf32>
    %60 = vector.extract_strided_slice %46 {offsets = [0, 256], sizes = [8, 128], strides = [1, 1]} : vector<8x512xf32> to vector<8x128xf32>
    %61 = math.tanh %60 : vector<8x128xf32>
    %62 = vector.extract_strided_slice %46 {offsets = [0, 384], sizes = [8, 128], strides = [1, 1]} : vector<8x512xf32> to vector<8x128xf32>
    %63 = arith.negf %62 : vector<8x128xf32>
    %64 = math.exp %63 : vector<8x128xf32>
    %cst_27 = arith.constant 1.000000e+00 : f32
    %65 = vector.broadcast %cst_27 : f32 to vector<8x128xf32>
    %66 = arith.addf %65, %64 : vector<8x128xf32>
    %67 = arith.divf %65, %66 : vector<8x128xf32>
    %68 = arith.mulf %59, %47 : vector<8x128xf32>
    %69 = arith.mulf %53, %61 : vector<8x128xf32>
    %70 = arith.addf %68, %69 : vector<8x128xf32>
    %71 = math.tanh %70 : vector<8x128xf32>
    %72 = arith.mulf %67, %71 : vector<8x128xf32>
    %c0_28 = arith.constant 0 : index
    %c0_29 = arith.constant 0 : index
    %73 = vector.load %arg8[%c0_28, %c0_29] : memref<8x128xf32, #tpu.memory_space<vmem>>, vector<8x128xf32>
    tpu.vector_store %arg8[%c0_28, %c0_29], %70 {strides = array<i32>} : memref<8x128xf32, #tpu.memory_space<vmem>>, vector<8x128xf32>,
    %74 = arith.truncf %72 : vector<8x128xf32> to vector<8x128xbf16>
    %c0_30 = arith.constant 0 : index
    %c128 = arith.constant 128 : index
    %75 = vector.load %arg6[%c0_30, %c128] : memref<8x256xbf16, #tpu.memory_space<vmem>>, vector<8x128xbf16>
    tpu.vector_store %arg6[%c0_30, %c128], %74 {strides = array<i32>} : memref<8x256xbf16, #tpu.memory_space<vmem>>, vector<8x128xbf16>,
    %76 = arith.truncf %72 : vector<8x128xf32> to vector<8x128xbf16>
    %77 = arith.index_cast %c0_i32_2 : i32 to index
    %c0_31 = arith.constant 0 : index
    %c0_32 = arith.constant 0 : index
    %78 = vector.load %arg5[%77, %c0_31, %c0_32] : memref<8x8x128xbf16, #tpu.memory_space<vmem>>, vector<1x8x128xbf16>
    %79 = vector.shape_cast %78 : vector<1x8x128xbf16> to vector<8x128xbf16>
    %80 = vector.shape_cast %76 : vector<8x128xbf16> to vector<1x8x128xbf16>
    tpu.vector_store %arg5[%77, %c0_31, %c0_32], %80 {strides = array<i32>} : memref<8x8x128xbf16, #tpu.memory_space<vmem>>, vector<1x8x128xbf16>,
    %c1_i32 = arith.constant 1 : i32
    %c0_33 = arith.constant 0 : index
    %c0_34 = arith.constant 0 : index
    %81 = vector.load %arg6[%c0_33, %c0_34] : memref<8x256xbf16, #tpu.memory_space<vmem>>, vector<8x128xbf16>
    %c0_35 = arith.constant 0 : index
    %c0_36 = arith.constant 0 : index
    %82 = vector.load %arg2[%c0_35, %c0_36] : memref<128x512xbf16, #tpu.memory_space<vmem>>, vector<128x512xbf16>
    %cst_37 = arith.constant dense<0.000000e+00> : vector<8x512xf32>
    %83 = tpu.matmul %81, %82, %cst_37 {dimension_numbers = #tpu.dot_dimension_numbers<[1], [0], [0], [1], [0, 0, 1, 1], [], []>} : vector<8x128xbf16>, vector<128x512xbf16>, vector<8x512xf32> -> vector<8x512xf32>
    %84 = arith.index_cast %c1_i32 : i32 to index
    %c0_38 = arith.constant 0 : index
    %c0_39 = arith.constant 0 : index
    %85 = vector.load %arg1[%84, %c0_38, %c0_39] : memref<8x8x512xbf16, #tpu.memory_space<vmem>>, vector<1x8x512xbf16>
    %86 = vector.shape_cast %85 : vector<1x8x512xbf16> to vector<8x512xbf16>
    %87 = arith.extf %86 : vector<8x512xbf16> to vector<8x512xf32>
    %88 = arith.addf %83, %87 : vector<8x512xf32>
    %c0_40 = arith.constant 0 : index
    %c0_41 = arith.constant 0 : index
    %89 = vector.load %arg7[%c0_40, %c0_41] : memref<8x128xf32, #tpu.memory_space<vmem>>, vector<8x128xf32>
    %90 = vector.extract_strided_slice %88 {offsets = [0, 0], sizes = [8, 128], strides = [1, 1]} : vector<8x512xf32> to vector<8x128xf32>
    %91 = arith.negf %90 : vector<8x128xf32>
    %92 = math.exp %91 : vector<8x128xf32>
    %cst_42 = arith.constant 1.000000e+00 : f32
    %93 = vector.broadcast %cst_42 : f32 to vector<8x128xf32>
    %94 = arith.addf %93, %92 : vector<8x128xf32>
    %95 = arith.divf %93, %94 : vector<8x128xf32>
    %96 = vector.extract_strided_slice %88 {offsets = [0, 128], sizes = [8, 128], strides = [1, 1]} : vector<8x512xf32> to vector<8x128xf32>
    %97 = arith.negf %96 : vector<8x128xf32>
    %98 = math.exp %97 : vector<8x128xf32>
    %cst_43 = arith.constant 1.000000e+00 : f32
    %99 = vector.broadcast %cst_43 : f32 to vector<8x128xf32>
    %100 = arith.addf %99, %98 : vector<8x128xf32>
    %101 = arith.divf %99, %100 : vector<8x128xf32>
    %102 = vector.extract_strided_slice %88 {offsets = [0, 256], sizes = [8, 128], strides = [1, 1]} : vector<8x512xf32> to vector<8x128xf32>
    %103 = math.tanh %102 : vector<8x128xf32>
    %104 = vector.extract_strided_slice %88 {offsets = [0, 384], sizes = [8, 128], strides = [1, 1]} : vector<8x512xf32> to vector<8x128xf32>
    %105 = arith.negf %104 : vector<8x128xf32>
    %106 = math.exp %105 : vector<8x128xf32>
    %cst_44 = arith.constant 1.000000e+00 : f32
    %107 = vector.broadcast %cst_44 : f32 to vector<8x128xf32>
    %108 = arith.addf %107, %106 : vector<8x128xf32>
    %109 = arith.divf %107, %108 : vector<8x128xf32>
    %110 = arith.mulf %101, %89 : vector<8x128xf32>
    %111 = arith.mulf %95, %103 : vector<8x128xf32>
    %112 = arith.addf %110, %111 : vector<8x128xf32>
    %113 = math.tanh %112 : vector<8x128xf32>
    %114 = arith.mulf %109, %113 : vector<8x128xf32>
    %c0_45 = arith.constant 0 : index
    %c0_46 = arith.constant 0 : index
    %115 = vector.load %arg7[%c0_45, %c0_46] : memref<8x128xf32, #tpu.memory_space<vmem>>, vector<8x128xf32>
    tpu.vector_store %arg7[%c0_45, %c0_46], %112 {strides = array<i32>} : memref<8x128xf32, #tpu.memory_space<vmem>>, vector<8x128xf32>,
    %116 = arith.truncf %114 : vector<8x128xf32> to vector<8x128xbf16>
    %c0_47 = arith.constant 0 : index
    %c0_48 = arith.constant 0 : index
    %117 = vector.load %arg6[%c0_47, %c0_48] : memref<8x256xbf16, #tpu.memory_space<vmem>>, vector<8x128xbf16>
    tpu.vector_store %arg6[%c0_47, %c0_48], %116 {strides = array<i32>} : memref<8x256xbf16, #tpu.memory_space<vmem>>, vector<8x128xbf16>,
    %c0_49 = arith.constant 0 : index
    %c0_50 = arith.constant 0 : index
    %118 = vector.load %arg6[%c0_49, %c0_50] : memref<8x256xbf16, #tpu.memory_space<vmem>>, vector<8x256xbf16>
    %c0_51 = arith.constant 0 : index
    %c0_52 = arith.constant 0 : index
    %119 = vector.load %arg3[%c0_51, %c0_52] : memref<256x512xbf16, #tpu.memory_space<vmem>>, vector<256x512xbf16>
    %cst_53 = arith.constant dense<0.000000e+00> : vector<8x512xf32>
    %120 = tpu.matmul %118, %119, %cst_53 {dimension_numbers = #tpu.dot_dimension_numbers<[1], [0], [0], [1], [0, 0, 1, 1], [], []>} : vector<8x256xbf16>, vector<256x512xbf16>, vector<8x512xf32> -> vector<8x512xf32>
    %121 = arith.addf %120, %5 : vector<8x512xf32>
    %c0_54 = arith.constant 0 : index
    %c0_55 = arith.constant 0 : index
    %122 = vector.load %arg8[%c0_54, %c0_55] : memref<8x128xf32, #tpu.memory_space<vmem>>, vector<8x128xf32>
    %123 = vector.extract_strided_slice %121 {offsets = [0, 0], sizes = [8, 128], strides = [1, 1]} : vector<8x512xf32> to vector<8x128xf32>
    %124 = arith.negf %123 : vector<8x128xf32>
    %125 = math.exp %124 : vector<8x128xf32>
    %cst_56 = arith.constant 1.000000e+00 : f32
    %126 = vector.broadcast %cst_56 : f32 to vector<8x128xf32>
    %127 = arith.addf %126, %125 : vector<8x128xf32>
    %128 = arith.divf %126, %127 : vector<8x128xf32>
    %129 = vector.extract_strided_slice %121 {offsets = [0, 128], sizes = [8, 128], strides = [1, 1]} : vector<8x512xf32> to vector<8x128xf32>
    %130 = arith.negf %129 : vector<8x128xf32>
    %131 = math.exp %130 : vector<8x128xf32>
    %cst_57 = arith.constant 1.000000e+00 : f32
    %132 = vector.broadcast %cst_57 : f32 to vector<8x128xf32>
    %133 = arith.addf %132, %131 : vector<8x128xf32>
    %134 = arith.divf %132, %133 : vector<8x128xf32>
    %135 = vector.extract_strided_slice %121 {offsets = [0, 256], sizes = [8, 128], strides = [1, 1]} : vector<8x512xf32> to vector<8x128xf32>
    %136 = math.tanh %135 : vector<8x128xf32>
    %137 = vector.extract_strided_slice %121 {offsets = [0, 384], sizes = [8, 128], strides = [1, 1]} : vector<8x512xf32> to vector<8x128xf32>
    %138 = arith.negf %137 : vector<8x128xf32>
    %139 = math.exp %138 : vector<8x128xf32>
    %cst_58 = arith.constant 1.000000e+00 : f32
    %140 = vector.broadcast %cst_58 : f32 to vector<8x128xf32>
    %141 = arith.addf %140, %139 : vector<8x128xf32>
    %142 = arith.divf %140, %141 : vector<8x128xf32>
    %143 = arith.mulf %134, %122 : vector<8x128xf32>
    %144 = arith.mulf %128, %136 : vector<8x128xf32>
    %145 = arith.addf %143, %144 : vector<8x128xf32>
    %146 = math.tanh %145 : vector<8x128xf32>
    %147 = arith.mulf %142, %146 : vector<8x128xf32>
    %c0_59 = arith.constant 0 : index
    %c0_60 = arith.constant 0 : index
    %148 = vector.load %arg8[%c0_59, %c0_60] : memref<8x128xf32, #tpu.memory_space<vmem>>, vector<8x128xf32>
    tpu.vector_store %arg8[%c0_59, %c0_60], %145 {strides = array<i32>} : memref<8x128xf32, #tpu.memory_space<vmem>>, vector<8x128xf32>,
    %149 = arith.truncf %147 : vector<8x128xf32> to vector<8x128xbf16>
    %c0_61 = arith.constant 0 : index
    %c128_62 = arith.constant 128 : index
    %150 = vector.load %arg6[%c0_61, %c128_62] : memref<8x256xbf16, #tpu.memory_space<vmem>>, vector<8x128xbf16>
    tpu.vector_store %arg6[%c0_61, %c128_62], %149 {strides = array<i32>} : memref<8x256xbf16, #tpu.memory_space<vmem>>, vector<8x128xbf16>,
    %151 = arith.truncf %147 : vector<8x128xf32> to vector<8x128xbf16>
    %152 = arith.index_cast %c1_i32 : i32 to index
    %c0_63 = arith.constant 0 : index
    %c0_64 = arith.constant 0 : index
    %153 = vector.load %arg5[%152, %c0_63, %c0_64] : memref<8x8x128xbf16, #tpu.memory_space<vmem>>, vector<1x8x128xbf16>
    %154 = vector.shape_cast %153 : vector<1x8x128xbf16> to vector<8x128xbf16>
    %155 = vector.shape_cast %151 : vector<8x128xbf16> to vector<1x8x128xbf16>
    tpu.vector_store %arg5[%152, %c0_63, %c0_64], %155 {strides = array<i32>} : memref<8x8x128xbf16, #tpu.memory_space<vmem>>, vector<1x8x128xbf16>,
    %c2_i32 = arith.constant 2 : i32
    %c0_65 = arith.constant 0 : index
    %c0_66 = arith.constant 0 : index
    %156 = vector.load %arg6[%c0_65, %c0_66] : memref<8x256xbf16, #tpu.memory_space<vmem>>, vector<8x128xbf16>
    %c0_67 = arith.constant 0 : index
    %c0_68 = arith.constant 0 : index
    %157 = vector.load %arg2[%c0_67, %c0_68] : memref<128x512xbf16, #tpu.memory_space<vmem>>, vector<128x512xbf16>
    %cst_69 = arith.constant dense<0.000000e+00> : vector<8x512xf32>
    %158 = tpu.matmul %156, %157, %cst_69 {dimension_numbers = #tpu.dot_dimension_numbers<[1], [0], [0], [1], [0, 0, 1, 1], [], []>} : vector<8x128xbf16>, vector<128x512xbf16>, vector<8x512xf32> -> vector<8x512xf32>
    %159 = arith.index_cast %c2_i32 : i32 to index
    %c0_70 = arith.constant 0 : index
    %c0_71 = arith.constant 0 : index
    %160 = vector.load %arg1[%159, %c0_70, %c0_71] : memref<8x8x512xbf16, #tpu.memory_space<vmem>>, vector<1x8x512xbf16>
    %161 = vector.shape_cast %160 : vector<1x8x512xbf16> to vector<8x512xbf16>
    %162 = arith.extf %161 : vector<8x512xbf16> to vector<8x512xf32>
    %163 = arith.addf %158, %162 : vector<8x512xf32>
    %c0_72 = arith.constant 0 : index
    %c0_73 = arith.constant 0 : index
    %164 = vector.load %arg7[%c0_72, %c0_73] : memref<8x128xf32, #tpu.memory_space<vmem>>, vector<8x128xf32>
    %165 = vector.extract_strided_slice %163 {offsets = [0, 0], sizes = [8, 128], strides = [1, 1]} : vector<8x512xf32> to vector<8x128xf32>
    %166 = arith.negf %165 : vector<8x128xf32>
    %167 = math.exp %166 : vector<8x128xf32>
    %cst_74 = arith.constant 1.000000e+00 : f32
    %168 = vector.broadcast %cst_74 : f32 to vector<8x128xf32>
    %169 = arith.addf %168, %167 : vector<8x128xf32>
    %170 = arith.divf %168, %169 : vector<8x128xf32>
    %171 = vector.extract_strided_slice %163 {offsets = [0, 128], sizes = [8, 128], strides = [1, 1]} : vector<8x512xf32> to vector<8x128xf32>
    %172 = arith.negf %171 : vector<8x128xf32>
    %173 = math.exp %172 : vector<8x128xf32>
    %cst_75 = arith.constant 1.000000e+00 : f32
    %174 = vector.broadcast %cst_75 : f32 to vector<8x128xf32>
    %175 = arith.addf %174, %173 : vector<8x128xf32>
    %176 = arith.divf %174, %175 : vector<8x128xf32>
    %177 = vector.extract_strided_slice %163 {offsets = [0, 256], sizes = [8, 128], strides = [1, 1]} : vector<8x512xf32> to vector<8x128xf32>
    %178 = math.tanh %177 : vector<8x128xf32>
    %179 = vector.extract_strided_slice %163 {offsets = [0, 384], sizes = [8, 128], strides = [1, 1]} : vector<8x512xf32> to vector<8x128xf32>
    %180 = arith.negf %179 : vector<8x128xf32>
    %181 = math.exp %180 : vector<8x128xf32>
    %cst_76 = arith.constant 1.000000e+00 : f32
    %182 = vector.broadcast %cst_76 : f32 to vector<8x128xf32>
    %183 = arith.addf %182, %181 : vector<8x128xf32>
    %184 = arith.divf %182, %183 : vector<8x128xf32>
    %185 = arith.mulf %176, %164 : vector<8x128xf32>
    %186 = arith.mulf %170, %178 : vector<8x128xf32>
    %187 = arith.addf %185, %186 : vector<8x128xf32>
    %188 = math.tanh %187 : vector<8x128xf32>
    %189 = arith.mulf %184, %188 : vector<8x128xf32>
    %c0_77 = arith.constant 0 : index
    %c0_78 = arith.constant 0 : index
    %190 = vector.load %arg7[%c0_77, %c0_78] : memref<8x128xf32, #tpu.memory_space<vmem>>, vector<8x128xf32>
    tpu.vector_store %arg7[%c0_77, %c0_78], %187 {strides = array<i32>} : memref<8x128xf32, #tpu.memory_space<vmem>>, vector<8x128xf32>,
    %191 = arith.truncf %189 : vector<8x128xf32> to vector<8x128xbf16>
    %c0_79 = arith.constant 0 : index
    %c0_80 = arith.constant 0 : index
    %192 = vector.load %arg6[%c0_79, %c0_80] : memref<8x256xbf16, #tpu.memory_space<vmem>>, vector<8x128xbf16>
    tpu.vector_store %arg6[%c0_79, %c0_80], %191 {strides = array<i32>} : memref<8x256xbf16, #tpu.memory_space<vmem>>, vector<8x128xbf16>,
    %c0_81 = arith.constant 0 : index
    %c0_82 = arith.constant 0 : index
    %193 = vector.load %arg6[%c0_81, %c0_82] : memref<8x256xbf16, #tpu.memory_space<vmem>>, vector<8x256xbf16>
    %c0_83 = arith.constant 0 : index
    %c0_84 = arith.constant 0 : index
    %194 = vector.load %arg3[%c0_83, %c0_84] : memref<256x512xbf16, #tpu.memory_space<vmem>>, vector<256x512xbf16>
    %cst_85 = arith.constant dense<0.000000e+00> : vector<8x512xf32>
    %195 = tpu.matmul %193, %194, %cst_85 {dimension_numbers = #tpu.dot_dimension_numbers<[1], [0], [0], [1], [0, 0, 1, 1], [], []>} : vector<8x256xbf16>, vector<256x512xbf16>, vector<8x512xf32> -> vector<8x512xf32>
    %196 = arith.addf %195, %5 : vector<8x512xf32>
    %c0_86 = arith.constant 0 : index
    %c0_87 = arith.constant 0 : index
    %197 = vector.load %arg8[%c0_86, %c0_87] : memref<8x128xf32, #tpu.memory_space<vmem>>, vector<8x128xf32>
    %198 = vector.extract_strided_slice %196 {offsets = [0, 0], sizes = [8, 128], strides = [1, 1]} : vector<8x512xf32> to vector<8x128xf32>
    %199 = arith.negf %198 : vector<8x128xf32>
    %200 = math.exp %199 : vector<8x128xf32>
    %cst_88 = arith.constant 1.000000e+00 : f32
    %201 = vector.broadcast %cst_88 : f32 to vector<8x128xf32>
    %202 = arith.addf %201, %200 : vector<8x128xf32>
    %203 = arith.divf %201, %202 : vector<8x128xf32>
    %204 = vector.extract_strided_slice %196 {offsets = [0, 128], sizes = [8, 128], strides = [1, 1]} : vector<8x512xf32> to vector<8x128xf32>
    %205 = arith.negf %204 : vector<8x128xf32>
    %206 = math.exp %205 : vector<8x128xf32>
    %cst_89 = arith.constant 1.000000e+00 : f32
    %207 = vector.broadcast %cst_89 : f32 to vector<8x128xf32>
    %208 = arith.addf %207, %206 : vector<8x128xf32>
    %209 = arith.divf %207, %208 : vector<8x128xf32>
    %210 = vector.extract_strided_slice %196 {offsets = [0, 256], sizes = [8, 128], strides = [1, 1]} : vector<8x512xf32> to vector<8x128xf32>
    %211 = math.tanh %210 : vector<8x128xf32>
    %212 = vector.extract_strided_slice %196 {offsets = [0, 384], sizes = [8, 128], strides = [1, 1]} : vector<8x512xf32> to vector<8x128xf32>
    %213 = arith.negf %212 : vector<8x128xf32>
    %214 = math.exp %213 : vector<8x128xf32>
    %cst_90 = arith.constant 1.000000e+00 : f32
    %215 = vector.broadcast %cst_90 : f32 to vector<8x128xf32>
    %216 = arith.addf %215, %214 : vector<8x128xf32>
    %217 = arith.divf %215, %216 : vector<8x128xf32>
    %218 = arith.mulf %209, %197 : vector<8x128xf32>
    %219 = arith.mulf %203, %211 : vector<8x128xf32>
    %220 = arith.addf %218, %219 : vector<8x128xf32>
    %221 = math.tanh %220 : vector<8x128xf32>
    %222 = arith.mulf %217, %221 : vector<8x128xf32>
    %c0_91 = arith.constant 0 : index
    %c0_92 = arith.constant 0 : index
    %223 = vector.load %arg8[%c0_91, %c0_92] : memref<8x128xf32, #tpu.memory_space<vmem>>, vector<8x128xf32>
    tpu.vector_store %arg8[%c0_91, %c0_92], %220 {strides = array<i32>} : memref<8x128xf32, #tpu.memory_space<vmem>>, vector<8x128xf32>,
    %224 = arith.truncf %222 : vector<8x128xf32> to vector<8x128xbf16>
    %c0_93 = arith.constant 0 : index
    %c128_94 = arith.constant 128 : index
    %225 = vector.load %arg6[%c0_93, %c128_94] : memref<8x256xbf16, #tpu.memory_space<vmem>>, vector<8x128xbf16>
    tpu.vector_store %arg6[%c0_93, %c128_94], %224 {strides = array<i32>} : memref<8x256xbf16, #tpu.memory_space<vmem>>, vector<8x128xbf16>,
    %226 = arith.truncf %222 : vector<8x128xf32> to vector<8x128xbf16>
    %227 = arith.index_cast %c2_i32 : i32 to index
    %c0_95 = arith.constant 0 : index
    %c0_96 = arith.constant 0 : index
    %228 = vector.load %arg5[%227, %c0_95, %c0_96] : memref<8x8x128xbf16, #tpu.memory_space<vmem>>, vector<1x8x128xbf16>
    %229 = vector.shape_cast %228 : vector<1x8x128xbf16> to vector<8x128xbf16>
    %230 = vector.shape_cast %226 : vector<8x128xbf16> to vector<1x8x128xbf16>
    tpu.vector_store %arg5[%227, %c0_95, %c0_96], %230 {strides = array<i32>} : memref<8x8x128xbf16, #tpu.memory_space<vmem>>, vector<1x8x128xbf16>,
    %c3_i32 = arith.constant 3 : i32
    %c0_97 = arith.constant 0 : index
    %c0_98 = arith.constant 0 : index
    %231 = vector.load %arg6[%c0_97, %c0_98] : memref<8x256xbf16, #tpu.memory_space<vmem>>, vector<8x128xbf16>
    %c0_99 = arith.constant 0 : index
    %c0_100 = arith.constant 0 : index
    %232 = vector.load %arg2[%c0_99, %c0_100] : memref<128x512xbf16, #tpu.memory_space<vmem>>, vector<128x512xbf16>
    %cst_101 = arith.constant dense<0.000000e+00> : vector<8x512xf32>
    %233 = tpu.matmul %231, %232, %cst_101 {dimension_numbers = #tpu.dot_dimension_numbers<[1], [0], [0], [1], [0, 0, 1, 1], [], []>} : vector<8x128xbf16>, vector<128x512xbf16>, vector<8x512xf32> -> vector<8x512xf32>
    %234 = arith.index_cast %c3_i32 : i32 to index
    %c0_102 = arith.constant 0 : index
    %c0_103 = arith.constant 0 : index
    %235 = vector.load %arg1[%234, %c0_102, %c0_103] : memref<8x8x512xbf16, #tpu.memory_space<vmem>>, vector<1x8x512xbf16>
    %236 = vector.shape_cast %235 : vector<1x8x512xbf16> to vector<8x512xbf16>
    %237 = arith.extf %236 : vector<8x512xbf16> to vector<8x512xf32>
    %238 = arith.addf %233, %237 : vector<8x512xf32>
    %c0_104 = arith.constant 0 : index
    %c0_105 = arith.constant 0 : index
    %239 = vector.load %arg7[%c0_104, %c0_105] : memref<8x128xf32, #tpu.memory_space<vmem>>, vector<8x128xf32>
    %240 = vector.extract_strided_slice %238 {offsets = [0, 0], sizes = [8, 128], strides = [1, 1]} : vector<8x512xf32> to vector<8x128xf32>
    %241 = arith.negf %240 : vector<8x128xf32>
    %242 = math.exp %241 : vector<8x128xf32>
    %cst_106 = arith.constant 1.000000e+00 : f32
    %243 = vector.broadcast %cst_106 : f32 to vector<8x128xf32>
    %244 = arith.addf %243, %242 : vector<8x128xf32>
    %245 = arith.divf %243, %244 : vector<8x128xf32>
    %246 = vector.extract_strided_slice %238 {offsets = [0, 128], sizes = [8, 128], strides = [1, 1]} : vector<8x512xf32> to vector<8x128xf32>
    %247 = arith.negf %246 : vector<8x128xf32>
    %248 = math.exp %247 : vector<8x128xf32>
    %cst_107 = arith.constant 1.000000e+00 : f32
    %249 = vector.broadcast %cst_107 : f32 to vector<8x128xf32>
    %250 = arith.addf %249, %248 : vector<8x128xf32>
    %251 = arith.divf %249, %250 : vector<8x128xf32>
    %252 = vector.extract_strided_slice %238 {offsets = [0, 256], sizes = [8, 128], strides = [1, 1]} : vector<8x512xf32> to vector<8x128xf32>
    %253 = math.tanh %252 : vector<8x128xf32>
    %254 = vector.extract_strided_slice %238 {offsets = [0, 384], sizes = [8, 128], strides = [1, 1]} : vector<8x512xf32> to vector<8x128xf32>
    %255 = arith.negf %254 : vector<8x128xf32>
    %256 = math.exp %255 : vector<8x128xf32>
    %cst_108 = arith.constant 1.000000e+00 : f32
    %257 = vector.broadcast %cst_108 : f32 to vector<8x128xf32>
    %258 = arith.addf %257, %256 : vector<8x128xf32>
    %259 = arith.divf %257, %258 : vector<8x128xf32>
    %260 = arith.mulf %251, %239 : vector<8x128xf32>
    %261 = arith.mulf %245, %253 : vector<8x128xf32>
    %262 = arith.addf %260, %261 : vector<8x128xf32>
    %263 = math.tanh %262 : vector<8x128xf32>
    %264 = arith.mulf %259, %263 : vector<8x128xf32>
    %c0_109 = arith.constant 0 : index
    %c0_110 = arith.constant 0 : index
    %265 = vector.load %arg7[%c0_109, %c0_110] : memref<8x128xf32, #tpu.memory_space<vmem>>, vector<8x128xf32>
    tpu.vector_store %arg7[%c0_109, %c0_110], %262 {strides = array<i32>} : memref<8x128xf32, #tpu.memory_space<vmem>>, vector<8x128xf32>,
    %266 = arith.truncf %264 : vector<8x128xf32> to vector<8x128xbf16>
    %c0_111 = arith.constant 0 : index
    %c0_112 = arith.constant 0 : index
    %267 = vector.load %arg6[%c0_111, %c0_112] : memref<8x256xbf16, #tpu.memory_space<vmem>>, vector<8x128xbf16>
    tpu.vector_store %arg6[%c0_111, %c0_112], %266 {strides = array<i32>} : memref<8x256xbf16, #tpu.memory_space<vmem>>, vector<8x128xbf16>,
    %c0_113 = arith.constant 0 : index
    %c0_114 = arith.constant 0 : index
    %268 = vector.load %arg6[%c0_113, %c0_114] : memref<8x256xbf16, #tpu.memory_space<vmem>>, vector<8x256xbf16>
    %c0_115 = arith.constant 0 : index
    %c0_116 = arith.constant 0 : index
    %269 = vector.load %arg3[%c0_115, %c0_116] : memref<256x512xbf16, #tpu.memory_space<vmem>>, vector<256x512xbf16>
    %cst_117 = arith.constant dense<0.000000e+00> : vector<8x512xf32>
    %270 = tpu.matmul %268, %269, %cst_117 {dimension_numbers = #tpu.dot_dimension_numbers<[1], [0], [0], [1], [0, 0, 1, 1], [], []>} : vector<8x256xbf16>, vector<256x512xbf16>, vector<8x512xf32> -> vector<8x512xf32>
    %271 = arith.addf %270, %5 : vector<8x512xf32>
    %c0_118 = arith.constant 0 : index
    %c0_119 = arith.constant 0 : index
    %272 = vector.load %arg8[%c0_118, %c0_119] : memref<8x128xf32, #tpu.memory_space<vmem>>, vector<8x128xf32>
    %273 = vector.extract_strided_slice %271 {offsets = [0, 0], sizes = [8, 128], strides = [1, 1]} : vector<8x512xf32> to vector<8x128xf32>
    %274 = arith.negf %273 : vector<8x128xf32>
    %275 = math.exp %274 : vector<8x128xf32>
    %cst_120 = arith.constant 1.000000e+00 : f32
    %276 = vector.broadcast %cst_120 : f32 to vector<8x128xf32>
    %277 = arith.addf %276, %275 : vector<8x128xf32>
    %278 = arith.divf %276, %277 : vector<8x128xf32>
    %279 = vector.extract_strided_slice %271 {offsets = [0, 128], sizes = [8, 128], strides = [1, 1]} : vector<8x512xf32> to vector<8x128xf32>
    %280 = arith.negf %279 : vector<8x128xf32>
    %281 = math.exp %280 : vector<8x128xf32>
    %cst_121 = arith.constant 1.000000e+00 : f32
    %282 = vector.broadcast %cst_121 : f32 to vector<8x128xf32>
    %283 = arith.addf %282, %281 : vector<8x128xf32>
    %284 = arith.divf %282, %283 : vector<8x128xf32>
    %285 = vector.extract_strided_slice %271 {offsets = [0, 256], sizes = [8, 128], strides = [1, 1]} : vector<8x512xf32> to vector<8x128xf32>
    %286 = math.tanh %285 : vector<8x128xf32>
    %287 = vector.extract_strided_slice %271 {offsets = [0, 384], sizes = [8, 128], strides = [1, 1]} : vector<8x512xf32> to vector<8x128xf32>
    %288 = arith.negf %287 : vector<8x128xf32>
    %289 = math.exp %288 : vector<8x128xf32>
    %cst_122 = arith.constant 1.000000e+00 : f32
    %290 = vector.broadcast %cst_122 : f32 to vector<8x128xf32>
    %291 = arith.addf %290, %289 : vector<8x128xf32>
    %292 = arith.divf %290, %291 : vector<8x128xf32>
    %293 = arith.mulf %284, %272 : vector<8x128xf32>
    %294 = arith.mulf %278, %286 : vector<8x128xf32>
    %295 = arith.addf %293, %294 : vector<8x128xf32>
    %296 = math.tanh %295 : vector<8x128xf32>
    %297 = arith.mulf %292, %296 : vector<8x128xf32>
    %c0_123 = arith.constant 0 : index
    %c0_124 = arith.constant 0 : index
    %298 = vector.load %arg8[%c0_123, %c0_124] : memref<8x128xf32, #tpu.memory_space<vmem>>, vector<8x128xf32>
    tpu.vector_store %arg8[%c0_123, %c0_124], %295 {strides = array<i32>} : memref<8x128xf32, #tpu.memory_space<vmem>>, vector<8x128xf32>,
    %299 = arith.truncf %297 : vector<8x128xf32> to vector<8x128xbf16>
    %c0_125 = arith.constant 0 : index
    %c128_126 = arith.constant 128 : index
    %300 = vector.load %arg6[%c0_125, %c128_126] : memref<8x256xbf16, #tpu.memory_space<vmem>>, vector<8x128xbf16>
    tpu.vector_store %arg6[%c0_125, %c128_126], %299 {strides = array<i32>} : memref<8x256xbf16, #tpu.memory_space<vmem>>, vector<8x128xbf16>,
    %301 = arith.truncf %297 : vector<8x128xf32> to vector<8x128xbf16>
    %302 = arith.index_cast %c3_i32 : i32 to index
    %c0_127 = arith.constant 0 : index
    %c0_128 = arith.constant 0 : index
    %303 = vector.load %arg5[%302, %c0_127, %c0_128] : memref<8x8x128xbf16, #tpu.memory_space<vmem>>, vector<1x8x128xbf16>
    %304 = vector.shape_cast %303 : vector<1x8x128xbf16> to vector<8x128xbf16>
    %305 = vector.shape_cast %301 : vector<8x128xbf16> to vector<1x8x128xbf16>
    tpu.vector_store %arg5[%302, %c0_127, %c0_128], %305 {strides = array<i32>} : memref<8x8x128xbf16, #tpu.memory_space<vmem>>, vector<1x8x128xbf16>,
    %c4_i32 = arith.constant 4 : i32
    %c0_129 = arith.constant 0 : index
    %c0_130 = arith.constant 0 : index
    %306 = vector.load %arg6[%c0_129, %c0_130] : memref<8x256xbf16, #tpu.memory_space<vmem>>, vector<8x128xbf16>
    %c0_131 = arith.constant 0 : index
    %c0_132 = arith.constant 0 : index
    %307 = vector.load %arg2[%c0_131, %c0_132] : memref<128x512xbf16, #tpu.memory_space<vmem>>, vector<128x512xbf16>
    %cst_133 = arith.constant dense<0.000000e+00> : vector<8x512xf32>
    %308 = tpu.matmul %306, %307, %cst_133 {dimension_numbers = #tpu.dot_dimension_numbers<[1], [0], [0], [1], [0, 0, 1, 1], [], []>} : vector<8x128xbf16>, vector<128x512xbf16>, vector<8x512xf32> -> vector<8x512xf32>
    %309 = arith.index_cast %c4_i32 : i32 to index
    %c0_134 = arith.constant 0 : index
    %c0_135 = arith.constant 0 : index
    %310 = vector.load %arg1[%309, %c0_134, %c0_135] : memref<8x8x512xbf16, #tpu.memory_space<vmem>>, vector<1x8x512xbf16>
    %311 = vector.shape_cast %310 : vector<1x8x512xbf16> to vector<8x512xbf16>
    %312 = arith.extf %311 : vector<8x512xbf16> to vector<8x512xf32>
    %313 = arith.addf %308, %312 : vector<8x512xf32>
    %c0_136 = arith.constant 0 : index
    %c0_137 = arith.constant 0 : index
    %314 = vector.load %arg7[%c0_136, %c0_137] : memref<8x128xf32, #tpu.memory_space<vmem>>, vector<8x128xf32>
    %315 = vector.extract_strided_slice %313 {offsets = [0, 0], sizes = [8, 128], strides = [1, 1]} : vector<8x512xf32> to vector<8x128xf32>
    %316 = arith.negf %315 : vector<8x128xf32>
    %317 = math.exp %316 : vector<8x128xf32>
    %cst_138 = arith.constant 1.000000e+00 : f32
    %318 = vector.broadcast %cst_138 : f32 to vector<8x128xf32>
    %319 = arith.addf %318, %317 : vector<8x128xf32>
    %320 = arith.divf %318, %319 : vector<8x128xf32>
    %321 = vector.extract_strided_slice %313 {offsets = [0, 128], sizes = [8, 128], strides = [1, 1]} : vector<8x512xf32> to vector<8x128xf32>
    %322 = arith.negf %321 : vector<8x128xf32>
    %323 = math.exp %322 : vector<8x128xf32>
    %cst_139 = arith.constant 1.000000e+00 : f32
    %324 = vector.broadcast %cst_139 : f32 to vector<8x128xf32>
    %325 = arith.addf %324, %323 : vector<8x128xf32>
    %326 = arith.divf %324, %325 : vector<8x128xf32>
    %327 = vector.extract_strided_slice %313 {offsets = [0, 256], sizes = [8, 128], strides = [1, 1]} : vector<8x512xf32> to vector<8x128xf32>
    %328 = math.tanh %327 : vector<8x128xf32>
    %329 = vector.extract_strided_slice %313 {offsets = [0, 384], sizes = [8, 128], strides = [1, 1]} : vector<8x512xf32> to vector<8x128xf32>
    %330 = arith.negf %329 : vector<8x128xf32>
    %331 = math.exp %330 : vector<8x128xf32>
    %cst_140 = arith.constant 1.000000e+00 : f32
    %332 = vector.broadcast %cst_140 : f32 to vector<8x128xf32>
    %333 = arith.addf %332, %331 : vector<8x128xf32>
    %334 = arith.divf %332, %333 : vector<8x128xf32>
    %335 = arith.mulf %326, %314 : vector<8x128xf32>
    %336 = arith.mulf %320, %328 : vector<8x128xf32>
    %337 = arith.addf %335, %336 : vector<8x128xf32>
    %338 = math.tanh %337 : vector<8x128xf32>
    %339 = arith.mulf %334, %338 : vector<8x128xf32>
    %c0_141 = arith.constant 0 : index
    %c0_142 = arith.constant 0 : index
    %340 = vector.load %arg7[%c0_141, %c0_142] : memref<8x128xf32, #tpu.memory_space<vmem>>, vector<8x128xf32>
    tpu.vector_store %arg7[%c0_141, %c0_142], %337 {strides = array<i32>} : memref<8x128xf32, #tpu.memory_space<vmem>>, vector<8x128xf32>,
    %341 = arith.truncf %339 : vector<8x128xf32> to vector<8x128xbf16>
    %c0_143 = arith.constant 0 : index
    %c0_144 = arith.constant 0 : index
    %342 = vector.load %arg6[%c0_143, %c0_144] : memref<8x256xbf16, #tpu.memory_space<vmem>>, vector<8x128xbf16>
    tpu.vector_store %arg6[%c0_143, %c0_144], %341 {strides = array<i32>} : memref<8x256xbf16, #tpu.memory_space<vmem>>, vector<8x128xbf16>,
    %c0_145 = arith.constant 0 : index
    %c0_146 = arith.constant 0 : index
    %343 = vector.load %arg6[%c0_145, %c0_146] : memref<8x256xbf16, #tpu.memory_space<vmem>>, vector<8x256xbf16>
    %c0_147 = arith.constant 0 : index
    %c0_148 = arith.constant 0 : index
    %344 = vector.load %arg3[%c0_147, %c0_148] : memref<256x512xbf16, #tpu.memory_space<vmem>>, vector<256x512xbf16>
    %cst_149 = arith.constant dense<0.000000e+00> : vector<8x512xf32>
    %345 = tpu.matmul %343, %344, %cst_149 {dimension_numbers = #tpu.dot_dimension_numbers<[1], [0], [0], [1], [0, 0, 1, 1], [], []>} : vector<8x256xbf16>, vector<256x512xbf16>, vector<8x512xf32> -> vector<8x512xf32>
    %346 = arith.addf %345, %5 : vector<8x512xf32>
    %c0_150 = arith.constant 0 : index
    %c0_151 = arith.constant 0 : index
    %347 = vector.load %arg8[%c0_150, %c0_151] : memref<8x128xf32, #tpu.memory_space<vmem>>, vector<8x128xf32>
    %348 = vector.extract_strided_slice %346 {offsets = [0, 0], sizes = [8, 128], strides = [1, 1]} : vector<8x512xf32> to vector<8x128xf32>
    %349 = arith.negf %348 : vector<8x128xf32>
    %350 = math.exp %349 : vector<8x128xf32>
    %cst_152 = arith.constant 1.000000e+00 : f32
    %351 = vector.broadcast %cst_152 : f32 to vector<8x128xf32>
    %352 = arith.addf %351, %350 : vector<8x128xf32>
    %353 = arith.divf %351, %352 : vector<8x128xf32>
    %354 = vector.extract_strided_slice %346 {offsets = [0, 128], sizes = [8, 128], strides = [1, 1]} : vector<8x512xf32> to vector<8x128xf32>
    %355 = arith.negf %354 : vector<8x128xf32>
    %356 = math.exp %355 : vector<8x128xf32>
    %cst_153 = arith.constant 1.000000e+00 : f32
    %357 = vector.broadcast %cst_153 : f32 to vector<8x128xf32>
    %358 = arith.addf %357, %356 : vector<8x128xf32>
    %359 = arith.divf %357, %358 : vector<8x128xf32>
    %360 = vector.extract_strided_slice %346 {offsets = [0, 256], sizes = [8, 128], strides = [1, 1]} : vector<8x512xf32> to vector<8x128xf32>
    %361 = math.tanh %360 : vector<8x128xf32>
    %362 = vector.extract_strided_slice %346 {offsets = [0, 384], sizes = [8, 128], strides = [1, 1]} : vector<8x512xf32> to vector<8x128xf32>
    %363 = arith.negf %362 : vector<8x128xf32>
    %364 = math.exp %363 : vector<8x128xf32>
    %cst_154 = arith.constant 1.000000e+00 : f32
    %365 = vector.broadcast %cst_154 : f32 to vector<8x128xf32>
    %366 = arith.addf %365, %364 : vector<8x128xf32>
    %367 = arith.divf %365, %366 : vector<8x128xf32>
    %368 = arith.mulf %359, %347 : vector<8x128xf32>
    %369 = arith.mulf %353, %361 : vector<8x128xf32>
    %370 = arith.addf %368, %369 : vector<8x128xf32>
    %371 = math.tanh %370 : vector<8x128xf32>
    %372 = arith.mulf %367, %371 : vector<8x128xf32>
    %c0_155 = arith.constant 0 : index
    %c0_156 = arith.constant 0 : index
    %373 = vector.load %arg8[%c0_155, %c0_156] : memref<8x128xf32, #tpu.memory_space<vmem>>, vector<8x128xf32>
    tpu.vector_store %arg8[%c0_155, %c0_156], %370 {strides = array<i32>} : memref<8x128xf32, #tpu.memory_space<vmem>>, vector<8x128xf32>,
    %374 = arith.truncf %372 : vector<8x128xf32> to vector<8x128xbf16>
    %c0_157 = arith.constant 0 : index
    %c128_158 = arith.constant 128 : index
    %375 = vector.load %arg6[%c0_157, %c128_158] : memref<8x256xbf16, #tpu.memory_space<vmem>>, vector<8x128xbf16>
    tpu.vector_store %arg6[%c0_157, %c128_158], %374 {strides = array<i32>} : memref<8x256xbf16, #tpu.memory_space<vmem>>, vector<8x128xbf16>,
    %376 = arith.truncf %372 : vector<8x128xf32> to vector<8x128xbf16>
    %377 = arith.index_cast %c4_i32 : i32 to index
    %c0_159 = arith.constant 0 : index
    %c0_160 = arith.constant 0 : index
    %378 = vector.load %arg5[%377, %c0_159, %c0_160] : memref<8x8x128xbf16, #tpu.memory_space<vmem>>, vector<1x8x128xbf16>
    %379 = vector.shape_cast %378 : vector<1x8x128xbf16> to vector<8x128xbf16>
    %380 = vector.shape_cast %376 : vector<8x128xbf16> to vector<1x8x128xbf16>
    tpu.vector_store %arg5[%377, %c0_159, %c0_160], %380 {strides = array<i32>} : memref<8x8x128xbf16, #tpu.memory_space<vmem>>, vector<1x8x128xbf16>,
    %c5_i32 = arith.constant 5 : i32
    %c0_161 = arith.constant 0 : index
    %c0_162 = arith.constant 0 : index
    %381 = vector.load %arg6[%c0_161, %c0_162] : memref<8x256xbf16, #tpu.memory_space<vmem>>, vector<8x128xbf16>
    %c0_163 = arith.constant 0 : index
    %c0_164 = arith.constant 0 : index
    %382 = vector.load %arg2[%c0_163, %c0_164] : memref<128x512xbf16, #tpu.memory_space<vmem>>, vector<128x512xbf16>
    %cst_165 = arith.constant dense<0.000000e+00> : vector<8x512xf32>
    %383 = tpu.matmul %381, %382, %cst_165 {dimension_numbers = #tpu.dot_dimension_numbers<[1], [0], [0], [1], [0, 0, 1, 1], [], []>} : vector<8x128xbf16>, vector<128x512xbf16>, vector<8x512xf32> -> vector<8x512xf32>
    %384 = arith.index_cast %c5_i32 : i32 to index
    %c0_166 = arith.constant 0 : index
    %c0_167 = arith.constant 0 : index
    %385 = vector.load %arg1[%384, %c0_166, %c0_167] : memref<8x8x512xbf16, #tpu.memory_space<vmem>>, vector<1x8x512xbf16>
    %386 = vector.shape_cast %385 : vector<1x8x512xbf16> to vector<8x512xbf16>
    %387 = arith.extf %386 : vector<8x512xbf16> to vector<8x512xf32>
    %388 = arith.addf %383, %387 : vector<8x512xf32>
    %c0_168 = arith.constant 0 : index
    %c0_169 = arith.constant 0 : index
    %389 = vector.load %arg7[%c0_168, %c0_169] : memref<8x128xf32, #tpu.memory_space<vmem>>, vector<8x128xf32>
    %390 = vector.extract_strided_slice %388 {offsets = [0, 0], sizes = [8, 128], strides = [1, 1]} : vector<8x512xf32> to vector<8x128xf32>
    %391 = arith.negf %390 : vector<8x128xf32>
    %392 = math.exp %391 : vector<8x128xf32>
    %cst_170 = arith.constant 1.000000e+00 : f32
    %393 = vector.broadcast %cst_170 : f32 to vector<8x128xf32>
    %394 = arith.addf %393, %392 : vector<8x128xf32>
    %395 = arith.divf %393, %394 : vector<8x128xf32>
    %396 = vector.extract_strided_slice %388 {offsets = [0, 128], sizes = [8, 128], strides = [1, 1]} : vector<8x512xf32> to vector<8x128xf32>
    %397 = arith.negf %396 : vector<8x128xf32>
    %398 = math.exp %397 : vector<8x128xf32>
    %cst_171 = arith.constant 1.000000e+00 : f32
    %399 = vector.broadcast %cst_171 : f32 to vector<8x128xf32>
    %400 = arith.addf %399, %398 : vector<8x128xf32>
    %401 = arith.divf %399, %400 : vector<8x128xf32>
    %402 = vector.extract_strided_slice %388 {offsets = [0, 256], sizes = [8, 128], strides = [1, 1]} : vector<8x512xf32> to vector<8x128xf32>
    %403 = math.tanh %402 : vector<8x128xf32>
    %404 = vector.extract_strided_slice %388 {offsets = [0, 384], sizes = [8, 128], strides = [1, 1]} : vector<8x512xf32> to vector<8x128xf32>
    %405 = arith.negf %404 : vector<8x128xf32>
    %406 = math.exp %405 : vector<8x128xf32>
    %cst_172 = arith.constant 1.000000e+00 : f32
    %407 = vector.broadcast %cst_172 : f32 to vector<8x128xf32>
    %408 = arith.addf %407, %406 : vector<8x128xf32>
    %409 = arith.divf %407, %408 : vector<8x128xf32>
    %410 = arith.mulf %401, %389 : vector<8x128xf32>
    %411 = arith.mulf %395, %403 : vector<8x128xf32>
    %412 = arith.addf %410, %411 : vector<8x128xf32>
    %413 = math.tanh %412 : vector<8x128xf32>
    %414 = arith.mulf %409, %413 : vector<8x128xf32>
    %c0_173 = arith.constant 0 : index
    %c0_174 = arith.constant 0 : index
    %415 = vector.load %arg7[%c0_173, %c0_174] : memref<8x128xf32, #tpu.memory_space<vmem>>, vector<8x128xf32>
    tpu.vector_store %arg7[%c0_173, %c0_174], %412 {strides = array<i32>} : memref<8x128xf32, #tpu.memory_space<vmem>>, vector<8x128xf32>,
    %416 = arith.truncf %414 : vector<8x128xf32> to vector<8x128xbf16>
    %c0_175 = arith.constant 0 : index
    %c0_176 = arith.constant 0 : index
    %417 = vector.load %arg6[%c0_175, %c0_176] : memref<8x256xbf16, #tpu.memory_space<vmem>>, vector<8x128xbf16>
    tpu.vector_store %arg6[%c0_175, %c0_176], %416 {strides = array<i32>} : memref<8x256xbf16, #tpu.memory_space<vmem>>, vector<8x128xbf16>,
    %c0_177 = arith.constant 0 : index
    %c0_178 = arith.constant 0 : index
    %418 = vector.load %arg6[%c0_177, %c0_178] : memref<8x256xbf16, #tpu.memory_space<vmem>>, vector<8x256xbf16>
    %c0_179 = arith.constant 0 : index
    %c0_180 = arith.constant 0 : index
    %419 = vector.load %arg3[%c0_179, %c0_180] : memref<256x512xbf16, #tpu.memory_space<vmem>>, vector<256x512xbf16>
    %cst_181 = arith.constant dense<0.000000e+00> : vector<8x512xf32>
    %420 = tpu.matmul %418, %419, %cst_181 {dimension_numbers = #tpu.dot_dimension_numbers<[1], [0], [0], [1], [0, 0, 1, 1], [], []>} : vector<8x256xbf16>, vector<256x512xbf16>, vector<8x512xf32> -> vector<8x512xf32>
    %421 = arith.addf %420, %5 : vector<8x512xf32>
    %c0_182 = arith.constant 0 : index
    %c0_183 = arith.constant 0 : index
    %422 = vector.load %arg8[%c0_182, %c0_183] : memref<8x128xf32, #tpu.memory_space<vmem>>, vector<8x128xf32>
    %423 = vector.extract_strided_slice %421 {offsets = [0, 0], sizes = [8, 128], strides = [1, 1]} : vector<8x512xf32> to vector<8x128xf32>
    %424 = arith.negf %423 : vector<8x128xf32>
    %425 = math.exp %424 : vector<8x128xf32>
    %cst_184 = arith.constant 1.000000e+00 : f32
    %426 = vector.broadcast %cst_184 : f32 to vector<8x128xf32>
    %427 = arith.addf %426, %425 : vector<8x128xf32>
    %428 = arith.divf %426, %427 : vector<8x128xf32>
    %429 = vector.extract_strided_slice %421 {offsets = [0, 128], sizes = [8, 128], strides = [1, 1]} : vector<8x512xf32> to vector<8x128xf32>
    %430 = arith.negf %429 : vector<8x128xf32>
    %431 = math.exp %430 : vector<8x128xf32>
    %cst_185 = arith.constant 1.000000e+00 : f32
    %432 = vector.broadcast %cst_185 : f32 to vector<8x128xf32>
    %433 = arith.addf %432, %431 : vector<8x128xf32>
    %434 = arith.divf %432, %433 : vector<8x128xf32>
    %435 = vector.extract_strided_slice %421 {offsets = [0, 256], sizes = [8, 128], strides = [1, 1]} : vector<8x512xf32> to vector<8x128xf32>
    %436 = math.tanh %435 : vector<8x128xf32>
    %437 = vector.extract_strided_slice %421 {offsets = [0, 384], sizes = [8, 128], strides = [1, 1]} : vector<8x512xf32> to vector<8x128xf32>
    %438 = arith.negf %437 : vector<8x128xf32>
    %439 = math.exp %438 : vector<8x128xf32>
    %cst_186 = arith.constant 1.000000e+00 : f32
    %440 = vector.broadcast %cst_186 : f32 to vector<8x128xf32>
    %441 = arith.addf %440, %439 : vector<8x128xf32>
    %442 = arith.divf %440, %441 : vector<8x128xf32>
    %443 = arith.mulf %434, %422 : vector<8x128xf32>
    %444 = arith.mulf %428, %436 : vector<8x128xf32>
    %445 = arith.addf %443, %444 : vector<8x128xf32>
    %446 = math.tanh %445 : vector<8x128xf32>
    %447 = arith.mulf %442, %446 : vector<8x128xf32>
    %c0_187 = arith.constant 0 : index
    %c0_188 = arith.constant 0 : index
    %448 = vector.load %arg8[%c0_187, %c0_188] : memref<8x128xf32, #tpu.memory_space<vmem>>, vector<8x128xf32>
    tpu.vector_store %arg8[%c0_187, %c0_188], %445 {strides = array<i32>} : memref<8x128xf32, #tpu.memory_space<vmem>>, vector<8x128xf32>,
    %449 = arith.truncf %447 : vector<8x128xf32> to vector<8x128xbf16>
    %c0_189 = arith.constant 0 : index
    %c128_190 = arith.constant 128 : index
    %450 = vector.load %arg6[%c0_189, %c128_190] : memref<8x256xbf16, #tpu.memory_space<vmem>>, vector<8x128xbf16>
    tpu.vector_store %arg6[%c0_189, %c128_190], %449 {strides = array<i32>} : memref<8x256xbf16, #tpu.memory_space<vmem>>, vector<8x128xbf16>,
    %451 = arith.truncf %447 : vector<8x128xf32> to vector<8x128xbf16>
    %452 = arith.index_cast %c5_i32 : i32 to index
    %c0_191 = arith.constant 0 : index
    %c0_192 = arith.constant 0 : index
    %453 = vector.load %arg5[%452, %c0_191, %c0_192] : memref<8x8x128xbf16, #tpu.memory_space<vmem>>, vector<1x8x128xbf16>
    %454 = vector.shape_cast %453 : vector<1x8x128xbf16> to vector<8x128xbf16>
    %455 = vector.shape_cast %451 : vector<8x128xbf16> to vector<1x8x128xbf16>
    tpu.vector_store %arg5[%452, %c0_191, %c0_192], %455 {strides = array<i32>} : memref<8x8x128xbf16, #tpu.memory_space<vmem>>, vector<1x8x128xbf16>,
    %c6_i32 = arith.constant 6 : i32
    %c0_193 = arith.constant 0 : index
    %c0_194 = arith.constant 0 : index
    %456 = vector.load %arg6[%c0_193, %c0_194] : memref<8x256xbf16, #tpu.memory_space<vmem>>, vector<8x128xbf16>
    %c0_195 = arith.constant 0 : index
    %c0_196 = arith.constant 0 : index
    %457 = vector.load %arg2[%c0_195, %c0_196] : memref<128x512xbf16, #tpu.memory_space<vmem>>, vector<128x512xbf16>
    %cst_197 = arith.constant dense<0.000000e+00> : vector<8x512xf32>
    %458 = tpu.matmul %456, %457, %cst_197 {dimension_numbers = #tpu.dot_dimension_numbers<[1], [0], [0], [1], [0, 0, 1, 1], [], []>} : vector<8x128xbf16>, vector<128x512xbf16>, vector<8x512xf32> -> vector<8x512xf32>
    %459 = arith.index_cast %c6_i32 : i32 to index
    %c0_198 = arith.constant 0 : index
    %c0_199 = arith.constant 0 : index
    %460 = vector.load %arg1[%459, %c0_198, %c0_199] : memref<8x8x512xbf16, #tpu.memory_space<vmem>>, vector<1x8x512xbf16>
    %461 = vector.shape_cast %460 : vector<1x8x512xbf16> to vector<8x512xbf16>
    %462 = arith.extf %461 : vector<8x512xbf16> to vector<8x512xf32>
    %463 = arith.addf %458, %462 : vector<8x512xf32>
    %c0_200 = arith.constant 0 : index
    %c0_201 = arith.constant 0 : index
    %464 = vector.load %arg7[%c0_200, %c0_201] : memref<8x128xf32, #tpu.memory_space<vmem>>, vector<8x128xf32>
    %465 = vector.extract_strided_slice %463 {offsets = [0, 0], sizes = [8, 128], strides = [1, 1]} : vector<8x512xf32> to vector<8x128xf32>
    %466 = arith.negf %465 : vector<8x128xf32>
    %467 = math.exp %466 : vector<8x128xf32>
    %cst_202 = arith.constant 1.000000e+00 : f32
    %468 = vector.broadcast %cst_202 : f32 to vector<8x128xf32>
    %469 = arith.addf %468, %467 : vector<8x128xf32>
    %470 = arith.divf %468, %469 : vector<8x128xf32>
    %471 = vector.extract_strided_slice %463 {offsets = [0, 128], sizes = [8, 128], strides = [1, 1]} : vector<8x512xf32> to vector<8x128xf32>
    %472 = arith.negf %471 : vector<8x128xf32>
    %473 = math.exp %472 : vector<8x128xf32>
    %cst_203 = arith.constant 1.000000e+00 : f32
    %474 = vector.broadcast %cst_203 : f32 to vector<8x128xf32>
    %475 = arith.addf %474, %473 : vector<8x128xf32>
    %476 = arith.divf %474, %475 : vector<8x128xf32>
    %477 = vector.extract_strided_slice %463 {offsets = [0, 256], sizes = [8, 128], strides = [1, 1]} : vector<8x512xf32> to vector<8x128xf32>
    %478 = math.tanh %477 : vector<8x128xf32>
    %479 = vector.extract_strided_slice %463 {offsets = [0, 384], sizes = [8, 128], strides = [1, 1]} : vector<8x512xf32> to vector<8x128xf32>
    %480 = arith.negf %479 : vector<8x128xf32>
    %481 = math.exp %480 : vector<8x128xf32>
    %cst_204 = arith.constant 1.000000e+00 : f32
    %482 = vector.broadcast %cst_204 : f32 to vector<8x128xf32>
    %483 = arith.addf %482, %481 : vector<8x128xf32>
    %484 = arith.divf %482, %483 : vector<8x128xf32>
    %485 = arith.mulf %476, %464 : vector<8x128xf32>
    %486 = arith.mulf %470, %478 : vector<8x128xf32>
    %487 = arith.addf %485, %486 : vector<8x128xf32>
    %488 = math.tanh %487 : vector<8x128xf32>
    %489 = arith.mulf %484, %488 : vector<8x128xf32>
    %c0_205 = arith.constant 0 : index
    %c0_206 = arith.constant 0 : index
    %490 = vector.load %arg7[%c0_205, %c0_206] : memref<8x128xf32, #tpu.memory_space<vmem>>, vector<8x128xf32>
    tpu.vector_store %arg7[%c0_205, %c0_206], %487 {strides = array<i32>} : memref<8x128xf32, #tpu.memory_space<vmem>>, vector<8x128xf32>,
    %491 = arith.truncf %489 : vector<8x128xf32> to vector<8x128xbf16>
    %c0_207 = arith.constant 0 : index
    %c0_208 = arith.constant 0 : index
    %492 = vector.load %arg6[%c0_207, %c0_208] : memref<8x256xbf16, #tpu.memory_space<vmem>>, vector<8x128xbf16>
    tpu.vector_store %arg6[%c0_207, %c0_208], %491 {strides = array<i32>} : memref<8x256xbf16, #tpu.memory_space<vmem>>, vector<8x128xbf16>,
    %c0_209 = arith.constant 0 : index
    %c0_210 = arith.constant 0 : index
    %493 = vector.load %arg6[%c0_209, %c0_210] : memref<8x256xbf16, #tpu.memory_space<vmem>>, vector<8x256xbf16>
    %c0_211 = arith.constant 0 : index
    %c0_212 = arith.constant 0 : index
    %494 = vector.load %arg3[%c0_211, %c0_212] : memref<256x512xbf16, #tpu.memory_space<vmem>>, vector<256x512xbf16>
    %cst_213 = arith.constant dense<0.000000e+00> : vector<8x512xf32>
    %495 = tpu.matmul %493, %494, %cst_213 {dimension_numbers = #tpu.dot_dimension_numbers<[1], [0], [0], [1], [0, 0, 1, 1], [], []>} : vector<8x256xbf16>, vector<256x512xbf16>, vector<8x512xf32> -> vector<8x512xf32>
    %496 = arith.addf %495, %5 : vector<8x512xf32>
    %c0_214 = arith.constant 0 : index
    %c0_215 = arith.constant 0 : index
    %497 = vector.load %arg8[%c0_214, %c0_215] : memref<8x128xf32, #tpu.memory_space<vmem>>, vector<8x128xf32>
    %498 = vector.extract_strided_slice %496 {offsets = [0, 0], sizes = [8, 128], strides = [1, 1]} : vector<8x512xf32> to vector<8x128xf32>
    %499 = arith.negf %498 : vector<8x128xf32>
    %500 = math.exp %499 : vector<8x128xf32>
    %cst_216 = arith.constant 1.000000e+00 : f32
    %501 = vector.broadcast %cst_216 : f32 to vector<8x128xf32>
    %502 = arith.addf %501, %500 : vector<8x128xf32>
    %503 = arith.divf %501, %502 : vector<8x128xf32>
    %504 = vector.extract_strided_slice %496 {offsets = [0, 128], sizes = [8, 128], strides = [1, 1]} : vector<8x512xf32> to vector<8x128xf32>
    %505 = arith.negf %504 : vector<8x128xf32>
    %506 = math.exp %505 : vector<8x128xf32>
    %cst_217 = arith.constant 1.000000e+00 : f32
    %507 = vector.broadcast %cst_217 : f32 to vector<8x128xf32>
    %508 = arith.addf %507, %506 : vector<8x128xf32>
    %509 = arith.divf %507, %508 : vector<8x128xf32>
    %510 = vector.extract_strided_slice %496 {offsets = [0, 256], sizes = [8, 128], strides = [1, 1]} : vector<8x512xf32> to vector<8x128xf32>
    %511 = math.tanh %510 : vector<8x128xf32>
    %512 = vector.extract_strided_slice %496 {offsets = [0, 384], sizes = [8, 128], strides = [1, 1]} : vector<8x512xf32> to vector<8x128xf32>
    %513 = arith.negf %512 : vector<8x128xf32>
    %514 = math.exp %513 : vector<8x128xf32>
    %cst_218 = arith.constant 1.000000e+00 : f32
    %515 = vector.broadcast %cst_218 : f32 to vector<8x128xf32>
    %516 = arith.addf %515, %514 : vector<8x128xf32>
    %517 = arith.divf %515, %516 : vector<8x128xf32>
    %518 = arith.mulf %509, %497 : vector<8x128xf32>
    %519 = arith.mulf %503, %511 : vector<8x128xf32>
    %520 = arith.addf %518, %519 : vector<8x128xf32>
    %521 = math.tanh %520 : vector<8x128xf32>
    %522 = arith.mulf %517, %521 : vector<8x128xf32>
    %c0_219 = arith.constant 0 : index
    %c0_220 = arith.constant 0 : index
    %523 = vector.load %arg8[%c0_219, %c0_220] : memref<8x128xf32, #tpu.memory_space<vmem>>, vector<8x128xf32>
    tpu.vector_store %arg8[%c0_219, %c0_220], %520 {strides = array<i32>} : memref<8x128xf32, #tpu.memory_space<vmem>>, vector<8x128xf32>,
    %524 = arith.truncf %522 : vector<8x128xf32> to vector<8x128xbf16>
    %c0_221 = arith.constant 0 : index
    %c128_222 = arith.constant 128 : index
    %525 = vector.load %arg6[%c0_221, %c128_222] : memref<8x256xbf16, #tpu.memory_space<vmem>>, vector<8x128xbf16>
    tpu.vector_store %arg6[%c0_221, %c128_222], %524 {strides = array<i32>} : memref<8x256xbf16, #tpu.memory_space<vmem>>, vector<8x128xbf16>,
    %526 = arith.truncf %522 : vector<8x128xf32> to vector<8x128xbf16>
    %527 = arith.index_cast %c6_i32 : i32 to index
    %c0_223 = arith.constant 0 : index
    %c0_224 = arith.constant 0 : index
    %528 = vector.load %arg5[%527, %c0_223, %c0_224] : memref<8x8x128xbf16, #tpu.memory_space<vmem>>, vector<1x8x128xbf16>
    %529 = vector.shape_cast %528 : vector<1x8x128xbf16> to vector<8x128xbf16>
    %530 = vector.shape_cast %526 : vector<8x128xbf16> to vector<1x8x128xbf16>
    tpu.vector_store %arg5[%527, %c0_223, %c0_224], %530 {strides = array<i32>} : memref<8x8x128xbf16, #tpu.memory_space<vmem>>, vector<1x8x128xbf16>,
    %c7_i32 = arith.constant 7 : i32
    %c0_225 = arith.constant 0 : index
    %c0_226 = arith.constant 0 : index
    %531 = vector.load %arg6[%c0_225, %c0_226] : memref<8x256xbf16, #tpu.memory_space<vmem>>, vector<8x128xbf16>
    %c0_227 = arith.constant 0 : index
    %c0_228 = arith.constant 0 : index
    %532 = vector.load %arg2[%c0_227, %c0_228] : memref<128x512xbf16, #tpu.memory_space<vmem>>, vector<128x512xbf16>
    %cst_229 = arith.constant dense<0.000000e+00> : vector<8x512xf32>
    %533 = tpu.matmul %531, %532, %cst_229 {dimension_numbers = #tpu.dot_dimension_numbers<[1], [0], [0], [1], [0, 0, 1, 1], [], []>} : vector<8x128xbf16>, vector<128x512xbf16>, vector<8x512xf32> -> vector<8x512xf32>
    %534 = arith.index_cast %c7_i32 : i32 to index
    %c0_230 = arith.constant 0 : index
    %c0_231 = arith.constant 0 : index
    %535 = vector.load %arg1[%534, %c0_230, %c0_231] : memref<8x8x512xbf16, #tpu.memory_space<vmem>>, vector<1x8x512xbf16>
    %536 = vector.shape_cast %535 : vector<1x8x512xbf16> to vector<8x512xbf16>
    %537 = arith.extf %536 : vector<8x512xbf16> to vector<8x512xf32>
    %538 = arith.addf %533, %537 : vector<8x512xf32>
    %c0_232 = arith.constant 0 : index
    %c0_233 = arith.constant 0 : index
    %539 = vector.load %arg7[%c0_232, %c0_233] : memref<8x128xf32, #tpu.memory_space<vmem>>, vector<8x128xf32>
    %540 = vector.extract_strided_slice %538 {offsets = [0, 0], sizes = [8, 128], strides = [1, 1]} : vector<8x512xf32> to vector<8x128xf32>
    %541 = arith.negf %540 : vector<8x128xf32>
    %542 = math.exp %541 : vector<8x128xf32>
    %cst_234 = arith.constant 1.000000e+00 : f32
    %543 = vector.broadcast %cst_234 : f32 to vector<8x128xf32>
    %544 = arith.addf %543, %542 : vector<8x128xf32>
    %545 = arith.divf %543, %544 : vector<8x128xf32>
    %546 = vector.extract_strided_slice %538 {offsets = [0, 128], sizes = [8, 128], strides = [1, 1]} : vector<8x512xf32> to vector<8x128xf32>
    %547 = arith.negf %546 : vector<8x128xf32>
    %548 = math.exp %547 : vector<8x128xf32>
    %cst_235 = arith.constant 1.000000e+00 : f32
    %549 = vector.broadcast %cst_235 : f32 to vector<8x128xf32>
    %550 = arith.addf %549, %548 : vector<8x128xf32>
    %551 = arith.divf %549, %550 : vector<8x128xf32>
    %552 = vector.extract_strided_slice %538 {offsets = [0, 256], sizes = [8, 128], strides = [1, 1]} : vector<8x512xf32> to vector<8x128xf32>
    %553 = math.tanh %552 : vector<8x128xf32>
    %554 = vector.extract_strided_slice %538 {offsets = [0, 384], sizes = [8, 128], strides = [1, 1]} : vector<8x512xf32> to vector<8x128xf32>
    %555 = arith.negf %554 : vector<8x128xf32>
    %556 = math.exp %555 : vector<8x128xf32>
    %cst_236 = arith.constant 1.000000e+00 : f32
    %557 = vector.broadcast %cst_236 : f32 to vector<8x128xf32>
    %558 = arith.addf %557, %556 : vector<8x128xf32>
    %559 = arith.divf %557, %558 : vector<8x128xf32>
    %560 = arith.mulf %551, %539 : vector<8x128xf32>
    %561 = arith.mulf %545, %553 : vector<8x128xf32>
    %562 = arith.addf %560, %561 : vector<8x128xf32>
    %563 = math.tanh %562 : vector<8x128xf32>
    %564 = arith.mulf %559, %563 : vector<8x128xf32>
    %c0_237 = arith.constant 0 : index
    %c0_238 = arith.constant 0 : index
    %565 = vector.load %arg7[%c0_237, %c0_238] : memref<8x128xf32, #tpu.memory_space<vmem>>, vector<8x128xf32>
    tpu.vector_store %arg7[%c0_237, %c0_238], %562 {strides = array<i32>} : memref<8x128xf32, #tpu.memory_space<vmem>>, vector<8x128xf32>,
    %566 = arith.truncf %564 : vector<8x128xf32> to vector<8x128xbf16>
    %c0_239 = arith.constant 0 : index
    %c0_240 = arith.constant 0 : index
    %567 = vector.load %arg6[%c0_239, %c0_240] : memref<8x256xbf16, #tpu.memory_space<vmem>>, vector<8x128xbf16>
    tpu.vector_store %arg6[%c0_239, %c0_240], %566 {strides = array<i32>} : memref<8x256xbf16, #tpu.memory_space<vmem>>, vector<8x128xbf16>,
    %c0_241 = arith.constant 0 : index
    %c0_242 = arith.constant 0 : index
    %568 = vector.load %arg6[%c0_241, %c0_242] : memref<8x256xbf16, #tpu.memory_space<vmem>>, vector<8x256xbf16>
    %c0_243 = arith.constant 0 : index
    %c0_244 = arith.constant 0 : index
    %569 = vector.load %arg3[%c0_243, %c0_244] : memref<256x512xbf16, #tpu.memory_space<vmem>>, vector<256x512xbf16>
    %cst_245 = arith.constant dense<0.000000e+00> : vector<8x512xf32>
    %570 = tpu.matmul %568, %569, %cst_245 {dimension_numbers = #tpu.dot_dimension_numbers<[1], [0], [0], [1], [0, 0, 1, 1], [], []>} : vector<8x256xbf16>, vector<256x512xbf16>, vector<8x512xf32> -> vector<8x512xf32>
    %571 = arith.addf %570, %5 : vector<8x512xf32>
    %c0_246 = arith.constant 0 : index
    %c0_247 = arith.constant 0 : index
    %572 = vector.load %arg8[%c0_246, %c0_247] : memref<8x128xf32, #tpu.memory_space<vmem>>, vector<8x128xf32>
    %573 = vector.extract_strided_slice %571 {offsets = [0, 0], sizes = [8, 128], strides = [1, 1]} : vector<8x512xf32> to vector<8x128xf32>
    %574 = arith.negf %573 : vector<8x128xf32>
    %575 = math.exp %574 : vector<8x128xf32>
    %cst_248 = arith.constant 1.000000e+00 : f32
    %576 = vector.broadcast %cst_248 : f32 to vector<8x128xf32>
    %577 = arith.addf %576, %575 : vector<8x128xf32>
    %578 = arith.divf %576, %577 : vector<8x128xf32>
    %579 = vector.extract_strided_slice %571 {offsets = [0, 128], sizes = [8, 128], strides = [1, 1]} : vector<8x512xf32> to vector<8x128xf32>
    %580 = arith.negf %579 : vector<8x128xf32>
    %581 = math.exp %580 : vector<8x128xf32>
    %cst_249 = arith.constant 1.000000e+00 : f32
    %582 = vector.broadcast %cst_249 : f32 to vector<8x128xf32>
    %583 = arith.addf %582, %581 : vector<8x128xf32>
    %584 = arith.divf %582, %583 : vector<8x128xf32>
    %585 = vector.extract_strided_slice %571 {offsets = [0, 256], sizes = [8, 128], strides = [1, 1]} : vector<8x512xf32> to vector<8x128xf32>
    %586 = math.tanh %585 : vector<8x128xf32>
    %587 = vector.extract_strided_slice %571 {offsets = [0, 384], sizes = [8, 128], strides = [1, 1]} : vector<8x512xf32> to vector<8x128xf32>
    %588 = arith.negf %587 : vector<8x128xf32>
    %589 = math.exp %588 : vector<8x128xf32>
    %cst_250 = arith.constant 1.000000e+00 : f32
    %590 = vector.broadcast %cst_250 : f32 to vector<8x128xf32>
    %591 = arith.addf %590, %589 : vector<8x128xf32>
    %592 = arith.divf %590, %591 : vector<8x128xf32>
    %593 = arith.mulf %584, %572 : vector<8x128xf32>
    %594 = arith.mulf %578, %586 : vector<8x128xf32>
    %595 = arith.addf %593, %594 : vector<8x128xf32>
    %596 = math.tanh %595 : vector<8x128xf32>
    %597 = arith.mulf %592, %596 : vector<8x128xf32>
    %c0_251 = arith.constant 0 : index
    %c0_252 = arith.constant 0 : index
    %598 = vector.load %arg8[%c0_251, %c0_252] : memref<8x128xf32, #tpu.memory_space<vmem>>, vector<8x128xf32>
    tpu.vector_store %arg8[%c0_251, %c0_252], %595 {strides = array<i32>} : memref<8x128xf32, #tpu.memory_space<vmem>>, vector<8x128xf32>,
    %599 = arith.truncf %597 : vector<8x128xf32> to vector<8x128xbf16>
    %c0_253 = arith.constant 0 : index
    %c128_254 = arith.constant 128 : index
    %600 = vector.load %arg6[%c0_253, %c128_254] : memref<8x256xbf16, #tpu.memory_space<vmem>>, vector<8x128xbf16>
    tpu.vector_store %arg6[%c0_253, %c128_254], %599 {strides = array<i32>} : memref<8x256xbf16, #tpu.memory_space<vmem>>, vector<8x128xbf16>,
    %601 = arith.truncf %597 : vector<8x128xf32> to vector<8x128xbf16>
    %602 = arith.index_cast %c7_i32 : i32 to index
    %c0_255 = arith.constant 0 : index
    %c0_256 = arith.constant 0 : index
    %603 = vector.load %arg5[%602, %c0_255, %c0_256] : memref<8x8x128xbf16, #tpu.memory_space<vmem>>, vector<1x8x128xbf16>
    %604 = vector.shape_cast %603 : vector<1x8x128xbf16> to vector<8x128xbf16>
    %605 = vector.shape_cast %601 : vector<8x128xbf16> to vector<1x8x128xbf16>
    tpu.vector_store %arg5[%602, %c0_255, %c0_256], %605 {strides = array<i32>} : memref<8x8x128xbf16, #tpu.memory_space<vmem>>, vector<1x8x128xbf16>,
    %c8_i32 = arith.constant 8 : i32
    return
  }
  func.func @transform_0(%arg0: i32) -> (i32, i32, i32) {
    %c0_i32 = arith.constant 0 : i32
    %c0_i32_0 = arith.constant 0 : i32
    %c0_i32_1 = arith.constant 0 : i32
    return %arg0, %c0_i32, %c0_i32_0 : i32, i32, i32
  }
  func.func @transform_1(%arg0: i32) -> (i32, i32) {
    %c0_i32 = arith.constant 0 : i32
    %c0_i32_0 = arith.constant 0 : i32
    %c0_i32_1 = arith.constant 0 : i32
    return %c0_i32, %c0_i32_0 : i32, i32
  }
  func.func @transform_2(%arg0: i32) -> (i32, i32) {
    %c0_i32 = arith.constant 0 : i32
    %c0_i32_0 = arith.constant 0 : i32
    %c0_i32_1 = arith.constant 0 : i32
    return %c0_i32, %c0_i32_0 : i32, i32
  }
  func.func @transform_3(%arg0: i32) -> (i32, i32) {
    %c0_i32 = arith.constant 0 : i32
    %c0_i32_0 = arith.constant 0 : i32
    %c0_i32_1 = arith.constant 0 : i32
    return %c0_i32, %c0_i32_0 : i32, i32
  }
  func.func @transform_4(%arg0: i32) -> (i32, i32, i32) {
    %c0_i32 = arith.constant 0 : i32
    %c0_i32_0 = arith.constant 0 : i32
    %c0_i32_1 = arith.constant 0 : i32
    return %arg0, %c0_i32, %c0_i32_0 : i32, i32, i32
  }
}

</mosaic_0001>

<llo_original>
// kernel: lstm_try_forward.5
$region0: #{lstm_try_forward.5}
  #allocation0 [shape = 'u32[]', space=smem, size = 0x4, offset = 0x4, fixed_abs, tag = 'smem constant byte address 0x4 - core index']
  #allocation1 [shape = 'u32[144,128]{1,0:T(1,128)}', space=vmem, size = 0x12000, scoped, tag = 'internal scratch']
  %s0 = inlined_call_operand.vmem [shape: bf16[64,128], index: 0, kind: input, shape index: {}]
  %s1 = inlined_call_operand.vmem [shape: bf16[128,128], index: 1, kind: input, shape index: {}]
  %s2 = inlined_call_operand.vmem [shape: f32[1,128], index: 2, kind: input, shape index: {}]
  %s3 = inlined_call_operand.vmem [shape: f32[64,128], index: 3, kind: output, shape index: {}]
  %s4 = sld [smem:[#allocation0]]
  $region22: #{lstm_try_forward.5} parent=0
    _
  %s6 = ssub.s32 1, %s4
  %s7 = scalar_select 0, %s6, %s4
  // Predicated region
  $region2: #{lstm_try_forward.5} parent=0 // pred_check
    _
  $region3: #{lstm_try_forward.5} parent=0 // pred_check_branch
    %9 = sbr.rel (0) target = $region5
  $region4: #{lstm_try_forward.5} parent=0 // pred_region
    _
  $region5: #{lstm_try_forward.5} parent=0 // pred_fallthru
    _
  // Predicated region
  $region6: #{lstm_try_forward.5} parent=0 // pred_check
    _
  $region7: #{lstm_try_forward.5} parent=0 // pred_check_branch
    %11 = sbr.rel (0) target = $region9
  $region8: #{lstm_try_forward.5} parent=0 // pred_region
    _
  $region9: #{lstm_try_forward.5} parent=0 // pred_fallthru
    _
  // Predicated region
  $region10: #{lstm_try_forward.5} parent=0 // pred_check
    _
  $region11: #{lstm_try_forward.5} parent=0 // pred_check_branch
    %13 = sbr.rel (0) target = $region13
  $region12: #{lstm_try_forward.5} parent=0 // pred_region
    _
  $region13: #{lstm_try_forward.5} parent=0 // pred_fallthru
    _
  %v15 = vld [vmem:[%s0] sm:$0xf]
  %v16 = vld [vmem:[%s0 + $0x4] sm:$0xf]
  %v17 = vld [vmem:[%s0 + $0x8] sm:$0xf]
  %v18 = vld [vmem:[%s0 + $0xc] sm:$0xf]
  %v19 = vld [vmem:[%s0 + $0x10] sm:$0xf]
  %v20 = vld [vmem:[%s0 + $0x14] sm:$0xf]
  %v21 = vld [vmem:[%s0 + $0x18] sm:$0xf]
  %v22 = vld [vmem:[%s0 + $0x1c] sm:$0xf]
  %v23 = vld [vmem:[%s1] sm:$0xf]
  %v24 = vld [vmem:[%s1 + $0x4] sm:$0xf]
  %v25 = vld [vmem:[%s1 + $0x8] sm:$0xf]
  %v26 = vld [vmem:[%s1 + $0xc] sm:$0xf]
  %v27 = vld [vmem:[%s1 + $0x10] sm:$0xf]
  %v28 = vld [vmem:[%s1 + $0x14] sm:$0xf]
  %v29 = vld [vmem:[%s1 + $0x18] sm:$0xf]
  %v30 = vld [vmem:[%s1 + $0x1c] sm:$0xf]
  %v31 = vld [vmem:[%s1 + $0x20] sm:$0xf]
  %v32 = vld [vmem:[%s1 + $0x24] sm:$0xf]
  %v33 = vld [vmem:[%s1 + $0x28] sm:$0xf]
  %v34 = vld [vmem:[%s1 + $0x2c] sm:$0xf]
  %v35 = vld [vmem:[%s1 + $0x30] sm:$0xf]
  %v36 = vld [vmem:[%s1 + $0x34] sm:$0xf]
  %v37 = vld [vmem:[%s1 + $0x38] sm:$0xf]
  %v38 = vld [vmem:[%s1 + $0x3c] sm:$0xf]
  %v39 = vld [vmem:[%s2] sm:$0x1]
  %v41 = vlaneseq
  %v42 = vshrl.u32 %v41, 7
  %v43 = vsub.s32 0, %v42
  %v44 = vrot.slane %v39, %v43
  %v54 = vunpack.c.l.b16 %v15
  %v55 = vunpack.c.l.b16 %v16
  %v56 = vunpack.c.l.b16 %v17
  %v57 = vunpack.c.l.b16 %v18
  %v58 = vunpack.c.l.b16 %v19
  %v59 = vunpack.c.l.b16 %v20
  %v60 = vunpack.c.l.b16 %v21
  %v61 = vunpack.c.l.b16 %v22
  %v62 = vpack.c.b16 %v55, %v54
  %v63 = vpack.c.b16 %v57, %v56
  %v64 = vpack.c.b16 %v59, %v58
  %v65 = vpack.c.b16 %v61, %v60
  %v86 = vunpack.c.l.b16 %v23
  %v87 = vunpack.c.l.b16 %v24
  %v88 = vunpack.c.l.b16 %v25
  %v89 = vunpack.c.l.b16 %v26
  %v90 = vunpack.c.l.b16 %v27
  %v91 = vunpack.c.l.b16 %v28
  %v92 = vunpack.c.l.b16 %v29
  %v93 = vunpack.c.l.b16 %v30
  %v94 = vunpack.c.l.b16 %v31
  %v95 = vunpack.c.l.b16 %v32
  %v96 = vunpack.c.l.b16 %v33
  %v97 = vunpack.c.l.b16 %v34
  %v98 = vunpack.c.l.b16 %v35
  %v99 = vunpack.c.l.b16 %v36
  %v100 = vunpack.c.l.b16 %v37
  %v101 = vunpack.c.l.b16 %v38
  %v102 = vpack.c.b16 %v87, %v86
  %v103 = vpack.c.b16 %v89, %v88
  %v104 = vpack.c.b16 %v91, %v90
  %v105 = vpack.c.b16 %v93, %v92
  %v106 = vpack.c.b16 %v95, %v94
  %v107 = vpack.c.b16 %v97, %v96
  %v108 = vpack.c.b16 %v99, %v98
  %v109 = vpack.c.b16 %v101, %v100
  %118 = vmatprep.subr.bf16.mxu0 0
  %119 = vmatpush1.bf16.msra.mxu0 %v102
  %120 = vmatprep.subr.bf16.mxu0 0
  %121 = vmatpush1.bf16.msra.mxu0 %v103
  %122 = vmatprep.subr.bf16.mxu0 0
  %123 = vmatpush1.bf16.msra.mxu0 %v104
  %124 = vmatprep.subr.bf16.mxu0 0
  %125 = vmatpush1.bf16.msra.mxu0 %v105
  %126 = vmatprep.subr.bf16.mxu0 0
  %127 = vmatpush1.bf16.msra.mxu0 %v106
  %128 = vmatprep.subr.bf16.mxu0 0
  %129 = vmatpush1.bf16.msra.mxu0 %v107
  %130 = vmatprep.subr.bf16.mxu0 0
  %131 = vmatpush1.bf16.msra.mxu0 %v108
  %132 = vmatprep.subr.bf16.mxu0 0
  %133 = vmatpush1.bf16.msra.mxu0 %v109
  %134 = vmatprep.subr.bf16.mxu0 0
  %135 = vmatpush1.bf16.msra.mxu0 0
  %136 = vmatprep.subr.bf16.mxu0 0
  %137 = vmatpush1.bf16.msra.mxu0 0
  %138 = vmatprep.subr.bf16.mxu0 0
  %139 = vmatpush1.bf16.msra.mxu0 0
  %140 = vmatprep.subr.bf16.mxu0 0
  %141 = vmatpush1.bf16.msra.mxu0 0
  %142 = vmatprep.subr.bf16.mxu0 0
  %143 = vmatpush1.bf16.msra.mxu0 0
  %144 = vmatprep.subr.bf16.mxu0 0
  %145 = vmatpush1.bf16.msra.mxu0 0
  %146 = vmatprep.subr.bf16.mxu0 0
  %147 = vmatpush1.bf16.msra.mxu0 0
  %148 = vmatprep.subr.bf16.mxu0 0
  %149 = vmatpush1.bf16.msra.mxu0 0
  %150 = vmatprep.mubr.bf16.mxu0 0
  %151 = vmatmul.mubr.bf16.gmra.mrb[0].mxu0 %v62
  %v152 = vpop.f32.mrb[0].mxu0
  %v153 = vadd.f32 %v44, %v152
  %v154 = vpop.f32.mrb[0].mxu0
  %v155 = vpop.f32.mrb[0].mxu0
  %v156 = vadd.f32 %v44, %v155
  %v157 = vpop.f32.mrb[0].mxu0
  %158 = vmatprep.mubr.bf16.mxu0 0
  %159 = vmatmul.mubr.bf16.gmra.mrb[0].mxu0 %v63
  %v160 = vpop.f32.mrb[0].mxu0
  %v161 = vadd.f32 %v44, %v160
  %v162 = vpop.f32.mrb[0].mxu0
  %v163 = vpop.f32.mrb[0].mxu0
  %v164 = vadd.f32 %v44, %v163
  %v165 = vpop.f32.mrb[0].mxu0
  %166 = vmatprep.mubr.bf16.mxu0 0
  %167 = vmatmul.mubr.bf16.gmra.mrb[0].mxu0 %v64
  %v168 = vpop.f32.mrb[0].mxu0
  %v169 = vadd.f32 %v44, %v168
  %v170 = vpop.f32.mrb[0].mxu0
  %v171 = vpop.f32.mrb[0].mxu0
  %v172 = vadd.f32 %v44, %v171
  %v173 = vpop.f32.mrb[0].mxu0
  %174 = vmatprep.mubr.bf16.mxu0 0
  %175 = vmatmul.mubr.bf16.gmra.mrb[0].mxu0 %v65
  %v176 = vpop.f32.mrb[0].mxu0
  %v177 = vadd.f32 %v44, %v176
  %v178 = vpop.f32.mrb[0].mxu0
  %v179 = vpop.f32.mrb[0].mxu0
  %v180 = vadd.f32 %v44, %v179
  %v181 = vpop.f32.mrb[0].mxu0
  %182 = vdwg.mxu0
  %183 = vst [vmem:[%s3] sm:$0xff] %v153
  %184 = vst [vmem:[%s3 + $0x8] sm:$0xff] %v156
  %185 = vst [vmem:[%s3 + $0x10] sm:$0xff] %v161
  %186 = vst [vmem:[%s3 + $0x18] sm:$0xff] %v164
  %187 = vst [vmem:[%s3 + $0x20] sm:$0xff] %v169
  %188 = vst [vmem:[%s3 + $0x28] sm:$0xff] %v172
  %189 = vst [vmem:[%s3 + $0x30] sm:$0xff] %v177
  %190 = vst [vmem:[%s3 + $0x38] sm:$0xff] %v180
  // Predicated region
  $region14: #{lstm_try_forward.5} parent=0 // pred_check
    _
  $region15: #{lstm_try_forward.5} parent=0 // pred_check_branch
    %192 = sbr.rel (0) target = $region17
  $region16: #{lstm_try_forward.5} parent=0 // pred_region
    _
  $region17: #{lstm_try_forward.5} parent=0 // pred_fallthru
    _
  // Predicated region
  $region18: #{lstm_try_forward.5} parent=0 // pred_check
    _
  $region19: #{lstm_try_forward.5} parent=0 // pred_check_branch
    %194 = sbr.rel (0) target = $region21
  $region20: #{lstm_try_forward.5} parent=0 // pred_region
    _
  $region21: #{lstm_try_forward.5} parent=0 // pred_fallthru
    _

// kernel: lstm_try_forward.3
$region0: #{lstm_try_forward.3}
  #allocation0 [shape = 'u32[]', space=smem, size = 0x4, offset = 0x4, fixed_abs, tag = 'smem constant byte address 0x4 - core index']
  #allocation1 [shape = 'u32[144,128]{1,0:T(1,128)}', space=vmem, size = 0x12000, scoped, tag = 'internal scratch']
  %s0 = inlined_call_operand.vmem [shape: f32[64,16], index: 0, kind: input, shape index: {}]
  %s1 = inlined_call_operand.vmem [shape: f32[16,512], index: 1, kind: input, shape index: {}]
  %s2 = inlined_call_operand.vmem [shape: f32[1,512], index: 2, kind: input, shape index: {}]
  %s3 = inlined_call_operand.vmem [shape: bf16[64,512], index: 3, kind: output, shape index: {}]
  %s4 = sld [smem:[#allocation0]]
  $region22: #{lstm_try_forward.3} parent=0
    _
  %s6 = ssub.s32 1, %s4
  %s7 = scalar_select 0, %s6, %s4
  // Predicated region
  $region2: #{lstm_try_forward.3} parent=0 // pred_check
    _
  $region3: #{lstm_try_forward.3} parent=0 // pred_check_branch
    %9 = sbr.rel (0) target = $region5
  $region4: #{lstm_try_forward.3} parent=0 // pred_region
    _
  $region5: #{lstm_try_forward.3} parent=0 // pred_fallthru
    _
  // Predicated region
  $region6: #{lstm_try_forward.3} parent=0 // pred_check
    _
  $region7: #{lstm_try_forward.3} parent=0 // pred_check_branch
    %11 = sbr.rel (0) target = $region9
  $region8: #{lstm_try_forward.3} parent=0 // pred_region
    _
  $region9: #{lstm_try_forward.3} parent=0 // pred_fallthru
    _
  // Predicated region
  $region10: #{lstm_try_forward.3} parent=0 // pred_check
    _
  $region11: #{lstm_try_forward.3} parent=0 // pred_check_branch
    %13 = sbr.rel (0) target = $region13
  $region12: #{lstm_try_forward.3} parent=0 // pred_region
    _
  $region13: #{lstm_try_forward.3} parent=0 // pred_fallthru
    _
  %v14 = vld [vmem:[%s0] sm:$0xff]
  %v15 = vld [vmem:[%s0 + $0x8] sm:$0xff]
  %v16 = vld [vmem:[%s0 + $0x10] sm:$0xff]
  %v17 = vld [vmem:[%s0 + $0x18] sm:$0xff]
  %v18 = vld [vmem:[%s0 + $0x20] sm:$0xff]
  %v19 = vld [vmem:[%s0 + $0x28] sm:$0xff]
  %v20 = vld [vmem:[%s0 + $0x30] sm:$0xff]
  %v21 = vld [vmem:[%s0 + $0x38] sm:$0xff]
  %v22 = vld [vmem:[%s1] sm:$0xff]
  %v23 = vld [vmem:[%s1 + $0x8] sm:$0xff]
  %v24 = vld [vmem:[%s1 + $0x10] sm:$0xff]
  %v25 = vld [vmem:[%s1 + $0x18] sm:$0xff]
  %v26 = vld [vmem:[%s1 + $0x20] sm:$0xff]
  %v27 = vld [vmem:[%s1 + $0x28] sm:$0xff]
  %v28 = vld [vmem:[%s1 + $0x30] sm:$0xff]
  %v29 = vld [vmem:[%s1 + $0x38] sm:$0xff]
  %v30 = vld [vmem:[%s2] sm:$0xf]
  %v32 = vlaneseq
  %v33 = vshrl.u32 %v32, 7
  %v34 = vsub.s32 0, %v33
  %v35 = vrot.slane %v30, %v34
  %v36 = vlaneseq
  %v37 = vshrl.u32 %v36, 7
  %v38 = vsub.s32 1, %v37
  %v39 = vrot.slane %v30, %v38
  %v40 = vlaneseq
  %v41 = vshrl.u32 %v40, 7
  %v42 = vsub.s32 2, %v41
  %v43 = vrot.slane %v30, %v42
  %v44 = vlaneseq
  %v45 = vshrl.u32 %v44, 7
  %v46 = vsub.s32 3, %v45
  %v47 = vrot.slane %v30, %v46
  %vm52 = vcmask 130048
  %v54 = vsel %vm52, %v14, 0
  %v57 = vsel %vm52, %v15, 0
  %v60 = vsel %vm52, %v16, 0
  %v63 = vsel %vm52, %v17, 0
  %v66 = vsel %vm52, %v18, 0
  %v69 = vsel %vm52, %v19, 0
  %v72 = vsel %vm52, %v20, 0
  %v75 = vsel %vm52, %v21, 0
  %77 = vmatprep.subr.mxu0 %v23
  %78 = vmatpush1.msra.mxu0 %v22
  %79 = vmatprep.subr.mxu0 %v27
  %80 = vmatpush1.msra.mxu0 %v26
  %81 = vmatprep.subr.mxu0 0.0
  %82 = vmatpush1.msra.mxu0 0.0
  %83 = vmatprep.subr.mxu0 0.0
  %84 = vmatpush1.msra.mxu0 0.0
  %85 = vmatprep.subr.mxu0 0.0
  %86 = vmatpush1.msra.mxu0 0.0
  %87 = vmatprep.subr.mxu0 0.0
  %88 = vmatpush1.msra.mxu0 0.0
  %89 = vmatprep.subr.mxu0 0.0
  %90 = vmatpush1.msra.mxu0 0.0
  %91 = vmatprep.subr.mxu0 0.0
  %92 = vmatpush1.msra.mxu0 0.0
  %93 = vmatprep.subr.mxu0 0.0
  %94 = vmatpush1.msra.mxu0 0.0
  %95 = vmatprep.subr.mxu0 0.0
  %96 = vmatpush1.msra.mxu0 0.0
  %97 = vmatprep.subr.mxu0 0.0
  %98 = vmatpush1.msra.mxu0 0.0
  %99 = vmatprep.subr.mxu0 0.0
  %100 = vmatpush1.msra.mxu0 0.0
  %101 = vmatprep.subr.mxu0 0.0
  %102 = vmatpush1.msra.mxu0 0.0
  %103 = vmatprep.subr.mxu0 0.0
  %104 = vmatpush1.msra.mxu0 0.0
  %105 = vmatprep.subr.mxu0 0.0
  %106 = vmatpush1.msra.mxu0 0.0
  %107 = vmatprep.subr.mxu0 0.0
  %108 = vmatpush1.msra.mxu0 0.0
  %109 = vmatprep.subr.mxu0 0.0
  %110 = vmatpush1.msra.mxu0 0.0
  %111 = vmatprep.subr.mxu0 0.0
  %112 = vmatpush1.msra.mxu0 0.0
  %113 = vmatprep.subr.mxu0 0.0
  %114 = vmatpush1.msra.mxu0 0.0
  %115 = vmatprep.subr.mxu0 0.0
  %116 = vmatpush1.msra.mxu0 0.0
  %117 = vmatprep.subr.mxu0 0.0
  %118 = vmatpush1.msra.mxu0 0.0
  %119 = vmatprep.subr.mxu0 0.0
  %120 = vmatpush1.msra.mxu0 0.0
  %121 = vmatprep.subr.mxu0 0.0
  %122 = vmatpush1.msra.mxu0 0.0
  %123 = vmatprep.subr.mxu0 0.0
  %124 = vmatpush1.msra.mxu0 0.0
  %125 = vmatprep.subr.mxu0 0.0
  %126 = vmatpush1.msra.mxu0 0.0
  %127 = vmatprep.subr.mxu0 0.0
  %128 = vmatpush1.msra.mxu0 0.0
  %129 = vmatprep.subr.mxu0 0.0
  %130 = vmatpush1.msra.mxu0 0.0
  %131 = vmatprep.subr.mxu0 0.0
  %132 = vmatpush1.msra.mxu0 0.0
  %133 = vmatprep.subr.mxu0 0.0
  %134 = vmatpush1.msra.mxu0 0.0
  %135 = vmatprep.subr.mxu0 0.0
  %136 = vmatpush1.msra.mxu0 0.0
  %137 = vmatprep.subr.mxu0 0.0
  %138 = vmatpush1.msra.mxu0 0.0
  %139 = vmatprep.subr.mxu0 0.0
  %140 = vmatpush1.msra.mxu0 0.0
  %141 = vmatprep.mubr.f32.mxu0 0.0
  %142 = vmatmul.mubr.f32.gmra.mrb[0].mxu0 %v54
  %v143 = vpop.f32.mrb[0].mxu0
  %v144 = vadd.f32 %v35, %v143
  %v145 = vpop.f32.mrb[0].mxu0
  %v146 = vadd.f32 %v39, %v145
  %147 = vmatprep.mubr.f32.mxu0 0.0
  %148 = vmatmul.mubr.f32.gmra.mrb[0].mxu0 %v57
  %v149 = vpop.f32.mrb[0].mxu0
  %v150 = vadd.f32 %v35, %v149
  %v151 = vpop.f32.mrb[0].mxu0
  %v152 = vadd.f32 %v39, %v151
  %153 = vmatprep.mubr.f32.mxu0 0.0
  %154 = vmatmul.mubr.f32.gmra.mrb[0].mxu0 %v60
  %v155 = vpop.f32.mrb[0].mxu0
  %v156 = vadd.f32 %v35, %v155
  %v157 = vpop.f32.mrb[0].mxu0
  %v158 = vadd.f32 %v39, %v157
  %159 = vmatprep.mubr.f32.mxu0 0.0
  %160 = vmatmul.mubr.f32.gmra.mrb[0].mxu0 %v63
  %v161 = vpop.f32.mrb[0].mxu0
  %v162 = vadd.f32 %v35, %v161
  %v163 = vpop.f32.mrb[0].mxu0
  %v164 = vadd.f32 %v39, %v163
  %165 = vmatprep.mubr.f32.mxu0 0.0
  %166 = vmatmul.mubr.f32.gmra.mrb[0].mxu0 %v66
  %v167 = vpop.f32.mrb[0].mxu0
  %v168 = vadd.f32 %v35, %v167
  %v169 = vpop.f32.mrb[0].mxu0
  %v170 = vadd.f32 %v39, %v169
  %171 = vmatprep.mubr.f32.mxu0 0.0
  %172 = vmatmul.mubr.f32.gmra.mrb[0].mxu0 %v69
  %v173 = vpop.f32.mrb[0].mxu0
  %v174 = vadd.f32 %v35, %v173
  %v175 = vpop.f32.mrb[0].mxu0
  %v176 = vadd.f32 %v39, %v175
  %177 = vmatprep.mubr.f32.mxu0 0.0
  %178 = vmatmul.mubr.f32.gmra.mrb[0].mxu0 %v72
  %v179 = vpop.f32.mrb[0].mxu0
  %v180 = vadd.f32 %v35, %v179
  %v181 = vpop.f32.mrb[0].mxu0
  %v182 = vadd.f32 %v39, %v181
  %183 = vmatprep.mubr.f32.mxu0 0.0
  %184 = vmatmul.mubr.f32.gmra.mrb[0].mxu0 %v75
  %v185 = vpop.f32.mrb[0].mxu0
  %v186 = vadd.f32 %v35, %v185
  %v187 = vpop.f32.mrb[0].mxu0
  %v188 = vadd.f32 %v39, %v187
  %189 = vdwg.mxu0
  %190 = vmatprep.subr.mxu0 %v25
  %191 = vmatpush1.msra.mxu0 %v24
  %192 = vmatprep.subr.mxu0 %v29
  %193 = vmatpush1.msra.mxu0 %v28
  %194 = vmatprep.subr.mxu0 0.0
  %195 = vmatpush1.msra.mxu0 0.0
  %196 = vmatprep.subr.mxu0 0.0
  %197 = vmatpush1.msra.mxu0 0.0
  %198 = vmatprep.subr.mxu0 0.0
  %199 = vmatpush1.msra.mxu0 0.0
  %200 = vmatprep.subr.mxu0 0.0
  %201 = vmatpush1.msra.mxu0 0.0
  %202 = vmatprep.subr.mxu0 0.0
  %203 = vmatpush1.msra.mxu0 0.0
  %204 = vmatprep.subr.mxu0 0.0
  %205 = vmatpush1.msra.mxu0 0.0
  %206 = vmatprep.subr.mxu0 0.0
  %207 = vmatpush1.msra.mxu0 0.0
  %208 = vmatprep.subr.mxu0 0.0
  %209 = vmatpush1.msra.mxu0 0.0
  %210 = vmatprep.subr.mxu0 0.0
  %211 = vmatpush1.msra.mxu0 0.0
  %212 = vmatprep.subr.mxu0 0.0
  %213 = vmatpush1.msra.mxu0 0.0
  %214 = vmatprep.subr.mxu0 0.0
  %215 = vmatpush1.msra.mxu0 0.0
  %216 = vmatprep.subr.mxu0 0.0
  %217 = vmatpush1.msra.mxu0 0.0
  %218 = vmatprep.subr.mxu0 0.0
  %219 = vmatpush1.msra.mxu0 0.0
  %220 = vmatprep.subr.mxu0 0.0
  %221 = vmatpush1.msra.mxu0 0.0
  %222 = vmatprep.subr.mxu0 0.0
  %223 = vmatpush1.msra.mxu0 0.0
  %224 = vmatprep.subr.mxu0 0.0
  %225 = vmatpush1.msra.mxu0 0.0
  %226 = vmatprep.subr.mxu0 0.0
  %227 = vmatpush1.msra.mxu0 0.0
  %228 = vmatprep.subr.mxu0 0.0
  %229 = vmatpush1.msra.mxu0 0.0
  %230 = vmatprep.subr.mxu0 0.0
  %231 = vmatpush1.msra.mxu0 0.0
  %232 = vmatprep.subr.mxu0 0.0
  %233 = vmatpush1.msra.mxu0 0.0
  %234 = vmatprep.subr.mxu0 0.0
  %235 = vmatpush1.msra.mxu0 0.0
  %236 = vmatprep.subr.mxu0 0.0
  %237 = vmatpush1.msra.mxu0 0.0
  %238 = vmatprep.subr.mxu0 0.0
  %239 = vmatpush1.msra.mxu0 0.0
  %240 = vmatprep.subr.mxu0 0.0
  %241 = vmatpush1.msra.mxu0 0.0
  %242 = vmatprep.subr.mxu0 0.0
  %243 = vmatpush1.msra.mxu0 0.0
  %244 = vmatprep.subr.mxu0 0.0
  %245 = vmatpush1.msra.mxu0 0.0
  %246 = vmatprep.subr.mxu0 0.0
  %247 = vmatpush1.msra.mxu0 0.0
  %248 = vmatprep.subr.mxu0 0.0
  %249 = vmatpush1.msra.mxu0 0.0
  %250 = vmatprep.subr.mxu0 0.0
  %251 = vmatpush1.msra.mxu0 0.0
  %252 = vmatprep.subr.mxu0 0.0
  %253 = vmatpush1.msra.mxu0 0.0
  %254 = vmatprep.mubr.f32.mxu0 0.0
  %255 = vmatmul.mubr.f32.gmra.mrb[0].mxu0 %v54
  %v256 = vpop.f32.mrb[0].mxu0
  %v257 = vadd.f32 %v43, %v256
  %v258 = vpop.f32.mrb[0].mxu0
  %v259 = vadd.f32 %v47, %v258
  %260 = vmatprep.mubr.f32.mxu0 0.0
  %261 = vmatmul.mubr.f32.gmra.mrb[0].mxu0 %v57
  %v262 = vpop.f32.mrb[0].mxu0
  %v263 = vadd.f32 %v43, %v262
  %v264 = vpop.f32.mrb[0].mxu0
  %v265 = vadd.f32 %v47, %v264
  %266 = vmatprep.mubr.f32.mxu0 0.0
  %267 = vmatmul.mubr.f32.gmra.mrb[0].mxu0 %v60
  %v268 = vpop.f32.mrb[0].mxu0
  %v269 = vadd.f32 %v43, %v268
  %v270 = vpop.f32.mrb[0].mxu0
  %v271 = vadd.f32 %v47, %v270
  %272 = vmatprep.mubr.f32.mxu0 0.0
  %273 = vmatmul.mubr.f32.gmra.mrb[0].mxu0 %v63
  %v274 = vpop.f32.mrb[0].mxu0
  %v275 = vadd.f32 %v43, %v274
  %v276 = vpop.f32.mrb[0].mxu0
  %v277 = vadd.f32 %v47, %v276
  %278 = vmatprep.mubr.f32.mxu0 0.0
  %279 = vmatmul.mubr.f32.gmra.mrb[0].mxu0 %v66
  %v280 = vpop.f32.mrb[0].mxu0
  %v281 = vadd.f32 %v43, %v280
  %v282 = vpop.f32.mrb[0].mxu0
  %v283 = vadd.f32 %v47, %v282
  %284 = vmatprep.mubr.f32.mxu0 0.0
  %285 = vmatmul.mubr.f32.gmra.mrb[0].mxu0 %v69
  %v286 = vpop.f32.mrb[0].mxu0
  %v287 = vadd.f32 %v43, %v286
  %v288 = vpop.f32.mrb[0].mxu0
  %v289 = vadd.f32 %v47, %v288
  %290 = vmatprep.mubr.f32.mxu0 0.0
  %291 = vmatmul.mubr.f32.gmra.mrb[0].mxu0 %v72
  %v292 = vpop.f32.mrb[0].mxu0
  %v293 = vadd.f32 %v43, %v292
  %v294 = vpop.f32.mrb[0].mxu0
  %v295 = vadd.f32 %v47, %v294
  %296 = vmatprep.mubr.f32.mxu0 0.0
  %297 = vmatmul.mubr.f32.gmra.mrb[0].mxu0 %v75
  %v298 = vpop.f32.mrb[0].mxu0
  %v299 = vadd.f32 %v43, %v298
  %v300 = vpop.f32.mrb[0].mxu0
  %v301 = vadd.f32 %v47, %v300
  %302 = vdwg.mxu0
  %v303 = vpack.c.bf16 %v150, %v144
  %v304 = vpack.c.bf16 %v152, %v146
  %v305 = vpack.c.bf16 %v263, %v257
  %v306 = vpack.c.bf16 %v265, %v259
  %v307 = vpack.c.bf16 %v162, %v156
  %v308 = vpack.c.bf16 %v164, %v158
  %v309 = vpack.c.bf16 %v275, %v269
  %v310 = vpack.c.bf16 %v277, %v271
  %v311 = vpack.c.bf16 %v174, %v168
  %v312 = vpack.c.bf16 %v176, %v170
  %v313 = vpack.c.bf16 %v287, %v281
  %v314 = vpack.c.bf16 %v289, %v283
  %v315 = vpack.c.bf16 %v186, %v180
  %v316 = vpack.c.bf16 %v188, %v182
  %v317 = vpack.c.bf16 %v299, %v293
  %v318 = vpack.c.bf16 %v301, %v295
  %v335 = vunpack.c.l.b16 %v303
  %v336 = vunpack.c.l.b16 %v304
  %v337 = vunpack.c.l.b16 %v305
  %v338 = vunpack.c.l.b16 %v306
  %v339 = vunpack.c.h.b16 %v303
  %v340 = vunpack.c.h.b16 %v304
  %v341 = vunpack.c.h.b16 %v305
  %v342 = vunpack.c.h.b16 %v306
  %v343 = vunpack.c.l.b16 %v307
  %v344 = vunpack.c.l.b16 %v308
  %v345 = vunpack.c.l.b16 %v309
  %v346 = vunpack.c.l.b16 %v310
  %v347 = vunpack.c.h.b16 %v307
  %v348 = vunpack.c.h.b16 %v308
  %v349 = vunpack.c.h.b16 %v309
  %v350 = vunpack.c.h.b16 %v310
  %v351 = vunpack.c.l.b16 %v311
  %v352 = vunpack.c.l.b16 %v312
  %v353 = vunpack.c.l.b16 %v313
  %v354 = vunpack.c.l.b16 %v314
  %v355 = vunpack.c.h.b16 %v311
  %v356 = vunpack.c.h.b16 %v312
  %v357 = vunpack.c.h.b16 %v313
  %v358 = vunpack.c.h.b16 %v314
  %v359 = vunpack.c.l.b16 %v315
  %v360 = vunpack.c.l.b16 %v316
  %v361 = vunpack.c.l.b16 %v317
  %v362 = vunpack.c.l.b16 %v318
  %v363 = vunpack.c.h.b16 %v315
  %v364 = vunpack.c.h.b16 %v316
  %v365 = vunpack.c.h.b16 %v317
  %v366 = vunpack.c.h.b16 %v318
  %v367 = vpack.c.b16 %v336, %v335
  %v368 = vpack.c.b16 %v338, %v337
  %v369 = vpack.c.b16 %v340, %v339
  %v370 = vpack.c.b16 %v342, %v341
  %v371 = vpack.c.b16 %v344, %v343
  %v372 = vpack.c.b16 %v346, %v345
  %v373 = vpack.c.b16 %v348, %v347
  %v374 = vpack.c.b16 %v350, %v349
  %v375 = vpack.c.b16 %v352, %v351
  %v376 = vpack.c.b16 %v354, %v353
  %v377 = vpack.c.b16 %v356, %v355
  %v378 = vpack.c.b16 %v358, %v357
  %v379 = vpack.c.b16 %v360, %v359
  %v380 = vpack.c.b16 %v362, %v361
  %v381 = vpack.c.b16 %v364, %v363
  %v382 = vpack.c.b16 %v366, %v365
  %399 = vst [vmem:[%s3] sm:$0xff] %v367
  %400 = vst [vmem:[%s3 + $0x8] sm:$0xff] %v368
  %401 = vst [vmem:[%s3 + $0x10] sm:$0xff] %v369
  %402 = vst [vmem:[%s3 + $0x18] sm:$0xff] %v370
  %403 = vst [vmem:[%s3 + $0x20] sm:$0xff] %v371
  %404 = vst [vmem:[%s3 + $0x28] sm:$0xff] %v372
  %405 = vst [vmem:[%s3 + $0x30] sm:$0xff] %v373
  %406 = vst [vmem:[%s3 + $0x38] sm:$0xff] %v374
  %407 = vst [vmem:[%s3 + $0x40] sm:$0xff] %v375
  %408 = vst [vmem:[%s3 + $0x48] sm:$0xff] %v376
  %409 = vst [vmem:[%s3 + $0x50] sm:$0xff] %v377
  %410 = vst [vmem:[%s3 + $0x58] sm:$0xff] %v378
  %411 = vst [vmem:[%s3 + $0x60] sm:$0xff] %v379
  %412 = vst [vmem:[%s3 + $0x68] sm:$0xff] %v380
  %413 = vst [vmem:[%s3 + $0x70] sm:$0xff] %v381
  %414 = vst [vmem:[%s3 + $0x78] sm:$0xff] %v382
  // Predicated region
  $region14: #{lstm_try_forward.3} parent=0 // pred_check
    _
  $region15: #{lstm_try_forward.3} parent=0 // pred_check_branch
    %416 = sbr.rel (0) target = $region17
  $region16: #{lstm_try_forward.3} parent=0 // pred_region
    _
  $region17: #{lstm_try_forward.3} parent=0 // pred_fallthru
    _
  // Predicated region
  $region18: #{lstm_try_forward.3} parent=0 // pred_check
    _
  $region19: #{lstm_try_forward.3} parent=0 // pred_check_branch
    %418 = sbr.rel (0) target = $region21
  $region20: #{lstm_try_forward.3} parent=0 // pred_region
    _
  $region21: #{lstm_try_forward.3} parent=0 // pred_fallthru
    _

// kernel: lstm_try_forward.4
$region0: #{lstm_try_forward.4}
  #allocation0 [shape = 'u32[]', space=smem, size = 0x4, offset = 0x4, fixed_abs, tag = 'smem constant byte address 0x4 - core index']
  #allocation1 [shape = 'u32[144,128]{1,0:T(1,128)}', space=vmem, size = 0x12000, scoped, tag = 'internal scratch']
  #allocation2 [shape = 'bf16[8,256]{1,0:T(8,128)(2,1)}', space=vmem, size = 0x1000, scoped, tag = 'scratch operand']
  #allocation3 [shape = 'f32[8,128]{1,0:T(8,128)}', space=vmem, size = 0x1000, scoped, tag = 'scratch operand']
  #allocation4 [shape = 'f32[8,128]{1,0:T(8,128)}', space=vmem, size = 0x1000, scoped, tag = 'scratch operand']
  %s0 = inlined_call_operand.vmem [shape: bf16[8,8,512], index: 0, kind: input, shape index: {}]
  %s1 = inlined_call_operand.vmem [shape: bf16[128,512], index: 1, kind: input, shape index: {}]
  %s2 = inlined_call_operand.vmem [shape: bf16[256,512], index: 2, kind: input, shape index: {}]
  %s3 = inlined_call_operand.vmem [shape: f32[1,512], index: 3, kind: input, shape index: {}]
  %s4 = inlined_call_operand.vmem [shape: bf16[8,8,128], index: 4, kind: output, shape index: {}]
  %s5 = sld [smem:[#allocation0]]
  $region30: #{lstm_try_forward.4} parent=0
    _
  %s7 = ssub.s32 1, %s5
  %s8 = scalar_select 0, %s7, %s5
  // Predicated region
  $region2: #{lstm_try_forward.4} parent=0 // pred_check
    _
  $region3: #{lstm_try_forward.4} parent=0 // pred_check_branch
    %10 = sbr.rel (0) target = $region5
  $region4: #{lstm_try_forward.4} parent=0 // pred_region
    _
  $region5: #{lstm_try_forward.4} parent=0 // pred_fallthru
    _
  // Predicated region
  $region6: #{lstm_try_forward.4} parent=0 // pred_check
    _
  $region7: #{lstm_try_forward.4} parent=0 // pred_check_branch
    %12 = sbr.rel (0) target = $region9
  $region8: #{lstm_try_forward.4} parent=0 // pred_region
    _
  $region9: #{lstm_try_forward.4} parent=0 // pred_fallthru
    _
  // Predicated region
  $region10: #{lstm_try_forward.4} parent=0 // pred_check
    _
  $region11: #{lstm_try_forward.4} parent=0 // pred_check_branch
    %14 = sbr.rel (0) target = $region13
  $region12: #{lstm_try_forward.4} parent=0 // pred_region
    _
  $region13: #{lstm_try_forward.4} parent=0 // pred_fallthru
    _
  // Predicated region
  $region14: #{lstm_try_forward.4} parent=0 // pred_check
    _
  $region15: #{lstm_try_forward.4} parent=0 // pred_check_branch
    %16 = sbr.rel (0) target = $region17
  $region16: #{lstm_try_forward.4} parent=0 // pred_region
    _
  $region17: #{lstm_try_forward.4} parent=0 // pred_fallthru
    _
  %p18 = scmp.eq.s32.totalorder 0, 0
  // Predicated region
  $region18: #{lstm_try_forward.4} parent=0 // pred_check
    %p19 = pneg %p18
  $region19: #{lstm_try_forward.4} parent=0 // pred_check_branch
    %21 = sbr.rel (%p19) target = $region21
  $region20: #{lstm_try_forward.4} parent=0 // pred_region
    %22 = vst [vmem:[#allocation2] sm:$0xff] 0
    %23 = vst [vmem:[#allocation3] sm:$0xff] 0.0
    %24 = vst [vmem:[#allocation4] sm:$0xff] 0.0
  $region21: #{lstm_try_forward.4} parent=0 // pred_fallthru
    _
  %v25 = vld [vmem:[%s3] sm:$0xf]
  %v27 = vlaneseq
  %v28 = vshrl.u32 %v27, 7
  %v29 = vsub.s32 0, %v28
  %v30 = vrot.slane %v25, %v29
  %v31 = vlaneseq
  %v32 = vshrl.u32 %v31, 7
  %v33 = vsub.s32 1, %v32
  %v34 = vrot.slane %v25, %v33
  %v35 = vlaneseq
  %v36 = vshrl.u32 %v35, 7
  %v37 = vsub.s32 2, %v36
  %v38 = vrot.slane %v25, %v37
  %v39 = vlaneseq
  %v40 = vshrl.u32 %v39, 7
  %v41 = vsub.s32 3, %v40
  %v42 = vrot.slane %v25, %v41
  %v47 = vld [vmem:[#allocation2] sm:$0xf]
  %v48 = vld [vmem:[%s1] sm:$0xff]
  %v49 = vld [vmem:[%s1 + $0x8] sm:$0xff]
  %v50 = vld [vmem:[%s1 + $0x10] sm:$0xff]
  %v51 = vld [vmem:[%s1 + $0x18] sm:$0xff]
  %v52 = vld [vmem:[%s1 + $0x20] sm:$0xff]
  %v53 = vld [vmem:[%s1 + $0x28] sm:$0xff]
  %v54 = vld [vmem:[%s1 + $0x30] sm:$0xff]
  %v55 = vld [vmem:[%s1 + $0x38] sm:$0xff]
  %v56 = vld [vmem:[%s1 + $0x40] sm:$0xff]
  %v57 = vld [vmem:[%s1 + $0x48] sm:$0xff]
  %v58 = vld [vmem:[%s1 + $0x50] sm:$0xff]
  %v59 = vld [vmem:[%s1 + $0x58] sm:$0xff]
  %v60 = vld [vmem:[%s1 + $0x60] sm:$0xff]
  %v61 = vld [vmem:[%s1 + $0x68] sm:$0xff]
  %v62 = vld [vmem:[%s1 + $0x70] sm:$0xff]
  %v63 = vld [vmem:[%s1 + $0x78] sm:$0xff]
  %v64 = vld [vmem:[%s1 + $0x80] sm:$0xff]
  %v65 = vld [vmem:[%s1 + $0x88] sm:$0xff]
  %v66 = vld [vmem:[%s1 + $0x90] sm:$0xff]
  %v67 = vld [vmem:[%s1 + $0x98] sm:$0xff]
  %v68 = vld [vmem:[%s1 + $0xa0] sm:$0xff]
  %v69 = vld [vmem:[%s1 + $0xa8] sm:$0xff]
  %v70 = vld [vmem:[%s1 + $0xb0] sm:$0xff]
  %v71 = vld [vmem:[%s1 + $0xb8] sm:$0xff]
  %v72 = vld [vmem:[%s1 + $0xc0] sm:$0xff]
  %v73 = vld [vmem:[%s1 + $0xc8] sm:$0xff]
  %v74 = vld [vmem:[%s1 + $0xd0] sm:$0xff]
  %v75 = vld [vmem:[%s1 + $0xd8] sm:$0xff]
  %v76 = vld [vmem:[%s1 + $0xe0] sm:$0xff]
  %v77 = vld [vmem:[%s1 + $0xe8] sm:$0xff]
  %v78 = vld [vmem:[%s1 + $0xf0] sm:$0xff]
  %v79 = vld [vmem:[%s1 + $0xf8] sm:$0xff]
  %v80 = vld [vmem:[%s0] sm:$0xff]
  %v81 = vld [vmem:[%s0 + $0x8] sm:$0xff]
  %v82 = vunpack.c.l.bf16 %v80
  %v83 = vunpack.c.h.bf16 %v80
  %v84 = vunpack.c.l.bf16 %v81
  %v85 = vunpack.c.h.bf16 %v81
  %v118 = vunpack.c.l.b16 %v48
  %v119 = vunpack.c.h.b16 %v48
  %v120 = vunpack.c.l.b16 %v49
  %v121 = vunpack.c.h.b16 %v49
  %v122 = vunpack.c.l.b16 %v50
  %v123 = vunpack.c.h.b16 %v50
  %v124 = vunpack.c.l.b16 %v51
  %v125 = vunpack.c.h.b16 %v51
  %v126 = vunpack.c.l.b16 %v52
  %v127 = vunpack.c.h.b16 %v52
  %v128 = vunpack.c.l.b16 %v53
  %v129 = vunpack.c.h.b16 %v53
  %v130 = vunpack.c.l.b16 %v54
  %v131 = vunpack.c.h.b16 %v54
  %v132 = vunpack.c.l.b16 %v55
  %v133 = vunpack.c.h.b16 %v55
  %v134 = vunpack.c.l.b16 %v56
  %v135 = vunpack.c.h.b16 %v56
  %v136 = vunpack.c.l.b16 %v57
  %v137 = vunpack.c.h.b16 %v57
  %v138 = vunpack.c.l.b16 %v58
  %v139 = vunpack.c.h.b16 %v58
  %v140 = vunpack.c.l.b16 %v59
  %v141 = vunpack.c.h.b16 %v59
  %v142 = vunpack.c.l.b16 %v60
  %v143 = vunpack.c.h.b16 %v60
  %v144 = vunpack.c.l.b16 %v61
  %v145 = vunpack.c.h.b16 %v61
  %v146 = vunpack.c.l.b16 %v62
  %v147 = vunpack.c.h.b16 %v62
  %v148 = vunpack.c.l.b16 %v63
  %v149 = vunpack.c.h.b16 %v63
  %v150 = vunpack.c.l.b16 %v64
  %v151 = vunpack.c.h.b16 %v64
  %v152 = vunpack.c.l.b16 %v65
  %v153 = vunpack.c.h.b16 %v65
  %v154 = vunpack.c.l.b16 %v66
  %v155 = vunpack.c.h.b16 %v66
  %v156 = vunpack.c.l.b16 %v67
  %v157 = vunpack.c.h.b16 %v67
  %v158 = vunpack.c.l.b16 %v68
  %v159 = vunpack.c.h.b16 %v68
  %v160 = vunpack.c.l.b16 %v69
  %v161 = vunpack.c.h.b16 %v69
  %v162 = vunpack.c.l.b16 %v70
  %v163 = vunpack.c.h.b16 %v70
  %v164 = vunpack.c.l.b16 %v71
  %v165 = vunpack.c.h.b16 %v71
  %v166 = vunpack.c.l.b16 %v72
  %v167 = vunpack.c.h.b16 %v72
  %v168 = vunpack.c.l.b16 %v73
  %v169 = vunpack.c.h.b16 %v73
  %v170 = vunpack.c.l.b16 %v74
  %v171 = vunpack.c.h.b16 %v74
  %v172 = vunpack.c.l.b16 %v75
  %v173 = vunpack.c.h.b16 %v75
  %v174 = vunpack.c.l.b16 %v76
  %v175 = vunpack.c.h.b16 %v76
  %v176 = vunpack.c.l.b16 %v77
  %v177 = vunpack.c.h.b16 %v77
  %v178 = vunpack.c.l.b16 %v78
  %v179 = vunpack.c.h.b16 %v78
  %v180 = vunpack.c.l.b16 %v79
  %v181 = vunpack.c.h.b16 %v79
  %v182 = vpack.c.b16 %v122, %v118
  %v183 = vpack.c.b16 %v123, %v119
  %v184 = vpack.c.b16 %v124, %v120
  %v185 = vpack.c.b16 %v125, %v121
  %v186 = vpack.c.b16 %v130, %v126
  %v187 = vpack.c.b16 %v131, %v127
  %v188 = vpack.c.b16 %v132, %v128
  %v189 = vpack.c.b16 %v133, %v129
  %v190 = vpack.c.b16 %v138, %v134
  %v191 = vpack.c.b16 %v139, %v135
  %v192 = vpack.c.b16 %v140, %v136
  %v193 = vpack.c.b16 %v141, %v137
  %v194 = vpack.c.b16 %v146, %v142
  %v195 = vpack.c.b16 %v147, %v143
  %v196 = vpack.c.b16 %v148, %v144
  %v197 = vpack.c.b16 %v149, %v145
  %v198 = vpack.c.b16 %v154, %v150
  %v199 = vpack.c.b16 %v155, %v151
  %v200 = vpack.c.b16 %v156, %v152
  %v201 = vpack.c.b16 %v157, %v153
  %v202 = vpack.c.b16 %v162, %v158
  %v203 = vpack.c.b16 %v163, %v159
  %v204 = vpack.c.b16 %v164, %v160
  %v205 = vpack.c.b16 %v165, %v161
  %v206 = vpack.c.b16 %v170, %v166
  %v207 = vpack.c.b16 %v171, %v167
  %v208 = vpack.c.b16 %v172, %v168
  %v209 = vpack.c.b16 %v173, %v169
  %v210 = vpack.c.b16 %v178, %v174
  %v211 = vpack.c.b16 %v179, %v175
  %v212 = vpack.c.b16 %v180, %v176
  %v213 = vpack.c.b16 %v181, %v177
  %246 = vmatprep.subr.bf16.mxu0 %v183
  %247 = vmatpush1.bf16.msra.mxu0 %v182
  %248 = vmatprep.subr.bf16.mxu0 %v187
  %249 = vmatpush1.bf16.msra.mxu0 %v186
  %250 = vmatprep.subr.bf16.mxu0 %v191
  %251 = vmatpush1.bf16.msra.mxu0 %v190
  %252 = vmatprep.subr.bf16.mxu0 %v195
  %253 = vmatpush1.bf16.msra.mxu0 %v194
  %254 = vmatprep.subr.bf16.mxu0 %v199
  %255 = vmatpush1.bf16.msra.mxu0 %v198
  %256 = vmatprep.subr.bf16.mxu0 %v203
  %257 = vmatpush1.bf16.msra.mxu0 %v202
  %258 = vmatprep.subr.bf16.mxu0 %v207
  %259 = vmatpush1.bf16.msra.mxu0 %v206
  %260 = vmatprep.subr.bf16.mxu0 %v211
  %261 = vmatpush1.bf16.msra.mxu0 %v210
  %262 = vmatprep.subr.bf16.mxu0 0
  %263 = vmatpush1.bf16.msra.mxu0 0
  %264 = vmatprep.subr.bf16.mxu0 0
  %265 = vmatpush1.bf16.msra.mxu0 0
  %266 = vmatprep.subr.bf16.mxu0 0
  %267 = vmatpush1.bf16.msra.mxu0 0
  %268 = vmatprep.subr.bf16.mxu0 0
  %269 = vmatpush1.bf16.msra.mxu0 0
  %270 = vmatprep.subr.bf16.mxu0 0
  %271 = vmatpush1.bf16.msra.mxu0 0
  %272 = vmatprep.subr.bf16.mxu0 0
  %273 = vmatpush1.bf16.msra.mxu0 0
  %274 = vmatprep.subr.bf16.mxu0 0
  %275 = vmatpush1.bf16.msra.mxu0 0
  %276 = vmatprep.subr.bf16.mxu0 0
  %277 = vmatpush1.bf16.msra.mxu0 0
  %278 = vmatprep.mubr.bf16.mxu0 0
  %279 = vmatmul.mubr.bf16.gmra.mrb[0].mxu0 %v47
  %v280 = vpop.f32.mrb[0].mxu0
  %v281 = vadd.f32 %v82, %v280
  %v282 = vpop.f32.mrb[0].mxu0
  %v283 = vadd.f32 %v83, %v282
  %v284 = vpop.f32.mrb[0].mxu0
  %v285 = vpop.f32.mrb[0].mxu0
  %286 = vdwg.mxu0
  %287 = vmatprep.subr.bf16.mxu0 %v185
  %288 = vmatpush1.bf16.msra.mxu0 %v184
  %289 = vmatprep.subr.bf16.mxu0 %v189
  %290 = vmatpush1.bf16.msra.mxu0 %v188
  %291 = vmatprep.subr.bf16.mxu0 %v193
  %292 = vmatpush1.bf16.msra.mxu0 %v192
  %293 = vmatprep.subr.bf16.mxu0 %v197
  %294 = vmatpush1.bf16.msra.mxu0 %v196
  %295 = vmatprep.subr.bf16.mxu0 %v201
  %296 = vmatpush1.bf16.msra.mxu0 %v200
  %297 = vmatprep.subr.bf16.mxu0 %v205
  %298 = vmatpush1.bf16.msra.mxu0 %v204
  %299 = vmatprep.subr.bf16.mxu0 %v209
  %300 = vmatpush1.bf16.msra.mxu0 %v208
  %301 = vmatprep.subr.bf16.mxu0 %v213
  %302 = vmatpush1.bf16.msra.mxu0 %v212
  %303 = vmatprep.subr.bf16.mxu0 0
  %304 = vmatpush1.bf16.msra.mxu0 0
  %305 = vmatprep.subr.bf16.mxu0 0
  %306 = vmatpush1.bf16.msra.mxu0 0
  %307 = vmatprep.subr.bf16.mxu0 0
  %308 = vmatpush1.bf16.msra.mxu0 0
  %309 = vmatprep.subr.bf16.mxu0 0
  %310 = vmatpush1.bf16.msra.mxu0 0
  %311 = vmatprep.subr.bf16.mxu0 0
  %312 = vmatpush1.bf16.msra.mxu0 0
  %313 = vmatprep.subr.bf16.mxu0 0
  %314 = vmatpush1.bf16.msra.mxu0 0
  %315 = vmatprep.subr.bf16.mxu0 0
  %316 = vmatpush1.bf16.msra.mxu0 0
  %317 = vmatprep.subr.bf16.mxu0 0
  %318 = vmatpush1.bf16.msra.mxu0 0
  %319 = vmatprep.mubr.bf16.mxu0 0
  %320 = vmatmul.mubr.bf16.gmra.mrb[0].mxu0 %v47
  %v321 = vpop.f32.mrb[0].mxu0
  %v322 = vadd.f32 %v84, %v321
  %v323 = vpop.f32.mrb[0].mxu0
  %v324 = vadd.f32 %v85, %v323
  %v325 = vpop.f32.mrb[0].mxu0
  %v326 = vpop.f32.mrb[0].mxu0
  %327 = vdwg.mxu0
  %v328 = vld [vmem:[#allocation3] sm:$0xff]
  %v329 = vxor.u32 %v281, 2147483648
  %v330 = vmul.f32 %v329, 1.442695
  %v331 = vpow.pop %v330
  %v332 = vadd.f32 %v331, 1.0
  %v333 = vrcp.pop %v332
  %v334 = vmul.f32 1.0, %v333
  %v335 = vxor.u32 %v283, 2147483648
  %v336 = vmul.f32 %v335, 1.442695
  %v337 = vpow.pop %v336
  %v338 = vadd.f32 %v337, 1.0
  %v339 = vrcp.pop %v338
  %v340 = vmul.f32 1.0, %v339
  %v341 = vtanh.pop %v322
  %v342 = vxor.u32 %v324, 2147483648
  %v343 = vmul.f32 %v342, 1.442695
  %v344 = vpow.pop %v343
  %v345 = vadd.f32 %v344, 1.0
  %v346 = vrcp.pop %v345
  %v347 = vmul.f32 1.0, %v346
  %v348 = vmul.f32 %v340, %v328
  %v349 = vmul.f32 %v334, %v341
  %v350 = vadd.f32 %v348, %v349
  %v351 = vtanh.pop %v350
  %v352 = vmul.f32 %v347, %v351
  %353 = vst [vmem:[#allocation3] sm:$0xff] %v350
  %v354 = vpack.c.bf16 %v352, %v352
  %355 = vst [vmem:[#allocation2] sm:$0xf] %v354
  %v356 = vld [vmem:[#allocation2] sm:$0xff]
  %v357 = vld [vmem:[%s2] sm:$0xff]
  %v358 = vld [vmem:[%s2 + $0x8] sm:$0xff]
  %v359 = vld [vmem:[%s2 + $0x10] sm:$0xff]
  %v360 = vld [vmem:[%s2 + $0x18] sm:$0xff]
  %v361 = vld [vmem:[%s2 + $0x20] sm:$0xff]
  %v362 = vld [vmem:[%s2 + $0x28] sm:$0xff]
  %v363 = vld [vmem:[%s2 + $0x30] sm:$0xff]
  %v364 = vld [vmem:[%s2 + $0x38] sm:$0xff]
  %v365 = vld [vmem:[%s2 + $0x40] sm:$0xff]
  %v366 = vld [vmem:[%s2 + $0x48] sm:$0xff]
  %v367 = vld [vmem:[%s2 + $0x50] sm:$0xff]
  %v368 = vld [vmem:[%s2 + $0x58] sm:$0xff]
  %v369 = vld [vmem:[%s2 + $0x60] sm:$0xff]
  %v370 = vld [vmem:[%s2 + $0x68] sm:$0xff]
  %v371 = vld [vmem:[%s2 + $0x70] sm:$0xff]
  %v372 = vld [vmem:[%s2 + $0x78] sm:$0xff]
  %v373 = vld [vmem:[%s2 + $0x80] sm:$0xff]
  %v374 = vld [vmem:[%s2 + $0x88] sm:$0xff]
  %v375 = vld [vmem:[%s2 + $0x90] sm:$0xff]
  %v376 = vld [vmem:[%s2 + $0x98] sm:$0xff]
  %v377 = vld [vmem:[%s2 + $0xa0] sm:$0xff]
  %v378 = vld [vmem:[%s2 + $0xa8] sm:$0xff]
  %v379 = vld [vmem:[%s2 + $0xb0] sm:$0xff]
  %v380 = vld [vmem:[%s2 + $0xb8] sm:$0xff]
  %v381 = vld [vmem:[%s2 + $0xc0] sm:$0xff]
  %v382 = vld [vmem:[%s2 + $0xc8] sm:$0xff]
  %v383 = vld [vmem:[%s2 + $0xd0] sm:$0xff]
  %v384 = vld [vmem:[%s2 + $0xd8] sm:$0xff]
  %v385 = vld [vmem:[%s2 + $0xe0] sm:$0xff]
  %v386 = vld [vmem:[%s2 + $0xe8] sm:$0xff]
  %v387 = vld [vmem:[%s2 + $0xf0] sm:$0xff]
  %v388 = vld [vmem:[%s2 + $0xf8] sm:$0xff]
  %v389 = vld [vmem:[%s2 + $0x100] sm:$0xff]
  %v390 = vld [vmem:[%s2 + $0x108] sm:$0xff]
  %v391 = vld [vmem:[%s2 + $0x110] sm:$0xff]
  %v392 = vld [vmem:[%s2 + $0x118] sm:$0xff]
  %v393 = vld [vmem:[%s2 + $0x120] sm:$0xff]
  %v394 = vld [vmem:[%s2 + $0x128] sm:$0xff]
  %v395 = vld [vmem:[%s2 + $0x130] sm:$0xff]
  %v396 = vld [vmem:[%s2 + $0x138] sm:$0xff]
  %v397 = vld [vmem:[%s2 + $0x140] sm:$0xff]
  %v398 = vld [vmem:[%s2 + $0x148] sm:$0xff]
  %v399 = vld [vmem:[%s2 + $0x150] sm:$0xff]
  %v400 = vld [vmem:[%s2 + $0x158] sm:$0xff]
  %v401 = vld [vmem:[%s2 + $0x160] sm:$0xff]
  %v402 = vld [vmem:[%s2 + $0x168] sm:$0xff]
  %v403 = vld [vmem:[%s2 + $0x170] sm:$0xff]
  %v404 = vld [vmem:[%s2 + $0x178] sm:$0xff]
  %v405 = vld [vmem:[%s2 + $0x180] sm:$0xff]
  %v406 = vld [vmem:[%s2 + $0x188] sm:$0xff]
  %v407 = vld [vmem:[%s2 + $0x190] sm:$0xff]
  %v408 = vld [vmem:[%s2 + $0x198] sm:$0xff]
  %v409 = vld [vmem:[%s2 + $0x1a0] sm:$0xff]
  %v410 = vld [vmem:[%s2 + $0x1a8] sm:$0xff]
  %v411 = vld [vmem:[%s2 + $0x1b0] sm:$0xff]
  %v412 = vld [vmem:[%s2 + $0x1b8] sm:$0xff]
  %v413 = vld [vmem:[%s2 + $0x1c0] sm:$0xff]
  %v414 = vld [vmem:[%s2 + $0x1c8] sm:$0xff]
  %v415 = vld [vmem:[%s2 + $0x1d0] sm:$0xff]
  %v416 = vld [vmem:[%s2 + $0x1d8] sm:$0xff]
  %v417 = vld [vmem:[%s2 + $0x1e0] sm:$0xff]
  %v418 = vld [vmem:[%s2 + $0x1e8] sm:$0xff]
  %v419 = vld [vmem:[%s2 + $0x1f0] sm:$0xff]
  %v420 = vld [vmem:[%s2 + $0x1f8] sm:$0xff]
  %v422 = vunpack.c.l.b16 %v356
  %v423 = vunpack.c.h.b16 %v356
  %v424 = vpack.c.b16 %v422, %v422
  %v425 = vpack.c.b16 %v423, %v423
  %v492 = vunpack.c.l.b16 %v357
  %v493 = vunpack.c.h.b16 %v357
  %v494 = vunpack.c.l.b16 %v358
  %v495 = vunpack.c.h.b16 %v358
  %v496 = vunpack.c.l.b16 %v359
  %v497 = vunpack.c.h.b16 %v359
  %v498 = vunpack.c.l.b16 %v360
  %v499 = vunpack.c.h.b16 %v360
  %v500 = vunpack.c.l.b16 %v361
  %v501 = vunpack.c.h.b16 %v361
  %v502 = vunpack.c.l.b16 %v362
  %v503 = vunpack.c.h.b16 %v362
  %v504 = vunpack.c.l.b16 %v363
  %v505 = vunpack.c.h.b16 %v363
  %v506 = vunpack.c.l.b16 %v364
  %v507 = vunpack.c.h.b16 %v364
  %v508 = vunpack.c.l.b16 %v365
  %v509 = vunpack.c.h.b16 %v365
  %v510 = vunpack.c.l.b16 %v366
  %v511 = vunpack.c.h.b16 %v366
  %v512 = vunpack.c.l.b16 %v367
  %v513 = vunpack.c.h.b16 %v367
  %v514 = vunpack.c.l.b16 %v368
  %v515 = vunpack.c.h.b16 %v368
  %v516 = vunpack.c.l.b16 %v369
  %v517 = vunpack.c.h.b16 %v369
  %v518 = vunpack.c.l.b16 %v370
  %v519 = vunpack.c.h.b16 %v370
  %v520 = vunpack.c.l.b16 %v371
  %v521 = vunpack.c.h.b16 %v371
  %v522 = vunpack.c.l.b16 %v372
  %v523 = vunpack.c.h.b16 %v372
  %v524 = vunpack.c.l.b16 %v373
  %v525 = vunpack.c.h.b16 %v373
  %v526 = vunpack.c.l.b16 %v374
  %v527 = vunpack.c.h.b16 %v374
  %v528 = vunpack.c.l.b16 %v375
  %v529 = vunpack.c.h.b16 %v375
  %v530 = vunpack.c.l.b16 %v376
  %v531 = vunpack.c.h.b16 %v376
  %v532 = vunpack.c.l.b16 %v377
  %v533 = vunpack.c.h.b16 %v377
  %v534 = vunpack.c.l.b16 %v378
  %v535 = vunpack.c.h.b16 %v378
  %v536 = vunpack.c.l.b16 %v379
  %v537 = vunpack.c.h.b16 %v379
  %v538 = vunpack.c.l.b16 %v380
  %v539 = vunpack.c.h.b16 %v380
  %v540 = vunpack.c.l.b16 %v381
  %v541 = vunpack.c.h.b16 %v381
  %v542 = vunpack.c.l.b16 %v382
  %v543 = vunpack.c.h.b16 %v382
  %v544 = vunpack.c.l.b16 %v383
  %v545 = vunpack.c.h.b16 %v383
  %v546 = vunpack.c.l.b16 %v384
  %v547 = vunpack.c.h.b16 %v384
  %v548 = vunpack.c.l.b16 %v385
  %v549 = vunpack.c.h.b16 %v385
  %v550 = vunpack.c.l.b16 %v386
  %v551 = vunpack.c.h.b16 %v386
  %v552 = vunpack.c.l.b16 %v387
  %v553 = vunpack.c.h.b16 %v387
  %v554 = vunpack.c.l.b16 %v388
  %v555 = vunpack.c.h.b16 %v388
  %v556 = vunpack.c.l.b16 %v389
  %v557 = vunpack.c.h.b16 %v389
  %v558 = vunpack.c.l.b16 %v390
  %v559 = vunpack.c.h.b16 %v390
  %v560 = vunpack.c.l.b16 %v391
  %v561 = vunpack.c.h.b16 %v391
  %v562 = vunpack.c.l.b16 %v392
  %v563 = vunpack.c.h.b16 %v392
  %v564 = vunpack.c.l.b16 %v393
  %v565 = vunpack.c.h.b16 %v393
  %v566 = vunpack.c.l.b16 %v394
  %v567 = vunpack.c.h.b16 %v394
  %v568 = vunpack.c.l.b16 %v395
  %v569 = vunpack.c.h.b16 %v395
  %v570 = vunpack.c.l.b16 %v396
  %v571 = vunpack.c.h.b16 %v396
  %v572 = vunpack.c.l.b16 %v397
  %v573 = vunpack.c.h.b16 %v397
  %v574 = vunpack.c.l.b16 %v398
  %v575 = vunpack.c.h.b16 %v398
  %v576 = vunpack.c.l.b16 %v399
  %v577 = vunpack.c.h.b16 %v399
  %v578 = vunpack.c.l.b16 %v400
  %v579 = vunpack.c.h.b16 %v400
  %v580 = vunpack.c.l.b16 %v401
  %v581 = vunpack.c.h.b16 %v401
  %v582 = vunpack.c.l.b16 %v402
  %v583 = vunpack.c.h.b16 %v402
  %v584 = vunpack.c.l.b16 %v403
  %v585 = vunpack.c.h.b16 %v403
  %v586 = vunpack.c.l.b16 %v404
  %v587 = vunpack.c.h.b16 %v404
  %v588 = vunpack.c.l.b16 %v405
  %v589 = vunpack.c.h.b16 %v405
  %v590 = vunpack.c.l.b16 %v406
  %v591 = vunpack.c.h.b16 %v406
  %v592 = vunpack.c.l.b16 %v407
  %v593 = vunpack.c.h.b16 %v407
  %v594 = vunpack.c.l.b16 %v408
  %v595 = vunpack.c.h.b16 %v408
  %v596 = vunpack.c.l.b16 %v409
  %v597 = vunpack.c.h.b16 %v409
  %v598 = vunpack.c.l.b16 %v410
  %v599 = vunpack.c.h.b16 %v410
  %v600 = vunpack.c.l.b16 %v411
  %v601 = vunpack.c.h.b16 %v411
  %v602 = vunpack.c.l.b16 %v412
  %v603 = vunpack.c.h.b16 %v412
  %v604 = vunpack.c.l.b16 %v413
  %v605 = vunpack.c.h.b16 %v413
  %v606 = vunpack.c.l.b16 %v414
  %v607 = vunpack.c.h.b16 %v414
  %v608 = vunpack.c.l.b16 %v415
  %v609 = vunpack.c.h.b16 %v415
  %v610 = vunpack.c.l.b16 %v416
  %v611 = vunpack.c.h.b16 %v416
  %v612 = vunpack.c.l.b16 %v417
  %v613 = vunpack.c.h.b16 %v417
  %v614 = vunpack.c.l.b16 %v418
  %v615 = vunpack.c.h.b16 %v418
  %v616 = vunpack.c.l.b16 %v419
  %v617 = vunpack.c.h.b16 %v419
  %v618 = vunpack.c.l.b16 %v420
  %v619 = vunpack.c.h.b16 %v420
  %v620 = vpack.c.b16 %v496, %v492
  %v621 = vpack.c.b16 %v497, %v493
  %v622 = vpack.c.b16 %v498, %v494
  %v623 = vpack.c.b16 %v499, %v495
  %v624 = vpack.c.b16 %v504, %v500
  %v625 = vpack.c.b16 %v505, %v501
  %v626 = vpack.c.b16 %v506, %v502
  %v627 = vpack.c.b16 %v507, %v503
  %v628 = vpack.c.b16 %v512, %v508
  %v629 = vpack.c.b16 %v513, %v509
  %v630 = vpack.c.b16 %v514, %v510
  %v631 = vpack.c.b16 %v515, %v511
  %v632 = vpack.c.b16 %v520, %v516
  %v633 = vpack.c.b16 %v521, %v517
  %v634 = vpack.c.b16 %v522, %v518
  %v635 = vpack.c.b16 %v523, %v519
  %v636 = vpack.c.b16 %v528, %v524
  %v637 = vpack.c.b16 %v529, %v525
  %v638 = vpack.c.b16 %v530, %v526
  %v639 = vpack.c.b16 %v531, %v527
  %v640 = vpack.c.b16 %v536, %v532
  %v641 = vpack.c.b16 %v537, %v533
  %v642 = vpack.c.b16 %v538, %v534
  %v643 = vpack.c.b16 %v539, %v535
  %v644 = vpack.c.b16 %v544, %v540
  %v645 = vpack.c.b16 %v545, %v541
  %v646 = vpack.c.b16 %v546, %v542
  %v647 = vpack.c.b16 %v547, %v543
  %v648 = vpack.c.b16 %v552, %v548
  %v649 = vpack.c.b16 %v553, %v549
  %v650 = vpack.c.b16 %v554, %v550
  %v651 = vpack.c.b16 %v555, %v551
  %v652 = vpack.c.b16 %v560, %v556
  %v653 = vpack.c.b16 %v561, %v557
  %v654 = vpack.c.b16 %v562, %v558
  %v655 = vpack.c.b16 %v563, %v559
  %v656 = vpack.c.b16 %v568, %v564
  %v657 = vpack.c.b16 %v569, %v565
  %v658 = vpack.c.b16 %v570, %v566
  %v659 = vpack.c.b16 %v571, %v567
  %v660 = vpack.c.b16 %v576, %v572
  %v661 = vpack.c.b16 %v577, %v573
  %v662 = vpack.c.b16 %v578, %v574
  %v663 = vpack.c.b16 %v579, %v575
  %v664 = vpack.c.b16 %v584, %v580
  %v665 = vpack.c.b16 %v585, %v581
  %v666 = vpack.c.b16 %v586, %v582
  %v667 = vpack.c.b16 %v587, %v583
  %v668 = vpack.c.b16 %v592, %v588
  %v669 = vpack.c.b16 %v593, %v589
  %v670 = vpack.c.b16 %v594, %v590
  %v671 = vpack.c.b16 %v595, %v591
  %v672 = vpack.c.b16 %v600, %v596
  %v673 = vpack.c.b16 %v601, %v597
  %v674 = vpack.c.b16 %v602, %v598
  %v675 = vpack.c.b16 %v603, %v599
  %v676 = vpack.c.b16 %v608, %v604
  %v677 = vpack.c.b16 %v609, %v605
  %v678 = vpack.c.b16 %v610, %v606
  %v679 = vpack.c.b16 %v611, %v607
  %v680 = vpack.c.b16 %v616, %v612
  %v681 = vpack.c.b16 %v617, %v613
  %v682 = vpack.c.b16 %v618, %v614
  %v683 = vpack.c.b16 %v619, %v615
  %748 = vmatprep.subr.bf16.mxu0 %v621
  %749 = vmatpush1.bf16.msra.mxu0 %v620
  %750 = vmatprep.subr.bf16.mxu0 %v625
  %751 = vmatpush1.bf16.msra.mxu0 %v624
  %752 = vmatprep.subr.bf16.mxu0 %v629
  %753 = vmatpush1.bf16.msra.mxu0 %v628
  %754 = vmatprep.subr.bf16.mxu0 %v633
  %755 = vmatpush1.bf16.msra.mxu0 %v632
  %756 = vmatprep.subr.bf16.mxu0 %v637
  %757 = vmatpush1.bf16.msra.mxu0 %v636
  %758 = vmatprep.subr.bf16.mxu0 %v641
  %759 = vmatpush1.bf16.msra.mxu0 %v640
  %760 = vmatprep.subr.bf16.mxu0 %v645
  %761 = vmatpush1.bf16.msra.mxu0 %v644
  %762 = vmatprep.subr.bf16.mxu0 %v649
  %763 = vmatpush1.bf16.msra.mxu0 %v648
  %764 = vmatprep.subr.bf16.mxu0 %v653
  %765 = vmatpush1.bf16.msra.mxu0 %v652
  %766 = vmatprep.subr.bf16.mxu0 %v657
  %767 = vmatpush1.bf16.msra.mxu0 %v656
  %768 = vmatprep.subr.bf16.mxu0 %v661
  %769 = vmatpush1.bf16.msra.mxu0 %v660
  %770 = vmatprep.subr.bf16.mxu0 %v665
  %771 = vmatpush1.bf16.msra.mxu0 %v664
  %772 = vmatprep.subr.bf16.mxu0 %v669
  %773 = vmatpush1.bf16.msra.mxu0 %v668
  %774 = vmatprep.subr.bf16.mxu0 %v673
  %775 = vmatpush1.bf16.msra.mxu0 %v672
  %776 = vmatprep.subr.bf16.mxu0 %v677
  %777 = vmatpush1.bf16.msra.mxu0 %v676
  %778 = vmatprep.subr.bf16.mxu0 %v681
  %779 = vmatpush1.bf16.msra.mxu0 %v680
  %780 = vmatprep.mubr.bf16.mxu0 %v425
  %781 = vmatmul.mubr.bf16.gmra.mrb[0].mxu0 %v424
  %v782 = vpop.f32.mrb[0].mxu0
  %v783 = vadd.f32 %v30, %v782
  %v784 = vpop.f32.mrb[0].mxu0
  %v785 = vadd.f32 %v34, %v784
  %v786 = vpop.f32.mrb[0].mxu0
  %v787 = vpop.f32.mrb[0].mxu0
  %788 = vdwg.mxu0
  %789 = vmatprep.subr.bf16.mxu0 %v623
  %790 = vmatpush1.bf16.msra.mxu0 %v622
  %791 = vmatprep.subr.bf16.mxu0 %v627
  %792 = vmatpush1.bf16.msra.mxu0 %v626
  %793 = vmatprep.subr.bf16.mxu0 %v631
  %794 = vmatpush1.bf16.msra.mxu0 %v630
  %795 = vmatprep.subr.bf16.mxu0 %v635
  %796 = vmatpush1.bf16.msra.mxu0 %v634
  %797 = vmatprep.subr.bf16.mxu0 %v639
  %798 = vmatpush1.bf16.msra.mxu0 %v638
  %799 = vmatprep.subr.bf16.mxu0 %v643
  %800 = vmatpush1.bf16.msra.mxu0 %v642
  %801 = vmatprep.subr.bf16.mxu0 %v647
  %802 = vmatpush1.bf16.msra.mxu0 %v646
  %803 = vmatprep.subr.bf16.mxu0 %v651
  %804 = vmatpush1.bf16.msra.mxu0 %v650
  %805 = vmatprep.subr.bf16.mxu0 %v655
  %806 = vmatpush1.bf16.msra.mxu0 %v654
  %807 = vmatprep.subr.bf16.mxu0 %v659
  %808 = vmatpush1.bf16.msra.mxu0 %v658
  %809 = vmatprep.subr.bf16.mxu0 %v663
  %810 = vmatpush1.bf16.msra.mxu0 %v662
  %811 = vmatprep.subr.bf16.mxu0 %v667
  %812 = vmatpush1.bf16.msra.mxu0 %v666
  %813 = vmatprep.subr.bf16.mxu0 %v671
  %814 = vmatpush1.bf16.msra.mxu0 %v670
  %815 = vmatprep.subr.bf16.mxu0 %v675
  %816 = vmatpush1.bf16.msra.mxu0 %v674
  %817 = vmatprep.subr.bf16.mxu0 %v679
  %818 = vmatpush1.bf16.msra.mxu0 %v678
  %819 = vmatprep.subr.bf16.mxu0 %v683
  %820 = vmatpush1.bf16.msra.mxu0 %v682
  %821 = vmatprep.mubr.bf16.mxu0 %v425
  %822 = vmatmul.mubr.bf16.gmra.mrb[0].mxu0 %v424
  %v823 = vpop.f32.mrb[0].mxu0
  %v824 = vadd.f32 %v38, %v823
  %v825 = vpop.f32.mrb[0].mxu0
  %v826 = vadd.f32 %v42, %v825
  %v827 = vpop.f32.mrb[0].mxu0
  %v828 = vpop.f32.mrb[0].mxu0
  %829 = vdwg.mxu0
  %v830 = vld [vmem:[#allocation4] sm:$0xff]
  %v831 = vxor.u32 %v783, 2147483648
  %v832 = vmul.f32 %v831, 1.442695
  %v833 = vpow.pop %v832
  %v834 = vadd.f32 %v833, 1.0
  %v835 = vrcp.pop %v834
  %v836 = vmul.f32 1.0, %v835
  %v837 = vxor.u32 %v785, 2147483648
  %v838 = vmul.f32 %v837, 1.442695
  %v839 = vpow.pop %v838
  %v840 = vadd.f32 %v839, 1.0
  %v841 = vrcp.pop %v840
  %v842 = vmul.f32 1.0, %v841
  %v843 = vtanh.pop %v824
  %v844 = vxor.u32 %v826, 2147483648
  %v845 = vmul.f32 %v844, 1.442695
  %v846 = vpow.pop %v845
  %v847 = vadd.f32 %v846, 1.0
  %v848 = vrcp.pop %v847
  %v849 = vmul.f32 1.0, %v848
  %v850 = vmul.f32 %v842, %v830
  %v851 = vmul.f32 %v836, %v843
  %v852 = vadd.f32 %v850, %v851
  %v853 = vtanh.pop %v852
  %v854 = vmul.f32 %v849, %v853
  %855 = vst [vmem:[#allocation4] sm:$0xff] %v852
  %v856 = vpack.c.bf16 %v854, %v854
  %857 = vst [vmem:[#allocation2 + $0x4] sm:$0xf] %v856
  %858 = vst [vmem:[%s4] sm:$0xf] %v856
  %v859 = vld [vmem:[#allocation2] sm:$0xf]
  %v860 = vld [vmem:[%s1] sm:$0xff]
  %v861 = vld [vmem:[%s1 + $0x8] sm:$0xff]
  %v862 = vld [vmem:[%s1 + $0x10] sm:$0xff]
  %v863 = vld [vmem:[%s1 + $0x18] sm:$0xff]
  %v864 = vld [vmem:[%s1 + $0x20] sm:$0xff]
  %v865 = vld [vmem:[%s1 + $0x28] sm:$0xff]
  %v866 = vld [vmem:[%s1 + $0x30] sm:$0xff]
  %v867 = vld [vmem:[%s1 + $0x38] sm:$0xff]
  %v868 = vld [vmem:[%s1 + $0x40] sm:$0xff]
  %v869 = vld [vmem:[%s1 + $0x48] sm:$0xff]
  %v870 = vld [vmem:[%s1 + $0x50] sm:$0xff]
  %v871 = vld [vmem:[%s1 + $0x58] sm:$0xff]
  %v872 = vld [vmem:[%s1 + $0x60] sm:$0xff]
  %v873 = vld [vmem:[%s1 + $0x68] sm:$0xff]
  %v874 = vld [vmem:[%s1 + $0x70] sm:$0xff]
  %v875 = vld [vmem:[%s1 + $0x78] sm:$0xff]
  %v876 = vld [vmem:[%s1 + $0x80] sm:$0xff]
  %v877 = vld [vmem:[%s1 + $0x88] sm:$0xff]
  %v878 = vld [vmem:[%s1 + $0x90] sm:$0xff]
  %v879 = vld [vmem:[%s1 + $0x98] sm:$0xff]
  %v880 = vld [vmem:[%s1 + $0xa0] sm:$0xff]
  %v881 = vld [vmem:[%s1 + $0xa8] sm:$0xff]
  %v882 = vld [vmem:[%s1 + $0xb0] sm:$0xff]
  %v883 = vld [vmem:[%s1 + $0xb8] sm:$0xff]
  %v884 = vld [vmem:[%s1 + $0xc0] sm:$0xff]
  %v885 = vld [vmem:[%s1 + $0xc8] sm:$0xff]
  %v886 = vld [vmem:[%s1 + $0xd0] sm:$0xff]
  %v887 = vld [vmem:[%s1 + $0xd8] sm:$0xff]
  %v888 = vld [vmem:[%s1 + $0xe0] sm:$0xff]
  %v889 = vld [vmem:[%s1 + $0xe8] sm:$0xff]
  %v890 = vld [vmem:[%s1 + $0xf0] sm:$0xff]
  %v891 = vld [vmem:[%s1 + $0xf8] sm:$0xff]
  %s892 = scalar_lea.vmem %s0, 16
  %v893 = vld [vmem:[%s892] sm:$0xff]
  %v894 = vld [vmem:[%s892 + $0x8] sm:$0xff]
  %v895 = vunpack.c.l.bf16 %v893
  %v896 = vunpack.c.h.bf16 %v893
  %v897 = vunpack.c.l.bf16 %v894
  %v898 = vunpack.c.h.bf16 %v894
  %v931 = vunpack.c.l.b16 %v860
  %v932 = vunpack.c.h.b16 %v860
  %v933 = vunpack.c.l.b16 %v861
  %v934 = vunpack.c.h.b16 %v861
  %v935 = vunpack.c.l.b16 %v862
  %v936 = vunpack.c.h.b16 %v862
  %v937 = vunpack.c.l.b16 %v863
  %v938 = vunpack.c.h.b16 %v863
  %v939 = vunpack.c.l.b16 %v864
  %v940 = vunpack.c.h.b16 %v864
  %v941 = vunpack.c.l.b16 %v865
  %v942 = vunpack.c.h.b16 %v865
  %v943 = vunpack.c.l.b16 %v866
  %v944 = vunpack.c.h.b16 %v866
  %v945 = vunpack.c.l.b16 %v867
  %v946 = vunpack.c.h.b16 %v867
  %v947 = vunpack.c.l.b16 %v868
  %v948 = vunpack.c.h.b16 %v868
  %v949 = vunpack.c.l.b16 %v869
  %v950 = vunpack.c.h.b16 %v869
  %v951 = vunpack.c.l.b16 %v870
  %v952 = vunpack.c.h.b16 %v870
  %v953 = vunpack.c.l.b16 %v871
  %v954 = vunpack.c.h.b16 %v871
  %v955 = vunpack.c.l.b16 %v872
  %v956 = vunpack.c.h.b16 %v872
  %v957 = vunpack.c.l.b16 %v873
  %v958 = vunpack.c.h.b16 %v873
  %v959 = vunpack.c.l.b16 %v874
  %v960 = vunpack.c.h.b16 %v874
  %v961 = vunpack.c.l.b16 %v875
  %v962 = vunpack.c.h.b16 %v875
  %v963 = vunpack.c.l.b16 %v876
  %v964 = vunpack.c.h.b16 %v876
  %v965 = vunpack.c.l.b16 %v877
  %v966 = vunpack.c.h.b16 %v877
  %v967 = vunpack.c.l.b16 %v878
  %v968 = vunpack.c.h.b16 %v878
  %v969 = vunpack.c.l.b16 %v879
  %v970 = vunpack.c.h.b16 %v879
  %v971 = vunpack.c.l.b16 %v880
  %v972 = vunpack.c.h.b16 %v880
  %v973 = vunpack.c.l.b16 %v881
  %v974 = vunpack.c.h.b16 %v881
  %v975 = vunpack.c.l.b16 %v882
  %v976 = vunpack.c.h.b16 %v882
  %v977 = vunpack.c.l.b16 %v883
  %v978 = vunpack.c.h.b16 %v883
  %v979 = vunpack.c.l.b16 %v884
  %v980 = vunpack.c.h.b16 %v884
  %v981 = vunpack.c.l.b16 %v885
  %v982 = vunpack.c.h.b16 %v885
  %v983 = vunpack.c.l.b16 %v886
  %v984 = vunpack.c.h.b16 %v886
  %v985 = vunpack.c.l.b16 %v887
  %v986 = vunpack.c.h.b16 %v887
  %v987 = vunpack.c.l.b16 %v888
  %v988 = vunpack.c.h.b16 %v888
  %v989 = vunpack.c.l.b16 %v889
  %v990 = vunpack.c.h.b16 %v889
  %v991 = vunpack.c.l.b16 %v890
  %v992 = vunpack.c.h.b16 %v890
  %v993 = vunpack.c.l.b16 %v891
  %v994 = vunpack.c.h.b16 %v891
  %v995 = vpack.c.b16 %v935, %v931
  %v996 = vpack.c.b16 %v936, %v932
  %v997 = vpack.c.b16 %v937, %v933
  %v998 = vpack.c.b16 %v938, %v934
  %v999 = vpack.c.b16 %v943, %v939
  %v1000 = vpack.c.b16 %v944, %v940
  %v1001 = vpack.c.b16 %v945, %v941
  %v1002 = vpack.c.b16 %v946, %v942
  %v1003 = vpack.c.b16 %v951, %v947
  %v1004 = vpack.c.b16 %v952, %v948
  %v1005 = vpack.c.b16 %v953, %v949
  %v1006 = vpack.c.b16 %v954, %v950
  %v1007 = vpack.c.b16 %v959, %v955
  %v1008 = vpack.c.b16 %v960, %v956
  %v1009 = vpack.c.b16 %v961, %v957
  %v1010 = vpack.c.b16 %v962, %v958
  %v1011 = vpack.c.b16 %v967, %v963
  %v1012 = vpack.c.b16 %v968, %v964
  %v1013 = vpack.c.b16 %v969, %v965
  %v1014 = vpack.c.b16 %v970, %v966
  %v1015 = vpack.c.b16 %v975, %v971
  %v1016 = vpack.c.b16 %v976, %v972
  %v1017 = vpack.c.b16 %v977, %v973
  %v1018 = vpack.c.b16 %v978, %v974
  %v1019 = vpack.c.b16 %v983, %v979
  %v1020 = vpack.c.b16 %v984, %v980
  %v1021 = vpack.c.b16 %v985, %v981
  %v1022 = vpack.c.b16 %v986, %v982
  %v1023 = vpack.c.b16 %v991, %v987
  %v1024 = vpack.c.b16 %v992, %v988
  %v1025 = vpack.c.b16 %v993, %v989
  %v1026 = vpack.c.b16 %v994, %v990
  %1059 = vmatprep.subr.bf16.mxu0 %v996
  %1060 = vmatpush1.bf16.msra.mxu0 %v995
  %1061 = vmatprep.subr.bf16.mxu0 %v1000
  %1062 = vmatpush1.bf16.msra.mxu0 %v999
  %1063 = vmatprep.subr.bf16.mxu0 %v1004
  %1064 = vmatpush1.bf16.msra.mxu0 %v1003
  %1065 = vmatprep.subr.bf16.mxu0 %v1008
  %1066 = vmatpush1.bf16.msra.mxu0 %v1007
  %1067 = vmatprep.subr.bf16.mxu0 %v1012
  %1068 = vmatpush1.bf16.msra.mxu0 %v1011
  %1069 = vmatprep.subr.bf16.mxu0 %v1016
  %1070 = vmatpush1.bf16.msra.mxu0 %v1015
  %1071 = vmatprep.subr.bf16.mxu0 %v1020
  %1072 = vmatpush1.bf16.msra.mxu0 %v1019
  %1073 = vmatprep.subr.bf16.mxu0 %v1024
  %1074 = vmatpush1.bf16.msra.mxu0 %v1023
  %1075 = vmatprep.subr.bf16.mxu0 0
  %1076 = vmatpush1.bf16.msra.mxu0 0
  %1077 = vmatprep.subr.bf16.mxu0 0
  %1078 = vmatpush1.bf16.msra.mxu0 0
  %1079 = vmatprep.subr.bf16.mxu0 0
  %1080 = vmatpush1.bf16.msra.mxu0 0
  %1081 = vmatprep.subr.bf16.mxu0 0
  %1082 = vmatpush1.bf16.msra.mxu0 0
  %1083 = vmatprep.subr.bf16.mxu0 0
  %1084 = vmatpush1.bf16.msra.mxu0 0
  %1085 = vmatprep.subr.bf16.mxu0 0
  %1086 = vmatpush1.bf16.msra.mxu0 0
  %1087 = vmatprep.subr.bf16.mxu0 0
  %1088 = vmatpush1.bf16.msra.mxu0 0
  %1089 = vmatprep.subr.bf16.mxu0 0
  %1090 = vmatpush1.bf16.msra.mxu0 0
  %1091 = vmatprep.mubr.bf16.mxu0 0
  %1092 = vmatmul.mubr.bf16.gmra.mrb[0].mxu0 %v859
  %v1093 = vpop.f32.mrb[0].mxu0
  %v1094 = vadd.f32 %v895, %v1093
  %v1095 = vpop.f32.mrb[0].mxu0
  %v1096 = vadd.f32 %v896, %v1095
  %v1097 = vpop.f32.mrb[0].mxu0
  %v1098 = vpop.f32.mrb[0].mxu0
  %1099 = vdwg.mxu0
  %1100 = vmatprep.subr.bf16.mxu0 %v998
  %1101 = vmatpush1.bf16.msra.mxu0 %v997
  %1102 = vmatprep.subr.bf16.mxu0 %v1002
  %1103 = vmatpush1.bf16.msra.mxu0 %v1001
  %1104 = vmatprep.subr.bf16.mxu0 %v1006
  %1105 = vmatpush1.bf16.msra.mxu0 %v1005
  %1106 = vmatprep.subr.bf16.mxu0 %v1010
  %1107 = vmatpush1.bf16.msra.mxu0 %v1009
  %1108 = vmatprep.subr.bf16.mxu0 %v1014
  %1109 = vmatpush1.bf16.msra.mxu0 %v1013
  %1110 = vmatprep.subr.bf16.mxu0 %v1018
  %1111 = vmatpush1.bf16.msra.mxu0 %v1017
  %1112 = vmatprep.subr.bf16.mxu0 %v1022
  %1113 = vmatpush1.bf16.msra.mxu0 %v1021
  %1114 = vmatprep.subr.bf16.mxu0 %v1026
  %1115 = vmatpush1.bf16.msra.mxu0 %v1025
  %1116 = vmatprep.subr.bf16.mxu0 0
  %1117 = vmatpush1.bf16.msra.mxu0 0
  %1118 = vmatprep.subr.bf16.mxu0 0
  %1119 = vmatpush1.bf16.msra.mxu0 0
  %1120 = vmatprep.subr.bf16.mxu0 0
  %1121 = vmatpush1.bf16.msra.mxu0 0
  %1122 = vmatprep.subr.bf16.mxu0 0
  %1123 = vmatpush1.bf16.msra.mxu0 0
  %1124 = vmatprep.subr.bf16.mxu0 0
  %1125 = vmatpush1.bf16.msra.mxu0 0
  %1126 = vmatprep.subr.bf16.mxu0 0
  %1127 = vmatpush1.bf16.msra.mxu0 0
  %1128 = vmatprep.subr.bf16.mxu0 0
  %1129 = vmatpush1.bf16.msra.mxu0 0
  %1130 = vmatprep.subr.bf16.mxu0 0
  %1131 = vmatpush1.bf16.msra.mxu0 0
  %1132 = vmatprep.mubr.bf16.mxu0 0
  %1133 = vmatmul.mubr.bf16.gmra.mrb[0].mxu0 %v859
  %v1134 = vpop.f32.mrb[0].mxu0
  %v1135 = vadd.f32 %v897, %v1134
  %v1136 = vpop.f32.mrb[0].mxu0
  %v1137 = vadd.f32 %v898, %v1136
  %v1138 = vpop.f32.mrb[0].mxu0
  %v1139 = vpop.f32.mrb[0].mxu0
  %1140 = vdwg.mxu0
  %v1141 = vld [vmem:[#allocation3] sm:$0xff]
  %v1142 = vxor.u32 %v1094, 2147483648
  %v1143 = vmul.f32 %v1142, 1.442695
  %v1144 = vpow.pop %v1143
  %v1145 = vadd.f32 %v1144, 1.0
  %v1146 = vrcp.pop %v1145
  %v1147 = vmul.f32 1.0, %v1146
  %v1148 = vxor.u32 %v1096, 2147483648
  %v1149 = vmul.f32 %v1148, 1.442695
  %v1150 = vpow.pop %v1149
  %v1151 = vadd.f32 %v1150, 1.0
  %v1152 = vrcp.pop %v1151
  %v1153 = vmul.f32 1.0, %v1152
  %v1154 = vtanh.pop %v1135
  %v1155 = vxor.u32 %v1137, 2147483648
  %v1156 = vmul.f32 %v1155, 1.442695
  %v1157 = vpow.pop %v1156
  %v1158 = vadd.f32 %v1157, 1.0
  %v1159 = vrcp.pop %v1158
  %v1160 = vmul.f32 1.0, %v1159
  %v1161 = vmul.f32 %v1153, %v1141
  %v1162 = vmul.f32 %v1147, %v1154
  %v1163 = vadd.f32 %v1161, %v1162
  %v1164 = vtanh.pop %v1163
  %v1165 = vmul.f32 %v1160, %v1164
  %1166 = vst [vmem:[#allocation3] sm:$0xff] %v1163
  %v1167 = vpack.c.bf16 %v1165, %v1165
  %1168 = vst [vmem:[#allocation2] sm:$0xf] %v1167
  %v1169 = vld [vmem:[#allocation2] sm:$0xff]
  %v1170 = vld [vmem:[%s2] sm:$0xff]
  %v1171 = vld [vmem:[%s2 + $0x8] sm:$0xff]
  %v1172 = vld [vmem:[%s2 + $0x10] sm:$0xff]
  %v1173 = vld [vmem:[%s2 + $0x18] sm:$0xff]
  %v1174 = vld [vmem:[%s2 + $0x20] sm:$0xff]
  %v1175 = vld [vmem:[%s2 + $0x28] sm:$0xff]
  %v1176 = vld [vmem:[%s2 + $0x30] sm:$0xff]
  %v1177 = vld [vmem:[%s2 + $0x38] sm:$0xff]
  %v1178 = vld [vmem:[%s2 + $0x40] sm:$0xff]
  %v1179 = vld [vmem:[%s2 + $0x48] sm:$0xff]
  %v1180 = vld [vmem:[%s2 + $0x50] sm:$0xff]
  %v1181 = vld [vmem:[%s2 + $0x58] sm:$0xff]
  %v1182 = vld [vmem:[%s2 + $0x60] sm:$0xff]
  %v1183 = vld [vmem:[%s2 + $0x68] sm:$0xff]
  %v1184 = vld [vmem:[%s2 + $0x70] sm:$0xff]
  %v1185 = vld [vmem:[%s2 + $0x78] sm:$0xff]
  %v1186 = vld [vmem:[%s2 + $0x80] sm:$0xff]
  %v1187 = vld [vmem:[%s2 + $0x88] sm:$0xff]
  %v1188 = vld [vmem:[%s2 + $0x90] sm:$0xff]
  %v1189 = vld [vmem:[%s2 + $0x98] sm:$0xff]
  %v1190 = vld [vmem:[%s2 + $0xa0] sm:$0xff]
  %v1191 = vld [vmem:[%s2 + $0xa8] sm:$0xff]
  %v1192 = vld [vmem:[%s2 + $0xb0] sm:$0xff]
  %v1193 = vld [vmem:[%s2 + $0xb8] sm:$0xff]
  %v1194 = vld [vmem:[%s2 + $0xc0] sm:$0xff]
  %v1195 = vld [vmem:[%s2 + $0xc8] sm:$0xff]
  %v1196 = vld [vmem:[%s2 + $0xd0] sm:$0xff]
  %v1197 = vld [vmem:[%s2 + $0xd8] sm:$0xff]
  %v1198 = vld [vmem:[%s2 + $0xe0] sm:$0xff]
  %v1199 = vld [vmem:[%s2 + $0xe8] sm:$0xff]
  %v1200 = vld [vmem:[%s2 + $0xf0] sm:$0xff]
  %v1201 = vld [vmem:[%s2 + $0xf8] sm:$0xff]
  %v1202 = vld [vmem:[%s2 + $0x100] sm:$0xff]
  %v1203 = vld [vmem:[%s2 + $0x108] sm:$0xff]
  %v1204 = vld [vmem:[%s2 + $0x110] sm:$0xff]
  %v1205 = vld [vmem:[%s2 + $0x118] sm:$0xff]
  %v1206 = vld [vmem:[%s2 + $0x120] sm:$0xff]
  %v1207 = vld [vmem:[%s2 + $0x128] sm:$0xff]
  %v1208 = vld [vmem:[%s2 + $0x130] sm:$0xff]
  %v1209 = vld [vmem:[%s2 + $0x138] sm:$0xff]
  %v1210 = vld [vmem:[%s2 + $0x140] sm:$0xff]
  %v1211 = vld [vmem:[%s2 + $0x148] sm:$0xff]
  %v1212 = vld [vmem:[%s2 + $0x150] sm:$0xff]
  %v1213 = vld [vmem:[%s2 + $0x158] sm:$0xff]
  %v1214 = vld [vmem:[%s2 + $0x160] sm:$0xff]
  %v1215 = vld [vmem:[%s2 + $0x168] sm:$0xff]
  %v1216 = vld [vmem:[%s2 + $0x170] sm:$0xff]
  %v1217 = vld [vmem:[%s2 + $0x178] sm:$0xff]
  %v1218 = vld [vmem:[%s2 + $0x180] sm:$0xff]
  %v1219 = vld [vmem:[%s2 + $0x188] sm:$0xff]
  %v1220 = vld [vmem:[%s2 + $0x190] sm:$0xff]
  %v1221 = vld [vmem:[%s2 + $0x198] sm:$0xff]
  %v1222 = vld [vmem:[%s2 + $0x1a0] sm:$0xff]
  %v1223 = vld [vmem:[%s2 + $0x1a8] sm:$0xff]
  %v1224 = vld [vmem:[%s2 + $0x1b0] sm:$0xff]
  %v1225 = vld [vmem:[%s2 + $0x1b8] sm:$0xff]
  %v1226 = vld [vmem:[%s2 + $0x1c0] sm:$0xff]
  %v1227 = vld [vmem:[%s2 + $0x1c8] sm:$0xff]
  %v1228 = vld [vmem:[%s2 + $0x1d0] sm:$0xff]
  %v1229 = vld [vmem:[%s2 + $0x1d8] sm:$0xff]
  %v1230 = vld [vmem:[%s2 + $0x1e0] sm:$0xff]
  %v1231 = vld [vmem:[%s2 + $0x1e8] sm:$0xff]
  %v1232 = vld [vmem:[%s2 + $0x1f0] sm:$0xff]
  %v1233 = vld [vmem:[%s2 + $0x1f8] sm:$0xff]
  %v1235 = vunpack.c.l.b16 %v1169
  %v1236 = vunpack.c.h.b16 %v1169
  %v1237 = vpack.c.b16 %v1235, %v1235
  %v1238 = vpack.c.b16 %v1236, %v1236
  %v1305 = vunpack.c.l.b16 %v1170
  %v1306 = vunpack.c.h.b16 %v1170
  %v1307 = vunpack.c.l.b16 %v1171
  %v1308 = vunpack.c.h.b16 %v1171
  %v1309 = vunpack.c.l.b16 %v1172
  %v1310 = vunpack.c.h.b16 %v1172
  %v1311 = vunpack.c.l.b16 %v1173
  %v1312 = vunpack.c.h.b16 %v1173
  %v1313 = vunpack.c.l.b16 %v1174
  %v1314 = vunpack.c.h.b16 %v1174
  %v1315 = vunpack.c.l.b16 %v1175
  %v1316 = vunpack.c.h.b16 %v1175
  %v1317 = vunpack.c.l.b16 %v1176
  %v1318 = vunpack.c.h.b16 %v1176
  %v1319 = vunpack.c.l.b16 %v1177
  %v1320 = vunpack.c.h.b16 %v1177
  %v1321 = vunpack.c.l.b16 %v1178
  %v1322 = vunpack.c.h.b16 %v1178
  %v1323 = vunpack.c.l.b16 %v1179
  %v1324 = vunpack.c.h.b16 %v1179
  %v1325 = vunpack.c.l.b16 %v1180
  %v1326 = vunpack.c.h.b16 %v1180
  %v1327 = vunpack.c.l.b16 %v1181
  %v1328 = vunpack.c.h.b16 %v1181
  %v1329 = vunpack.c.l.b16 %v1182
  %v1330 = vunpack.c.h.b16 %v1182
  %v1331 = vunpack.c.l.b16 %v1183
  %v1332 = vunpack.c.h.b16 %v1183
  %v1333 = vunpack.c.l.b16 %v1184
  %v1334 = vunpack.c.h.b16 %v1184
  %v1335 = vunpack.c.l.b16 %v1185
  %v1336 = vunpack.c.h.b16 %v1185
  %v1337 = vunpack.c.l.b16 %v1186
  %v1338 = vunpack.c.h.b16 %v1186
  %v1339 = vunpack.c.l.b16 %v1187
  %v1340 = vunpack.c.h.b16 %v1187
  %v1341 = vunpack.c.l.b16 %v1188
  %v1342 = vunpack.c.h.b16 %v1188
  %v1343 = vunpack.c.l.b16 %v1189
  %v1344 = vunpack.c.h.b16 %v1189
  %v1345 = vunpack.c.l.b16 %v1190
  %v1346 = vunpack.c.h.b16 %v1190
  %v1347 = vunpack.c.l.b16 %v1191
  %v1348 = vunpack.c.h.b16 %v1191
  %v1349 = vunpack.c.l.b16 %v1192
  %v1350 = vunpack.c.h.b16 %v1192
  %v1351 = vunpack.c.l.b16 %v1193
  %v1352 = vunpack.c.h.b16 %v1193
  %v1353 = vunpack.c.l.b16 %v1194
  %v1354 = vunpack.c.h.b16 %v1194
  %v1355 = vunpack.c.l.b16 %v1195
  %v1356 = vunpack.c.h.b16 %v1195
  %v1357 = vunpack.c.l.b16 %v1196
  %v1358 = vunpack.c.h.b16 %v1196
  %v1359 = vunpack.c.l.b16 %v1197
  %v1360 = vunpack.c.h.b16 %v1197
  %v1361 = vunpack.c.l.b16 %v1198
  %v1362 = vunpack.c.h.b16 %v1198
  %v1363 = vunpack.c.l.b16 %v1199
  %v1364 = vunpack.c.h.b16 %v1199
  %v1365 = vunpack.c.l.b16 %v1200
  %v1366 = vunpack.c.h.b16 %v1200
  %v1367 = vunpack.c.l.b16 %v1201
  %v1368 = vunpack.c.h.b16 %v1201
  %v1369 = vunpack.c.l.b16 %v1202
  %v1370 = vunpack.c.h.b16 %v1202
  %v1371 = vunpack.c.l.b16 %v1203
  %v1372 = vunpack.c.h.b16 %v1203
  %v1373 = vunpack.c.l.b16 %v1204
  %v1374 = vunpack.c.h.b16 %v1204
  %v1375 = vunpack.c.l.b16 %v1205
  %v1376 = vunpack.c.h.b16 %v1205
  %v1377 = vunpack.c.l.b16 %v1206
  %v1378 = vunpack.c.h.b16 %v1206
  %v1379 = vunpack.c.l.b16 %v1207
  %v1380 = vunpack.c.h.b16 %v1207
  %v1381 = vunpack.c.l.b16 %v1208
  %v1382 = vunpack.c.h.b16 %v1208
  %v1383 = vunpack.c.l.b16 %v1209
  %v1384 = vunpack.c.h.b16 %v1209
  %v1385 = vunpack.c.l.b16 %v1210
  %v1386 = vunpack.c.h.b16 %v1210
  %v1387 = vunpack.c.l.b16 %v1211
  %v1388 = vunpack.c.h.b16 %v1211
  %v1389 = vunpack.c.l.b16 %v1212
  %v1390 = vunpack.c.h.b16 %v1212
  %v1391 = vunpack.c.l.b16 %v1213
  %v1392 = vunpack.c.h.b16 %v1213
  %v1393 = vunpack.c.l.b16 %v1214
  %v1394 = vunpack.c.h.b16 %v1214
  %v1395 = vunpack.c.l.b16 %v1215
  %v1396 = vunpack.c.h.b16 %v1215
  %v1397 = vunpack.c.l.b16 %v1216
  %v1398 = vunpack.c.h.b16 %v1216
  %v1399 = vunpack.c.l.b16 %v1217
  %v1400 = vunpack.c.h.b16 %v1217
  %v1401 = vunpack.c.l.b16 %v1218
  %v1402 = vunpack.c.h.b16 %v1218
  %v1403 = vunpack.c.l.b16 %v1219
  %v1404 = vunpack.c.h.b16 %v1219
  %v1405 = vunpack.c.l.b16 %v1220
  %v1406 = vunpack.c.h.b16 %v1220
  %v1407 = vunpack.c.l.b16 %v1221
  %v1408 = vunpack.c.h.b16 %v1221
  %v1409 = vunpack.c.l.b16 %v1222
  %v1410 = vunpack.c.h.b16 %v1222
  %v1411 = vunpack.c.l.b16 %v1223
  %v1412 = vunpack.c.h.b16 %v1223
  %v1413 = vunpack.c.l.b16 %v1224
  %v1414 = vunpack.c.h.b16 %v1224
  %v1415 = vunpack.c.l.b16 %v1225
  %v1416 = vunpack.c.h.b16 %v1225
  %v1417 = vunpack.c.l.b16 %v1226
  %v1418 = vunpack.c.h.b16 %v1226
  %v1419 = vunpack.c.l.b16 %v1227
  %v1420 = vunpack.c.h.b16 %v1227
  %v1421 = vunpack.c.l.b16 %v1228
  %v1422 = vunpack.c.h.b16 %v1228
  %v1423 = vunpack.c.l.b16 %v1229
  %v1424 = vunpack.c.h.b16 %v1229
  %v1425 = vunpack.c.l.b16 %v1230
  %v1426 = vunpack.c.h.b16 %v1230
  %v1427 = vunpack.c.l.b16 %v1231
  %v1428 = vunpack.c.h.b16 %v1231
  %v1429 = vunpack.c.l.b16 %v1232
  %v1430 = vunpack.c.h.b16 %v1232
  %v1431 = vunpack.c.l.b16 %v1233
  %v1432 = vunpack.c.h.b16 %v1233
  %v1433 = vpack.c.b16 %v1309, %v1305
  %v1434 = vpack.c.b16 %v1310, %v1306
  %v1435 = vpack.c.b16 %v1311, %v1307
  %v1436 = vpack.c.b16 %v1312, %v1308
  %v1437 = vpack.c.b16 %v1317, %v1313
  %v1438 = vpack.c.b16 %v1318, %v1314
  %v1439 = vpack.c.b16 %v1319, %v1315
  %v1440 = vpack.c.b16 %v1320, %v1316
  %v1441 = vpack.c.b16 %v1325, %v1321
  %v1442 = vpack.c.b16 %v1326, %v1322
  %v1443 = vpack.c.b16 %v1327, %v1323
  %v1444 = vpack.c.b16 %v1328, %v1324
  %v1445 = vpack.c.b16 %v1333, %v1329
  %v1446 = vpack.c.b16 %v1334, %v1330
  %v1447 = vpack.c.b16 %v1335, %v1331
  %v1448 = vpack.c.b16 %v1336, %v1332
  %v1449 = vpack.c.b16 %v1341, %v1337
  %v1450 = vpack.c.b16 %v1342, %v1338
  %v1451 = vpack.c.b16 %v1343, %v1339
  %v1452 = vpack.c.b16 %v1344, %v1340
  %v1453 = vpack.c.b16 %v1349, %v1345
  %v1454 = vpack.c.b16 %v1350, %v1346
  %v1455 = vpack.c.b16 %v1351, %v1347
  %v1456 = vpack.c.b16 %v1352, %v1348
  %v1457 = vpack.c.b16 %v1357, %v1353
  %v1458 = vpack.c.b16 %v1358, %v1354
  %v1459 = vpack.c.b16 %v1359, %v1355
  %v1460 = vpack.c.b16 %v1360, %v1356
  %v1461 = vpack.c.b16 %v1365, %v1361
  %v1462 = vpack.c.b16 %v1366, %v1362
  %v1463 = vpack.c.b16 %v1367, %v1363
  %v1464 = vpack.c.b16 %v1368, %v1364
  %v1465 = vpack.c.b16 %v1373, %v1369
  %v1466 = vpack.c.b16 %v1374, %v1370
  %v1467 = vpack.c.b16 %v1375, %v1371
  %v1468 = vpack.c.b16 %v1376, %v1372
  %v1469 = vpack.c.b16 %v1381, %v1377
  %v1470 = vpack.c.b16 %v1382, %v1378
  %v1471 = vpack.c.b16 %v1383, %v1379
  %v1472 = vpack.c.b16 %v1384, %v1380
  %v1473 = vpack.c.b16 %v1389, %v1385
  %v1474 = vpack.c.b16 %v1390, %v1386
  %v1475 = vpack.c.b16 %v1391, %v1387
  %v1476 = vpack.c.b16 %v1392, %v1388
  %v1477 = vpack.c.b16 %v1397, %v1393
  %v1478 = vpack.c.b16 %v1398, %v1394
  %v1479 = vpack.c.b16 %v1399, %v1395
  %v1480 = vpack.c.b16 %v1400, %v1396
  %v1481 = vpack.c.b16 %v1405, %v1401
  %v1482 = vpack.c.b16 %v1406, %v1402
  %v1483 = vpack.c.b16 %v1407, %v1403
  %v1484 = vpack.c.b16 %v1408, %v1404
  %v1485 = vpack.c.b16 %v1413, %v1409
  %v1486 = vpack.c.b16 %v1414, %v1410
  %v1487 = vpack.c.b16 %v1415, %v1411
  %v1488 = vpack.c.b16 %v1416, %v1412
  %v1489 = vpack.c.b16 %v1421, %v1417
  %v1490 = vpack.c.b16 %v1422, %v1418
  %v1491 = vpack.c.b16 %v1423, %v1419
  %v1492 = vpack.c.b16 %v1424, %v1420
  %v1493 = vpack.c.b16 %v1429, %v1425
  %v1494 = vpack.c.b16 %v1430, %v1426
  %v1495 = vpack.c.b16 %v1431, %v1427
  %v1496 = vpack.c.b16 %v1432, %v1428
  %1561 = vmatprep.subr.bf16.mxu0 %v1434
  %1562 = vmatpush1.bf16.msra.mxu0 %v1433
  %1563 = vmatprep.subr.bf16.mxu0 %v1438
  %1564 = vmatpush1.bf16.msra.mxu0 %v1437
  %1565 = vmatprep.subr.bf16.mxu0 %v1442
  %1566 = vmatpush1.bf16.msra.mxu0 %v1441
  %1567 = vmatprep.subr.bf16.mxu0 %v1446
  %1568 = vmatpush1.bf16.msra.mxu0 %v1445
  %1569 = vmatprep.subr.bf16.mxu0 %v1450
  %1570 = vmatpush1.bf16.msra.mxu0 %v1449
  %1571 = vmatprep.subr.bf16.mxu0 %v1454
  %1572 = vmatpush1.bf16.msra.mxu0 %v1453
  %1573 = vmatprep.subr.bf16.mxu0 %v1458
  %1574 = vmatpush1.bf16.msra.mxu0 %v1457
  %1575 = vmatprep.subr.bf16.mxu0 %v1462
  %1576 = vmatpush1.bf16.msra.mxu0 %v1461
  %1577 = vmatprep.subr.bf16.mxu0 %v1466
  %1578 = vmatpush1.bf16.msra.mxu0 %v1465
  %1579 = vmatprep.subr.bf16.mxu0 %v1470
  %1580 = vmatpush1.bf16.msra.mxu0 %v1469
  %1581 = vmatprep.subr.bf16.mxu0 %v1474
  %1582 = vmatpush1.bf16.msra.mxu0 %v1473
  %1583 = vmatprep.subr.bf16.mxu0 %v1478
  %1584 = vmatpush1.bf16.msra.mxu0 %v1477
  %1585 = vmatprep.subr.bf16.mxu0 %v1482
  %1586 = vmatpush1.bf16.msra.mxu0 %v1481
  %1587 = vmatprep.subr.bf16.mxu0 %v1486
  %1588 = vmatpush1.bf16.msra.mxu0 %v1485
  %1589 = vmatprep.subr.bf16.mxu0 %v1490
  %1590 = vmatpush1.bf16.msra.mxu0 %v1489
  %1591 = vmatprep.subr.bf16.mxu0 %v1494
  %1592 = vmatpush1.bf16.msra.mxu0 %v1493
  %1593 = vmatprep.mubr.bf16.mxu0 %v1238
  %1594 = vmatmul.mubr.bf16.gmra.mrb[0].mxu0 %v1237
  %v1595 = vpop.f32.mrb[0].mxu0
  %v1596 = vadd.f32 %v30, %v1595
  %v1597 = vpop.f32.mrb[0].mxu0
  %v1598 = vadd.f32 %v34, %v1597
  %v1599 = vpop.f32.mrb[0].mxu0
  %v1600 = vpop.f32.mrb[0].mxu0
  %1601 = vdwg.mxu0
  %1602 = vmatprep.subr.bf16.mxu0 %v1436
  %1603 = vmatpush1.bf16.msra.mxu0 %v1435
  %1604 = vmatprep.subr.bf16.mxu0 %v1440
  %1605 = vmatpush1.bf16.msra.mxu0 %v1439
  %1606 = vmatprep.subr.bf16.mxu0 %v1444
  %1607 = vmatpush1.bf16.msra.mxu0 %v1443
  %1608 = vmatprep.subr.bf16.mxu0 %v1448
  %1609 = vmatpush1.bf16.msra.mxu0 %v1447
  %1610 = vmatprep.subr.bf16.mxu0 %v1452
  %1611 = vmatpush1.bf16.msra.mxu0 %v1451
  %1612 = vmatprep.subr.bf16.mxu0 %v1456
  %1613 = vmatpush1.bf16.msra.mxu0 %v1455
  %1614 = vmatprep.subr.bf16.mxu0 %v1460
  %1615 = vmatpush1.bf16.msra.mxu0 %v1459
  %1616 = vmatprep.subr.bf16.mxu0 %v1464
  %1617 = vmatpush1.bf16.msra.mxu0 %v1463
  %1618 = vmatprep.subr.bf16.mxu0 %v1468
  %1619 = vmatpush1.bf16.msra.mxu0 %v1467
  %1620 = vmatprep.subr.bf16.mxu0 %v1472
  %1621 = vmatpush1.bf16.msra.mxu0 %v1471
  %1622 = vmatprep.subr.bf16.mxu0 %v1476
  %1623 = vmatpush1.bf16.msra.mxu0 %v1475
  %1624 = vmatprep.subr.bf16.mxu0 %v1480
  %1625 = vmatpush1.bf16.msra.mxu0 %v1479
  %1626 = vmatprep.subr.bf16.mxu0 %v1484
  %1627 = vmatpush1.bf16.msra.mxu0 %v1483
  %1628 = vmatprep.subr.bf16.mxu0 %v1488
  %1629 = vmatpush1.bf16.msra.mxu0 %v1487
  %1630 = vmatprep.subr.bf16.mxu0 %v1492
  %1631 = vmatpush1.bf16.msra.mxu0 %v1491
  %1632 = vmatprep.subr.bf16.mxu0 %v1496
  %1633 = vmatpush1.bf16.msra.mxu0 %v1495
  %1634 = vmatprep.mubr.bf16.mxu0 %v1238
  %1635 = vmatmul.mubr.bf16.gmra.mrb[0].mxu0 %v1237
  %v1636 = vpop.f32.mrb[0].mxu0
  %v1637 = vadd.f32 %v38, %v1636
  %v1638 = vpop.f32.mrb[0].mxu0
  %v1639 = vadd.f32 %v42, %v1638
  %v1640 = vpop.f32.mrb[0].mxu0
  %v1641 = vpop.f32.mrb[0].mxu0
  %1642 = vdwg.mxu0
  %v1643 = vld [vmem:[#allocation4] sm:$0xff]
  %v1644 = vxor.u32 %v1596, 2147483648
  %v1645 = vmul.f32 %v1644, 1.442695
  %v1646 = vpow.pop %v1645
  %v1647 = vadd.f32 %v1646, 1.0
  %v1648 = vrcp.pop %v1647
  %v1649 = vmul.f32 1.0, %v1648
  %v1650 = vxor.u32 %v1598, 2147483648
  %v1651 = vmul.f32 %v1650, 1.442695
  %v1652 = vpow.pop %v1651
  %v1653 = vadd.f32 %v1652, 1.0
  %v1654 = vrcp.pop %v1653
  %v1655 = vmul.f32 1.0, %v1654
  %v1656 = vtanh.pop %v1637
  %v1657 = vxor.u32 %v1639, 2147483648
  %v1658 = vmul.f32 %v1657, 1.442695
  %v1659 = vpow.pop %v1658
  %v1660 = vadd.f32 %v1659, 1.0
  %v1661 = vrcp.pop %v1660
  %v1662 = vmul.f32 1.0, %v1661
  %v1663 = vmul.f32 %v1655, %v1643
  %v1664 = vmul.f32 %v1649, %v1656
  %v1665 = vadd.f32 %v1663, %v1664
  %v1666 = vtanh.pop %v1665
  %v1667 = vmul.f32 %v1662, %v1666
  %1668 = vst [vmem:[#allocation4] sm:$0xff] %v1665
  %v1669 = vpack.c.bf16 %v1667, %v1667
  %1670 = vst [vmem:[#allocation2 + $0x4] sm:$0xf] %v1669
  %s1671 = scalar_lea.vmem %s4, 4
  %1672 = vst [vmem:[%s1671] sm:$0xf] %v1669
  %v1673 = vld [vmem:[#allocation2] sm:$0xf]
  %v1674 = vld [vmem:[%s1] sm:$0xff]
  %v1675 = vld [vmem:[%s1 + $0x8] sm:$0xff]
  %v1676 = vld [vmem:[%s1 + $0x10] sm:$0xff]
  %v1677 = vld [vmem:[%s1 + $0x18] sm:$0xff]
  %v1678 = vld [vmem:[%s1 + $0x20] sm:$0xff]
  %v1679 = vld [vmem:[%s1 + $0x28] sm:$0xff]
  %v1680 = vld [vmem:[%s1 + $0x30] sm:$0xff]
  %v1681 = vld [vmem:[%s1 + $0x38] sm:$0xff]
  %v1682 = vld [vmem:[%s1 + $0x40] sm:$0xff]
  %v1683 = vld [vmem:[%s1 + $0x48] sm:$0xff]
  %v1684 = vld [vmem:[%s1 + $0x50] sm:$0xff]
  %v1685 = vld [vmem:[%s1 + $0x58] sm:$0xff]
  %v1686 = vld [vmem:[%s1 + $0x60] sm:$0xff]
  %v1687 = vld [vmem:[%s1 + $0x68] sm:$0xff]
  %v1688 = vld [vmem:[%s1 + $0x70] sm:$0xff]
  %v1689 = vld [vmem:[%s1 + $0x78] sm:$0xff]
  %v1690 = vld [vmem:[%s1 + $0x80] sm:$0xff]
  %v1691 = vld [vmem:[%s1 + $0x88] sm:$0xff]
  %v1692 = vld [vmem:[%s1 + $0x90] sm:$0xff]
  %v1693 = vld [vmem:[%s1 + $0x98] sm:$0xff]
  %v1694 = vld [vmem:[%s1 + $0xa0] sm:$0xff]
  %v1695 = vld [vmem:[%s1 + $0xa8] sm:$0xff]
  %v1696 = vld [vmem:[%s1 + $0xb0] sm:$0xff]
  %v1697 = vld [vmem:[%s1 + $0xb8] sm:$0xff]
  %v1698 = vld [vmem:[%s1 + $0xc0] sm:$0xff]
  %v1699 = vld [vmem:[%s1 + $0xc8] sm:$0xff]
  %v1700 = vld [vmem:[%s1 + $0xd0] sm:$0xff]
  %v1701 = vld [vmem:[%s1 + $0xd8] sm:$0xff]
  %v1702 = vld [vmem:[%s1 + $0xe0] sm:$0xff]
  %v1703 = vld [vmem:[%s1 + $0xe8] sm:$0xff]
  %v1704 = vld [vmem:[%s1 + $0xf0] sm:$0xff]
  %v1705 = vld [vmem:[%s1 + $0xf8] sm:$0xff]
  %s1706 = scalar_lea.vmem %s0, 32
  %v1707 = vld [vmem:[%s1706] sm:$0xff]
  %v1708 = vld [vmem:[%s1706 + $0x8] sm:$0xff]
  %v1709 = vunpack.c.l.bf16 %v1707
  %v1710 = vunpack.c.h.bf16 %v1707
  %v1711 = vunpack.c.l.bf16 %v1708
  %v1712 = vunpack.c.h.bf16 %v1708
  %v1745 = vunpack.c.l.b16 %v1674
  %v1746 = vunpack.c.h.b16 %v1674
  %v1747 = vunpack.c.l.b16 %v1675
  %v1748 = vunpack.c.h.b16 %v1675
  %v1749 = vunpack.c.l.b16 %v1676
  %v1750 = vunpack.c.h.b16 %v1676
  %v1751 = vunpack.c.l.b16 %v1677
  %v1752 = vunpack.c.h.b16 %v1677
  %v1753 = vunpack.c.l.b16 %v1678
  %v1754 = vunpack.c.h.b16 %v1678
  %v1755 = vunpack.c.l.b16 %v1679
  %v1756 = vunpack.c.h.b16 %v1679
  %v1757 = vunpack.c.l.b16 %v1680
  %v1758 = vunpack.c.h.b16 %v1680
  %v1759 = vunpack.c.l.b16 %v1681
  %v1760 = vunpack.c.h.b16 %v1681
  %v1761 = vunpack.c.l.b16 %v1682
  %v1762 = vunpack.c.h.b16 %v1682
  %v1763 = vunpack.c.l.b16 %v1683
  %v1764 = vunpack.c.h.b16 %v1683
  %v1765 = vunpack.c.l.b16 %v1684
  %v1766 = vunpack.c.h.b16 %v1684
  %v1767 = vunpack.c.l.b16 %v1685
  %v1768 = vunpack.c.h.b16 %v1685
  %v1769 = vunpack.c.l.b16 %v1686
  %v1770 = vunpack.c.h.b16 %v1686
  %v1771 = vunpack.c.l.b16 %v1687
  %v1772 = vunpack.c.h.b16 %v1687
  %v1773 = vunpack.c.l.b16 %v1688
  %v1774 = vunpack.c.h.b16 %v1688
  %v1775 = vunpack.c.l.b16 %v1689
  %v1776 = vunpack.c.h.b16 %v1689
  %v1777 = vunpack.c.l.b16 %v1690
  %v1778 = vunpack.c.h.b16 %v1690
  %v1779 = vunpack.c.l.b16 %v1691
  %v1780 = vunpack.c.h.b16 %v1691
  %v1781 = vunpack.c.l.b16 %v1692
  %v1782 = vunpack.c.h.b16 %v1692
  %v1783 = vunpack.c.l.b16 %v1693
  %v1784 = vunpack.c.h.b16 %v1693
  %v1785 = vunpack.c.l.b16 %v1694
  %v1786 = vunpack.c.h.b16 %v1694
  %v1787 = vunpack.c.l.b16 %v1695
  %v1788 = vunpack.c.h.b16 %v1695
  %v1789 = vunpack.c.l.b16 %v1696
  %v1790 = vunpack.c.h.b16 %v1696
  %v1791 = vunpack.c.l.b16 %v1697
  %v1792 = vunpack.c.h.b16 %v1697
  %v1793 = vunpack.c.l.b16 %v1698
  %v1794 = vunpack.c.h.b16 %v1698
  %v1795 = vunpack.c.l.b16 %v1699
  %v1796 = vunpack.c.h.b16 %v1699
  %v1797 = vunpack.c.l.b16 %v1700
  %v1798 = vunpack.c.h.b16 %v1700
  %v1799 = vunpack.c.l.b16 %v1701
  %v1800 = vunpack.c.h.b16 %v1701
  %v1801 = vunpack.c.l.b16 %v1702
  %v1802 = vunpack.c.h.b16 %v1702
  %v1803 = vunpack.c.l.b16 %v1703
  %v1804 = vunpack.c.h.b16 %v1703
  %v1805 = vunpack.c.l.b16 %v1704
  %v1806 = vunpack.c.h.b16 %v1704
  %v1807 = vunpack.c.l.b16 %v1705
  %v1808 = vunpack.c.h.b16 %v1705
  %v1809 = vpack.c.b16 %v1749, %v1745
  %v1810 = vpack.c.b16 %v1750, %v1746
  %v1811 = vpack.c.b16 %v1751, %v1747
  %v1812 = vpack.c.b16 %v1752, %v1748
  %v1813 = vpack.c.b16 %v1757, %v1753
  %v1814 = vpack.c.b16 %v1758, %v1754
  %v1815 = vpack.c.b16 %v1759, %v1755
  %v1816 = vpack.c.b16 %v1760, %v1756
  %v1817 = vpack.c.b16 %v1765, %v1761
  %v1818 = vpack.c.b16 %v1766, %v1762
  %v1819 = vpack.c.b16 %v1767, %v1763
  %v1820 = vpack.c.b16 %v1768, %v1764
  %v1821 = vpack.c.b16 %v1773, %v1769
  %v1822 = vpack.c.b16 %v1774, %v1770
  %v1823 = vpack.c.b16 %v1775, %v1771
  %v1824 = vpack.c.b16 %v1776, %v1772
  %v1825 = vpack.c.b16 %v1781, %v1777
  %v1826 = vpack.c.b16 %v1782, %v1778
  %v1827 = vpack.c.b16 %v1783, %v1779
  %v1828 = vpack.c.b16 %v1784, %v1780
  %v1829 = vpack.c.b16 %v1789, %v1785
  %v1830 = vpack.c.b16 %v1790, %v1786
  %v1831 = vpack.c.b16 %v1791, %v1787
  %v1832 = vpack.c.b16 %v1792, %v1788
  %v1833 = vpack.c.b16 %v1797, %v1793
  %v1834 = vpack.c.b16 %v1798, %v1794
  %v1835 = vpack.c.b16 %v1799, %v1795
  %v1836 = vpack.c.b16 %v1800, %v1796
  %v1837 = vpack.c.b16 %v1805, %v1801
  %v1838 = vpack.c.b16 %v1806, %v1802
  %v1839 = vpack.c.b16 %v1807, %v1803
  %v1840 = vpack.c.b16 %v1808, %v1804
  %1873 = vmatprep.subr.bf16.mxu0 %v1810
  %1874 = vmatpush1.bf16.msra.mxu0 %v1809
  %1875 = vmatprep.subr.bf16.mxu0 %v1814
  %1876 = vmatpush1.bf16.msra.mxu0 %v1813
  %1877 = vmatprep.subr.bf16.mxu0 %v1818
  %1878 = vmatpush1.bf16.msra.mxu0 %v1817
  %1879 = vmatprep.subr.bf16.mxu0 %v1822
  %1880 = vmatpush1.bf16.msra.mxu0 %v1821
  %1881 = vmatprep.subr.bf16.mxu0 %v1826
  %1882 = vmatpush1.bf16.msra.mxu0 %v1825
  %1883 = vmatprep.subr.bf16.mxu0 %v1830
  %1884 = vmatpush1.bf16.msra.mxu0 %v1829
  %1885 = vmatprep.subr.bf16.mxu0 %v1834
  %1886 = vmatpush1.bf16.msra.mxu0 %v1833
  %1887 = vmatprep.subr.bf16.mxu0 %v1838
  %1888 = vmatpush1.bf16.msra.mxu0 %v1837
  %1889 = vmatprep.subr.bf16.mxu0 0
  %1890 = vmatpush1.bf16.msra.mxu0 0
  %1891 = vmatprep.subr.bf16.mxu0 0
  %1892 = vmatpush1.bf16.msra.mxu0 0
  %1893 = vmatprep.subr.bf16.mxu0 0
  %1894 = vmatpush1.bf16.msra.mxu0 0
  %1895 = vmatprep.subr.bf16.mxu0 0
  %1896 = vmatpush1.bf16.msra.mxu0 0
  %1897 = vmatprep.subr.bf16.mxu0 0
  %1898 = vmatpush1.bf16.msra.mxu0 0
  %1899 = vmatprep.subr.bf16.mxu0 0
  %1900 = vmatpush1.bf16.msra.mxu0 0
  %1901 = vmatprep.subr.bf16.mxu0 0
  %1902 = vmatpush1.bf16.msra.mxu0 0
  %1903 = vmatprep.subr.bf16.mxu0 0
  %1904 = vmatpush1.bf16.msra.mxu0 0
  %1905 = vmatprep.mubr.bf16.mxu0 0
  %1906 = vmatmul.mubr.bf16.gmra.mrb[0].mxu0 %v1673
  %v1907 = vpop.f32.mrb[0].mxu0
  %v1908 = vadd.f32 %v1709, %v1907
  %v1909 = vpop.f32.mrb[0].mxu0
  %v1910 = vadd.f32 %v1710, %v1909
  %v1911 = vpop.f32.mrb[0].mxu0
  %v1912 = vpop.f32.mrb[0].mxu0
  %1913 = vdwg.mxu0
  %1914 = vmatprep.subr.bf16.mxu0 %v1812
  %1915 = vmatpush1.bf16.msra.mxu0 %v1811
  %1916 = vmatprep.subr.bf16.mxu0 %v1816
  %1917 = vmatpush1.bf16.msra.mxu0 %v1815
  %1918 = vmatprep.subr.bf16.mxu0 %v1820
  %1919 = vmatpush1.bf16.msra.mxu0 %v1819
  %1920 = vmatprep.subr.bf16.mxu0 %v1824
  %1921 = vmatpush1.bf16.msra.mxu0 %v1823
  %1922 = vmatprep.subr.bf16.mxu0 %v1828
  %1923 = vmatpush1.bf16.msra.mxu0 %v1827
  %1924 = vmatprep.subr.bf16.mxu0 %v1832
  %1925 = vmatpush1.bf16.msra.mxu0 %v1831
  %1926 = vmatprep.subr.bf16.mxu0 %v1836
  %1927 = vmatpush1.bf16.msra.mxu0 %v1835
  %1928 = vmatprep.subr.bf16.mxu0 %v1840
  %1929 = vmatpush1.bf16.msra.mxu0 %v1839
  %1930 = vmatprep.subr.bf16.mxu0 0
  %1931 = vmatpush1.bf16.msra.mxu0 0
  %1932 = vmatprep.subr.bf16.mxu0 0
  %1933 = vmatpush1.bf16.msra.mxu0 0
  %1934 = vmatprep.subr.bf16.mxu0 0
  %1935 = vmatpush1.bf16.msra.mxu0 0
  %1936 = vmatprep.subr.bf16.mxu0 0
  %1937 = vmatpush1.bf16.msra.mxu0 0
  %1938 = vmatprep.subr.bf16.mxu0 0
  %1939 = vmatpush1.bf16.msra.mxu0 0
  %1940 = vmatprep.subr.bf16.mxu0 0
  %1941 = vmatpush1.bf16.msra.mxu0 0
  %1942 = vmatprep.subr.bf16.mxu0 0
  %1943 = vmatpush1.bf16.msra.mxu0 0
  %1944 = vmatprep.subr.bf16.mxu0 0
  %1945 = vmatpush1.bf16.msra.mxu0 0
  %1946 = vmatprep.mubr.bf16.mxu0 0
  %1947 = vmatmul.mubr.bf16.gmra.mrb[0].mxu0 %v1673
  %v1948 = vpop.f32.mrb[0].mxu0
  %v1949 = vadd.f32 %v1711, %v1948
  %v1950 = vpop.f32.mrb[0].mxu0
  %v1951 = vadd.f32 %v1712, %v1950
  %v1952 = vpop.f32.mrb[0].mxu0
  %v1953 = vpop.f32.mrb[0].mxu0
  %1954 = vdwg.mxu0
  %v1955 = vld [vmem:[#allocation3] sm:$0xff]
  %v1956 = vxor.u32 %v1908, 2147483648
  %v1957 = vmul.f32 %v1956, 1.442695
  %v1958 = vpow.pop %v1957
  %v1959 = vadd.f32 %v1958, 1.0
  %v1960 = vrcp.pop %v1959
  %v1961 = vmul.f32 1.0, %v1960
  %v1962 = vxor.u32 %v1910, 2147483648
  %v1963 = vmul.f32 %v1962, 1.442695
  %v1964 = vpow.pop %v1963
  %v1965 = vadd.f32 %v1964, 1.0
  %v1966 = vrcp.pop %v1965
  %v1967 = vmul.f32 1.0, %v1966
  %v1968 = vtanh.pop %v1949
  %v1969 = vxor.u32 %v1951, 2147483648
  %v1970 = vmul.f32 %v1969, 1.442695
  %v1971 = vpow.pop %v1970
  %v1972 = vadd.f32 %v1971, 1.0
  %v1973 = vrcp.pop %v1972
  %v1974 = vmul.f32 1.0, %v1973
  %v1975 = vmul.f32 %v1967, %v1955
  %v1976 = vmul.f32 %v1961, %v1968
  %v1977 = vadd.f32 %v1975, %v1976
  %v1978 = vtanh.pop %v1977
  %v1979 = vmul.f32 %v1974, %v1978
  %1980 = vst [vmem:[#allocation3] sm:$0xff] %v1977
  %v1981 = vpack.c.bf16 %v1979, %v1979
  %1982 = vst [vmem:[#allocation2] sm:$0xf] %v1981
  %v1983 = vld [vmem:[#allocation2] sm:$0xff]
  %v1984 = vld [vmem:[%s2] sm:$0xff]
  %v1985 = vld [vmem:[%s2 + $0x8] sm:$0xff]
  %v1986 = vld [vmem:[%s2 + $0x10] sm:$0xff]
  %v1987 = vld [vmem:[%s2 + $0x18] sm:$0xff]
  %v1988 = vld [vmem:[%s2 + $0x20] sm:$0xff]
  %v1989 = vld [vmem:[%s2 + $0x28] sm:$0xff]
  %v1990 = vld [vmem:[%s2 + $0x30] sm:$0xff]
  %v1991 = vld [vmem:[%s2 + $0x38] sm:$0xff]
  %v1992 = vld [vmem:[%s2 + $0x40] sm:$0xff]
  %v1993 = vld [vmem:[%s2 + $0x48] sm:$0xff]
  %v1994 = vld [vmem:[%s2 + $0x50] sm:$0xff]
  %v1995 = vld [vmem:[%s2 + $0x58] sm:$0xff]
  %v1996 = vld [vmem:[%s2 + $0x60] sm:$0xff]
  %v1997 = vld [vmem:[%s2 + $0x68] sm:$0xff]
  %v1998 = vld [vmem:[%s2 + $0x70] sm:$0xff]
  %v1999 = vld [vmem:[%s2 + $0x78] sm:$0xff]
  %v2000 = vld [vmem:[%s2 + $0x80] sm:$0xff]
  %v2001 = vld [vmem:[%s2 + $0x88] sm:$0xff]
  %v2002 = vld [vmem:[%s2 + $0x90] sm:$0xff]
  %v2003 = vld [vmem:[%s2 + $0x98] sm:$0xff]
  %v2004 = vld [vmem:[%s2 + $0xa0] sm:$0xff]
  %v2005 = vld [vmem:[%s2 + $0xa8] sm:$0xff]
  %v2006 = vld [vmem:[%s2 + $0xb0] sm:$0xff]
  %v2007 = vld [vmem:[%s2 + $0xb8] sm:$0xff]
  %v2008 = vld [vmem:[%s2 + $0xc0] sm:$0xff]
  %v2009 = vld [vmem:[%s2 + $0xc8] sm:$0xff]
  %v2010 = vld [vmem:[%s2 + $0xd0] sm:$0xff]
  %v2011 = vld [vmem:[%s2 + $0xd8] sm:$0xff]
  %v2012 = vld [vmem:[%s2 + $0xe0] sm:$0xff]
  %v2013 = vld [vmem:[%s2 + $0xe8] sm:$0xff]
  %v2014 = vld [vmem:[%s2 + $0xf0] sm:$0xff]
  %v2015 = vld [vmem:[%s2 + $0xf8] sm:$0xff]
  %v2016 = vld [vmem:[%s2 + $0x100] sm:$0xff]
  %v2017 = vld [vmem:[%s2 + $0x108] sm:$0xff]
  %v2018 = vld [vmem:[%s2 + $0x110] sm:$0xff]
  %v2019 = vld [vmem:[%s2 + $0x118] sm:$0xff]
  %v2020 = vld [vmem:[%s2 + $0x120] sm:$0xff]
  %v2021 = vld [vmem:[%s2 + $0x128] sm:$0xff]
  %v2022 = vld [vmem:[%s2 + $0x130] sm:$0xff]
  %v2023 = vld [vmem:[%s2 + $0x138] sm:$0xff]
  %v2024 = vld [vmem:[%s2 + $0x140] sm:$0xff]
  %v2025 = vld [vmem:[%s2 + $0x148] sm:$0xff]
  %v2026 = vld [vmem:[%s2 + $0x150] sm:$0xff]
  %v2027 = vld [vmem:[%s2 + $0x158] sm:$0xff]
  %v2028 = vld [vmem:[%s2 + $0x160] sm:$0xff]
  %v2029 = vld [vmem:[%s2 + $0x168] sm:$0xff]
  %v2030 = vld [vmem:[%s2 + $0x170] sm:$0xff]
  %v2031 = vld [vmem:[%s2 + $0x178] sm:$0xff]
  %v2032 = vld [vmem:[%s2 + $0x180] sm:$0xff]
  %v2033 = vld [vmem:[%s2 + $0x188] sm:$0xff]
  %v2034 = vld [vmem:[%s2 + $0x190] sm:$0xff]
  %v2035 = vld [vmem:[%s2 + $0x198] sm:$0xff]
  %v2036 = vld [vmem:[%s2 + $0x1a0] sm:$0xff]
  %v2037 = vld [vmem:[%s2 + $0x1a8] sm:$0xff]
  %v2038 = vld [vmem:[%s2 + $0x1b0] sm:$0xff]
  %v2039 = vld [vmem:[%s2 + $0x1b8] sm:$0xff]
  %v2040 = vld [vmem:[%s2 + $0x1c0] sm:$0xff]
  %v2041 = vld [vmem:[%s2 + $0x1c8] sm:$0xff]
  %v2042 = vld [vmem:[%s2 + $0x1d0] sm:$0xff]
  %v2043 = vld [vmem:[%s2 + $0x1d8] sm:$0xff]
  %v2044 = vld [vmem:[%s2 + $0x1e0] sm:$0xff]
  %v2045 = vld [vmem:[%s2 + $0x1e8] sm:$0xff]
  %v2046 = vld [vmem:[%s2 + $0x1f0] sm:$0xff]
  %v2047 = vld [vmem:[%s2 + $0x1f8] sm:$0xff]
  %v2049 = vunpack.c.l.b16 %v1983
  %v2050 = vunpack.c.h.b16 %v1983
  %v2051 = vpack.c.b16 %v2049, %v2049
  %v2052 = vpack.c.b16 %v2050, %v2050
  %v2119 = vunpack.c.l.b16 %v1984
  %v2120 = vunpack.c.h.b16 %v1984
  %v2121 = vunpack.c.l.b16 %v1985
  %v2122 = vunpack.c.h.b16 %v1985
  %v2123 = vunpack.c.l.b16 %v1986
  %v2124 = vunpack.c.h.b16 %v1986
  %v2125 = vunpack.c.l.b16 %v1987
  %v2126 = vunpack.c.h.b16 %v1987
  %v2127 = vunpack.c.l.b16 %v1988
  %v2128 = vunpack.c.h.b16 %v1988
  %v2129 = vunpack.c.l.b16 %v1989
  %v2130 = vunpack.c.h.b16 %v1989
  %v2131 = vunpack.c.l.b16 %v1990
  %v2132 = vunpack.c.h.b16 %v1990
  %v2133 = vunpack.c.l.b16 %v1991
  %v2134 = vunpack.c.h.b16 %v1991
  %v2135 = vunpack.c.l.b16 %v1992
  %v2136 = vunpack.c.h.b16 %v1992
  %v2137 = vunpack.c.l.b16 %v1993
  %v2138 = vunpack.c.h.b16 %v1993
  %v2139 = vunpack.c.l.b16 %v1994
  %v2140 = vunpack.c.h.b16 %v1994
  %v2141 = vunpack.c.l.b16 %v1995
  %v2142 = vunpack.c.h.b16 %v1995
  %v2143 = vunpack.c.l.b16 %v1996
  %v2144 = vunpack.c.h.b16 %v1996
  %v2145 = vunpack.c.l.b16 %v1997
  %v2146 = vunpack.c.h.b16 %v1997
  %v2147 = vunpack.c.l.b16 %v1998
  %v2148 = vunpack.c.h.b16 %v1998
  %v2149 = vunpack.c.l.b16 %v1999
  %v2150 = vunpack.c.h.b16 %v1999
  %v2151 = vunpack.c.l.b16 %v2000
  %v2152 = vunpack.c.h.b16 %v2000
  %v2153 = vunpack.c.l.b16 %v2001
  %v2154 = vunpack.c.h.b16 %v2001
  %v2155 = vunpack.c.l.b16 %v2002
  %v2156 = vunpack.c.h.b16 %v2002
  %v2157 = vunpack.c.l.b16 %v2003
  %v2158 = vunpack.c.h.b16 %v2003
  %v2159 = vunpack.c.l.b16 %v2004
  %v2160 = vunpack.c.h.b16 %v2004
  %v2161 = vunpack.c.l.b16 %v2005
  %v2162 = vunpack.c.h.b16 %v2005
  %v2163 = vunpack.c.l.b16 %v2006
  %v2164 = vunpack.c.h.b16 %v2006
  %v2165 = vunpack.c.l.b16 %v2007
  %v2166 = vunpack.c.h.b16 %v2007
  %v2167 = vunpack.c.l.b16 %v2008
  %v2168 = vunpack.c.h.b16 %v2008
  %v2169 = vunpack.c.l.b16 %v2009
  %v2170 = vunpack.c.h.b16 %v2009
  %v2171 = vunpack.c.l.b16 %v2010
  %v2172 = vunpack.c.h.b16 %v2010
  %v2173 = vunpack.c.l.b16 %v2011
  %v2174 = vunpack.c.h.b16 %v2011
  %v2175 = vunpack.c.l.b16 %v2012
  %v2176 = vunpack.c.h.b16 %v2012
  %v2177 = vunpack.c.l.b16 %v2013
  %v2178 = vunpack.c.h.b16 %v2013
  %v2179 = vunpack.c.l.b16 %v2014
  %v2180 = vunpack.c.h.b16 %v2014
  %v2181 = vunpack.c.l.b16 %v2015
  %v2182 = vunpack.c.h.b16 %v2015
  %v2183 = vunpack.c.l.b16 %v2016
  %v2184 = vunpack.c.h.b16 %v2016
  %v2185 = vunpack.c.l.b16 %v2017
  %v2186 = vunpack.c.h.b16 %v2017
  %v2187 = vunpack.c.l.b16 %v2018
  %v2188 = vunpack.c.h.b16 %v2018
  %v2189 = vunpack.c.l.b16 %v2019
  %v2190 = vunpack.c.h.b16 %v2019
  %v2191 = vunpack.c.l.b16 %v2020
  %v2192 = vunpack.c.h.b16 %v2020
  %v2193 = vunpack.c.l.b16 %v2021
  %v2194 = vunpack.c.h.b16 %v2021
  %v2195 = vunpack.c.l.b16 %v2022
  %v2196 = vunpack.c.h.b16 %v2022
  %v2197 = vunpack.c.l.b16 %v2023
  %v2198 = vunpack.c.h.b16 %v2023
  %v2199 = vunpack.c.l.b16 %v2024
  %v2200 = vunpack.c.h.b16 %v2024
  %v2201 = vunpack.c.l.b16 %v2025
  %v2202 = vunpack.c.h.b16 %v2025
  %v2203 = vunpack.c.l.b16 %v2026
  %v2204 = vunpack.c.h.b16 %v2026
  %v2205 = vunpack.c.l.b16 %v2027
  %v2206 = vunpack.c.h.b16 %v2027
  %v2207 = vunpack.c.l.b16 %v2028
  %v2208 = vunpack.c.h.b16 %v2028
  %v2209 = vunpack.c.l.b16 %v2029
  %v2210 = vunpack.c.h.b16 %v2029
  %v2211 = vunpack.c.l.b16 %v2030
  %v2212 = vunpack.c.h.b16 %v2030
  %v2213 = vunpack.c.l.b16 %v2031
  %v2214 = vunpack.c.h.b16 %v2031
  %v2215 = vunpack.c.l.b16 %v2032
  %v2216 = vunpack.c.h.b16 %v2032
  %v2217 = vunpack.c.l.b16 %v2033
  %v2218 = vunpack.c.h.b16 %v2033
  %v2219 = vunpack.c.l.b16 %v2034
  %v2220 = vunpack.c.h.b16 %v2034
  %v2221 = vunpack.c.l.b16 %v2035
  %v2222 = vunpack.c.h.b16 %v2035
  %v2223 = vunpack.c.l.b16 %v2036
  %v2224 = vunpack.c.h.b16 %v2036
  %v2225 = vunpack.c.l.b16 %v2037
  %v2226 = vunpack.c.h.b16 %v2037
  %v2227 = vunpack.c.l.b16 %v2038
  %v2228 = vunpack.c.h.b16 %v2038
  %v2229 = vunpack.c.l.b16 %v2039
  %v2230 = vunpack.c.h.b16 %v2039
  %v2231 = vunpack.c.l.b16 %v2040
  %v2232 = vunpack.c.h.b16 %v2040
  %v2233 = vunpack.c.l.b16 %v2041
  %v2234 = vunpack.c.h.b16 %v2041
  %v2235 = vunpack.c.l.b16 %v2042
  %v2236 = vunpack.c.h.b16 %v2042
  %v2237 = vunpack.c.l.b16 %v2043
  %v2238 = vunpack.c.h.b16 %v2043
  %v2239 = vunpack.c.l.b16 %v2044
  %v2240 = vunpack.c.h.b16 %v2044
  %v2241 = vunpack.c.l.b16 %v2045
  %v2242 = vunpack.c.h.b16 %v2045
  %v2243 = vunpack.c.l.b16 %v2046
  %v2244 = vunpack.c.h.b16 %v2046
  %v2245 = vunpack.c.l.b16 %v2047
  %v2246 = vunpack.c.h.b16 %v2047
  %v2247 = vpack.c.b16 %v2123, %v2119
  %v2248 = vpack.c.b16 %v2124, %v2120
  %v2249 = vpack.c.b16 %v2125, %v2121
  %v2250 = vpack.c.b16 %v2126, %v2122
  %v2251 = vpack.c.b16 %v2131, %v2127
  %v2252 = vpack.c.b16 %v2132, %v2128
  %v2253 = vpack.c.b16 %v2133, %v2129
  %v2254 = vpack.c.b16 %v2134, %v2130
  %v2255 = vpack.c.b16 %v2139, %v2135
  %v2256 = vpack.c.b16 %v2140, %v2136
  %v2257 = vpack.c.b16 %v2141, %v2137
  %v2258 = vpack.c.b16 %v2142, %v2138
  %v2259 = vpack.c.b16 %v2147, %v2143
  %v2260 = vpack.c.b16 %v2148, %v2144
  %v2261 = vpack.c.b16 %v2149, %v2145
  %v2262 = vpack.c.b16 %v2150, %v2146
  %v2263 = vpack.c.b16 %v2155, %v2151
  %v2264 = vpack.c.b16 %v2156, %v2152
  %v2265 = vpack.c.b16 %v2157, %v2153
  %v2266 = vpack.c.b16 %v2158, %v2154
  %v2267 = vpack.c.b16 %v2163, %v2159
  %v2268 = vpack.c.b16 %v2164, %v2160
  %v2269 = vpack.c.b16 %v2165, %v2161
  %v2270 = vpack.c.b16 %v2166, %v2162
  %v2271 = vpack.c.b16 %v2171, %v2167
  %v2272 = vpack.c.b16 %v2172, %v2168
  %v2273 = vpack.c.b16 %v2173, %v2169
  %v2274 = vpack.c.b16 %v2174, %v2170
  %v2275 = vpack.c.b16 %v2179, %v2175
  %v2276 = vpack.c.b16 %v2180, %v2176
  %v2277 = vpack.c.b16 %v2181, %v2177
  %v2278 = vpack.c.b16 %v2182, %v2178
  %v2279 = vpack.c.b16 %v2187, %v2183
  %v2280 = vpack.c.b16 %v2188, %v2184
  %v2281 = vpack.c.b16 %v2189, %v2185
  %v2282 = vpack.c.b16 %v2190, %v2186
  %v2283 = vpack.c.b16 %v2195, %v2191
  %v2284 = vpack.c.b16 %v2196, %v2192
  %v2285 = vpack.c.b16 %v2197, %v2193
  %v2286 = vpack.c.b16 %v2198, %v2194
  %v2287 = vpack.c.b16 %v2203, %v2199
  %v2288 = vpack.c.b16 %v2204, %v2200
  %v2289 = vpack.c.b16 %v2205, %v2201
  %v2290 = vpack.c.b16 %v2206, %v2202
  %v2291 = vpack.c.b16 %v2211, %v2207
  %v2292 = vpack.c.b16 %v2212, %v2208
  %v2293 = vpack.c.b16 %v2213, %v2209
  %v2294 = vpack.c.b16 %v2214, %v2210
  %v2295 = vpack.c.b16 %v2219, %v2215
  %v2296 = vpack.c.b16 %v2220, %v2216
  %v2297 = vpack.c.b16 %v2221, %v2217
  %v2298 = vpack.c.b16 %v2222, %v2218
  %v2299 = vpack.c.b16 %v2227, %v2223
  %v2300 = vpack.c.b16 %v2228, %v2224
  %v2301 = vpack.c.b16 %v2229, %v2225
  %v2302 = vpack.c.b16 %v2230, %v2226
  %v2303 = vpack.c.b16 %v2235, %v2231
  %v2304 = vpack.c.b16 %v2236, %v2232
  %v2305 = vpack.c.b16 %v2237, %v2233
  %v2306 = vpack.c.b16 %v2238, %v2234
  %v2307 = vpack.c.b16 %v2243, %v2239
  %v2308 = vpack.c.b16 %v2244, %v2240
  %v2309 = vpack.c.b16 %v2245, %v2241
  %v2310 = vpack.c.b16 %v2246, %v2242
  %2375 = vmatprep.subr.bf16.mxu0 %v2248
  %2376 = vmatpush1.bf16.msra.mxu0 %v2247
  %2377 = vmatprep.subr.bf16.mxu0 %v2252
  %2378 = vmatpush1.bf16.msra.mxu0 %v2251
  %2379 = vmatprep.subr.bf16.mxu0 %v2256
  %2380 = vmatpush1.bf16.msra.mxu0 %v2255
  %2381 = vmatprep.subr.bf16.mxu0 %v2260
  %2382 = vmatpush1.bf16.msra.mxu0 %v2259
  %2383 = vmatprep.subr.bf16.mxu0 %v2264
  %2384 = vmatpush1.bf16.msra.mxu0 %v2263
  %2385 = vmatprep.subr.bf16.mxu0 %v2268
  %2386 = vmatpush1.bf16.msra.mxu0 %v2267
  %2387 = vmatprep.subr.bf16.mxu0 %v2272
  %2388 = vmatpush1.bf16.msra.mxu0 %v2271
  %2389 = vmatprep.subr.bf16.mxu0 %v2276
  %2390 = vmatpush1.bf16.msra.mxu0 %v2275
  %2391 = vmatprep.subr.bf16.mxu0 %v2280
  %2392 = vmatpush1.bf16.msra.mxu0 %v2279
  %2393 = vmatprep.subr.bf16.mxu0 %v2284
  %2394 = vmatpush1.bf16.msra.mxu0 %v2283
  %2395 = vmatprep.subr.bf16.mxu0 %v2288
  %2396 = vmatpush1.bf16.msra.mxu0 %v2287
  %2397 = vmatprep.subr.bf16.mxu0 %v2292
  %2398 = vmatpush1.bf16.msra.mxu0 %v2291
  %2399 = vmatprep.subr.bf16.mxu0 %v2296
  %2400 = vmatpush1.bf16.msra.mxu0 %v2295
  %2401 = vmatprep.subr.bf16.mxu0 %v2300
  %2402 = vmatpush1.bf16.msra.mxu0 %v2299
  %2403 = vmatprep.subr.bf16.mxu0 %v2304
  %2404 = vmatpush1.bf16.msra.mxu0 %v2303
  %2405 = vmatprep.subr.bf16.mxu0 %v2308
  %2406 = vmatpush1.bf16.msra.mxu0 %v2307
  %2407 = vmatprep.mubr.bf16.mxu0 %v2052
  %2408 = vmatmul.mubr.bf16.gmra.mrb[0].mxu0 %v2051
  %v2409 = vpop.f32.mrb[0].mxu0
  %v2410 = vadd.f32 %v30, %v2409
  %v2411 = vpop.f32.mrb[0].mxu0
  %v2412 = vadd.f32 %v34, %v2411
  %v2413 = vpop.f32.mrb[0].mxu0
  %v2414 = vpop.f32.mrb[0].mxu0
  %2415 = vdwg.mxu0
  %2416 = vmatprep.subr.bf16.mxu0 %v2250
  %2417 = vmatpush1.bf16.msra.mxu0 %v2249
  %2418 = vmatprep.subr.bf16.mxu0 %v2254
  %2419 = vmatpush1.bf16.msra.mxu0 %v2253
  %2420 = vmatprep.subr.bf16.mxu0 %v2258
  %2421 = vmatpush1.bf16.msra.mxu0 %v2257
  %2422 = vmatprep.subr.bf16.mxu0 %v2262
  %2423 = vmatpush1.bf16.msra.mxu0 %v2261
  %2424 = vmatprep.subr.bf16.mxu0 %v2266
  %2425 = vmatpush1.bf16.msra.mxu0 %v2265
  %2426 = vmatprep.subr.bf16.mxu0 %v2270
  %2427 = vmatpush1.bf16.msra.mxu0 %v2269
  %2428 = vmatprep.subr.bf16.mxu0 %v2274
  %2429 = vmatpush1.bf16.msra.mxu0 %v2273
  %2430 = vmatprep.subr.bf16.mxu0 %v2278
  %2431 = vmatpush1.bf16.msra.mxu0 %v2277
  %2432 = vmatprep.subr.bf16.mxu0 %v2282
  %2433 = vmatpush1.bf16.msra.mxu0 %v2281
  %2434 = vmatprep.subr.bf16.mxu0 %v2286
  %2435 = vmatpush1.bf16.msra.mxu0 %v2285
  %2436 = vmatprep.subr.bf16.mxu0 %v2290
  %2437 = vmatpush1.bf16.msra.mxu0 %v2289
  %2438 = vmatprep.subr.bf16.mxu0 %v2294
  %2439 = vmatpush1.bf16.msra.mxu0 %v2293
  %2440 = vmatprep.subr.bf16.mxu0 %v2298
  %2441 = vmatpush1.bf16.msra.mxu0 %v2297
  %2442 = vmatprep.subr.bf16.mxu0 %v2302
  %2443 = vmatpush1.bf16.msra.mxu0 %v2301
  %2444 = vmatprep.subr.bf16.mxu0 %v2306
  %2445 = vmatpush1.bf16.msra.mxu0 %v2305
  %2446 = vmatprep.subr.bf16.mxu0 %v2310
  %2447 = vmatpush1.bf16.msra.mxu0 %v2309
  %2448 = vmatprep.mubr.bf16.mxu0 %v2052
  %2449 = vmatmul.mubr.bf16.gmra.mrb[0].mxu0 %v2051
  %v2450 = vpop.f32.mrb[0].mxu0
  %v2451 = vadd.f32 %v38, %v2450
  %v2452 = vpop.f32.mrb[0].mxu0
  %v2453 = vadd.f32 %v42, %v2452
  %v2454 = vpop.f32.mrb[0].mxu0
  %v2455 = vpop.f32.mrb[0].mxu0
  %2456 = vdwg.mxu0
  %v2457 = vld [vmem:[#allocation4] sm:$0xff]
  %v2458 = vxor.u32 %v2410, 2147483648
  %v2459 = vmul.f32 %v2458, 1.442695
  %v2460 = vpow.pop %v2459
  %v2461 = vadd.f32 %v2460, 1.0
  %v2462 = vrcp.pop %v2461
  %v2463 = vmul.f32 1.0, %v2462
  %v2464 = vxor.u32 %v2412, 2147483648
  %v2465 = vmul.f32 %v2464, 1.442695
  %v2466 = vpow.pop %v2465
  %v2467 = vadd.f32 %v2466, 1.0
  %v2468 = vrcp.pop %v2467
  %v2469 = vmul.f32 1.0, %v2468
  %v2470 = vtanh.pop %v2451
  %v2471 = vxor.u32 %v2453, 2147483648
  %v2472 = vmul.f32 %v2471, 1.442695
  %v2473 = vpow.pop %v2472
  %v2474 = vadd.f32 %v2473, 1.0
  %v2475 = vrcp.pop %v2474
  %v2476 = vmul.f32 1.0, %v2475
  %v2477 = vmul.f32 %v2469, %v2457
  %v2478 = vmul.f32 %v2463, %v2470
  %v2479 = vadd.f32 %v2477, %v2478
  %v2480 = vtanh.pop %v2479
  %v2481 = vmul.f32 %v2476, %v2480
  %2482 = vst [vmem:[#allocation4] sm:$0xff] %v2479
  %v2483 = vpack.c.bf16 %v2481, %v2481
  %2484 = vst [vmem:[#allocation2 + $0x4] sm:$0xf] %v2483
  %s2485 = scalar_lea.vmem %s4, 8
  %2486 = vst [vmem:[%s2485] sm:$0xf] %v2483
  %v2487 = vld [vmem:[#allocation2] sm:$0xf]
  %v2488 = vld [vmem:[%s1] sm:$0xff]
  %v2489 = vld [vmem:[%s1 + $0x8] sm:$0xff]
  %v2490 = vld [vmem:[%s1 + $0x10] sm:$0xff]
  %v2491 = vld [vmem:[%s1 + $0x18] sm:$0xff]
  %v2492 = vld [vmem:[%s1 + $0x20] sm:$0xff]
  %v2493 = vld [vmem:[%s1 + $0x28] sm:$0xff]
  %v2494 = vld [vmem:[%s1 + $0x30] sm:$0xff]
  %v2495 = vld [vmem:[%s1 + $0x38] sm:$0xff]
  %v2496 = vld [vmem:[%s1 + $0x40] sm:$0xff]
  %v2497 = vld [vmem:[%s1 + $0x48] sm:$0xff]
  %v2498 = vld [vmem:[%s1 + $0x50] sm:$0xff]
  %v2499 = vld [vmem:[%s1 + $0x58] sm:$0xff]
  %v2500 = vld [vmem:[%s1 + $0x60] sm:$0xff]
  %v2501 = vld [vmem:[%s1 + $0x68] sm:$0xff]
  %v2502 = vld [vmem:[%s1 + $0x70] sm:$0xff]
  %v2503 = vld [vmem:[%s1 + $0x78] sm:$0xff]
  %v2504 = vld [vmem:[%s1 + $0x80] sm:$0xff]
  %v2505 = vld [vmem:[%s1 + $0x88] sm:$0xff]
  %v2506 = vld [vmem:[%s1 + $0x90] sm:$0xff]
  %v2507 = vld [vmem:[%s1 + $0x98] sm:$0xff]
  %v2508 = vld [vmem:[%s1 + $0xa0] sm:$0xff]
  %v2509 = vld [vmem:[%s1 + $0xa8] sm:$0xff]
  %v2510 = vld [vmem:[%s1 + $0xb0] sm:$0xff]
  %v2511 = vld [vmem:[%s1 + $0xb8] sm:$0xff]
  %v2512 = vld [vmem:[%s1 + $0xc0] sm:$0xff]
  %v2513 = vld [vmem:[%s1 + $0xc8] sm:$0xff]
  %v2514 = vld [vmem:[%s1 + $0xd0] sm:$0xff]
  %v2515 = vld [vmem:[%s1 + $0xd8] sm:$0xff]
  %v2516 = vld [vmem:[%s1 + $0xe0] sm:$0xff]
  %v2517 = vld [vmem:[%s1 + $0xe8] sm:$0xff]
  %v2518 = vld [vmem:[%s1 + $0xf0] sm:$0xff]
  %v2519 = vld [vmem:[%s1 + $0xf8] sm:$0xff]
  %s2520 = scalar_lea.vmem %s0, 48
  %v2521 = vld [vmem:[%s2520] sm:$0xff]
  %v2522 = vld [vmem:[%s2520 + $0x8] sm:$0xff]
  %v2523 = vunpack.c.l.bf16 %v2521
  %v2524 = vunpack.c.h.bf16 %v2521
  %v2525 = vunpack.c.l.bf16 %v2522
  %v2526 = vunpack.c.h.bf16 %v2522
  %v2559 = vunpack.c.l.b16 %v2488
  %v2560 = vunpack.c.h.b16 %v2488
  %v2561 = vunpack.c.l.b16 %v2489
  %v2562 = vunpack.c.h.b16 %v2489
  %v2563 = vunpack.c.l.b16 %v2490
  %v2564 = vunpack.c.h.b16 %v2490
  %v2565 = vunpack.c.l.b16 %v2491
  %v2566 = vunpack.c.h.b16 %v2491
  %v2567 = vunpack.c.l.b16 %v2492
  %v2568 = vunpack.c.h.b16 %v2492
  %v2569 = vunpack.c.l.b16 %v2493
  %v2570 = vunpack.c.h.b16 %v2493
  %v2571 = vunpack.c.l.b16 %v2494
  %v2572 = vunpack.c.h.b16 %v2494
  %v2573 = vunpack.c.l.b16 %v2495
  %v2574 = vunpack.c.h.b16 %v2495
  %v2575 = vunpack.c.l.b16 %v2496
  %v2576 = vunpack.c.h.b16 %v2496
  %v2577 = vunpack.c.l.b16 %v2497
  %v2578 = vunpack.c.h.b16 %v2497
  %v2579 = vunpack.c.l.b16 %v2498
  %v2580 = vunpack.c.h.b16 %v2498
  %v2581 = vunpack.c.l.b16 %v2499
  %v2582 = vunpack.c.h.b16 %v2499
  %v2583 = vunpack.c.l.b16 %v2500
  %v2584 = vunpack.c.h.b16 %v2500
  %v2585 = vunpack.c.l.b16 %v2501
  %v2586 = vunpack.c.h.b16 %v2501
  %v2587 = vunpack.c.l.b16 %v2502
  %v2588 = vunpack.c.h.b16 %v2502
  %v2589 = vunpack.c.l.b16 %v2503
  %v2590 = vunpack.c.h.b16 %v2503
  %v2591 = vunpack.c.l.b16 %v2504
  %v2592 = vunpack.c.h.b16 %v2504
  %v2593 = vunpack.c.l.b16 %v2505
  %v2594 = vunpack.c.h.b16 %v2505
  %v2595 = vunpack.c.l.b16 %v2506
  %v2596 = vunpack.c.h.b16 %v2506
  %v2597 = vunpack.c.l.b16 %v2507
  %v2598 = vunpack.c.h.b16 %v2507
  %v2599 = vunpack.c.l.b16 %v2508
  %v2600 = vunpack.c.h.b16 %v2508
  %v2601 = vunpack.c.l.b16 %v2509
  %v2602 = vunpack.c.h.b16 %v2509
  %v2603 = vunpack.c.l.b16 %v2510
  %v2604 = vunpack.c.h.b16 %v2510
  %v2605 = vunpack.c.l.b16 %v2511
  %v2606 = vunpack.c.h.b16 %v2511
  %v2607 = vunpack.c.l.b16 %v2512
  %v2608 = vunpack.c.h.b16 %v2512
  %v2609 = vunpack.c.l.b16 %v2513
  %v2610 = vunpack.c.h.b16 %v2513
  %v2611 = vunpack.c.l.b16 %v2514
  %v2612 = vunpack.c.h.b16 %v2514
  %v2613 = vunpack.c.l.b16 %v2515
  %v2614 = vunpack.c.h.b16 %v2515
  %v2615 = vunpack.c.l.b16 %v2516
  %v2616 = vunpack.c.h.b16 %v2516
  %v2617 = vunpack.c.l.b16 %v2517
  %v2618 = vunpack.c.h.b16 %v2517
  %v2619 = vunpack.c.l.b16 %v2518
  %v2620 = vunpack.c.h.b16 %v2518
  %v2621 = vunpack.c.l.b16 %v2519
  %v2622 = vunpack.c.h.b16 %v2519
  %v2623 = vpack.c.b16 %v2563, %v2559
  %v2624 = vpack.c.b16 %v2564, %v2560
  %v2625 = vpack.c.b16 %v2565, %v2561
  %v2626 = vpack.c.b16 %v2566, %v2562
  %v2627 = vpack.c.b16 %v2571, %v2567
  %v2628 = vpack.c.b16 %v2572, %v2568
  %v2629 = vpack.c.b16 %v2573, %v2569
  %v2630 = vpack.c.b16 %v2574, %v2570
  %v2631 = vpack.c.b16 %v2579, %v2575
  %v2632 = vpack.c.b16 %v2580, %v2576
  %v2633 = vpack.c.b16 %v2581, %v2577
  %v2634 = vpack.c.b16 %v2582, %v2578
  %v2635 = vpack.c.b16 %v2587, %v2583
  %v2636 = vpack.c.b16 %v2588, %v2584
  %v2637 = vpack.c.b16 %v2589, %v2585
  %v2638 = vpack.c.b16 %v2590, %v2586
  %v2639 = vpack.c.b16 %v2595, %v2591
  %v2640 = vpack.c.b16 %v2596, %v2592
  %v2641 = vpack.c.b16 %v2597, %v2593
  %v2642 = vpack.c.b16 %v2598, %v2594
  %v2643 = vpack.c.b16 %v2603, %v2599
  %v2644 = vpack.c.b16 %v2604, %v2600
  %v2645 = vpack.c.b16 %v2605, %v2601
  %v2646 = vpack.c.b16 %v2606, %v2602
  %v2647 = vpack.c.b16 %v2611, %v2607
  %v2648 = vpack.c.b16 %v2612, %v2608
  %v2649 = vpack.c.b16 %v2613, %v2609
  %v2650 = vpack.c.b16 %v2614, %v2610
  %v2651 = vpack.c.b16 %v2619, %v2615
  %v2652 = vpack.c.b16 %v2620, %v2616
  %v2653 = vpack.c.b16 %v2621, %v2617
  %v2654 = vpack.c.b16 %v2622, %v2618
  %2687 = vmatprep.subr.bf16.mxu0 %v2624
  %2688 = vmatpush1.bf16.msra.mxu0 %v2623
  %2689 = vmatprep.subr.bf16.mxu0 %v2628
  %2690 = vmatpush1.bf16.msra.mxu0 %v2627
  %2691 = vmatprep.subr.bf16.mxu0 %v2632
  %2692 = vmatpush1.bf16.msra.mxu0 %v2631
  %2693 = vmatprep.subr.bf16.mxu0 %v2636
  %2694 = vmatpush1.bf16.msra.mxu0 %v2635
  %2695 = vmatprep.subr.bf16.mxu0 %v2640
  %2696 = vmatpush1.bf16.msra.mxu0 %v2639
  %2697 = vmatprep.subr.bf16.mxu0 %v2644
  %2698 = vmatpush1.bf16.msra.mxu0 %v2643
  %2699 = vmatprep.subr.bf16.mxu0 %v2648
  %2700 = vmatpush1.bf16.msra.mxu0 %v2647
  %2701 = vmatprep.subr.bf16.mxu0 %v2652
  %2702 = vmatpush1.bf16.msra.mxu0 %v2651
  %2703 = vmatprep.subr.bf16.mxu0 0
  %2704 = vmatpush1.bf16.msra.mxu0 0
  %2705 = vmatprep.subr.bf16.mxu0 0
  %2706 = vmatpush1.bf16.msra.mxu0 0
  %2707 = vmatprep.subr.bf16.mxu0 0
  %2708 = vmatpush1.bf16.msra.mxu0 0
  %2709 = vmatprep.subr.bf16.mxu0 0
  %2710 = vmatpush1.bf16.msra.mxu0 0
  %2711 = vmatprep.subr.bf16.mxu0 0
  %2712 = vmatpush1.bf16.msra.mxu0 0
  %2713 = vmatprep.subr.bf16.mxu0 0
  %2714 = vmatpush1.bf16.msra.mxu0 0
  %2715 = vmatprep.subr.bf16.mxu0 0
  %2716 = vmatpush1.bf16.msra.mxu0 0
  %2717 = vmatprep.subr.bf16.mxu0 0
  %2718 = vmatpush1.bf16.msra.mxu0 0
  %2719 = vmatprep.mubr.bf16.mxu0 0
  %2720 = vmatmul.mubr.bf16.gmra.mrb[0].mxu0 %v2487
  %v2721 = vpop.f32.mrb[0].mxu0
  %v2722 = vadd.f32 %v2523, %v2721
  %v2723 = vpop.f32.mrb[0].mxu0
  %v2724 = vadd.f32 %v2524, %v2723
  %v2725 = vpop.f32.mrb[0].mxu0
  %v2726 = vpop.f32.mrb[0].mxu0
  %2727 = vdwg.mxu0
  %2728 = vmatprep.subr.bf16.mxu0 %v2626
  %2729 = vmatpush1.bf16.msra.mxu0 %v2625
  %2730 = vmatprep.subr.bf16.mxu0 %v2630
  %2731 = vmatpush1.bf16.msra.mxu0 %v2629
  %2732 = vmatprep.subr.bf16.mxu0 %v2634
  %2733 = vmatpush1.bf16.msra.mxu0 %v2633
  %2734 = vmatprep.subr.bf16.mxu0 %v2638
  %2735 = vmatpush1.bf16.msra.mxu0 %v2637
  %2736 = vmatprep.subr.bf16.mxu0 %v2642
  %2737 = vmatpush1.bf16.msra.mxu0 %v2641
  %2738 = vmatprep.subr.bf16.mxu0 %v2646
  %2739 = vmatpush1.bf16.msra.mxu0 %v2645
  %2740 = vmatprep.subr.bf16.mxu0 %v2650
  %2741 = vmatpush1.bf16.msra.mxu0 %v2649
  %2742 = vmatprep.subr.bf16.mxu0 %v2654
  %2743 = vmatpush1.bf16.msra.mxu0 %v2653
  %2744 = vmatprep.subr.bf16.mxu0 0
  %2745 = vmatpush1.bf16.msra.mxu0 0
  %2746 = vmatprep.subr.bf16.mxu0 0
  %2747 = vmatpush1.bf16.msra.mxu0 0
  %2748 = vmatprep.subr.bf16.mxu0 0
  %2749 = vmatpush1.bf16.msra.mxu0 0
  %2750 = vmatprep.subr.bf16.mxu0 0
  %2751 = vmatpush1.bf16.msra.mxu0 0
  %2752 = vmatprep.subr.bf16.mxu0 0
  %2753 = vmatpush1.bf16.msra.mxu0 0
  %2754 = vmatprep.subr.bf16.mxu0 0
  %2755 = vmatpush1.bf16.msra.mxu0 0
  %2756 = vmatprep.subr.bf16.mxu0 0
  %2757 = vmatpush1.bf16.msra.mxu0 0
  %2758 = vmatprep.subr.bf16.mxu0 0
  %2759 = vmatpush1.bf16.msra.mxu0 0
  %2760 = vmatprep.mubr.bf16.mxu0 0
  %2761 = vmatmul.mubr.bf16.gmra.mrb[0].mxu0 %v2487
  %v2762 = vpop.f32.mrb[0].mxu0
  %v2763 = vadd.f32 %v2525, %v2762
  %v2764 = vpop.f32.mrb[0].mxu0
  %v2765 = vadd.f32 %v2526, %v2764
  %v2766 = vpop.f32.mrb[0].mxu0
  %v2767 = vpop.f32.mrb[0].mxu0
  %2768 = vdwg.mxu0
  %v2769 = vld [vmem:[#allocation3] sm:$0xff]
  %v2770 = vxor.u32 %v2722, 2147483648
  %v2771 = vmul.f32 %v2770, 1.442695
  %v2772 = vpow.pop %v2771
  %v2773 = vadd.f32 %v2772, 1.0
  %v2774 = vrcp.pop %v2773
  %v2775 = vmul.f32 1.0, %v2774
  %v2776 = vxor.u32 %v2724, 2147483648
  %v2777 = vmul.f32 %v2776, 1.442695
  %v2778 = vpow.pop %v2777
  %v2779 = vadd.f32 %v2778, 1.0
  %v2780 = vrcp.pop %v2779
  %v2781 = vmul.f32 1.0, %v2780
  %v2782 = vtanh.pop %v2763
  %v2783 = vxor.u32 %v2765, 2147483648
  %v2784 = vmul.f32 %v2783, 1.442695
  %v2785 = vpow.pop %v2784
  %v2786 = vadd.f32 %v2785, 1.0
  %v2787 = vrcp.pop %v2786
  %v2788 = vmul.f32 1.0, %v2787
  %v2789 = vmul.f32 %v2781, %v2769
  %v2790 = vmul.f32 %v2775, %v2782
  %v2791 = vadd.f32 %v2789, %v2790
  %v2792 = vtanh.pop %v2791
  %v2793 = vmul.f32 %v2788, %v2792
  %2794 = vst [vmem:[#allocation3] sm:$0xff] %v2791
  %v2795 = vpack.c.bf16 %v2793, %v2793
  %2796 = vst [vmem:[#allocation2] sm:$0xf] %v2795
  %v2797 = vld [vmem:[#allocation2] sm:$0xff]
  %v2798 = vld [vmem:[%s2] sm:$0xff]
  %v2799 = vld [vmem:[%s2 + $0x8] sm:$0xff]
  %v2800 = vld [vmem:[%s2 + $0x10] sm:$0xff]
  %v2801 = vld [vmem:[%s2 + $0x18] sm:$0xff]
  %v2802 = vld [vmem:[%s2 + $0x20] sm:$0xff]
  %v2803 = vld [vmem:[%s2 + $0x28] sm:$0xff]
  %v2804 = vld [vmem:[%s2 + $0x30] sm:$0xff]
  %v2805 = vld [vmem:[%s2 + $0x38] sm:$0xff]
  %v2806 = vld [vmem:[%s2 + $0x40] sm:$0xff]
  %v2807 = vld [vmem:[%s2 + $0x48] sm:$0xff]
  %v2808 = vld [vmem:[%s2 + $0x50] sm:$0xff]
  %v2809 = vld [vmem:[%s2 + $0x58] sm:$0xff]
  %v2810 = vld [vmem:[%s2 + $0x60] sm:$0xff]
  %v2811 = vld [vmem:[%s2 + $0x68] sm:$0xff]
  %v2812 = vld [vmem:[%s2 + $0x70] sm:$0xff]
  %v2813 = vld [vmem:[%s2 + $0x78] sm:$0xff]
  %v2814 = vld [vmem:[%s2 + $0x80] sm:$0xff]
  %v2815 = vld [vmem:[%s2 + $0x88] sm:$0xff]
  %v2816 = vld [vmem:[%s2 + $0x90] sm:$0xff]
  %v2817 = vld [vmem:[%s2 + $0x98] sm:$0xff]
  %v2818 = vld [vmem:[%s2 + $0xa0] sm:$0xff]
  %v2819 = vld [vmem:[%s2 + $0xa8] sm:$0xff]
  %v2820 = vld [vmem:[%s2 + $0xb0] sm:$0xff]
  %v2821 = vld [vmem:[%s2 + $0xb8] sm:$0xff]
  %v2822 = vld [vmem:[%s2 + $0xc0] sm:$0xff]
  %v2823 = vld [vmem:[%s2 + $0xc8] sm:$0xff]
  %v2824 = vld [vmem:[%s2 + $0xd0] sm:$0xff]
  %v2825 = vld [vmem:[%s2 + $0xd8] sm:$0xff]
  %v2826 = vld [vmem:[%s2 + $0xe0] sm:$0xff]
  %v2827 = vld [vmem:[%s2 + $0xe8] sm:$0xff]
  %v2828 = vld [vmem:[%s2 + $0xf0] sm:$0xff]
  %v2829 = vld [vmem:[%s2 + $0xf8] sm:$0xff]
  %v2830 = vld [vmem:[%s2 + $0x100] sm:$0xff]
  %v2831 = vld [vmem:[%s2 + $0x108] sm:$0xff]
  %v2832 = vld [vmem:[%s2 + $0x110] sm:$0xff]
  %v2833 = vld [vmem:[%s2 + $0x118] sm:$0xff]
  %v2834 = vld [vmem:[%s2 + $0x120] sm:$0xff]
  %v2835 = vld [vmem:[%s2 + $0x128] sm:$0xff]
  %v2836 = vld [vmem:[%s2 + $0x130] sm:$0xff]
  %v2837 = vld [vmem:[%s2 + $0x138] sm:$0xff]
  %v2838 = vld [vmem:[%s2 + $0x140] sm:$0xff]
  %v2839 = vld [vmem:[%s2 + $0x148] sm:$0xff]
  %v2840 = vld [vmem:[%s2 + $0x150] sm:$0xff]
  %v2841 = vld [vmem:[%s2 + $0x158] sm:$0xff]
  %v2842 = vld [vmem:[%s2 + $0x160] sm:$0xff]
  %v2843 = vld [vmem:[%s2 + $0x168] sm:$0xff]
  %v2844 = vld [vmem:[%s2 + $0x170] sm:$0xff]
  %v2845 = vld [vmem:[%s2 + $0x178] sm:$0xff]
  %v2846 = vld [vmem:[%s2 + $0x180] sm:$0xff]
  %v2847 = vld [vmem:[%s2 + $0x188] sm:$0xff]
  %v2848 = vld [vmem:[%s2 + $0x190] sm:$0xff]
  %v2849 = vld [vmem:[%s2 + $0x198] sm:$0xff]
  %v2850 = vld [vmem:[%s2 + $0x1a0] sm:$0xff]
  %v2851 = vld [vmem:[%s2 + $0x1a8] sm:$0xff]
  %v2852 = vld [vmem:[%s2 + $0x1b0] sm:$0xff]
  %v2853 = vld [vmem:[%s2 + $0x1b8] sm:$0xff]
  %v2854 = vld [vmem:[%s2 + $0x1c0] sm:$0xff]
  %v2855 = vld [vmem:[%s2 + $0x1c8] sm:$0xff]
  %v2856 = vld [vmem:[%s2 + $0x1d0] sm:$0xff]
  %v2857 = vld [vmem:[%s2 + $0x1d8] sm:$0xff]
  %v2858 = vld [vmem:[%s2 + $0x1e0] sm:$0xff]
  %v2859 = vld [vmem:[%s2 + $0x1e8] sm:$0xff]
  %v2860 = vld [vmem:[%s2 + $0x1f0] sm:$0xff]
  %v2861 = vld [vmem:[%s2 + $0x1f8] sm:$0xff]
  %v2863 = vunpack.c.l.b16 %v2797
  %v2864 = vunpack.c.h.b16 %v2797
  %v2865 = vpack.c.b16 %v2863, %v2863
  %v2866 = vpack.c.b16 %v2864, %v2864
  %v2933 = vunpack.c.l.b16 %v2798
  %v2934 = vunpack.c.h.b16 %v2798
  %v2935 = vunpack.c.l.b16 %v2799
  %v2936 = vunpack.c.h.b16 %v2799
  %v2937 = vunpack.c.l.b16 %v2800
  %v2938 = vunpack.c.h.b16 %v2800
  %v2939 = vunpack.c.l.b16 %v2801
  %v2940 = vunpack.c.h.b16 %v2801
  %v2941 = vunpack.c.l.b16 %v2802
  %v2942 = vunpack.c.h.b16 %v2802
  %v2943 = vunpack.c.l.b16 %v2803
  %v2944 = vunpack.c.h.b16 %v2803
  %v2945 = vunpack.c.l.b16 %v2804
  %v2946 = vunpack.c.h.b16 %v2804
  %v2947 = vunpack.c.l.b16 %v2805
  %v2948 = vunpack.c.h.b16 %v2805
  %v2949 = vunpack.c.l.b16 %v2806
  %v2950 = vunpack.c.h.b16 %v2806
  %v2951 = vunpack.c.l.b16 %v2807
  %v2952 = vunpack.c.h.b16 %v2807
  %v2953 = vunpack.c.l.b16 %v2808
  %v2954 = vunpack.c.h.b16 %v2808
  %v2955 = vunpack.c.l.b16 %v2809
  %v2956 = vunpack.c.h.b16 %v2809
  %v2957 = vunpack.c.l.b16 %v2810
  %v2958 = vunpack.c.h.b16 %v2810
  %v2959 = vunpack.c.l.b16 %v2811
  %v2960 = vunpack.c.h.b16 %v2811
  %v2961 = vunpack.c.l.b16 %v2812
  %v2962 = vunpack.c.h.b16 %v2812
  %v2963 = vunpack.c.l.b16 %v2813
  %v2964 = vunpack.c.h.b16 %v2813
  %v2965 = vunpack.c.l.b16 %v2814
  %v2966 = vunpack.c.h.b16 %v2814
  %v2967 = vunpack.c.l.b16 %v2815
  %v2968 = vunpack.c.h.b16 %v2815
  %v2969 = vunpack.c.l.b16 %v2816
  %v2970 = vunpack.c.h.b16 %v2816
  %v2971 = vunpack.c.l.b16 %v2817
  %v2972 = vunpack.c.h.b16 %v2817
  %v2973 = vunpack.c.l.b16 %v2818
  %v2974 = vunpack.c.h.b16 %v2818
  %v2975 = vunpack.c.l.b16 %v2819
  %v2976 = vunpack.c.h.b16 %v2819
  %v2977 = vunpack.c.l.b16 %v2820
  %v2978 = vunpack.c.h.b16 %v2820
  %v2979 = vunpack.c.l.b16 %v2821
  %v2980 = vunpack.c.h.b16 %v2821
  %v2981 = vunpack.c.l.b16 %v2822
  %v2982 = vunpack.c.h.b16 %v2822
  %v2983 = vunpack.c.l.b16 %v2823
  %v2984 = vunpack.c.h.b16 %v2823
  %v2985 = vunpack.c.l.b16 %v2824
  %v2986 = vunpack.c.h.b16 %v2824
  %v2987 = vunpack.c.l.b16 %v2825
  %v2988 = vunpack.c.h.b16 %v2825
  %v2989 = vunpack.c.l.b16 %v2826
  %v2990 = vunpack.c.h.b16 %v2826
  %v2991 = vunpack.c.l.b16 %v2827
  %v2992 = vunpack.c.h.b16 %v2827
  %v2993 = vunpack.c.l.b16 %v2828
  %v2994 = vunpack.c.h.b16 %v2828
  %v2995 = vunpack.c.l.b16 %v2829
  %v2996 = vunpack.c.h.b16 %v2829
  %v2997 = vunpack.c.l.b16 %v2830
  %v2998 = vunpack.c.h.b16 %v2830
  %v2999 = vunpack.c.l.b16 %v2831
  %v3000 = vunpack.c.h.b16 %v2831
  %v3001 = vunpack.c.l.b16 %v2832
  %v3002 = vunpack.c.h.b16 %v2832
  %v3003 = vunpack.c.l.b16 %v2833
  %v3004 = vunpack.c.h.b16 %v2833
  %v3005 = vunpack.c.l.b16 %v2834
  %v3006 = vunpack.c.h.b16 %v2834
  %v3007 = vunpack.c.l.b16 %v2835
  %v3008 = vunpack.c.h.b16 %v2835
  %v3009 = vunpack.c.l.b16 %v2836
  %v3010 = vunpack.c.h.b16 %v2836
  %v3011 = vunpack.c.l.b16 %v2837
  %v3012 = vunpack.c.h.b16 %v2837
  %v3013 = vunpack.c.l.b16 %v2838
  %v3014 = vunpack.c.h.b16 %v2838
  %v3015 = vunpack.c.l.b16 %v2839
  %v3016 = vunpack.c.h.b16 %v2839
  %v3017 = vunpack.c.l.b16 %v2840
  %v3018 = vunpack.c.h.b16 %v2840
  %v3019 = vunpack.c.l.b16 %v2841
  %v3020 = vunpack.c.h.b16 %v2841
  %v3021 = vunpack.c.l.b16 %v2842
  %v3022 = vunpack.c.h.b16 %v2842
  %v3023 = vunpack.c.l.b16 %v2843
  %v3024 = vunpack.c.h.b16 %v2843
  %v3025 = vunpack.c.l.b16 %v2844
  %v3026 = vunpack.c.h.b16 %v2844
  %v3027 = vunpack.c.l.b16 %v2845
  %v3028 = vunpack.c.h.b16 %v2845
  %v3029 = vunpack.c.l.b16 %v2846
  %v3030 = vunpack.c.h.b16 %v2846
  %v3031 = vunpack.c.l.b16 %v2847
  %v3032 = vunpack.c.h.b16 %v2847
  %v3033 = vunpack.c.l.b16 %v2848
  %v3034 = vunpack.c.h.b16 %v2848
  %v3035 = vunpack.c.l.b16 %v2849
  %v3036 = vunpack.c.h.b16 %v2849
  %v3037 = vunpack.c.l.b16 %v2850
  %v3038 = vunpack.c.h.b16 %v2850
  %v3039 = vunpack.c.l.b16 %v2851
  %v3040 = vunpack.c.h.b16 %v2851
  %v3041 = vunpack.c.l.b16 %v2852
  %v3042 = vunpack.c.h.b16 %v2852
  %v3043 = vunpack.c.l.b16 %v2853
  %v3044 = vunpack.c.h.b16 %v2853
  %v3045 = vunpack.c.l.b16 %v2854
  %v3046 = vunpack.c.h.b16 %v2854
  %v3047 = vunpack.c.l.b16 %v2855
  %v3048 = vunpack.c.h.b16 %v2855
  %v3049 = vunpack.c.l.b16 %v2856
  %v3050 = vunpack.c.h.b16 %v2856
  %v3051 = vunpack.c.l.b16 %v2857
  %v3052 = vunpack.c.h.b16 %v2857
  %v3053 = vunpack.c.l.b16 %v2858
  %v3054 = vunpack.c.h.b16 %v2858
  %v3055 = vunpack.c.l.b16 %v2859
  %v3056 = vunpack.c.h.b16 %v2859
  %v3057 = vunpack.c.l.b16 %v2860
  %v3058 = vunpack.c.h.b16 %v2860
  %v3059 = vunpack.c.l.b16 %v2861
  %v3060 = vunpack.c.h.b16 %v2861
  %v3061 = vpack.c.b16 %v2937, %v2933
  %v3062 = vpack.c.b16 %v2938, %v2934
  %v3063 = vpack.c.b16 %v2939, %v2935
  %v3064 = vpack.c.b16 %v2940, %v2936
  %v3065 = vpack.c.b16 %v2945, %v2941
  %v3066 = vpack.c.b16 %v2946, %v2942
  %v3067 = vpack.c.b16 %v2947, %v2943
  %v3068 = vpack.c.b16 %v2948, %v2944
  %v3069 = vpack.c.b16 %v2953, %v2949
  %v3070 = vpack.c.b16 %v2954, %v2950
  %v3071 = vpack.c.b16 %v2955, %v2951
  %v3072 = vpack.c.b16 %v2956, %v2952
  %v3073 = vpack.c.b16 %v2961, %v2957
  %v3074 = vpack.c.b16 %v2962, %v2958
  %v3075 = vpack.c.b16 %v2963, %v2959
  %v3076 = vpack.c.b16 %v2964, %v2960
  %v3077 = vpack.c.b16 %v2969, %v2965
  %v3078 = vpack.c.b16 %v2970, %v2966
  %v3079 = vpack.c.b16 %v2971, %v2967
  %v3080 = vpack.c.b16 %v2972, %v2968
  %v3081 = vpack.c.b16 %v2977, %v2973
  %v3082 = vpack.c.b16 %v2978, %v2974
  %v3083 = vpack.c.b16 %v2979, %v2975
  %v3084 = vpack.c.b16 %v2980, %v2976
  %v3085 = vpack.c.b16 %v2985, %v2981
  %v3086 = vpack.c.b16 %v2986, %v2982
  %v3087 = vpack.c.b16 %v2987, %v2983
  %v3088 = vpack.c.b16 %v2988, %v2984
  %v3089 = vpack.c.b16 %v2993, %v2989
  %v3090 = vpack.c.b16 %v2994, %v2990
  %v3091 = vpack.c.b16 %v2995, %v2991
  %v3092 = vpack.c.b16 %v2996, %v2992
  %v3093 = vpack.c.b16 %v3001, %v2997
  %v3094 = vpack.c.b16 %v3002, %v2998
  %v3095 = vpack.c.b16 %v3003, %v2999
  %v3096 = vpack.c.b16 %v3004, %v3000
  %v3097 = vpack.c.b16 %v3009, %v3005
  %v3098 = vpack.c.b16 %v3010, %v3006
  %v3099 = vpack.c.b16 %v3011, %v3007
  %v3100 = vpack.c.b16 %v3012, %v3008
  %v3101 = vpack.c.b16 %v3017, %v3013
  %v3102 = vpack.c.b16 %v3018, %v3014
  %v3103 = vpack.c.b16 %v3019, %v3015
  %v3104 = vpack.c.b16 %v3020, %v3016
  %v3105 = vpack.c.b16 %v3025, %v3021
  %v3106 = vpack.c.b16 %v3026, %v3022
  %v3107 = vpack.c.b16 %v3027, %v3023
  %v3108 = vpack.c.b16 %v3028, %v3024
  %v3109 = vpack.c.b16 %v3033, %v3029
  %v3110 = vpack.c.b16 %v3034, %v3030
  %v3111 = vpack.c.b16 %v3035, %v3031
  %v3112 = vpack.c.b16 %v3036, %v3032
  %v3113 = vpack.c.b16 %v3041, %v3037
  %v3114 = vpack.c.b16 %v3042, %v3038
  %v3115 = vpack.c.b16 %v3043, %v3039
  %v3116 = vpack.c.b16 %v3044, %v3040
  %v3117 = vpack.c.b16 %v3049, %v3045
  %v3118 = vpack.c.b16 %v3050, %v3046
  %v3119 = vpack.c.b16 %v3051, %v3047
  %v3120 = vpack.c.b16 %v3052, %v3048
  %v3121 = vpack.c.b16 %v3057, %v3053
  %v3122 = vpack.c.b16 %v3058, %v3054
  %v3123 = vpack.c.b16 %v3059, %v3055
  %v3124 = vpack.c.b16 %v3060, %v3056
  %3189 = vmatprep.subr.bf16.mxu0 %v3062
  %3190 = vmatpush1.bf16.msra.mxu0 %v3061
  %3191 = vmatprep.subr.bf16.mxu0 %v3066
  %3192 = vmatpush1.bf16.msra.mxu0 %v3065
  %3193 = vmatprep.subr.bf16.mxu0 %v3070
  %3194 = vmatpush1.bf16.msra.mxu0 %v3069
  %3195 = vmatprep.subr.bf16.mxu0 %v3074
  %3196 = vmatpush1.bf16.msra.mxu0 %v3073
  %3197 = vmatprep.subr.bf16.mxu0 %v3078
  %3198 = vmatpush1.bf16.msra.mxu0 %v3077
  %3199 = vmatprep.subr.bf16.mxu0 %v3082
  %3200 = vmatpush1.bf16.msra.mxu0 %v3081
  %3201 = vmatprep.subr.bf16.mxu0 %v3086
  %3202 = vmatpush1.bf16.msra.mxu0 %v3085
  %3203 = vmatprep.subr.bf16.mxu0 %v3090
  %3204 = vmatpush1.bf16.msra.mxu0 %v3089
  %3205 = vmatprep.subr.bf16.mxu0 %v3094
  %3206 = vmatpush1.bf16.msra.mxu0 %v3093
  %3207 = vmatprep.subr.bf16.mxu0 %v3098
  %3208 = vmatpush1.bf16.msra.mxu0 %v3097
  %3209 = vmatprep.subr.bf16.mxu0 %v3102
  %3210 = vmatpush1.bf16.msra.mxu0 %v3101
  %3211 = vmatprep.subr.bf16.mxu0 %v3106
  %3212 = vmatpush1.bf16.msra.mxu0 %v3105
  %3213 = vmatprep.subr.bf16.mxu0 %v3110
  %3214 = vmatpush1.bf16.msra.mxu0 %v3109
  %3215 = vmatprep.subr.bf16.mxu0 %v3114
  %3216 = vmatpush1.bf16.msra.mxu0 %v3113
  %3217 = vmatprep.subr.bf16.mxu0 %v3118
  %3218 = vmatpush1.bf16.msra.mxu0 %v3117
  %3219 = vmatprep.subr.bf16.mxu0 %v3122
  %3220 = vmatpush1.bf16.msra.mxu0 %v3121
  %3221 = vmatprep.mubr.bf16.mxu0 %v2866
  %3222 = vmatmul.mubr.bf16.gmra.mrb[0].mxu0 %v2865
  %v3223 = vpop.f32.mrb[0].mxu0
  %v3224 = vadd.f32 %v30, %v3223
  %v3225 = vpop.f32.mrb[0].mxu0
  %v3226 = vadd.f32 %v34, %v3225
  %v3227 = vpop.f32.mrb[0].mxu0
  %v3228 = vpop.f32.mrb[0].mxu0
  %3229 = vdwg.mxu0
  %3230 = vmatprep.subr.bf16.mxu0 %v3064
  %3231 = vmatpush1.bf16.msra.mxu0 %v3063
  %3232 = vmatprep.subr.bf16.mxu0 %v3068
  %3233 = vmatpush1.bf16.msra.mxu0 %v3067
  %3234 = vmatprep.subr.bf16.mxu0 %v3072
  %3235 = vmatpush1.bf16.msra.mxu0 %v3071
  %3236 = vmatprep.subr.bf16.mxu0 %v3076
  %3237 = vmatpush1.bf16.msra.mxu0 %v3075
  %3238 = vmatprep.subr.bf16.mxu0 %v3080
  %3239 = vmatpush1.bf16.msra.mxu0 %v3079
  %3240 = vmatprep.subr.bf16.mxu0 %v3084
  %3241 = vmatpush1.bf16.msra.mxu0 %v3083
  %3242 = vmatprep.subr.bf16.mxu0 %v3088
  %3243 = vmatpush1.bf16.msra.mxu0 %v3087
  %3244 = vmatprep.subr.bf16.mxu0 %v3092
  %3245 = vmatpush1.bf16.msra.mxu0 %v3091
  %3246 = vmatprep.subr.bf16.mxu0 %v3096
  %3247 = vmatpush1.bf16.msra.mxu0 %v3095
  %3248 = vmatprep.subr.bf16.mxu0 %v3100
  %3249 = vmatpush1.bf16.msra.mxu0 %v3099
  %3250 = vmatprep.subr.bf16.mxu0 %v3104
  %3251 = vmatpush1.bf16.msra.mxu0 %v3103
  %3252 = vmatprep.subr.bf16.mxu0 %v3108
  %3253 = vmatpush1.bf16.msra.mxu0 %v3107
  %3254 = vmatprep.subr.bf16.mxu0 %v3112
  %3255 = vmatpush1.bf16.msra.mxu0 %v3111
  %3256 = vmatprep.subr.bf16.mxu0 %v3116
  %3257 = vmatpush1.bf16.msra.mxu0 %v3115
  %3258 = vmatprep.subr.bf16.mxu0 %v3120
  %3259 = vmatpush1.bf16.msra.mxu0 %v3119
  %3260 = vmatprep.subr.bf16.mxu0 %v3124
  %3261 = vmatpush1.bf16.msra.mxu0 %v3123
  %3262 = vmatprep.mubr.bf16.mxu0 %v2866
  %3263 = vmatmul.mubr.bf16.gmra.mrb[0].mxu0 %v2865
  %v3264 = vpop.f32.mrb[0].mxu0
  %v3265 = vadd.f32 %v38, %v3264
  %v3266 = vpop.f32.mrb[0].mxu0
  %v3267 = vadd.f32 %v42, %v3266
  %v3268 = vpop.f32.mrb[0].mxu0
  %v3269 = vpop.f32.mrb[0].mxu0
  %3270 = vdwg.mxu0
  %v3271 = vld [vmem:[#allocation4] sm:$0xff]
  %v3272 = vxor.u32 %v3224, 2147483648
  %v3273 = vmul.f32 %v3272, 1.442695
  %v3274 = vpow.pop %v3273
  %v3275 = vadd.f32 %v3274, 1.0
  %v3276 = vrcp.pop %v3275
  %v3277 = vmul.f32 1.0, %v3276
  %v3278 = vxor.u32 %v3226, 2147483648
  %v3279 = vmul.f32 %v3278, 1.442695
  %v3280 = vpow.pop %v3279
  %v3281 = vadd.f32 %v3280, 1.0
  %v3282 = vrcp.pop %v3281
  %v3283 = vmul.f32 1.0, %v3282
  %v3284 = vtanh.pop %v3265
  %v3285 = vxor.u32 %v3267, 2147483648
  %v3286 = vmul.f32 %v3285, 1.442695
  %v3287 = vpow.pop %v3286
  %v3288 = vadd.f32 %v3287, 1.0
  %v3289 = vrcp.pop %v3288
  %v3290 = vmul.f32 1.0, %v3289
  %v3291 = vmul.f32 %v3283, %v3271
  %v3292 = vmul.f32 %v3277, %v3284
  %v3293 = vadd.f32 %v3291, %v3292
  %v3294 = vtanh.pop %v3293
  %v3295 = vmul.f32 %v3290, %v3294
  %3296 = vst [vmem:[#allocation4] sm:$0xff] %v3293
  %v3297 = vpack.c.bf16 %v3295, %v3295
  %3298 = vst [vmem:[#allocation2 + $0x4] sm:$0xf] %v3297
  %s3299 = scalar_lea.vmem %s4, 12
  %3300 = vst [vmem:[%s3299] sm:$0xf] %v3297
  %v3301 = vld [vmem:[#allocation2] sm:$0xf]
  %v3302 = vld [vmem:[%s1] sm:$0xff]
  %v3303 = vld [vmem:[%s1 + $0x8] sm:$0xff]
  %v3304 = vld [vmem:[%s1 + $0x10] sm:$0xff]
  %v3305 = vld [vmem:[%s1 + $0x18] sm:$0xff]
  %v3306 = vld [vmem:[%s1 + $0x20] sm:$0xff]
  %v3307 = vld [vmem:[%s1 + $0x28] sm:$0xff]
  %v3308 = vld [vmem:[%s1 + $0x30] sm:$0xff]
  %v3309 = vld [vmem:[%s1 + $0x38] sm:$0xff]
  %v3310 = vld [vmem:[%s1 + $0x40] sm:$0xff]
  %v3311 = vld [vmem:[%s1 + $0x48] sm:$0xff]
  %v3312 = vld [vmem:[%s1 + $0x50] sm:$0xff]
  %v3313 = vld [vmem:[%s1 + $0x58] sm:$0xff]
  %v3314 = vld [vmem:[%s1 + $0x60] sm:$0xff]
  %v3315 = vld [vmem:[%s1 + $0x68] sm:$0xff]
  %v3316 = vld [vmem:[%s1 + $0x70] sm:$0xff]
  %v3317 = vld [vmem:[%s1 + $0x78] sm:$0xff]
  %v3318 = vld [vmem:[%s1 + $0x80] sm:$0xff]
  %v3319 = vld [vmem:[%s1 + $0x88] sm:$0xff]
  %v3320 = vld [vmem:[%s1 + $0x90] sm:$0xff]
  %v3321 = vld [vmem:[%s1 + $0x98] sm:$0xff]
  %v3322 = vld [vmem:[%s1 + $0xa0] sm:$0xff]
  %v3323 = vld [vmem:[%s1 + $0xa8] sm:$0xff]
  %v3324 = vld [vmem:[%s1 + $0xb0] sm:$0xff]
  %v3325 = vld [vmem:[%s1 + $0xb8] sm:$0xff]
  %v3326 = vld [vmem:[%s1 + $0xc0] sm:$0xff]
  %v3327 = vld [vmem:[%s1 + $0xc8] sm:$0xff]
  %v3328 = vld [vmem:[%s1 + $0xd0] sm:$0xff]
  %v3329 = vld [vmem:[%s1 + $0xd8] sm:$0xff]
  %v3330 = vld [vmem:[%s1 + $0xe0] sm:$0xff]
  %v3331 = vld [vmem:[%s1 + $0xe8] sm:$0xff]
  %v3332 = vld [vmem:[%s1 + $0xf0] sm:$0xff]
  %v3333 = vld [vmem:[%s1 + $0xf8] sm:$0xff]
  %s3334 = scalar_lea.vmem %s0, 64
  %v3335 = vld [vmem:[%s3334] sm:$0xff]
  %v3336 = vld [vmem:[%s3334 + $0x8] sm:$0xff]
  %v3337 = vunpack.c.l.bf16 %v3335
  %v3338 = vunpack.c.h.bf16 %v3335
  %v3339 = vunpack.c.l.bf16 %v3336
  %v3340 = vunpack.c.h.bf16 %v3336
  %v3373 = vunpack.c.l.b16 %v3302
  %v3374 = vunpack.c.h.b16 %v3302
  %v3375 = vunpack.c.l.b16 %v3303
  %v3376 = vunpack.c.h.b16 %v3303
  %v3377 = vunpack.c.l.b16 %v3304
  %v3378 = vunpack.c.h.b16 %v3304
  %v3379 = vunpack.c.l.b16 %v3305
  %v3380 = vunpack.c.h.b16 %v3305
  %v3381 = vunpack.c.l.b16 %v3306
  %v3382 = vunpack.c.h.b16 %v3306
  %v3383 = vunpack.c.l.b16 %v3307
  %v3384 = vunpack.c.h.b16 %v3307
  %v3385 = vunpack.c.l.b16 %v3308
  %v3386 = vunpack.c.h.b16 %v3308
  %v3387 = vunpack.c.l.b16 %v3309
  %v3388 = vunpack.c.h.b16 %v3309
  %v3389 = vunpack.c.l.b16 %v3310
  %v3390 = vunpack.c.h.b16 %v3310
  %v3391 = vunpack.c.l.b16 %v3311
  %v3392 = vunpack.c.h.b16 %v3311
  %v3393 = vunpack.c.l.b16 %v3312
  %v3394 = vunpack.c.h.b16 %v3312
  %v3395 = vunpack.c.l.b16 %v3313
  %v3396 = vunpack.c.h.b16 %v3313
  %v3397 = vunpack.c.l.b16 %v3314
  %v3398 = vunpack.c.h.b16 %v3314
  %v3399 = vunpack.c.l.b16 %v3315
  %v3400 = vunpack.c.h.b16 %v3315
  %v3401 = vunpack.c.l.b16 %v3316
  %v3402 = vunpack.c.h.b16 %v3316
  %v3403 = vunpack.c.l.b16 %v3317
  %v3404 = vunpack.c.h.b16 %v3317
  %v3405 = vunpack.c.l.b16 %v3318
  %v3406 = vunpack.c.h.b16 %v3318
  %v3407 = vunpack.c.l.b16 %v3319
  %v3408 = vunpack.c.h.b16 %v3319
  %v3409 = vunpack.c.l.b16 %v3320
  %v3410 = vunpack.c.h.b16 %v3320
  %v3411 = vunpack.c.l.b16 %v3321
  %v3412 = vunpack.c.h.b16 %v3321
  %v3413 = vunpack.c.l.b16 %v3322
  %v3414 = vunpack.c.h.b16 %v3322
  %v3415 = vunpack.c.l.b16 %v3323
  %v3416 = vunpack.c.h.b16 %v3323
  %v3417 = vunpack.c.l.b16 %v3324
  %v3418 = vunpack.c.h.b16 %v3324
  %v3419 = vunpack.c.l.b16 %v3325
  %v3420 = vunpack.c.h.b16 %v3325
  %v3421 = vunpack.c.l.b16 %v3326
  %v3422 = vunpack.c.h.b16 %v3326
  %v3423 = vunpack.c.l.b16 %v3327
  %v3424 = vunpack.c.h.b16 %v3327
  %v3425 = vunpack.c.l.b16 %v3328
  %v3426 = vunpack.c.h.b16 %v3328
  %v3427 = vunpack.c.l.b16 %v3329
  %v3428 = vunpack.c.h.b16 %v3329
  %v3429 = vunpack.c.l.b16 %v3330
  %v3430 = vunpack.c.h.b16 %v3330
  %v3431 = vunpack.c.l.b16 %v3331
  %v3432 = vunpack.c.h.b16 %v3331
  %v3433 = vunpack.c.l.b16 %v3332
  %v3434 = vunpack.c.h.b16 %v3332
  %v3435 = vunpack.c.l.b16 %v3333
  %v3436 = vunpack.c.h.b16 %v3333
  %v3437 = vpack.c.b16 %v3377, %v3373
  %v3438 = vpack.c.b16 %v3378, %v3374
  %v3439 = vpack.c.b16 %v3379, %v3375
  %v3440 = vpack.c.b16 %v3380, %v3376
  %v3441 = vpack.c.b16 %v3385, %v3381
  %v3442 = vpack.c.b16 %v3386, %v3382
  %v3443 = vpack.c.b16 %v3387, %v3383
  %v3444 = vpack.c.b16 %v3388, %v3384
  %v3445 = vpack.c.b16 %v3393, %v3389
  %v3446 = vpack.c.b16 %v3394, %v3390
  %v3447 = vpack.c.b16 %v3395, %v3391
  %v3448 = vpack.c.b16 %v3396, %v3392
  %v3449 = vpack.c.b16 %v3401, %v3397
  %v3450 = vpack.c.b16 %v3402, %v3398
  %v3451 = vpack.c.b16 %v3403, %v3399
  %v3452 = vpack.c.b16 %v3404, %v3400
  %v3453 = vpack.c.b16 %v3409, %v3405
  %v3454 = vpack.c.b16 %v3410, %v3406
  %v3455 = vpack.c.b16 %v3411, %v3407
  %v3456 = vpack.c.b16 %v3412, %v3408
  %v3457 = vpack.c.b16 %v3417, %v3413
  %v3458 = vpack.c.b16 %v3418, %v3414
  %v3459 = vpack.c.b16 %v3419, %v3415
  %v3460 = vpack.c.b16 %v3420, %v3416
  %v3461 = vpack.c.b16 %v3425, %v3421
  %v3462 = vpack.c.b16 %v3426, %v3422
  %v3463 = vpack.c.b16 %v3427, %v3423
  %v3464 = vpack.c.b16 %v3428, %v3424
  %v3465 = vpack.c.b16 %v3433, %v3429
  %v3466 = vpack.c.b16 %v3434, %v3430
  %v3467 = vpack.c.b16 %v3435, %v3431
  %v3468 = vpack.c.b16 %v3436, %v3432
  %3501 = vmatprep.subr.bf16.mxu0 %v3438
  %3502 = vmatpush1.bf16.msra.mxu0 %v3437
  %3503 = vmatprep.subr.bf16.mxu0 %v3442
  %3504 = vmatpush1.bf16.msra.mxu0 %v3441
  %3505 = vmatprep.subr.bf16.mxu0 %v3446
  %3506 = vmatpush1.bf16.msra.mxu0 %v3445
  %3507 = vmatprep.subr.bf16.mxu0 %v3450
  %3508 = vmatpush1.bf16.msra.mxu0 %v3449
  %3509 = vmatprep.subr.bf16.mxu0 %v3454
  %3510 = vmatpush1.bf16.msra.mxu0 %v3453
  %3511 = vmatprep.subr.bf16.mxu0 %v3458
  %3512 = vmatpush1.bf16.msra.mxu0 %v3457
  %3513 = vmatprep.subr.bf16.mxu0 %v3462
  %3514 = vmatpush1.bf16.msra.mxu0 %v3461
  %3515 = vmatprep.subr.bf16.mxu0 %v3466
  %3516 = vmatpush1.bf16.msra.mxu0 %v3465
  %3517 = vmatprep.subr.bf16.mxu0 0
  %3518 = vmatpush1.bf16.msra.mxu0 0
  %3519 = vmatprep.subr.bf16.mxu0 0
  %3520 = vmatpush1.bf16.msra.mxu0 0
  %3521 = vmatprep.subr.bf16.mxu0 0
  %3522 = vmatpush1.bf16.msra.mxu0 0
  %3523 = vmatprep.subr.bf16.mxu0 0
  %3524 = vmatpush1.bf16.msra.mxu0 0
  %3525 = vmatprep.subr.bf16.mxu0 0
  %3526 = vmatpush1.bf16.msra.mxu0 0
  %3527 = vmatprep.subr.bf16.mxu0 0
  %3528 = vmatpush1.bf16.msra.mxu0 0
  %3529 = vmatprep.subr.bf16.mxu0 0
  %3530 = vmatpush1.bf16.msra.mxu0 0
  %3531 = vmatprep.subr.bf16.mxu0 0
  %3532 = vmatpush1.bf16.msra.mxu0 0
  %3533 = vmatprep.mubr.bf16.mxu0 0
  %3534 = vmatmul.mubr.bf16.gmra.mrb[0].mxu0 %v3301
  %v3535 = vpop.f32.mrb[0].mxu0
  %v3536 = vadd.f32 %v3337, %v3535
  %v3537 = vpop.f32.mrb[0].mxu0
  %v3538 = vadd.f32 %v3338, %v3537
  %v3539 = vpop.f32.mrb[0].mxu0
  %v3540 = vpop.f32.mrb[0].mxu0
  %3541 = vdwg.mxu0
  %3542 = vmatprep.subr.bf16.mxu0 %v3440
  %3543 = vmatpush1.bf16.msra.mxu0 %v3439
  %3544 = vmatprep.subr.bf16.mxu0 %v3444
  %3545 = vmatpush1.bf16.msra.mxu0 %v3443
  %3546 = vmatprep.subr.bf16.mxu0 %v3448
  %3547 = vmatpush1.bf16.msra.mxu0 %v3447
  %3548 = vmatprep.subr.bf16.mxu0 %v3452
  %3549 = vmatpush1.bf16.msra.mxu0 %v3451
  %3550 = vmatprep.subr.bf16.mxu0 %v3456
  %3551 = vmatpush1.bf16.msra.mxu0 %v3455
  %3552 = vmatprep.subr.bf16.mxu0 %v3460
  %3553 = vmatpush1.bf16.msra.mxu0 %v3459
  %3554 = vmatprep.subr.bf16.mxu0 %v3464
  %3555 = vmatpush1.bf16.msra.mxu0 %v3463
  %3556 = vmatprep.subr.bf16.mxu0 %v3468
  %3557 = vmatpush1.bf16.msra.mxu0 %v3467
  %3558 = vmatprep.subr.bf16.mxu0 0
  %3559 = vmatpush1.bf16.msra.mxu0 0
  %3560 = vmatprep.subr.bf16.mxu0 0
  %3561 = vmatpush1.bf16.msra.mxu0 0
  %3562 = vmatprep.subr.bf16.mxu0 0
  %3563 = vmatpush1.bf16.msra.mxu0 0
  %3564 = vmatprep.subr.bf16.mxu0 0
  %3565 = vmatpush1.bf16.msra.mxu0 0
  %3566 = vmatprep.subr.bf16.mxu0 0
  %3567 = vmatpush1.bf16.msra.mxu0 0
  %3568 = vmatprep.subr.bf16.mxu0 0
  %3569 = vmatpush1.bf16.msra.mxu0 0
  %3570 = vmatprep.subr.bf16.mxu0 0
  %3571 = vmatpush1.bf16.msra.mxu0 0
  %3572 = vmatprep.subr.bf16.mxu0 0
  %3573 = vmatpush1.bf16.msra.mxu0 0
  %3574 = vmatprep.mubr.bf16.mxu0 0
  %3575 = vmatmul.mubr.bf16.gmra.mrb[0].mxu0 %v3301
  %v3576 = vpop.f32.mrb[0].mxu0
  %v3577 = vadd.f32 %v3339, %v3576
  %v3578 = vpop.f32.mrb[0].mxu0
  %v3579 = vadd.f32 %v3340, %v3578
  %v3580 = vpop.f32.mrb[0].mxu0
  %v3581 = vpop.f32.mrb[0].mxu0
  %3582 = vdwg.mxu0
  %v3583 = vld [vmem:[#allocation3] sm:$0xff]
  %v3584 = vxor.u32 %v3536, 2147483648
  %v3585 = vmul.f32 %v3584, 1.442695
  %v3586 = vpow.pop %v3585
  %v3587 = vadd.f32 %v3586, 1.0
  %v3588 = vrcp.pop %v3587
  %v3589 = vmul.f32 1.0, %v3588
  %v3590 = vxor.u32 %v3538, 2147483648
  %v3591 = vmul.f32 %v3590, 1.442695
  %v3592 = vpow.pop %v3591
  %v3593 = vadd.f32 %v3592, 1.0
  %v3594 = vrcp.pop %v3593
  %v3595 = vmul.f32 1.0, %v3594
  %v3596 = vtanh.pop %v3577
  %v3597 = vxor.u32 %v3579, 2147483648
  %v3598 = vmul.f32 %v3597, 1.442695
  %v3599 = vpow.pop %v3598
  %v3600 = vadd.f32 %v3599, 1.0
  %v3601 = vrcp.pop %v3600
  %v3602 = vmul.f32 1.0, %v3601
  %v3603 = vmul.f32 %v3595, %v3583
  %v3604 = vmul.f32 %v3589, %v3596
  %v3605 = vadd.f32 %v3603, %v3604
  %v3606 = vtanh.pop %v3605
  %v3607 = vmul.f32 %v3602, %v3606
  %3608 = vst [vmem:[#allocation3] sm:$0xff] %v3605
  %v3609 = vpack.c.bf16 %v3607, %v3607
  %3610 = vst [vmem:[#allocation2] sm:$0xf] %v3609
  %v3611 = vld [vmem:[#allocation2] sm:$0xff]
  %v3612 = vld [vmem:[%s2] sm:$0xff]
  %v3613 = vld [vmem:[%s2 + $0x8] sm:$0xff]
  %v3614 = vld [vmem:[%s2 + $0x10] sm:$0xff]
  %v3615 = vld [vmem:[%s2 + $0x18] sm:$0xff]
  %v3616 = vld [vmem:[%s2 + $0x20] sm:$0xff]
  %v3617 = vld [vmem:[%s2 + $0x28] sm:$0xff]
  %v3618 = vld [vmem:[%s2 + $0x30] sm:$0xff]
  %v3619 = vld [vmem:[%s2 + $0x38] sm:$0xff]
  %v3620 = vld [vmem:[%s2 + $0x40] sm:$0xff]
  %v3621 = vld [vmem:[%s2 + $0x48] sm:$0xff]
  %v3622 = vld [vmem:[%s2 + $0x50] sm:$0xff]
  %v3623 = vld [vmem:[%s2 + $0x58] sm:$0xff]
  %v3624 = vld [vmem:[%s2 + $0x60] sm:$0xff]
  %v3625 = vld [vmem:[%s2 + $0x68] sm:$0xff]
  %v3626 = vld [vmem:[%s2 + $0x70] sm:$0xff]
  %v3627 = vld [vmem:[%s2 + $0x78] sm:$0xff]
  %v3628 = vld [vmem:[%s2 + $0x80] sm:$0xff]
  %v3629 = vld [vmem:[%s2 + $0x88] sm:$0xff]
  %v3630 = vld [vmem:[%s2 + $0x90] sm:$0xff]
  %v3631 = vld [vmem:[%s2 + $0x98] sm:$0xff]
  %v3632 = vld [vmem:[%s2 + $0xa0] sm:$0xff]
  %v3633 = vld [vmem:[%s2 + $0xa8] sm:$0xff]
  %v3634 = vld [vmem:[%s2 + $0xb0] sm:$0xff]
  %v3635 = vld [vmem:[%s2 + $0xb8] sm:$0xff]
  %v3636 = vld [vmem:[%s2 + $0xc0] sm:$0xff]
  %v3637 = vld [vmem:[%s2 + $0xc8] sm:$0xff]
  %v3638 = vld [vmem:[%s2 + $0xd0] sm:$0xff]
  %v3639 = vld [vmem:[%s2 + $0xd8] sm:$0xff]
  %v3640 = vld [vmem:[%s2 + $0xe0] sm:$0xff]
  %v3641 = vld [vmem:[%s2 + $0xe8] sm:$0xff]
  %v3642 = vld [vmem:[%s2 + $0xf0] sm:$0xff]
  %v3643 = vld [vmem:[%s2 + $0xf8] sm:$0xff]
  %v3644 = vld [vmem:[%s2 + $0x100] sm:$0xff]
  %v3645 = vld [vmem:[%s2 + $0x108] sm:$0xff]
  %v3646 = vld [vmem:[%s2 + $0x110] sm:$0xff]
  %v3647 = vld [vmem:[%s2 + $0x118] sm:$0xff]
  %v3648 = vld [vmem:[%s2 + $0x120] sm:$0xff]
  %v3649 = vld [vmem:[%s2 + $0x128] sm:$0xff]
  %v3650 = vld [vmem:[%s2 + $0x130] sm:$0xff]
  %v3651 = vld [vmem:[%s2 + $0x138] sm:$0xff]
  %v3652 = vld [vmem:[%s2 + $0x140] sm:$0xff]
  %v3653 = vld [vmem:[%s2 + $0x148] sm:$0xff]
  %v3654 = vld [vmem:[%s2 + $0x150] sm:$0xff]
  %v3655 = vld [vmem:[%s2 + $0x158] sm:$0xff]
  %v3656 = vld [vmem:[%s2 + $0x160] sm:$0xff]
  %v3657 = vld [vmem:[%s2 + $0x168] sm:$0xff]
  %v3658 = vld [vmem:[%s2 + $0x170] sm:$0xff]
  %v3659 = vld [vmem:[%s2 + $0x178] sm:$0xff]
  %v3660 = vld [vmem:[%s2 + $0x180] sm:$0xff]
  %v3661 = vld [vmem:[%s2 + $0x188] sm:$0xff]
  %v3662 = vld [vmem:[%s2 + $0x190] sm:$0xff]
  %v3663 = vld [vmem:[%s2 + $0x198] sm:$0xff]
  %v3664 = vld [vmem:[%s2 + $0x1a0] sm:$0xff]
  %v3665 = vld [vmem:[%s2 + $0x1a8] sm:$0xff]
  %v3666 = vld [vmem:[%s2 + $0x1b0] sm:$0xff]
  %v3667 = vld [vmem:[%s2 + $0x1b8] sm:$0xff]
  %v3668 = vld [vmem:[%s2 + $0x1c0] sm:$0xff]
  %v3669 = vld [vmem:[%s2 + $0x1c8] sm:$0xff]
  %v3670 = vld [vmem:[%s2 + $0x1d0] sm:$0xff]
  %v3671 = vld [vmem:[%s2 + $0x1d8] sm:$0xff]
  %v3672 = vld [vmem:[%s2 + $0x1e0] sm:$0xff]
  %v3673 = vld [vmem:[%s2 + $0x1e8] sm:$0xff]
  %v3674 = vld [vmem:[%s2 + $0x1f0] sm:$0xff]
  %v3675 = vld [vmem:[%s2 + $0x1f8] sm:$0xff]
  %v3677 = vunpack.c.l.b16 %v3611
  %v3678 = vunpack.c.h.b16 %v3611
  %v3679 = vpack.c.b16 %v3677, %v3677
  %v3680 = vpack.c.b16 %v3678, %v3678
  %v3747 = vunpack.c.l.b16 %v3612
  %v3748 = vunpack.c.h.b16 %v3612
  %v3749 = vunpack.c.l.b16 %v3613
  %v3750 = vunpack.c.h.b16 %v3613
  %v3751 = vunpack.c.l.b16 %v3614
  %v3752 = vunpack.c.h.b16 %v3614
  %v3753 = vunpack.c.l.b16 %v3615
  %v3754 = vunpack.c.h.b16 %v3615
  %v3755 = vunpack.c.l.b16 %v3616
  %v3756 = vunpack.c.h.b16 %v3616
  %v3757 = vunpack.c.l.b16 %v3617
  %v3758 = vunpack.c.h.b16 %v3617
  %v3759 = vunpack.c.l.b16 %v3618
  %v3760 = vunpack.c.h.b16 %v3618
  %v3761 = vunpack.c.l.b16 %v3619
  %v3762 = vunpack.c.h.b16 %v3619
  %v3763 = vunpack.c.l.b16 %v3620
  %v3764 = vunpack.c.h.b16 %v3620
  %v3765 = vunpack.c.l.b16 %v3621
  %v3766 = vunpack.c.h.b16 %v3621
  %v3767 = vunpack.c.l.b16 %v3622
  %v3768 = vunpack.c.h.b16 %v3622
  %v3769 = vunpack.c.l.b16 %v3623
  %v3770 = vunpack.c.h.b16 %v3623
  %v3771 = vunpack.c.l.b16 %v3624
  %v3772 = vunpack.c.h.b16 %v3624
  %v3773 = vunpack.c.l.b16 %v3625
  %v3774 = vunpack.c.h.b16 %v3625
  %v3775 = vunpack.c.l.b16 %v3626
  %v3776 = vunpack.c.h.b16 %v3626
  %v3777 = vunpack.c.l.b16 %v3627
  %v3778 = vunpack.c.h.b16 %v3627
  %v3779 = vunpack.c.l.b16 %v3628
  %v3780 = vunpack.c.h.b16 %v3628
  %v3781 = vunpack.c.l.b16 %v3629
  %v3782 = vunpack.c.h.b16 %v3629
  %v3783 = vunpack.c.l.b16 %v3630
  %v3784 = vunpack.c.h.b16 %v3630
  %v3785 = vunpack.c.l.b16 %v3631
  %v3786 = vunpack.c.h.b16 %v3631
  %v3787 = vunpack.c.l.b16 %v3632
  %v3788 = vunpack.c.h.b16 %v3632
  %v3789 = vunpack.c.l.b16 %v3633
  %v3790 = vunpack.c.h.b16 %v3633
  %v3791 = vunpack.c.l.b16 %v3634
  %v3792 = vunpack.c.h.b16 %v3634
  %v3793 = vunpack.c.l.b16 %v3635
  %v3794 = vunpack.c.h.b16 %v3635
  %v3795 = vunpack.c.l.b16 %v3636
  %v3796 = vunpack.c.h.b16 %v3636
  %v3797 = vunpack.c.l.b16 %v3637
  %v3798 = vunpack.c.h.b16 %v3637
  %v3799 = vunpack.c.l.b16 %v3638
  %v3800 = vunpack.c.h.b16 %v3638
  %v3801 = vunpack.c.l.b16 %v3639
  %v3802 = vunpack.c.h.b16 %v3639
  %v3803 = vunpack.c.l.b16 %v3640
  %v3804 = vunpack.c.h.b16 %v3640
  %v3805 = vunpack.c.l.b16 %v3641
  %v3806 = vunpack.c.h.b16 %v3641
  %v3807 = vunpack.c.l.b16 %v3642
  %v3808 = vunpack.c.h.b16 %v3642
  %v3809 = vunpack.c.l.b16 %v3643
  %v3810 = vunpack.c.h.b16 %v3643
  %v3811 = vunpack.c.l.b16 %v3644
  %v3812 = vunpack.c.h.b16 %v3644
  %v3813 = vunpack.c.l.b16 %v3645
  %v3814 = vunpack.c.h.b16 %v3645
  %v3815 = vunpack.c.l.b16 %v3646
  %v3816 = vunpack.c.h.b16 %v3646
  %v3817 = vunpack.c.l.b16 %v3647
  %v3818 = vunpack.c.h.b16 %v3647
  %v3819 = vunpack.c.l.b16 %v3648
  %v3820 = vunpack.c.h.b16 %v3648
  %v3821 = vunpack.c.l.b16 %v3649
  %v3822 = vunpack.c.h.b16 %v3649
  %v3823 = vunpack.c.l.b16 %v3650
  %v3824 = vunpack.c.h.b16 %v3650
  %v3825 = vunpack.c.l.b16 %v3651
  %v3826 = vunpack.c.h.b16 %v3651
  %v3827 = vunpack.c.l.b16 %v3652
  %v3828 = vunpack.c.h.b16 %v3652
  %v3829 = vunpack.c.l.b16 %v3653
  %v3830 = vunpack.c.h.b16 %v3653
  %v3831 = vunpack.c.l.b16 %v3654
  %v3832 = vunpack.c.h.b16 %v3654
  %v3833 = vunpack.c.l.b16 %v3655
  %v3834 = vunpack.c.h.b16 %v3655
  %v3835 = vunpack.c.l.b16 %v3656
  %v3836 = vunpack.c.h.b16 %v3656
  %v3837 = vunpack.c.l.b16 %v3657
  %v3838 = vunpack.c.h.b16 %v3657
  %v3839 = vunpack.c.l.b16 %v3658
  %v3840 = vunpack.c.h.b16 %v3658
  %v3841 = vunpack.c.l.b16 %v3659
  %v3842 = vunpack.c.h.b16 %v3659
  %v3843 = vunpack.c.l.b16 %v3660
  %v3844 = vunpack.c.h.b16 %v3660
  %v3845 = vunpack.c.l.b16 %v3661
  %v3846 = vunpack.c.h.b16 %v3661
  %v3847 = vunpack.c.l.b16 %v3662
  %v3848 = vunpack.c.h.b16 %v3662
  %v3849 = vunpack.c.l.b16 %v3663
  %v3850 = vunpack.c.h.b16 %v3663
  %v3851 = vunpack.c.l.b16 %v3664
  %v3852 = vunpack.c.h.b16 %v3664
  %v3853 = vunpack.c.l.b16 %v3665
  %v3854 = vunpack.c.h.b16 %v3665
  %v3855 = vunpack.c.l.b16 %v3666
  %v3856 = vunpack.c.h.b16 %v3666
  %v3857 = vunpack.c.l.b16 %v3667
  %v3858 = vunpack.c.h.b16 %v3667
  %v3859 = vunpack.c.l.b16 %v3668
  %v3860 = vunpack.c.h.b16 %v3668
  %v3861 = vunpack.c.l.b16 %v3669
  %v3862 = vunpack.c.h.b16 %v3669
  %v3863 = vunpack.c.l.b16 %v3670
  %v3864 = vunpack.c.h.b16 %v3670
  %v3865 = vunpack.c.l.b16 %v3671
  %v3866 = vunpack.c.h.b16 %v3671
  %v3867 = vunpack.c.l.b16 %v3672
  %v3868 = vunpack.c.h.b16 %v3672
  %v3869 = vunpack.c.l.b16 %v3673
  %v3870 = vunpack.c.h.b16 %v3673
  %v3871 = vunpack.c.l.b16 %v3674
  %v3872 = vunpack.c.h.b16 %v3674
  %v3873 = vunpack.c.l.b16 %v3675
  %v3874 = vunpack.c.h.b16 %v3675
  %v3875 = vpack.c.b16 %v3751, %v3747
  %v3876 = vpack.c.b16 %v3752, %v3748
  %v3877 = vpack.c.b16 %v3753, %v3749
  %v3878 = vpack.c.b16 %v3754, %v3750
  %v3879 = vpack.c.b16 %v3759, %v3755
  %v3880 = vpack.c.b16 %v3760, %v3756
  %v3881 = vpack.c.b16 %v3761, %v3757
  %v3882 = vpack.c.b16 %v3762, %v3758
  %v3883 = vpack.c.b16 %v3767, %v3763
  %v3884 = vpack.c.b16 %v3768, %v3764
  %v3885 = vpack.c.b16 %v3769, %v3765
  %v3886 = vpack.c.b16 %v3770, %v3766
  %v3887 = vpack.c.b16 %v3775, %v3771
  %v3888 = vpack.c.b16 %v3776, %v3772
  %v3889 = vpack.c.b16 %v3777, %v3773
  %v3890 = vpack.c.b16 %v3778, %v3774
  %v3891 = vpack.c.b16 %v3783, %v3779
  %v3892 = vpack.c.b16 %v3784, %v3780
  %v3893 = vpack.c.b16 %v3785, %v3781
  %v3894 = vpack.c.b16 %v3786, %v3782
  %v3895 = vpack.c.b16 %v3791, %v3787
  %v3896 = vpack.c.b16 %v3792, %v3788
  %v3897 = vpack.c.b16 %v3793, %v3789
  %v3898 = vpack.c.b16 %v3794, %v3790
  %v3899 = vpack.c.b16 %v3799, %v3795
  %v3900 = vpack.c.b16 %v3800, %v3796
  %v3901 = vpack.c.b16 %v3801, %v3797
  %v3902 = vpack.c.b16 %v3802, %v3798
  %v3903 = vpack.c.b16 %v3807, %v3803
  %v3904 = vpack.c.b16 %v3808, %v3804
  %v3905 = vpack.c.b16 %v3809, %v3805
  %v3906 = vpack.c.b16 %v3810, %v3806
  %v3907 = vpack.c.b16 %v3815, %v3811
  %v3908 = vpack.c.b16 %v3816, %v3812
  %v3909 = vpack.c.b16 %v3817, %v3813
  %v3910 = vpack.c.b16 %v3818, %v3814
  %v3911 = vpack.c.b16 %v3823, %v3819
  %v3912 = vpack.c.b16 %v3824, %v3820
  %v3913 = vpack.c.b16 %v3825, %v3821
  %v3914 = vpack.c.b16 %v3826, %v3822
  %v3915 = vpack.c.b16 %v3831, %v3827
  %v3916 = vpack.c.b16 %v3832, %v3828
  %v3917 = vpack.c.b16 %v3833, %v3829
  %v3918 = vpack.c.b16 %v3834, %v3830
  %v3919 = vpack.c.b16 %v3839, %v3835
  %v3920 = vpack.c.b16 %v3840, %v3836
  %v3921 = vpack.c.b16 %v3841, %v3837
  %v3922 = vpack.c.b16 %v3842, %v3838
  %v3923 = vpack.c.b16 %v3847, %v3843
  %v3924 = vpack.c.b16 %v3848, %v3844
  %v3925 = vpack.c.b16 %v3849, %v3845
  %v3926 = vpack.c.b16 %v3850, %v3846
  %v3927 = vpack.c.b16 %v3855, %v3851
  %v3928 = vpack.c.b16 %v3856, %v3852
  %v3929 = vpack.c.b16 %v3857, %v3853
  %v3930 = vpack.c.b16 %v3858, %v3854
  %v3931 = vpack.c.b16 %v3863, %v3859
  %v3932 = vpack.c.b16 %v3864, %v3860
  %v3933 = vpack.c.b16 %v3865, %v3861
  %v3934 = vpack.c.b16 %v3866, %v3862
  %v3935 = vpack.c.b16 %v3871, %v3867
  %v3936 = vpack.c.b16 %v3872, %v3868
  %v3937 = vpack.c.b16 %v3873, %v3869
  %v3938 = vpack.c.b16 %v3874, %v3870
  %4003 = vmatprep.subr.bf16.mxu0 %v3876
  %4004 = vmatpush1.bf16.msra.mxu0 %v3875
  %4005 = vmatprep.subr.bf16.mxu0 %v3880
  %4006 = vmatpush1.bf16.msra.mxu0 %v3879
  %4007 = vmatprep.subr.bf16.mxu0 %v3884
  %4008 = vmatpush1.bf16.msra.mxu0 %v3883
  %4009 = vmatprep.subr.bf16.mxu0 %v3888
  %4010 = vmatpush1.bf16.msra.mxu0 %v3887
  %4011 = vmatprep.subr.bf16.mxu0 %v3892
  %4012 = vmatpush1.bf16.msra.mxu0 %v3891
  %4013 = vmatprep.subr.bf16.mxu0 %v3896
  %4014 = vmatpush1.bf16.msra.mxu0 %v3895
  %4015 = vmatprep.subr.bf16.mxu0 %v3900
  %4016 = vmatpush1.bf16.msra.mxu0 %v3899
  %4017 = vmatprep.subr.bf16.mxu0 %v3904
  %4018 = vmatpush1.bf16.msra.mxu0 %v3903
  %4019 = vmatprep.subr.bf16.mxu0 %v3908
  %4020 = vmatpush1.bf16.msra.mxu0 %v3907
  %4021 = vmatprep.subr.bf16.mxu0 %v3912
  %4022 = vmatpush1.bf16.msra.mxu0 %v3911
  %4023 = vmatprep.subr.bf16.mxu0 %v3916
  %4024 = vmatpush1.bf16.msra.mxu0 %v3915
  %4025 = vmatprep.subr.bf16.mxu0 %v3920
  %4026 = vmatpush1.bf16.msra.mxu0 %v3919
  %4027 = vmatprep.subr.bf16.mxu0 %v3924
  %4028 = vmatpush1.bf16.msra.mxu0 %v3923
  %4029 = vmatprep.subr.bf16.mxu0 %v3928
  %4030 = vmatpush1.bf16.msra.mxu0 %v3927
  %4031 = vmatprep.subr.bf16.mxu0 %v3932
  %4032 = vmatpush1.bf16.msra.mxu0 %v3931
  %4033 = vmatprep.subr.bf16.mxu0 %v3936
  %4034 = vmatpush1.bf16.msra.mxu0 %v3935
  %4035 = vmatprep.mubr.bf16.mxu0 %v3680
  %4036 = vmatmul.mubr.bf16.gmra.mrb[0].mxu0 %v3679
  %v4037 = vpop.f32.mrb[0].mxu0
  %v4038 = vadd.f32 %v30, %v4037
  %v4039 = vpop.f32.mrb[0].mxu0
  %v4040 = vadd.f32 %v34, %v4039
  %v4041 = vpop.f32.mrb[0].mxu0
  %v4042 = vpop.f32.mrb[0].mxu0
  %4043 = vdwg.mxu0
  %4044 = vmatprep.subr.bf16.mxu0 %v3878
  %4045 = vmatpush1.bf16.msra.mxu0 %v3877
  %4046 = vmatprep.subr.bf16.mxu0 %v3882
  %4047 = vmatpush1.bf16.msra.mxu0 %v3881
  %4048 = vmatprep.subr.bf16.mxu0 %v3886
  %4049 = vmatpush1.bf16.msra.mxu0 %v3885
  %4050 = vmatprep.subr.bf16.mxu0 %v3890
  %4051 = vmatpush1.bf16.msra.mxu0 %v3889
  %4052 = vmatprep.subr.bf16.mxu0 %v3894
  %4053 = vmatpush1.bf16.msra.mxu0 %v3893
  %4054 = vmatprep.subr.bf16.mxu0 %v3898
  %4055 = vmatpush1.bf16.msra.mxu0 %v3897
  %4056 = vmatprep.subr.bf16.mxu0 %v3902
  %4057 = vmatpush1.bf16.msra.mxu0 %v3901
  %4058 = vmatprep.subr.bf16.mxu0 %v3906
  %4059 = vmatpush1.bf16.msra.mxu0 %v3905
  %4060 = vmatprep.subr.bf16.mxu0 %v3910
  %4061 = vmatpush1.bf16.msra.mxu0 %v3909
  %4062 = vmatprep.subr.bf16.mxu0 %v3914
  %4063 = vmatpush1.bf16.msra.mxu0 %v3913
  %4064 = vmatprep.subr.bf16.mxu0 %v3918
  %4065 = vmatpush1.bf16.msra.mxu0 %v3917
  %4066 = vmatprep.subr.bf16.mxu0 %v3922
  %4067 = vmatpush1.bf16.msra.mxu0 %v3921
  %4068 = vmatprep.subr.bf16.mxu0 %v3926
  %4069 = vmatpush1.bf16.msra.mxu0 %v3925
  %4070 = vmatprep.subr.bf16.mxu0 %v3930
  %4071 = vmatpush1.bf16.msra.mxu0 %v3929
  %4072 = vmatprep.subr.bf16.mxu0 %v3934
  %4073 = vmatpush1.bf16.msra.mxu0 %v3933
  %4074 = vmatprep.subr.bf16.mxu0 %v3938
  %4075 = vmatpush1.bf16.msra.mxu0 %v3937
  %4076 = vmatprep.mubr.bf16.mxu0 %v3680
  %4077 = vmatmul.mubr.bf16.gmra.mrb[0].mxu0 %v3679
  %v4078 = vpop.f32.mrb[0].mxu0
  %v4079 = vadd.f32 %v38, %v4078
  %v4080 = vpop.f32.mrb[0].mxu0
  %v4081 = vadd.f32 %v42, %v4080
  %v4082 = vpop.f32.mrb[0].mxu0
  %v4083 = vpop.f32.mrb[0].mxu0
  %4084 = vdwg.mxu0
  %v4085 = vld [vmem:[#allocation4] sm:$0xff]
  %v4086 = vxor.u32 %v4038, 2147483648
  %v4087 = vmul.f32 %v4086, 1.442695
  %v4088 = vpow.pop %v4087
  %v4089 = vadd.f32 %v4088, 1.0
  %v4090 = vrcp.pop %v4089
  %v4091 = vmul.f32 1.0, %v4090
  %v4092 = vxor.u32 %v4040, 2147483648
  %v4093 = vmul.f32 %v4092, 1.442695
  %v4094 = vpow.pop %v4093
  %v4095 = vadd.f32 %v4094, 1.0
  %v4096 = vrcp.pop %v4095
  %v4097 = vmul.f32 1.0, %v4096
  %v4098 = vtanh.pop %v4079
  %v4099 = vxor.u32 %v4081, 2147483648
  %v4100 = vmul.f32 %v4099, 1.442695
  %v4101 = vpow.pop %v4100
  %v4102 = vadd.f32 %v4101, 1.0
  %v4103 = vrcp.pop %v4102
  %v4104 = vmul.f32 1.0, %v4103
  %v4105 = vmul.f32 %v4097, %v4085
  %v4106 = vmul.f32 %v4091, %v4098
  %v4107 = vadd.f32 %v4105, %v4106
  %v4108 = vtanh.pop %v4107
  %v4109 = vmul.f32 %v4104, %v4108
  %4110 = vst [vmem:[#allocation4] sm:$0xff] %v4107
  %v4111 = vpack.c.bf16 %v4109, %v4109
  %4112 = vst [vmem:[#allocation2 + $0x4] sm:$0xf] %v4111
  %s4113 = scalar_lea.vmem %s4, 16
  %4114 = vst [vmem:[%s4113] sm:$0xf] %v4111
  %v4115 = vld [vmem:[#allocation2] sm:$0xf]
  %v4116 = vld [vmem:[%s1] sm:$0xff]
  %v4117 = vld [vmem:[%s1 + $0x8] sm:$0xff]
  %v4118 = vld [vmem:[%s1 + $0x10] sm:$0xff]
  %v4119 = vld [vmem:[%s1 + $0x18] sm:$0xff]
  %v4120 = vld [vmem:[%s1 + $0x20] sm:$0xff]
  %v4121 = vld [vmem:[%s1 + $0x28] sm:$0xff]
  %v4122 = vld [vmem:[%s1 + $0x30] sm:$0xff]
  %v4123 = vld [vmem:[%s1 + $0x38] sm:$0xff]
  %v4124 = vld [vmem:[%s1 + $0x40] sm:$0xff]
  %v4125 = vld [vmem:[%s1 + $0x48] sm:$0xff]
  %v4126 = vld [vmem:[%s1 + $0x50] sm:$0xff]
  %v4127 = vld [vmem:[%s1 + $0x58] sm:$0xff]
  %v4128 = vld [vmem:[%s1 + $0x60] sm:$0xff]
  %v4129 = vld [vmem:[%s1 + $0x68] sm:$0xff]
  %v4130 = vld [vmem:[%s1 + $0x70] sm:$0xff]
  %v4131 = vld [vmem:[%s1 + $0x78] sm:$0xff]
  %v4132 = vld [vmem:[%s1 + $0x80] sm:$0xff]
  %v4133 = vld [vmem:[%s1 + $0x88] sm:$0xff]
  %v4134 = vld [vmem:[%s1 + $0x90] sm:$0xff]
  %v4135 = vld [vmem:[%s1 + $0x98] sm:$0xff]
  %v4136 = vld [vmem:[%s1 + $0xa0] sm:$0xff]
  %v4137 = vld [vmem:[%s1 + $0xa8] sm:$0xff]
  %v4138 = vld [vmem:[%s1 + $0xb0] sm:$0xff]
  %v4139 = vld [vmem:[%s1 + $0xb8] sm:$0xff]
  %v4140 = vld [vmem:[%s1 + $0xc0] sm:$0xff]
  %v4141 = vld [vmem:[%s1 + $0xc8] sm:$0xff]
  %v4142 = vld [vmem:[%s1 + $0xd0] sm:$0xff]
  %v4143 = vld [vmem:[%s1 + $0xd8] sm:$0xff]
  %v4144 = vld [vmem:[%s1 + $0xe0] sm:$0xff]
  %v4145 = vld [vmem:[%s1 + $0xe8] sm:$0xff]
  %v4146 = vld [vmem:[%s1 + $0xf0] sm:$0xff]
  %v4147 = vld [vmem:[%s1 + $0xf8] sm:$0xff]
  %s4148 = scalar_lea.vmem %s0, 80
  %v4149 = vld [vmem:[%s4148] sm:$0xff]
  %v4150 = vld [vmem:[%s4148 + $0x8] sm:$0xff]
  %v4151 = vunpack.c.l.bf16 %v4149
  %v4152 = vunpack.c.h.bf16 %v4149
  %v4153 = vunpack.c.l.bf16 %v4150
  %v4154 = vunpack.c.h.bf16 %v4150
  %v4187 = vunpack.c.l.b16 %v4116
  %v4188 = vunpack.c.h.b16 %v4116
  %v4189 = vunpack.c.l.b16 %v4117
  %v4190 = vunpack.c.h.b16 %v4117
  %v4191 = vunpack.c.l.b16 %v4118
  %v4192 = vunpack.c.h.b16 %v4118
  %v4193 = vunpack.c.l.b16 %v4119
  %v4194 = vunpack.c.h.b16 %v4119
  %v4195 = vunpack.c.l.b16 %v4120
  %v4196 = vunpack.c.h.b16 %v4120
  %v4197 = vunpack.c.l.b16 %v4121
  %v4198 = vunpack.c.h.b16 %v4121
  %v4199 = vunpack.c.l.b16 %v4122
  %v4200 = vunpack.c.h.b16 %v4122
  %v4201 = vunpack.c.l.b16 %v4123
  %v4202 = vunpack.c.h.b16 %v4123
  %v4203 = vunpack.c.l.b16 %v4124
  %v4204 = vunpack.c.h.b16 %v4124
  %v4205 = vunpack.c.l.b16 %v4125
  %v4206 = vunpack.c.h.b16 %v4125
  %v4207 = vunpack.c.l.b16 %v4126
  %v4208 = vunpack.c.h.b16 %v4126
  %v4209 = vunpack.c.l.b16 %v4127
  %v4210 = vunpack.c.h.b16 %v4127
  %v4211 = vunpack.c.l.b16 %v4128
  %v4212 = vunpack.c.h.b16 %v4128
  %v4213 = vunpack.c.l.b16 %v4129
  %v4214 = vunpack.c.h.b16 %v4129
  %v4215 = vunpack.c.l.b16 %v4130
  %v4216 = vunpack.c.h.b16 %v4130
  %v4217 = vunpack.c.l.b16 %v4131
  %v4218 = vunpack.c.h.b16 %v4131
  %v4219 = vunpack.c.l.b16 %v4132
  %v4220 = vunpack.c.h.b16 %v4132
  %v4221 = vunpack.c.l.b16 %v4133
  %v4222 = vunpack.c.h.b16 %v4133
  %v4223 = vunpack.c.l.b16 %v4134
  %v4224 = vunpack.c.h.b16 %v4134
  %v4225 = vunpack.c.l.b16 %v4135
  %v4226 = vunpack.c.h.b16 %v4135
  %v4227 = vunpack.c.l.b16 %v4136
  %v4228 = vunpack.c.h.b16 %v4136
  %v4229 = vunpack.c.l.b16 %v4137
  %v4230 = vunpack.c.h.b16 %v4137
  %v4231 = vunpack.c.l.b16 %v4138
  %v4232 = vunpack.c.h.b16 %v4138
  %v4233 = vunpack.c.l.b16 %v4139
  %v4234 = vunpack.c.h.b16 %v4139
  %v4235 = vunpack.c.l.b16 %v4140
  %v4236 = vunpack.c.h.b16 %v4140
  %v4237 = vunpack.c.l.b16 %v4141
  %v4238 = vunpack.c.h.b16 %v4141
  %v4239 = vunpack.c.l.b16 %v4142
  %v4240 = vunpack.c.h.b16 %v4142
  %v4241 = vunpack.c.l.b16 %v4143
  %v4242 = vunpack.c.h.b16 %v4143
  %v4243 = vunpack.c.l.b16 %v4144
  %v4244 = vunpack.c.h.b16 %v4144
  %v4245 = vunpack.c.l.b16 %v4145
  %v4246 = vunpack.c.h.b16 %v4145
  %v4247 = vunpack.c.l.b16 %v4146
  %v4248 = vunpack.c.h.b16 %v4146
  %v4249 = vunpack.c.l.b16 %v4147
  %v4250 = vunpack.c.h.b16 %v4147
  %v4251 = vpack.c.b16 %v4191, %v4187
  %v4252 = vpack.c.b16 %v4192, %v4188
  %v4253 = vpack.c.b16 %v4193, %v4189
  %v4254 = vpack.c.b16 %v4194, %v4190
  %v4255 = vpack.c.b16 %v4199, %v4195
  %v4256 = vpack.c.b16 %v4200, %v4196
  %v4257 = vpack.c.b16 %v4201, %v4197
  %v4258 = vpack.c.b16 %v4202, %v4198
  %v4259 = vpack.c.b16 %v4207, %v4203
  %v4260 = vpack.c.b16 %v4208, %v4204
  %v4261 = vpack.c.b16 %v4209, %v4205
  %v4262 = vpack.c.b16 %v4210, %v4206
  %v4263 = vpack.c.b16 %v4215, %v4211
  %v4264 = vpack.c.b16 %v4216, %v4212
  %v4265 = vpack.c.b16 %v4217, %v4213
  %v4266 = vpack.c.b16 %v4218, %v4214
  %v4267 = vpack.c.b16 %v4223, %v4219
  %v4268 = vpack.c.b16 %v4224, %v4220
  %v4269 = vpack.c.b16 %v4225, %v4221
  %v4270 = vpack.c.b16 %v4226, %v4222
  %v4271 = vpack.c.b16 %v4231, %v4227
  %v4272 = vpack.c.b16 %v4232, %v4228
  %v4273 = vpack.c.b16 %v4233, %v4229
  %v4274 = vpack.c.b16 %v4234, %v4230
  %v4275 = vpack.c.b16 %v4239, %v4235
  %v4276 = vpack.c.b16 %v4240, %v4236
  %v4277 = vpack.c.b16 %v4241, %v4237
  %v4278 = vpack.c.b16 %v4242, %v4238
  %v4279 = vpack.c.b16 %v4247, %v4243
  %v4280 = vpack.c.b16 %v4248, %v4244
  %v4281 = vpack.c.b16 %v4249, %v4245
  %v4282 = vpack.c.b16 %v4250, %v4246
  %4315 = vmatprep.subr.bf16.mxu0 %v4252
  %4316 = vmatpush1.bf16.msra.mxu0 %v4251
  %4317 = vmatprep.subr.bf16.mxu0 %v4256
  %4318 = vmatpush1.bf16.msra.mxu0 %v4255
  %4319 = vmatprep.subr.bf16.mxu0 %v4260
  %4320 = vmatpush1.bf16.msra.mxu0 %v4259
  %4321 = vmatprep.subr.bf16.mxu0 %v4264
  %4322 = vmatpush1.bf16.msra.mxu0 %v4263
  %4323 = vmatprep.subr.bf16.mxu0 %v4268
  %4324 = vmatpush1.bf16.msra.mxu0 %v4267
  %4325 = vmatprep.subr.bf16.mxu0 %v4272
  %4326 = vmatpush1.bf16.msra.mxu0 %v4271
  %4327 = vmatprep.subr.bf16.mxu0 %v4276
  %4328 = vmatpush1.bf16.msra.mxu0 %v4275
  %4329 = vmatprep.subr.bf16.mxu0 %v4280
  %4330 = vmatpush1.bf16.msra.mxu0 %v4279
  %4331 = vmatprep.subr.bf16.mxu0 0
  %4332 = vmatpush1.bf16.msra.mxu0 0
  %4333 = vmatprep.subr.bf16.mxu0 0
  %4334 = vmatpush1.bf16.msra.mxu0 0
  %4335 = vmatprep.subr.bf16.mxu0 0
  %4336 = vmatpush1.bf16.msra.mxu0 0
  %4337 = vmatprep.subr.bf16.mxu0 0
  %4338 = vmatpush1.bf16.msra.mxu0 0
  %4339 = vmatprep.subr.bf16.mxu0 0
  %4340 = vmatpush1.bf16.msra.mxu0 0
  %4341 = vmatprep.subr.bf16.mxu0 0
  %4342 = vmatpush1.bf16.msra.mxu0 0
  %4343 = vmatprep.subr.bf16.mxu0 0
  %4344 = vmatpush1.bf16.msra.mxu0 0
  %4345 = vmatprep.subr.bf16.mxu0 0
  %4346 = vmatpush1.bf16.msra.mxu0 0
  %4347 = vmatprep.mubr.bf16.mxu0 0
  %4348 = vmatmul.mubr.bf16.gmra.mrb[0].mxu0 %v4115
  %v4349 = vpop.f32.mrb[0].mxu0
  %v4350 = vadd.f32 %v4151, %v4349
  %v4351 = vpop.f32.mrb[0].mxu0
  %v4352 = vadd.f32 %v4152, %v4351
  %v4353 = vpop.f32.mrb[0].mxu0
  %v4354 = vpop.f32.mrb[0].mxu0
  %4355 = vdwg.mxu0
  %4356 = vmatprep.subr.bf16.mxu0 %v4254
  %4357 = vmatpush1.bf16.msra.mxu0 %v4253
  %4358 = vmatprep.subr.bf16.mxu0 %v4258
  %4359 = vmatpush1.bf16.msra.mxu0 %v4257
  %4360 = vmatprep.subr.bf16.mxu0 %v4262
  %4361 = vmatpush1.bf16.msra.mxu0 %v4261
  %4362 = vmatprep.subr.bf16.mxu0 %v4266
  %4363 = vmatpush1.bf16.msra.mxu0 %v4265
  %4364 = vmatprep.subr.bf16.mxu0 %v4270
  %4365 = vmatpush1.bf16.msra.mxu0 %v4269
  %4366 = vmatprep.subr.bf16.mxu0 %v4274
  %4367 = vmatpush1.bf16.msra.mxu0 %v4273
  %4368 = vmatprep.subr.bf16.mxu0 %v4278
  %4369 = vmatpush1.bf16.msra.mxu0 %v4277
  %4370 = vmatprep.subr.bf16.mxu0 %v4282
  %4371 = vmatpush1.bf16.msra.mxu0 %v4281
  %4372 = vmatprep.subr.bf16.mxu0 0
  %4373 = vmatpush1.bf16.msra.mxu0 0
  %4374 = vmatprep.subr.bf16.mxu0 0
  %4375 = vmatpush1.bf16.msra.mxu0 0
  %4376 = vmatprep.subr.bf16.mxu0 0
  %4377 = vmatpush1.bf16.msra.mxu0 0
  %4378 = vmatprep.subr.bf16.mxu0 0
  %4379 = vmatpush1.bf16.msra.mxu0 0
  %4380 = vmatprep.subr.bf16.mxu0 0
  %4381 = vmatpush1.bf16.msra.mxu0 0
  %4382 = vmatprep.subr.bf16.mxu0 0
  %4383 = vmatpush1.bf16.msra.mxu0 0
  %4384 = vmatprep.subr.bf16.mxu0 0
  %4385 = vmatpush1.bf16.msra.mxu0 0
  %4386 = vmatprep.subr.bf16.mxu0 0
  %4387 = vmatpush1.bf16.msra.mxu0 0
  %4388 = vmatprep.mubr.bf16.mxu0 0
  %4389 = vmatmul.mubr.bf16.gmra.mrb[0].mxu0 %v4115
  %v4390 = vpop.f32.mrb[0].mxu0
  %v4391 = vadd.f32 %v4153, %v4390
  %v4392 = vpop.f32.mrb[0].mxu0
  %v4393 = vadd.f32 %v4154, %v4392
  %v4394 = vpop.f32.mrb[0].mxu0
  %v4395 = vpop.f32.mrb[0].mxu0
  %4396 = vdwg.mxu0
  %v4397 = vld [vmem:[#allocation3] sm:$0xff]
  %v4398 = vxor.u32 %v4350, 2147483648
  %v4399 = vmul.f32 %v4398, 1.442695
  %v4400 = vpow.pop %v4399
  %v4401 = vadd.f32 %v4400, 1.0
  %v4402 = vrcp.pop %v4401
  %v4403 = vmul.f32 1.0, %v4402
  %v4404 = vxor.u32 %v4352, 2147483648
  %v4405 = vmul.f32 %v4404, 1.442695
  %v4406 = vpow.pop %v4405
  %v4407 = vadd.f32 %v4406, 1.0
  %v4408 = vrcp.pop %v4407
  %v4409 = vmul.f32 1.0, %v4408
  %v4410 = vtanh.pop %v4391
  %v4411 = vxor.u32 %v4393, 2147483648
  %v4412 = vmul.f32 %v4411, 1.442695
  %v4413 = vpow.pop %v4412
  %v4414 = vadd.f32 %v4413, 1.0
  %v4415 = vrcp.pop %v4414
  %v4416 = vmul.f32 1.0, %v4415
  %v4417 = vmul.f32 %v4409, %v4397
  %v4418 = vmul.f32 %v4403, %v4410
  %v4419 = vadd.f32 %v4417, %v4418
  %v4420 = vtanh.pop %v4419
  %v4421 = vmul.f32 %v4416, %v4420
  %4422 = vst [vmem:[#allocation3] sm:$0xff] %v4419
  %v4423 = vpack.c.bf16 %v4421, %v4421
  %4424 = vst [vmem:[#allocation2] sm:$0xf] %v4423
  %v4425 = vld [vmem:[#allocation2] sm:$0xff]
  %v4426 = vld [vmem:[%s2] sm:$0xff]
  %v4427 = vld [vmem:[%s2 + $0x8] sm:$0xff]
  %v4428 = vld [vmem:[%s2 + $0x10] sm:$0xff]
  %v4429 = vld [vmem:[%s2 + $0x18] sm:$0xff]
  %v4430 = vld [vmem:[%s2 + $0x20] sm:$0xff]
  %v4431 = vld [vmem:[%s2 + $0x28] sm:$0xff]
  %v4432 = vld [vmem:[%s2 + $0x30] sm:$0xff]
  %v4433 = vld [vmem:[%s2 + $0x38] sm:$0xff]
  %v4434 = vld [vmem:[%s2 + $0x40] sm:$0xff]
  %v4435 = vld [vmem:[%s2 + $0x48] sm:$0xff]
  %v4436 = vld [vmem:[%s2 + $0x50] sm:$0xff]
  %v4437 = vld [vmem:[%s2 + $0x58] sm:$0xff]
  %v4438 = vld [vmem:[%s2 + $0x60] sm:$0xff]
  %v4439 = vld [vmem:[%s2 + $0x68] sm:$0xff]
  %v4440 = vld [vmem:[%s2 + $0x70] sm:$0xff]
  %v4441 = vld [vmem:[%s2 + $0x78] sm:$0xff]
  %v4442 = vld [vmem:[%s2 + $0x80] sm:$0xff]
  %v4443 = vld [vmem:[%s2 + $0x88] sm:$0xff]
  %v4444 = vld [vmem:[%s2 + $0x90] sm:$0xff]
  %v4445 = vld [vmem:[%s2 + $0x98] sm:$0xff]
  %v4446 = vld [vmem:[%s2 + $0xa0] sm:$0xff]
  %v4447 = vld [vmem:[%s2 + $0xa8] sm:$0xff]
  %v4448 = vld [vmem:[%s2 + $0xb0] sm:$0xff]
  %v4449 = vld [vmem:[%s2 + $0xb8] sm:$0xff]
  %v4450 = vld [vmem:[%s2 + $0xc0] sm:$0xff]
  %v4451 = vld [vmem:[%s2 + $0xc8] sm:$0xff]
  %v4452 = vld [vmem:[%s2 + $0xd0] sm:$0xff]
  %v4453 = vld [vmem:[%s2 + $0xd8] sm:$0xff]
  %v4454 = vld [vmem:[%s2 + $0xe0] sm:$0xff]
  %v4455 = vld [vmem:[%s2 + $0xe8] sm:$0xff]
  %v4456 = vld [vmem:[%s2 + $0xf0] sm:$0xff]
  %v4457 = vld [vmem:[%s2 + $0xf8] sm:$0xff]
  %v4458 = vld [vmem:[%s2 + $0x100] sm:$0xff]
  %v4459 = vld [vmem:[%s2 + $0x108] sm:$0xff]
  %v4460 = vld [vmem:[%s2 + $0x110] sm:$0xff]
  %v4461 = vld [vmem:[%s2 + $0x118] sm:$0xff]
  %v4462 = vld [vmem:[%s2 + $0x120] sm:$0xff]
  %v4463 = vld [vmem:[%s2 + $0x128] sm:$0xff]
  %v4464 = vld [vmem:[%s2 + $0x130] sm:$0xff]
  %v4465 = vld [vmem:[%s2 + $0x138] sm:$0xff]
  %v4466 = vld [vmem:[%s2 + $0x140] sm:$0xff]
  %v4467 = vld [vmem:[%s2 + $0x148] sm:$0xff]
  %v4468 = vld [vmem:[%s2 + $0x150] sm:$0xff]
  %v4469 = vld [vmem:[%s2 + $0x158] sm:$0xff]
  %v4470 = vld [vmem:[%s2 + $0x160] sm:$0xff]
  %v4471 = vld [vmem:[%s2 + $0x168] sm:$0xff]
  %v4472 = vld [vmem:[%s2 + $0x170] sm:$0xff]
  %v4473 = vld [vmem:[%s2 + $0x178] sm:$0xff]
  %v4474 = vld [vmem:[%s2 + $0x180] sm:$0xff]
  %v4475 = vld [vmem:[%s2 + $0x188] sm:$0xff]
  %v4476 = vld [vmem:[%s2 + $0x190] sm:$0xff]
  %v4477 = vld [vmem:[%s2 + $0x198] sm:$0xff]
  %v4478 = vld [vmem:[%s2 + $0x1a0] sm:$0xff]
  %v4479 = vld [vmem:[%s2 + $0x1a8] sm:$0xff]
  %v4480 = vld [vmem:[%s2 + $0x1b0] sm:$0xff]
  %v4481 = vld [vmem:[%s2 + $0x1b8] sm:$0xff]
  %v4482 = vld [vmem:[%s2 + $0x1c0] sm:$0xff]
  %v4483 = vld [vmem:[%s2 + $0x1c8] sm:$0xff]
  %v4484 = vld [vmem:[%s2 + $0x1d0] sm:$0xff]
  %v4485 = vld [vmem:[%s2 + $0x1d8] sm:$0xff]
  %v4486 = vld [vmem:[%s2 + $0x1e0] sm:$0xff]
  %v4487 = vld [vmem:[%s2 + $0x1e8] sm:$0xff]
  %v4488 = vld [vmem:[%s2 + $0x1f0] sm:$0xff]
  %v4489 = vld [vmem:[%s2 + $0x1f8] sm:$0xff]
  %v4491 = vunpack.c.l.b16 %v4425
  %v4492 = vunpack.c.h.b16 %v4425
  %v4493 = vpack.c.b16 %v4491, %v4491
  %v4494 = vpack.c.b16 %v4492, %v4492
  %v4561 = vunpack.c.l.b16 %v4426
  %v4562 = vunpack.c.h.b16 %v4426
  %v4563 = vunpack.c.l.b16 %v4427
  %v4564 = vunpack.c.h.b16 %v4427
  %v4565 = vunpack.c.l.b16 %v4428
  %v4566 = vunpack.c.h.b16 %v4428
  %v4567 = vunpack.c.l.b16 %v4429
  %v4568 = vunpack.c.h.b16 %v4429
  %v4569 = vunpack.c.l.b16 %v4430
  %v4570 = vunpack.c.h.b16 %v4430
  %v4571 = vunpack.c.l.b16 %v4431
  %v4572 = vunpack.c.h.b16 %v4431
  %v4573 = vunpack.c.l.b16 %v4432
  %v4574 = vunpack.c.h.b16 %v4432
  %v4575 = vunpack.c.l.b16 %v4433
  %v4576 = vunpack.c.h.b16 %v4433
  %v4577 = vunpack.c.l.b16 %v4434
  %v4578 = vunpack.c.h.b16 %v4434
  %v4579 = vunpack.c.l.b16 %v4435
  %v4580 = vunpack.c.h.b16 %v4435
  %v4581 = vunpack.c.l.b16 %v4436
  %v4582 = vunpack.c.h.b16 %v4436
  %v4583 = vunpack.c.l.b16 %v4437
  %v4584 = vunpack.c.h.b16 %v4437
  %v4585 = vunpack.c.l.b16 %v4438
  %v4586 = vunpack.c.h.b16 %v4438
  %v4587 = vunpack.c.l.b16 %v4439
  %v4588 = vunpack.c.h.b16 %v4439
  %v4589 = vunpack.c.l.b16 %v4440
  %v4590 = vunpack.c.h.b16 %v4440
  %v4591 = vunpack.c.l.b16 %v4441
  %v4592 = vunpack.c.h.b16 %v4441
  %v4593 = vunpack.c.l.b16 %v4442
  %v4594 = vunpack.c.h.b16 %v4442
  %v4595 = vunpack.c.l.b16 %v4443
  %v4596 = vunpack.c.h.b16 %v4443
  %v4597 = vunpack.c.l.b16 %v4444
  %v4598 = vunpack.c.h.b16 %v4444
  %v4599 = vunpack.c.l.b16 %v4445
  %v4600 = vunpack.c.h.b16 %v4445
  %v4601 = vunpack.c.l.b16 %v4446
  %v4602 = vunpack.c.h.b16 %v4446
  %v4603 = vunpack.c.l.b16 %v4447
  %v4604 = vunpack.c.h.b16 %v4447
  %v4605 = vunpack.c.l.b16 %v4448
  %v4606 = vunpack.c.h.b16 %v4448
  %v4607 = vunpack.c.l.b16 %v4449
  %v4608 = vunpack.c.h.b16 %v4449
  %v4609 = vunpack.c.l.b16 %v4450
  %v4610 = vunpack.c.h.b16 %v4450
  %v4611 = vunpack.c.l.b16 %v4451
  %v4612 = vunpack.c.h.b16 %v4451
  %v4613 = vunpack.c.l.b16 %v4452
  %v4614 = vunpack.c.h.b16 %v4452
  %v4615 = vunpack.c.l.b16 %v4453
  %v4616 = vunpack.c.h.b16 %v4453
  %v4617 = vunpack.c.l.b16 %v4454
  %v4618 = vunpack.c.h.b16 %v4454
  %v4619 = vunpack.c.l.b16 %v4455
  %v4620 = vunpack.c.h.b16 %v4455
  %v4621 = vunpack.c.l.b16 %v4456
  %v4622 = vunpack.c.h.b16 %v4456
  %v4623 = vunpack.c.l.b16 %v4457
  %v4624 = vunpack.c.h.b16 %v4457
  %v4625 = vunpack.c.l.b16 %v4458
  %v4626 = vunpack.c.h.b16 %v4458
  %v4627 = vunpack.c.l.b16 %v4459
  %v4628 = vunpack.c.h.b16 %v4459
  %v4629 = vunpack.c.l.b16 %v4460
  %v4630 = vunpack.c.h.b16 %v4460
  %v4631 = vunpack.c.l.b16 %v4461
  %v4632 = vunpack.c.h.b16 %v4461
  %v4633 = vunpack.c.l.b16 %v4462
  %v4634 = vunpack.c.h.b16 %v4462
  %v4635 = vunpack.c.l.b16 %v4463
  %v4636 = vunpack.c.h.b16 %v4463
  %v4637 = vunpack.c.l.b16 %v4464
  %v4638 = vunpack.c.h.b16 %v4464
  %v4639 = vunpack.c.l.b16 %v4465
  %v4640 = vunpack.c.h.b16 %v4465
  %v4641 = vunpack.c.l.b16 %v4466
  %v4642 = vunpack.c.h.b16 %v4466
  %v4643 = vunpack.c.l.b16 %v4467
  %v4644 = vunpack.c.h.b16 %v4467
  %v4645 = vunpack.c.l.b16 %v4468
  %v4646 = vunpack.c.h.b16 %v4468
  %v4647 = vunpack.c.l.b16 %v4469
  %v4648 = vunpack.c.h.b16 %v4469
  %v4649 = vunpack.c.l.b16 %v4470
  %v4650 = vunpack.c.h.b16 %v4470
  %v4651 = vunpack.c.l.b16 %v4471
  %v4652 = vunpack.c.h.b16 %v4471
  %v4653 = vunpack.c.l.b16 %v4472
  %v4654 = vunpack.c.h.b16 %v4472
  %v4655 = vunpack.c.l.b16 %v4473
  %v4656 = vunpack.c.h.b16 %v4473
  %v4657 = vunpack.c.l.b16 %v4474
  %v4658 = vunpack.c.h.b16 %v4474
  %v4659 = vunpack.c.l.b16 %v4475
  %v4660 = vunpack.c.h.b16 %v4475
  %v4661 = vunpack.c.l.b16 %v4476
  %v4662 = vunpack.c.h.b16 %v4476
  %v4663 = vunpack.c.l.b16 %v4477
  %v4664 = vunpack.c.h.b16 %v4477
  %v4665 = vunpack.c.l.b16 %v4478
  %v4666 = vunpack.c.h.b16 %v4478
  %v4667 = vunpack.c.l.b16 %v4479
  %v4668 = vunpack.c.h.b16 %v4479
  %v4669 = vunpack.c.l.b16 %v4480
  %v4670 = vunpack.c.h.b16 %v4480
  %v4671 = vunpack.c.l.b16 %v4481
  %v4672 = vunpack.c.h.b16 %v4481
  %v4673 = vunpack.c.l.b16 %v4482
  %v4674 = vunpack.c.h.b16 %v4482
  %v4675 = vunpack.c.l.b16 %v4483
  %v4676 = vunpack.c.h.b16 %v4483
  %v4677 = vunpack.c.l.b16 %v4484
  %v4678 = vunpack.c.h.b16 %v4484
  %v4679 = vunpack.c.l.b16 %v4485
  %v4680 = vunpack.c.h.b16 %v4485
  %v4681 = vunpack.c.l.b16 %v4486
  %v4682 = vunpack.c.h.b16 %v4486
  %v4683 = vunpack.c.l.b16 %v4487
  %v4684 = vunpack.c.h.b16 %v4487
  %v4685 = vunpack.c.l.b16 %v4488
  %v4686 = vunpack.c.h.b16 %v4488
  %v4687 = vunpack.c.l.b16 %v4489
  %v4688 = vunpack.c.h.b16 %v4489
  %v4689 = vpack.c.b16 %v4565, %v4561
  %v4690 = vpack.c.b16 %v4566, %v4562
  %v4691 = vpack.c.b16 %v4567, %v4563
  %v4692 = vpack.c.b16 %v4568, %v4564
  %v4693 = vpack.c.b16 %v4573, %v4569
  %v4694 = vpack.c.b16 %v4574, %v4570
  %v4695 = vpack.c.b16 %v4575, %v4571
  %v4696 = vpack.c.b16 %v4576, %v4572
  %v4697 = vpack.c.b16 %v4581, %v4577
  %v4698 = vpack.c.b16 %v4582, %v4578
  %v4699 = vpack.c.b16 %v4583, %v4579
  %v4700 = vpack.c.b16 %v4584, %v4580
  %v4701 = vpack.c.b16 %v4589, %v4585
  %v4702 = vpack.c.b16 %v4590, %v4586
  %v4703 = vpack.c.b16 %v4591, %v4587
  %v4704 = vpack.c.b16 %v4592, %v4588
  %v4705 = vpack.c.b16 %v4597, %v4593
  %v4706 = vpack.c.b16 %v4598, %v4594
  %v4707 = vpack.c.b16 %v4599, %v4595
  %v4708 = vpack.c.b16 %v4600, %v4596
  %v4709 = vpack.c.b16 %v4605, %v4601
  %v4710 = vpack.c.b16 %v4606, %v4602
  %v4711 = vpack.c.b16 %v4607, %v4603
  %v4712 = vpack.c.b16 %v4608, %v4604
  %v4713 = vpack.c.b16 %v4613, %v4609
  %v4714 = vpack.c.b16 %v4614, %v4610
  %v4715 = vpack.c.b16 %v4615, %v4611
  %v4716 = vpack.c.b16 %v4616, %v4612
  %v4717 = vpack.c.b16 %v4621, %v4617
  %v4718 = vpack.c.b16 %v4622, %v4618
  %v4719 = vpack.c.b16 %v4623, %v4619
  %v4720 = vpack.c.b16 %v4624, %v4620
  %v4721 = vpack.c.b16 %v4629, %v4625
  %v4722 = vpack.c.b16 %v4630, %v4626
  %v4723 = vpack.c.b16 %v4631, %v4627
  %v4724 = vpack.c.b16 %v4632, %v4628
  %v4725 = vpack.c.b16 %v4637, %v4633
  %v4726 = vpack.c.b16 %v4638, %v4634
  %v4727 = vpack.c.b16 %v4639, %v4635
  %v4728 = vpack.c.b16 %v4640, %v4636
  %v4729 = vpack.c.b16 %v4645, %v4641
  %v4730 = vpack.c.b16 %v4646, %v4642
  %v4731 = vpack.c.b16 %v4647, %v4643
  %v4732 = vpack.c.b16 %v4648, %v4644
  %v4733 = vpack.c.b16 %v4653, %v4649
  %v4734 = vpack.c.b16 %v4654, %v4650
  %v4735 = vpack.c.b16 %v4655, %v4651
  %v4736 = vpack.c.b16 %v4656, %v4652
  %v4737 = vpack.c.b16 %v4661, %v4657
  %v4738 = vpack.c.b16 %v4662, %v4658
  %v4739 = vpack.c.b16 %v4663, %v4659
  %v4740 = vpack.c.b16 %v4664, %v4660
  %v4741 = vpack.c.b16 %v4669, %v4665
  %v4742 = vpack.c.b16 %v4670, %v4666
  %v4743 = vpack.c.b16 %v4671, %v4667
  %v4744 = vpack.c.b16 %v4672, %v4668
  %v4745 = vpack.c.b16 %v4677, %v4673
  %v4746 = vpack.c.b16 %v4678, %v4674
  %v4747 = vpack.c.b16 %v4679, %v4675
  %v4748 = vpack.c.b16 %v4680, %v4676
  %v4749 = vpack.c.b16 %v4685, %v4681
  %v4750 = vpack.c.b16 %v4686, %v4682
  %v4751 = vpack.c.b16 %v4687, %v4683
  %v4752 = vpack.c.b16 %v4688, %v4684
  %4817 = vmatprep.subr.bf16.mxu0 %v4690
  %4818 = vmatpush1.bf16.msra.mxu0 %v4689
  %4819 = vmatprep.subr.bf16.mxu0 %v4694
  %4820 = vmatpush1.bf16.msra.mxu0 %v4693
  %4821 = vmatprep.subr.bf16.mxu0 %v4698
  %4822 = vmatpush1.bf16.msra.mxu0 %v4697
  %4823 = vmatprep.subr.bf16.mxu0 %v4702
  %4824 = vmatpush1.bf16.msra.mxu0 %v4701
  %4825 = vmatprep.subr.bf16.mxu0 %v4706
  %4826 = vmatpush1.bf16.msra.mxu0 %v4705
  %4827 = vmatprep.subr.bf16.mxu0 %v4710
  %4828 = vmatpush1.bf16.msra.mxu0 %v4709
  %4829 = vmatprep.subr.bf16.mxu0 %v4714
  %4830 = vmatpush1.bf16.msra.mxu0 %v4713
  %4831 = vmatprep.subr.bf16.mxu0 %v4718
  %4832 = vmatpush1.bf16.msra.mxu0 %v4717
  %4833 = vmatprep.subr.bf16.mxu0 %v4722
  %4834 = vmatpush1.bf16.msra.mxu0 %v4721
  %4835 = vmatprep.subr.bf16.mxu0 %v4726
  %4836 = vmatpush1.bf16.msra.mxu0 %v4725
  %4837 = vmatprep.subr.bf16.mxu0 %v4730
  %4838 = vmatpush1.bf16.msra.mxu0 %v4729
  %4839 = vmatprep.subr.bf16.mxu0 %v4734
  %4840 = vmatpush1.bf16.msra.mxu0 %v4733
  %4841 = vmatprep.subr.bf16.mxu0 %v4738
  %4842 = vmatpush1.bf16.msra.mxu0 %v4737
  %4843 = vmatprep.subr.bf16.mxu0 %v4742
  %4844 = vmatpush1.bf16.msra.mxu0 %v4741
  %4845 = vmatprep.subr.bf16.mxu0 %v4746
  %4846 = vmatpush1.bf16.msra.mxu0 %v4745
  %4847 = vmatprep.subr.bf16.mxu0 %v4750
  %4848 = vmatpush1.bf16.msra.mxu0 %v4749
  %4849 = vmatprep.mubr.bf16.mxu0 %v4494
  %4850 = vmatmul.mubr.bf16.gmra.mrb[0].mxu0 %v4493
  %v4851 = vpop.f32.mrb[0].mxu0
  %v4852 = vadd.f32 %v30, %v4851
  %v4853 = vpop.f32.mrb[0].mxu0
  %v4854 = vadd.f32 %v34, %v4853
  %v4855 = vpop.f32.mrb[0].mxu0
  %v4856 = vpop.f32.mrb[0].mxu0
  %4857 = vdwg.mxu0
  %4858 = vmatprep.subr.bf16.mxu0 %v4692
  %4859 = vmatpush1.bf16.msra.mxu0 %v4691
  %4860 = vmatprep.subr.bf16.mxu0 %v4696
  %4861 = vmatpush1.bf16.msra.mxu0 %v4695
  %4862 = vmatprep.subr.bf16.mxu0 %v4700
  %4863 = vmatpush1.bf16.msra.mxu0 %v4699
  %4864 = vmatprep.subr.bf16.mxu0 %v4704
  %4865 = vmatpush1.bf16.msra.mxu0 %v4703
  %4866 = vmatprep.subr.bf16.mxu0 %v4708
  %4867 = vmatpush1.bf16.msra.mxu0 %v4707
  %4868 = vmatprep.subr.bf16.mxu0 %v4712
  %4869 = vmatpush1.bf16.msra.mxu0 %v4711
  %4870 = vmatprep.subr.bf16.mxu0 %v4716
  %4871 = vmatpush1.bf16.msra.mxu0 %v4715
  %4872 = vmatprep.subr.bf16.mxu0 %v4720
  %4873 = vmatpush1.bf16.msra.mxu0 %v4719
  %4874 = vmatprep.subr.bf16.mxu0 %v4724
  %4875 = vmatpush1.bf16.msra.mxu0 %v4723
  %4876 = vmatprep.subr.bf16.mxu0 %v4728
  %4877 = vmatpush1.bf16.msra.mxu0 %v4727
  %4878 = vmatprep.subr.bf16.mxu0 %v4732
  %4879 = vmatpush1.bf16.msra.mxu0 %v4731
  %4880 = vmatprep.subr.bf16.mxu0 %v4736
  %4881 = vmatpush1.bf16.msra.mxu0 %v4735
  %4882 = vmatprep.subr.bf16.mxu0 %v4740
  %4883 = vmatpush1.bf16.msra.mxu0 %v4739
  %4884 = vmatprep.subr.bf16.mxu0 %v4744
  %4885 = vmatpush1.bf16.msra.mxu0 %v4743
  %4886 = vmatprep.subr.bf16.mxu0 %v4748
  %4887 = vmatpush1.bf16.msra.mxu0 %v4747
  %4888 = vmatprep.subr.bf16.mxu0 %v4752
  %4889 = vmatpush1.bf16.msra.mxu0 %v4751
  %4890 = vmatprep.mubr.bf16.mxu0 %v4494
  %4891 = vmatmul.mubr.bf16.gmra.mrb[0].mxu0 %v4493
  %v4892 = vpop.f32.mrb[0].mxu0
  %v4893 = vadd.f32 %v38, %v4892
  %v4894 = vpop.f32.mrb[0].mxu0
  %v4895 = vadd.f32 %v42, %v4894
  %v4896 = vpop.f32.mrb[0].mxu0
  %v4897 = vpop.f32.mrb[0].mxu0
  %4898 = vdwg.mxu0
  %v4899 = vld [vmem:[#allocation4] sm:$0xff]
  %v4900 = vxor.u32 %v4852, 2147483648
  %v4901 = vmul.f32 %v4900, 1.442695
  %v4902 = vpow.pop %v4901
  %v4903 = vadd.f32 %v4902, 1.0
  %v4904 = vrcp.pop %v4903
  %v4905 = vmul.f32 1.0, %v4904
  %v4906 = vxor.u32 %v4854, 2147483648
  %v4907 = vmul.f32 %v4906, 1.442695
  %v4908 = vpow.pop %v4907
  %v4909 = vadd.f32 %v4908, 1.0
  %v4910 = vrcp.pop %v4909
  %v4911 = vmul.f32 1.0, %v4910
  %v4912 = vtanh.pop %v4893
  %v4913 = vxor.u32 %v4895, 2147483648
  %v4914 = vmul.f32 %v4913, 1.442695
  %v4915 = vpow.pop %v4914
  %v4916 = vadd.f32 %v4915, 1.0
  %v4917 = vrcp.pop %v4916
  %v4918 = vmul.f32 1.0, %v4917
  %v4919 = vmul.f32 %v4911, %v4899
  %v4920 = vmul.f32 %v4905, %v4912
  %v4921 = vadd.f32 %v4919, %v4920
  %v4922 = vtanh.pop %v4921
  %v4923 = vmul.f32 %v4918, %v4922
  %4924 = vst [vmem:[#allocation4] sm:$0xff] %v4921
  %v4925 = vpack.c.bf16 %v4923, %v4923
  %4926 = vst [vmem:[#allocation2 + $0x4] sm:$0xf] %v4925
  %s4927 = scalar_lea.vmem %s4, 20
  %4928 = vst [vmem:[%s4927] sm:$0xf] %v4925
  %v4929 = vld [vmem:[#allocation2] sm:$0xf]
  %v4930 = vld [vmem:[%s1] sm:$0xff]
  %v4931 = vld [vmem:[%s1 + $0x8] sm:$0xff]
  %v4932 = vld [vmem:[%s1 + $0x10] sm:$0xff]
  %v4933 = vld [vmem:[%s1 + $0x18] sm:$0xff]
  %v4934 = vld [vmem:[%s1 + $0x20] sm:$0xff]
  %v4935 = vld [vmem:[%s1 + $0x28] sm:$0xff]
  %v4936 = vld [vmem:[%s1 + $0x30] sm:$0xff]
  %v4937 = vld [vmem:[%s1 + $0x38] sm:$0xff]
  %v4938 = vld [vmem:[%s1 + $0x40] sm:$0xff]
  %v4939 = vld [vmem:[%s1 + $0x48] sm:$0xff]
  %v4940 = vld [vmem:[%s1 + $0x50] sm:$0xff]
  %v4941 = vld [vmem:[%s1 + $0x58] sm:$0xff]
  %v4942 = vld [vmem:[%s1 + $0x60] sm:$0xff]
  %v4943 = vld [vmem:[%s1 + $0x68] sm:$0xff]
  %v4944 = vld [vmem:[%s1 + $0x70] sm:$0xff]
  %v4945 = vld [vmem:[%s1 + $0x78] sm:$0xff]
  %v4946 = vld [vmem:[%s1 + $0x80] sm:$0xff]
  %v4947 = vld [vmem:[%s1 + $0x88] sm:$0xff]
  %v4948 = vld [vmem:[%s1 + $0x90] sm:$0xff]
  %v4949 = vld [vmem:[%s1 + $0x98] sm:$0xff]
  %v4950 = vld [vmem:[%s1 + $0xa0] sm:$0xff]
  %v4951 = vld [vmem:[%s1 + $0xa8] sm:$0xff]
  %v4952 = vld [vmem:[%s1 + $0xb0] sm:$0xff]
  %v4953 = vld [vmem:[%s1 + $0xb8] sm:$0xff]
  %v4954 = vld [vmem:[%s1 + $0xc0] sm:$0xff]
  %v4955 = vld [vmem:[%s1 + $0xc8] sm:$0xff]
  %v4956 = vld [vmem:[%s1 + $0xd0] sm:$0xff]
  %v4957 = vld [vmem:[%s1 + $0xd8] sm:$0xff]
  %v4958 = vld [vmem:[%s1 + $0xe0] sm:$0xff]
  %v4959 = vld [vmem:[%s1 + $0xe8] sm:$0xff]
  %v4960 = vld [vmem:[%s1 + $0xf0] sm:$0xff]
  %v4961 = vld [vmem:[%s1 + $0xf8] sm:$0xff]
  %s4962 = scalar_lea.vmem %s0, 96
  %v4963 = vld [vmem:[%s4962] sm:$0xff]
  %v4964 = vld [vmem:[%s4962 + $0x8] sm:$0xff]
  %v4965 = vunpack.c.l.bf16 %v4963
  %v4966 = vunpack.c.h.bf16 %v4963
  %v4967 = vunpack.c.l.bf16 %v4964
  %v4968 = vunpack.c.h.bf16 %v4964
  %v5001 = vunpack.c.l.b16 %v4930
  %v5002 = vunpack.c.h.b16 %v4930
  %v5003 = vunpack.c.l.b16 %v4931
  %v5004 = vunpack.c.h.b16 %v4931
  %v5005 = vunpack.c.l.b16 %v4932
  %v5006 = vunpack.c.h.b16 %v4932
  %v5007 = vunpack.c.l.b16 %v4933
  %v5008 = vunpack.c.h.b16 %v4933
  %v5009 = vunpack.c.l.b16 %v4934
  %v5010 = vunpack.c.h.b16 %v4934
  %v5011 = vunpack.c.l.b16 %v4935
  %v5012 = vunpack.c.h.b16 %v4935
  %v5013 = vunpack.c.l.b16 %v4936
  %v5014 = vunpack.c.h.b16 %v4936
  %v5015 = vunpack.c.l.b16 %v4937
  %v5016 = vunpack.c.h.b16 %v4937
  %v5017 = vunpack.c.l.b16 %v4938
  %v5018 = vunpack.c.h.b16 %v4938
  %v5019 = vunpack.c.l.b16 %v4939
  %v5020 = vunpack.c.h.b16 %v4939
  %v5021 = vunpack.c.l.b16 %v4940
  %v5022 = vunpack.c.h.b16 %v4940
  %v5023 = vunpack.c.l.b16 %v4941
  %v5024 = vunpack.c.h.b16 %v4941
  %v5025 = vunpack.c.l.b16 %v4942
  %v5026 = vunpack.c.h.b16 %v4942
  %v5027 = vunpack.c.l.b16 %v4943
  %v5028 = vunpack.c.h.b16 %v4943
  %v5029 = vunpack.c.l.b16 %v4944
  %v5030 = vunpack.c.h.b16 %v4944
  %v5031 = vunpack.c.l.b16 %v4945
  %v5032 = vunpack.c.h.b16 %v4945
  %v5033 = vunpack.c.l.b16 %v4946
  %v5034 = vunpack.c.h.b16 %v4946
  %v5035 = vunpack.c.l.b16 %v4947
  %v5036 = vunpack.c.h.b16 %v4947
  %v5037 = vunpack.c.l.b16 %v4948
  %v5038 = vunpack.c.h.b16 %v4948
  %v5039 = vunpack.c.l.b16 %v4949
  %v5040 = vunpack.c.h.b16 %v4949
  %v5041 = vunpack.c.l.b16 %v4950
  %v5042 = vunpack.c.h.b16 %v4950
  %v5043 = vunpack.c.l.b16 %v4951
  %v5044 = vunpack.c.h.b16 %v4951
  %v5045 = vunpack.c.l.b16 %v4952
  %v5046 = vunpack.c.h.b16 %v4952
  %v5047 = vunpack.c.l.b16 %v4953
  %v5048 = vunpack.c.h.b16 %v4953
  %v5049 = vunpack.c.l.b16 %v4954
  %v5050 = vunpack.c.h.b16 %v4954
  %v5051 = vunpack.c.l.b16 %v4955
  %v5052 = vunpack.c.h.b16 %v4955
  %v5053 = vunpack.c.l.b16 %v4956
  %v5054 = vunpack.c.h.b16 %v4956
  %v5055 = vunpack.c.l.b16 %v4957
  %v5056 = vunpack.c.h.b16 %v4957
  %v5057 = vunpack.c.l.b16 %v4958
  %v5058 = vunpack.c.h.b16 %v4958
  %v5059 = vunpack.c.l.b16 %v4959
  %v5060 = vunpack.c.h.b16 %v4959
  %v5061 = vunpack.c.l.b16 %v4960
  %v5062 = vunpack.c.h.b16 %v4960
  %v5063 = vunpack.c.l.b16 %v4961
  %v5064 = vunpack.c.h.b16 %v4961
  %v5065 = vpack.c.b16 %v5005, %v5001
  %v5066 = vpack.c.b16 %v5006, %v5002
  %v5067 = vpack.c.b16 %v5007, %v5003
  %v5068 = vpack.c.b16 %v5008, %v5004
  %v5069 = vpack.c.b16 %v5013, %v5009
  %v5070 = vpack.c.b16 %v5014, %v5010
  %v5071 = vpack.c.b16 %v5015, %v5011
  %v5072 = vpack.c.b16 %v5016, %v5012
  %v5073 = vpack.c.b16 %v5021, %v5017
  %v5074 = vpack.c.b16 %v5022, %v5018
  %v5075 = vpack.c.b16 %v5023, %v5019
  %v5076 = vpack.c.b16 %v5024, %v5020
  %v5077 = vpack.c.b16 %v5029, %v5025
  %v5078 = vpack.c.b16 %v5030, %v5026
  %v5079 = vpack.c.b16 %v5031, %v5027
  %v5080 = vpack.c.b16 %v5032, %v5028
  %v5081 = vpack.c.b16 %v5037, %v5033
  %v5082 = vpack.c.b16 %v5038, %v5034
  %v5083 = vpack.c.b16 %v5039, %v5035
  %v5084 = vpack.c.b16 %v5040, %v5036
  %v5085 = vpack.c.b16 %v5045, %v5041
  %v5086 = vpack.c.b16 %v5046, %v5042
  %v5087 = vpack.c.b16 %v5047, %v5043
  %v5088 = vpack.c.b16 %v5048, %v5044
  %v5089 = vpack.c.b16 %v5053, %v5049
  %v5090 = vpack.c.b16 %v5054, %v5050
  %v5091 = vpack.c.b16 %v5055, %v5051
  %v5092 = vpack.c.b16 %v5056, %v5052
  %v5093 = vpack.c.b16 %v5061, %v5057
  %v5094 = vpack.c.b16 %v5062, %v5058
  %v5095 = vpack.c.b16 %v5063, %v5059
  %v5096 = vpack.c.b16 %v5064, %v5060
  %5129 = vmatprep.subr.bf16.mxu0 %v5066
  %5130 = vmatpush1.bf16.msra.mxu0 %v5065
  %5131 = vmatprep.subr.bf16.mxu0 %v5070
  %5132 = vmatpush1.bf16.msra.mxu0 %v5069
  %5133 = vmatprep.subr.bf16.mxu0 %v5074
  %5134 = vmatpush1.bf16.msra.mxu0 %v5073
  %5135 = vmatprep.subr.bf16.mxu0 %v5078
  %5136 = vmatpush1.bf16.msra.mxu0 %v5077
  %5137 = vmatprep.subr.bf16.mxu0 %v5082
  %5138 = vmatpush1.bf16.msra.mxu0 %v5081
  %5139 = vmatprep.subr.bf16.mxu0 %v5086
  %5140 = vmatpush1.bf16.msra.mxu0 %v5085
  %5141 = vmatprep.subr.bf16.mxu0 %v5090
  %5142 = vmatpush1.bf16.msra.mxu0 %v5089
  %5143 = vmatprep.subr.bf16.mxu0 %v5094
  %5144 = vmatpush1.bf16.msra.mxu0 %v5093
  %5145 = vmatprep.subr.bf16.mxu0 0
  %5146 = vmatpush1.bf16.msra.mxu0 0
  %5147 = vmatprep.subr.bf16.mxu0 0
  %5148 = vmatpush1.bf16.msra.mxu0 0
  %5149 = vmatprep.subr.bf16.mxu0 0
  %5150 = vmatpush1.bf16.msra.mxu0 0
  %5151 = vmatprep.subr.bf16.mxu0 0
  %5152 = vmatpush1.bf16.msra.mxu0 0
  %5153 = vmatprep.subr.bf16.mxu0 0
  %5154 = vmatpush1.bf16.msra.mxu0 0
  %5155 = vmatprep.subr.bf16.mxu0 0
  %5156 = vmatpush1.bf16.msra.mxu0 0
  %5157 = vmatprep.subr.bf16.mxu0 0
  %5158 = vmatpush1.bf16.msra.mxu0 0
  %5159 = vmatprep.subr.bf16.mxu0 0
  %5160 = vmatpush1.bf16.msra.mxu0 0
  %5161 = vmatprep.mubr.bf16.mxu0 0
  %5162 = vmatmul.mubr.bf16.gmra.mrb[0].mxu0 %v4929
  %v5163 = vpop.f32.mrb[0].mxu0
  %v5164 = vadd.f32 %v4965, %v5163
  %v5165 = vpop.f32.mrb[0].mxu0
  %v5166 = vadd.f32 %v4966, %v5165
  %v5167 = vpop.f32.mrb[0].mxu0
  %v5168 = vpop.f32.mrb[0].mxu0
  %5169 = vdwg.mxu0
  %5170 = vmatprep.subr.bf16.mxu0 %v5068
  %5171 = vmatpush1.bf16.msra.mxu0 %v5067
  %5172 = vmatprep.subr.bf16.mxu0 %v5072
  %5173 = vmatpush1.bf16.msra.mxu0 %v5071
  %5174 = vmatprep.subr.bf16.mxu0 %v5076
  %5175 = vmatpush1.bf16.msra.mxu0 %v5075
  %5176 = vmatprep.subr.bf16.mxu0 %v5080
  %5177 = vmatpush1.bf16.msra.mxu0 %v5079
  %5178 = vmatprep.subr.bf16.mxu0 %v5084
  %5179 = vmatpush1.bf16.msra.mxu0 %v5083
  %5180 = vmatprep.subr.bf16.mxu0 %v5088
  %5181 = vmatpush1.bf16.msra.mxu0 %v5087
  %5182 = vmatprep.subr.bf16.mxu0 %v5092
  %5183 = vmatpush1.bf16.msra.mxu0 %v5091
  %5184 = vmatprep.subr.bf16.mxu0 %v5096
  %5185 = vmatpush1.bf16.msra.mxu0 %v5095
  %5186 = vmatprep.subr.bf16.mxu0 0
  %5187 = vmatpush1.bf16.msra.mxu0 0
  %5188 = vmatprep.subr.bf16.mxu0 0
  %5189 = vmatpush1.bf16.msra.mxu0 0
  %5190 = vmatprep.subr.bf16.mxu0 0
  %5191 = vmatpush1.bf16.msra.mxu0 0
  %5192 = vmatprep.subr.bf16.mxu0 0
  %5193 = vmatpush1.bf16.msra.mxu0 0
  %5194 = vmatprep.subr.bf16.mxu0 0
  %5195 = vmatpush1.bf16.msra.mxu0 0
  %5196 = vmatprep.subr.bf16.mxu0 0
  %5197 = vmatpush1.bf16.msra.mxu0 0
  %5198 = vmatprep.subr.bf16.mxu0 0
  %5199 = vmatpush1.bf16.msra.mxu0 0
  %5200 = vmatprep.subr.bf16.mxu0 0
  %5201 = vmatpush1.bf16.msra.mxu0 0
  %5202 = vmatprep.mubr.bf16.mxu0 0
  %5203 = vmatmul.mubr.bf16.gmra.mrb[0].mxu0 %v4929
  %v5204 = vpop.f32.mrb[0].mxu0
  %v5205 = vadd.f32 %v4967, %v5204
  %v5206 = vpop.f32.mrb[0].mxu0
  %v5207 = vadd.f32 %v4968, %v5206
  %v5208 = vpop.f32.mrb[0].mxu0
  %v5209 = vpop.f32.mrb[0].mxu0
  %5210 = vdwg.mxu0
  %v5211 = vld [vmem:[#allocation3] sm:$0xff]
  %v5212 = vxor.u32 %v5164, 2147483648
  %v5213 = vmul.f32 %v5212, 1.442695
  %v5214 = vpow.pop %v5213
  %v5215 = vadd.f32 %v5214, 1.0
  %v5216 = vrcp.pop %v5215
  %v5217 = vmul.f32 1.0, %v5216
  %v5218 = vxor.u32 %v5166, 2147483648
  %v5219 = vmul.f32 %v5218, 1.442695
  %v5220 = vpow.pop %v5219
  %v5221 = vadd.f32 %v5220, 1.0
  %v5222 = vrcp.pop %v5221
  %v5223 = vmul.f32 1.0, %v5222
  %v5224 = vtanh.pop %v5205
  %v5225 = vxor.u32 %v5207, 2147483648
  %v5226 = vmul.f32 %v5225, 1.442695
  %v5227 = vpow.pop %v5226
  %v5228 = vadd.f32 %v5227, 1.0
  %v5229 = vrcp.pop %v5228
  %v5230 = vmul.f32 1.0, %v5229
  %v5231 = vmul.f32 %v5223, %v5211
  %v5232 = vmul.f32 %v5217, %v5224
  %v5233 = vadd.f32 %v5231, %v5232
  %v5234 = vtanh.pop %v5233
  %v5235 = vmul.f32 %v5230, %v5234
  %5236 = vst [vmem:[#allocation3] sm:$0xff] %v5233
  %v5237 = vpack.c.bf16 %v5235, %v5235
  %5238 = vst [vmem:[#allocation2] sm:$0xf] %v5237
  %v5239 = vld [vmem:[#allocation2] sm:$0xff]
  %v5240 = vld [vmem:[%s2] sm:$0xff]
  %v5241 = vld [vmem:[%s2 + $0x8] sm:$0xff]
  %v5242 = vld [vmem:[%s2 + $0x10] sm:$0xff]
  %v5243 = vld [vmem:[%s2 + $0x18] sm:$0xff]
  %v5244 = vld [vmem:[%s2 + $0x20] sm:$0xff]
  %v5245 = vld [vmem:[%s2 + $0x28] sm:$0xff]
  %v5246 = vld [vmem:[%s2 + $0x30] sm:$0xff]
  %v5247 = vld [vmem:[%s2 + $0x38] sm:$0xff]
  %v5248 = vld [vmem:[%s2 + $0x40] sm:$0xff]
  %v5249 = vld [vmem:[%s2 + $0x48] sm:$0xff]
  %v5250 = vld [vmem:[%s2 + $0x50] sm:$0xff]
  %v5251 = vld [vmem:[%s2 + $0x58] sm:$0xff]
  %v5252 = vld [vmem:[%s2 + $0x60] sm:$0xff]
  %v5253 = vld [vmem:[%s2 + $0x68] sm:$0xff]
  %v5254 = vld [vmem:[%s2 + $0x70] sm:$0xff]
  %v5255 = vld [vmem:[%s2 + $0x78] sm:$0xff]
  %v5256 = vld [vmem:[%s2 + $0x80] sm:$0xff]
  %v5257 = vld [vmem:[%s2 + $0x88] sm:$0xff]
  %v5258 = vld [vmem:[%s2 + $0x90] sm:$0xff]
  %v5259 = vld [vmem:[%s2 + $0x98] sm:$0xff]
  %v5260 = vld [vmem:[%s2 + $0xa0] sm:$0xff]
  %v5261 = vld [vmem:[%s2 + $0xa8] sm:$0xff]
  %v5262 = vld [vmem:[%s2 + $0xb0] sm:$0xff]
  %v5263 = vld [vmem:[%s2 + $0xb8] sm:$0xff]
  %v5264 = vld [vmem:[%s2 + $0xc0] sm:$0xff]
  %v5265 = vld [vmem:[%s2 + $0xc8] sm:$0xff]
  %v5266 = vld [vmem:[%s2 + $0xd0] sm:$0xff]
  %v5267 = vld [vmem:[%s2 + $0xd8] sm:$0xff]
  %v5268 = vld [vmem:[%s2 + $0xe0] sm:$0xff]
  %v5269 = vld [vmem:[%s2 + $0xe8] sm:$0xff]
  %v5270 = vld [vmem:[%s2 + $0xf0] sm:$0xff]
  %v5271 = vld [vmem:[%s2 + $0xf8] sm:$0xff]
  %v5272 = vld [vmem:[%s2 + $0x100] sm:$0xff]
  %v5273 = vld [vmem:[%s2 + $0x108] sm:$0xff]
  %v5274 = vld [vmem:[%s2 + $0x110] sm:$0xff]
  %v5275 = vld [vmem:[%s2 + $0x118] sm:$0xff]
  %v5276 = vld [vmem:[%s2 + $0x120] sm:$0xff]
  %v5277 = vld [vmem:[%s2 + $0x128] sm:$0xff]
  %v5278 = vld [vmem:[%s2 + $0x130] sm:$0xff]
  %v5279 = vld [vmem:[%s2 + $0x138] sm:$0xff]
  %v5280 = vld [vmem:[%s2 + $0x140] sm:$0xff]
  %v5281 = vld [vmem:[%s2 + $0x148] sm:$0xff]
  %v5282 = vld [vmem:[%s2 + $0x150] sm:$0xff]
  %v5283 = vld [vmem:[%s2 + $0x158] sm:$0xff]
  %v5284 = vld [vmem:[%s2 + $0x160] sm:$0xff]
  %v5285 = vld [vmem:[%s2 + $0x168] sm:$0xff]
  %v5286 = vld [vmem:[%s2 + $0x170] sm:$0xff]
  %v5287 = vld [vmem:[%s2 + $0x178] sm:$0xff]
  %v5288 = vld [vmem:[%s2 + $0x180] sm:$0xff]
  %v5289 = vld [vmem:[%s2 + $0x188] sm:$0xff]
  %v5290 = vld [vmem:[%s2 + $0x190] sm:$0xff]
  %v5291 = vld [vmem:[%s2 + $0x198] sm:$0xff]
  %v5292 = vld [vmem:[%s2 + $0x1a0] sm:$0xff]
  %v5293 = vld [vmem:[%s2 + $0x1a8] sm:$0xff]
  %v5294 = vld [vmem:[%s2 + $0x1b0] sm:$0xff]
  %v5295 = vld [vmem:[%s2 + $0x1b8] sm:$0xff]
  %v5296 = vld [vmem:[%s2 + $0x1c0] sm:$0xff]
  %v5297 = vld [vmem:[%s2 + $0x1c8] sm:$0xff]
  %v5298 = vld [vmem:[%s2 + $0x1d0] sm:$0xff]
  %v5299 = vld [vmem:[%s2 + $0x1d8] sm:$0xff]
  %v5300 = vld [vmem:[%s2 + $0x1e0] sm:$0xff]
  %v5301 = vld [vmem:[%s2 + $0x1e8] sm:$0xff]
  %v5302 = vld [vmem:[%s2 + $0x1f0] sm:$0xff]
  %v5303 = vld [vmem:[%s2 + $0x1f8] sm:$0xff]
  %v5305 = vunpack.c.l.b16 %v5239
  %v5306 = vunpack.c.h.b16 %v5239
  %v5307 = vpack.c.b16 %v5305, %v5305
  %v5308 = vpack.c.b16 %v5306, %v5306
  %v5375 = vunpack.c.l.b16 %v5240
  %v5376 = vunpack.c.h.b16 %v5240
  %v5377 = vunpack.c.l.b16 %v5241
  %v5378 = vunpack.c.h.b16 %v5241
  %v5379 = vunpack.c.l.b16 %v5242
  %v5380 = vunpack.c.h.b16 %v5242
  %v5381 = vunpack.c.l.b16 %v5243
  %v5382 = vunpack.c.h.b16 %v5243
  %v5383 = vunpack.c.l.b16 %v5244
  %v5384 = vunpack.c.h.b16 %v5244
  %v5385 = vunpack.c.l.b16 %v5245
  %v5386 = vunpack.c.h.b16 %v5245
  %v5387 = vunpack.c.l.b16 %v5246
  %v5388 = vunpack.c.h.b16 %v5246
  %v5389 = vunpack.c.l.b16 %v5247
  %v5390 = vunpack.c.h.b16 %v5247
  %v5391 = vunpack.c.l.b16 %v5248
  %v5392 = vunpack.c.h.b16 %v5248
  %v5393 = vunpack.c.l.b16 %v5249
  %v5394 = vunpack.c.h.b16 %v5249
  %v5395 = vunpack.c.l.b16 %v5250
  %v5396 = vunpack.c.h.b16 %v5250
  %v5397 = vunpack.c.l.b16 %v5251
  %v5398 = vunpack.c.h.b16 %v5251
  %v5399 = vunpack.c.l.b16 %v5252
  %v5400 = vunpack.c.h.b16 %v5252
  %v5401 = vunpack.c.l.b16 %v5253
  %v5402 = vunpack.c.h.b16 %v5253
  %v5403 = vunpack.c.l.b16 %v5254
  %v5404 = vunpack.c.h.b16 %v5254
  %v5405 = vunpack.c.l.b16 %v5255
  %v5406 = vunpack.c.h.b16 %v5255
  %v5407 = vunpack.c.l.b16 %v5256
  %v5408 = vunpack.c.h.b16 %v5256
  %v5409 = vunpack.c.l.b16 %v5257
  %v5410 = vunpack.c.h.b16 %v5257
  %v5411 = vunpack.c.l.b16 %v5258
  %v5412 = vunpack.c.h.b16 %v5258
  %v5413 = vunpack.c.l.b16 %v5259
  %v5414 = vunpack.c.h.b16 %v5259
  %v5415 = vunpack.c.l.b16 %v5260
  %v5416 = vunpack.c.h.b16 %v5260
  %v5417 = vunpack.c.l.b16 %v5261
  %v5418 = vunpack.c.h.b16 %v5261
  %v5419 = vunpack.c.l.b16 %v5262
  %v5420 = vunpack.c.h.b16 %v5262
  %v5421 = vunpack.c.l.b16 %v5263
  %v5422 = vunpack.c.h.b16 %v5263
  %v5423 = vunpack.c.l.b16 %v5264
  %v5424 = vunpack.c.h.b16 %v5264
  %v5425 = vunpack.c.l.b16 %v5265
  %v5426 = vunpack.c.h.b16 %v5265
  %v5427 = vunpack.c.l.b16 %v5266
  %v5428 = vunpack.c.h.b16 %v5266
  %v5429 = vunpack.c.l.b16 %v5267
  %v5430 = vunpack.c.h.b16 %v5267
  %v5431 = vunpack.c.l.b16 %v5268
  %v5432 = vunpack.c.h.b16 %v5268
  %v5433 = vunpack.c.l.b16 %v5269
  %v5434 = vunpack.c.h.b16 %v5269
  %v5435 = vunpack.c.l.b16 %v5270
  %v5436 = vunpack.c.h.b16 %v5270
  %v5437 = vunpack.c.l.b16 %v5271
  %v5438 = vunpack.c.h.b16 %v5271
  %v5439 = vunpack.c.l.b16 %v5272
  %v5440 = vunpack.c.h.b16 %v5272
  %v5441 = vunpack.c.l.b16 %v5273
  %v5442 = vunpack.c.h.b16 %v5273
  %v5443 = vunpack.c.l.b16 %v5274
  %v5444 = vunpack.c.h.b16 %v5274
  %v5445 = vunpack.c.l.b16 %v5275
  %v5446 = vunpack.c.h.b16 %v5275
  %v5447 = vunpack.c.l.b16 %v5276
  %v5448 = vunpack.c.h.b16 %v5276
  %v5449 = vunpack.c.l.b16 %v5277
  %v5450 = vunpack.c.h.b16 %v5277
  %v5451 = vunpack.c.l.b16 %v5278
  %v5452 = vunpack.c.h.b16 %v5278
  %v5453 = vunpack.c.l.b16 %v5279
  %v5454 = vunpack.c.h.b16 %v5279
  %v5455 = vunpack.c.l.b16 %v5280
  %v5456 = vunpack.c.h.b16 %v5280
  %v5457 = vunpack.c.l.b16 %v5281
  %v5458 = vunpack.c.h.b16 %v5281
  %v5459 = vunpack.c.l.b16 %v5282
  %v5460 = vunpack.c.h.b16 %v5282
  %v5461 = vunpack.c.l.b16 %v5283
  %v5462 = vunpack.c.h.b16 %v5283
  %v5463 = vunpack.c.l.b16 %v5284
  %v5464 = vunpack.c.h.b16 %v5284
  %v5465 = vunpack.c.l.b16 %v5285
  %v5466 = vunpack.c.h.b16 %v5285
  %v5467 = vunpack.c.l.b16 %v5286
  %v5468 = vunpack.c.h.b16 %v5286
  %v5469 = vunpack.c.l.b16 %v5287
  %v5470 = vunpack.c.h.b16 %v5287
  %v5471 = vunpack.c.l.b16 %v5288
  %v5472 = vunpack.c.h.b16 %v5288
  %v5473 = vunpack.c.l.b16 %v5289
  %v5474 = vunpack.c.h.b16 %v5289
  %v5475 = vunpack.c.l.b16 %v5290
  %v5476 = vunpack.c.h.b16 %v5290
  %v5477 = vunpack.c.l.b16 %v5291
  %v5478 = vunpack.c.h.b16 %v5291
  %v5479 = vunpack.c.l.b16 %v5292
  %v5480 = vunpack.c.h.b16 %v5292
  %v5481 = vunpack.c.l.b16 %v5293
  %v5482 = vunpack.c.h.b16 %v5293
  %v5483 = vunpack.c.l.b16 %v5294
  %v5484 = vunpack.c.h.b16 %v5294
  %v5485 = vunpack.c.l.b16 %v5295
  %v5486 = vunpack.c.h.b16 %v5295
  %v5487 = vunpack.c.l.b16 %v5296
  %v5488 = vunpack.c.h.b16 %v5296
  %v5489 = vunpack.c.l.b16 %v5297
  %v5490 = vunpack.c.h.b16 %v5297
  %v5491 = vunpack.c.l.b16 %v5298
  %v5492 = vunpack.c.h.b16 %v5298
  %v5493 = vunpack.c.l.b16 %v5299
  %v5494 = vunpack.c.h.b16 %v5299
  %v5495 = vunpack.c.l.b16 %v5300
  %v5496 = vunpack.c.h.b16 %v5300
  %v5497 = vunpack.c.l.b16 %v5301
  %v5498 = vunpack.c.h.b16 %v5301
  %v5499 = vunpack.c.l.b16 %v5302
  %v5500 = vunpack.c.h.b16 %v5302
  %v5501 = vunpack.c.l.b16 %v5303
  %v5502 = vunpack.c.h.b16 %v5303
  %v5503 = vpack.c.b16 %v5379, %v5375
  %v5504 = vpack.c.b16 %v5380, %v5376
  %v5505 = vpack.c.b16 %v5381, %v5377
  %v5506 = vpack.c.b16 %v5382, %v5378
  %v5507 = vpack.c.b16 %v5387, %v5383
  %v5508 = vpack.c.b16 %v5388, %v5384
  %v5509 = vpack.c.b16 %v5389, %v5385
  %v5510 = vpack.c.b16 %v5390, %v5386
  %v5511 = vpack.c.b16 %v5395, %v5391
  %v5512 = vpack.c.b16 %v5396, %v5392
  %v5513 = vpack.c.b16 %v5397, %v5393
  %v5514 = vpack.c.b16 %v5398, %v5394
  %v5515 = vpack.c.b16 %v5403, %v5399
  %v5516 = vpack.c.b16 %v5404, %v5400
  %v5517 = vpack.c.b16 %v5405, %v5401
  %v5518 = vpack.c.b16 %v5406, %v5402
  %v5519 = vpack.c.b16 %v5411, %v5407
  %v5520 = vpack.c.b16 %v5412, %v5408
  %v5521 = vpack.c.b16 %v5413, %v5409
  %v5522 = vpack.c.b16 %v5414, %v5410
  %v5523 = vpack.c.b16 %v5419, %v5415
  %v5524 = vpack.c.b16 %v5420, %v5416
  %v5525 = vpack.c.b16 %v5421, %v5417
  %v5526 = vpack.c.b16 %v5422, %v5418
  %v5527 = vpack.c.b16 %v5427, %v5423
  %v5528 = vpack.c.b16 %v5428, %v5424
  %v5529 = vpack.c.b16 %v5429, %v5425
  %v5530 = vpack.c.b16 %v5430, %v5426
  %v5531 = vpack.c.b16 %v5435, %v5431
  %v5532 = vpack.c.b16 %v5436, %v5432
  %v5533 = vpack.c.b16 %v5437, %v5433
  %v5534 = vpack.c.b16 %v5438, %v5434
  %v5535 = vpack.c.b16 %v5443, %v5439
  %v5536 = vpack.c.b16 %v5444, %v5440
  %v5537 = vpack.c.b16 %v5445, %v5441
  %v5538 = vpack.c.b16 %v5446, %v5442
  %v5539 = vpack.c.b16 %v5451, %v5447
  %v5540 = vpack.c.b16 %v5452, %v5448
  %v5541 = vpack.c.b16 %v5453, %v5449
  %v5542 = vpack.c.b16 %v5454, %v5450
  %v5543 = vpack.c.b16 %v5459, %v5455
  %v5544 = vpack.c.b16 %v5460, %v5456
  %v5545 = vpack.c.b16 %v5461, %v5457
  %v5546 = vpack.c.b16 %v5462, %v5458
  %v5547 = vpack.c.b16 %v5467, %v5463
  %v5548 = vpack.c.b16 %v5468, %v5464
  %v5549 = vpack.c.b16 %v5469, %v5465
  %v5550 = vpack.c.b16 %v5470, %v5466
  %v5551 = vpack.c.b16 %v5475, %v5471
  %v5552 = vpack.c.b16 %v5476, %v5472
  %v5553 = vpack.c.b16 %v5477, %v5473
  %v5554 = vpack.c.b16 %v5478, %v5474
  %v5555 = vpack.c.b16 %v5483, %v5479
  %v5556 = vpack.c.b16 %v5484, %v5480
  %v5557 = vpack.c.b16 %v5485, %v5481
  %v5558 = vpack.c.b16 %v5486, %v5482
  %v5559 = vpack.c.b16 %v5491, %v5487
  %v5560 = vpack.c.b16 %v5492, %v5488
  %v5561 = vpack.c.b16 %v5493, %v5489
  %v5562 = vpack.c.b16 %v5494, %v5490
  %v5563 = vpack.c.b16 %v5499, %v5495
  %v5564 = vpack.c.b16 %v5500, %v5496
  %v5565 = vpack.c.b16 %v5501, %v5497
  %v5566 = vpack.c.b16 %v5502, %v5498
  %5631 = vmatprep.subr.bf16.mxu0 %v5504
  %5632 = vmatpush1.bf16.msra.mxu0 %v5503
  %5633 = vmatprep.subr.bf16.mxu0 %v5508
  %5634 = vmatpush1.bf16.msra.mxu0 %v5507
  %5635 = vmatprep.subr.bf16.mxu0 %v5512
  %5636 = vmatpush1.bf16.msra.mxu0 %v5511
  %5637 = vmatprep.subr.bf16.mxu0 %v5516
  %5638 = vmatpush1.bf16.msra.mxu0 %v5515
  %5639 = vmatprep.subr.bf16.mxu0 %v5520
  %5640 = vmatpush1.bf16.msra.mxu0 %v5519
  %5641 = vmatprep.subr.bf16.mxu0 %v5524
  %5642 = vmatpush1.bf16.msra.mxu0 %v5523
  %5643 = vmatprep.subr.bf16.mxu0 %v5528
  %5644 = vmatpush1.bf16.msra.mxu0 %v5527
  %5645 = vmatprep.subr.bf16.mxu0 %v5532
  %5646 = vmatpush1.bf16.msra.mxu0 %v5531
  %5647 = vmatprep.subr.bf16.mxu0 %v5536
  %5648 = vmatpush1.bf16.msra.mxu0 %v5535
  %5649 = vmatprep.subr.bf16.mxu0 %v5540
  %5650 = vmatpush1.bf16.msra.mxu0 %v5539
  %5651 = vmatprep.subr.bf16.mxu0 %v5544
  %5652 = vmatpush1.bf16.msra.mxu0 %v5543
  %5653 = vmatprep.subr.bf16.mxu0 %v5548
  %5654 = vmatpush1.bf16.msra.mxu0 %v5547
  %5655 = vmatprep.subr.bf16.mxu0 %v5552
  %5656 = vmatpush1.bf16.msra.mxu0 %v5551
  %5657 = vmatprep.subr.bf16.mxu0 %v5556
  %5658 = vmatpush1.bf16.msra.mxu0 %v5555
  %5659 = vmatprep.subr.bf16.mxu0 %v5560
  %5660 = vmatpush1.bf16.msra.mxu0 %v5559
  %5661 = vmatprep.subr.bf16.mxu0 %v5564
  %5662 = vmatpush1.bf16.msra.mxu0 %v5563
  %5663 = vmatprep.mubr.bf16.mxu0 %v5308
  %5664 = vmatmul.mubr.bf16.gmra.mrb[0].mxu0 %v5307
  %v5665 = vpop.f32.mrb[0].mxu0
  %v5666 = vadd.f32 %v30, %v5665
  %v5667 = vpop.f32.mrb[0].mxu0
  %v5668 = vadd.f32 %v34, %v5667
  %v5669 = vpop.f32.mrb[0].mxu0
  %v5670 = vpop.f32.mrb[0].mxu0
  %5671 = vdwg.mxu0
  %5672 = vmatprep.subr.bf16.mxu0 %v5506
  %5673 = vmatpush1.bf16.msra.mxu0 %v5505
  %5674 = vmatprep.subr.bf16.mxu0 %v5510
  %5675 = vmatpush1.bf16.msra.mxu0 %v5509
  %5676 = vmatprep.subr.bf16.mxu0 %v5514
  %5677 = vmatpush1.bf16.msra.mxu0 %v5513
  %5678 = vmatprep.subr.bf16.mxu0 %v5518
  %5679 = vmatpush1.bf16.msra.mxu0 %v5517
  %5680 = vmatprep.subr.bf16.mxu0 %v5522
  %5681 = vmatpush1.bf16.msra.mxu0 %v5521
  %5682 = vmatprep.subr.bf16.mxu0 %v5526
  %5683 = vmatpush1.bf16.msra.mxu0 %v5525
  %5684 = vmatprep.subr.bf16.mxu0 %v5530
  %5685 = vmatpush1.bf16.msra.mxu0 %v5529
  %5686 = vmatprep.subr.bf16.mxu0 %v5534
  %5687 = vmatpush1.bf16.msra.mxu0 %v5533
  %5688 = vmatprep.subr.bf16.mxu0 %v5538
  %5689 = vmatpush1.bf16.msra.mxu0 %v5537
  %5690 = vmatprep.subr.bf16.mxu0 %v5542
  %5691 = vmatpush1.bf16.msra.mxu0 %v5541
  %5692 = vmatprep.subr.bf16.mxu0 %v5546
  %5693 = vmatpush1.bf16.msra.mxu0 %v5545
  %5694 = vmatprep.subr.bf16.mxu0 %v5550
  %5695 = vmatpush1.bf16.msra.mxu0 %v5549
  %5696 = vmatprep.subr.bf16.mxu0 %v5554
  %5697 = vmatpush1.bf16.msra.mxu0 %v5553
  %5698 = vmatprep.subr.bf16.mxu0 %v5558
  %5699 = vmatpush1.bf16.msra.mxu0 %v5557
  %5700 = vmatprep.subr.bf16.mxu0 %v5562
  %5701 = vmatpush1.bf16.msra.mxu0 %v5561
  %5702 = vmatprep.subr.bf16.mxu0 %v5566
  %5703 = vmatpush1.bf16.msra.mxu0 %v5565
  %5704 = vmatprep.mubr.bf16.mxu0 %v5308
  %5705 = vmatmul.mubr.bf16.gmra.mrb[0].mxu0 %v5307
  %v5706 = vpop.f32.mrb[0].mxu0
  %v5707 = vadd.f32 %v38, %v5706
  %v5708 = vpop.f32.mrb[0].mxu0
  %v5709 = vadd.f32 %v42, %v5708
  %v5710 = vpop.f32.mrb[0].mxu0
  %v5711 = vpop.f32.mrb[0].mxu0
  %5712 = vdwg.mxu0
  %v5713 = vld [vmem:[#allocation4] sm:$0xff]
  %v5714 = vxor.u32 %v5666, 2147483648
  %v5715 = vmul.f32 %v5714, 1.442695
  %v5716 = vpow.pop %v5715
  %v5717 = vadd.f32 %v5716, 1.0
  %v5718 = vrcp.pop %v5717
  %v5719 = vmul.f32 1.0, %v5718
  %v5720 = vxor.u32 %v5668, 2147483648
  %v5721 = vmul.f32 %v5720, 1.442695
  %v5722 = vpow.pop %v5721
  %v5723 = vadd.f32 %v5722, 1.0
  %v5724 = vrcp.pop %v5723
  %v5725 = vmul.f32 1.0, %v5724
  %v5726 = vtanh.pop %v5707
  %v5727 = vxor.u32 %v5709, 2147483648
  %v5728 = vmul.f32 %v5727, 1.442695
  %v5729 = vpow.pop %v5728
  %v5730 = vadd.f32 %v5729, 1.0
  %v5731 = vrcp.pop %v5730
  %v5732 = vmul.f32 1.0, %v5731
  %v5733 = vmul.f32 %v5725, %v5713
  %v5734 = vmul.f32 %v5719, %v5726
  %v5735 = vadd.f32 %v5733, %v5734
  %v5736 = vtanh.pop %v5735
  %v5737 = vmul.f32 %v5732, %v5736
  %5738 = vst [vmem:[#allocation4] sm:$0xff] %v5735
  %v5739 = vpack.c.bf16 %v5737, %v5737
  %5740 = vst [vmem:[#allocation2 + $0x4] sm:$0xf] %v5739
  %s5741 = scalar_lea.vmem %s4, 24
  %5742 = vst [vmem:[%s5741] sm:$0xf] %v5739
  %v5743 = vld [vmem:[#allocation2] sm:$0xf]
  %v5744 = vld [vmem:[%s1] sm:$0xff]
  %v5745 = vld [vmem:[%s1 + $0x8] sm:$0xff]
  %v5746 = vld [vmem:[%s1 + $0x10] sm:$0xff]
  %v5747 = vld [vmem:[%s1 + $0x18] sm:$0xff]
  %v5748 = vld [vmem:[%s1 + $0x20] sm:$0xff]
  %v5749 = vld [vmem:[%s1 + $0x28] sm:$0xff]
  %v5750 = vld [vmem:[%s1 + $0x30] sm:$0xff]
  %v5751 = vld [vmem:[%s1 + $0x38] sm:$0xff]
  %v5752 = vld [vmem:[%s1 + $0x40] sm:$0xff]
  %v5753 = vld [vmem:[%s1 + $0x48] sm:$0xff]
  %v5754 = vld [vmem:[%s1 + $0x50] sm:$0xff]
  %v5755 = vld [vmem:[%s1 + $0x58] sm:$0xff]
  %v5756 = vld [vmem:[%s1 + $0x60] sm:$0xff]
  %v5757 = vld [vmem:[%s1 + $0x68] sm:$0xff]
  %v5758 = vld [vmem:[%s1 + $0x70] sm:$0xff]
  %v5759 = vld [vmem:[%s1 + $0x78] sm:$0xff]
  %v5760 = vld [vmem:[%s1 + $0x80] sm:$0xff]
  %v5761 = vld [vmem:[%s1 + $0x88] sm:$0xff]
  %v5762 = vld [vmem:[%s1 + $0x90] sm:$0xff]
  %v5763 = vld [vmem:[%s1 + $0x98] sm:$0xff]
  %v5764 = vld [vmem:[%s1 + $0xa0] sm:$0xff]
  %v5765 = vld [vmem:[%s1 + $0xa8] sm:$0xff]
  %v5766 = vld [vmem:[%s1 + $0xb0] sm:$0xff]
  %v5767 = vld [vmem:[%s1 + $0xb8] sm:$0xff]
  %v5768 = vld [vmem:[%s1 + $0xc0] sm:$0xff]
  %v5769 = vld [vmem:[%s1 + $0xc8] sm:$0xff]
  %v5770 = vld [vmem:[%s1 + $0xd0] sm:$0xff]
  %v5771 = vld [vmem:[%s1 + $0xd8] sm:$0xff]
  %v5772 = vld [vmem:[%s1 + $0xe0] sm:$0xff]
  %v5773 = vld [vmem:[%s1 + $0xe8] sm:$0xff]
  %v5774 = vld [vmem:[%s1 + $0xf0] sm:$0xff]
  %v5775 = vld [vmem:[%s1 + $0xf8] sm:$0xff]
  %s5776 = scalar_lea.vmem %s0, 112
  %v5777 = vld [vmem:[%s5776] sm:$0xff]
  %v5778 = vld [vmem:[%s5776 + $0x8] sm:$0xff]
  %v5779 = vunpack.c.l.bf16 %v5777
  %v5780 = vunpack.c.h.bf16 %v5777
  %v5781 = vunpack.c.l.bf16 %v5778
  %v5782 = vunpack.c.h.bf16 %v5778
  %v5815 = vunpack.c.l.b16 %v5744
  %v5816 = vunpack.c.h.b16 %v5744
  %v5817 = vunpack.c.l.b16 %v5745
  %v5818 = vunpack.c.h.b16 %v5745
  %v5819 = vunpack.c.l.b16 %v5746
  %v5820 = vunpack.c.h.b16 %v5746
  %v5821 = vunpack.c.l.b16 %v5747
  %v5822 = vunpack.c.h.b16 %v5747
  %v5823 = vunpack.c.l.b16 %v5748
  %v5824 = vunpack.c.h.b16 %v5748
  %v5825 = vunpack.c.l.b16 %v5749
  %v5826 = vunpack.c.h.b16 %v5749
  %v5827 = vunpack.c.l.b16 %v5750
  %v5828 = vunpack.c.h.b16 %v5750
  %v5829 = vunpack.c.l.b16 %v5751
  %v5830 = vunpack.c.h.b16 %v5751
  %v5831 = vunpack.c.l.b16 %v5752
  %v5832 = vunpack.c.h.b16 %v5752
  %v5833 = vunpack.c.l.b16 %v5753
  %v5834 = vunpack.c.h.b16 %v5753
  %v5835 = vunpack.c.l.b16 %v5754
  %v5836 = vunpack.c.h.b16 %v5754
  %v5837 = vunpack.c.l.b16 %v5755
  %v5838 = vunpack.c.h.b16 %v5755
  %v5839 = vunpack.c.l.b16 %v5756
  %v5840 = vunpack.c.h.b16 %v5756
  %v5841 = vunpack.c.l.b16 %v5757
  %v5842 = vunpack.c.h.b16 %v5757
  %v5843 = vunpack.c.l.b16 %v5758
  %v5844 = vunpack.c.h.b16 %v5758
  %v5845 = vunpack.c.l.b16 %v5759
  %v5846 = vunpack.c.h.b16 %v5759
  %v5847 = vunpack.c.l.b16 %v5760
  %v5848 = vunpack.c.h.b16 %v5760
  %v5849 = vunpack.c.l.b16 %v5761
  %v5850 = vunpack.c.h.b16 %v5761
  %v5851 = vunpack.c.l.b16 %v5762
  %v5852 = vunpack.c.h.b16 %v5762
  %v5853 = vunpack.c.l.b16 %v5763
  %v5854 = vunpack.c.h.b16 %v5763
  %v5855 = vunpack.c.l.b16 %v5764
  %v5856 = vunpack.c.h.b16 %v5764
  %v5857 = vunpack.c.l.b16 %v5765
  %v5858 = vunpack.c.h.b16 %v5765
  %v5859 = vunpack.c.l.b16 %v5766
  %v5860 = vunpack.c.h.b16 %v5766
  %v5861 = vunpack.c.l.b16 %v5767
  %v5862 = vunpack.c.h.b16 %v5767
  %v5863 = vunpack.c.l.b16 %v5768
  %v5864 = vunpack.c.h.b16 %v5768
  %v5865 = vunpack.c.l.b16 %v5769
  %v5866 = vunpack.c.h.b16 %v5769
  %v5867 = vunpack.c.l.b16 %v5770
  %v5868 = vunpack.c.h.b16 %v5770
  %v5869 = vunpack.c.l.b16 %v5771
  %v5870 = vunpack.c.h.b16 %v5771
  %v5871 = vunpack.c.l.b16 %v5772
  %v5872 = vunpack.c.h.b16 %v5772
  %v5873 = vunpack.c.l.b16 %v5773
  %v5874 = vunpack.c.h.b16 %v5773
  %v5875 = vunpack.c.l.b16 %v5774
  %v5876 = vunpack.c.h.b16 %v5774
  %v5877 = vunpack.c.l.b16 %v5775
  %v5878 = vunpack.c.h.b16 %v5775
  %v5879 = vpack.c.b16 %v5819, %v5815
  %v5880 = vpack.c.b16 %v5820, %v5816
  %v5881 = vpack.c.b16 %v5821, %v5817
  %v5882 = vpack.c.b16 %v5822, %v5818
  %v5883 = vpack.c.b16 %v5827, %v5823
  %v5884 = vpack.c.b16 %v5828, %v5824
  %v5885 = vpack.c.b16 %v5829, %v5825
  %v5886 = vpack.c.b16 %v5830, %v5826
  %v5887 = vpack.c.b16 %v5835, %v5831
  %v5888 = vpack.c.b16 %v5836, %v5832
  %v5889 = vpack.c.b16 %v5837, %v5833
  %v5890 = vpack.c.b16 %v5838, %v5834
  %v5891 = vpack.c.b16 %v5843, %v5839
  %v5892 = vpack.c.b16 %v5844, %v5840
  %v5893 = vpack.c.b16 %v5845, %v5841
  %v5894 = vpack.c.b16 %v5846, %v5842
  %v5895 = vpack.c.b16 %v5851, %v5847
  %v5896 = vpack.c.b16 %v5852, %v5848
  %v5897 = vpack.c.b16 %v5853, %v5849
  %v5898 = vpack.c.b16 %v5854, %v5850
  %v5899 = vpack.c.b16 %v5859, %v5855
  %v5900 = vpack.c.b16 %v5860, %v5856
  %v5901 = vpack.c.b16 %v5861, %v5857
  %v5902 = vpack.c.b16 %v5862, %v5858
  %v5903 = vpack.c.b16 %v5867, %v5863
  %v5904 = vpack.c.b16 %v5868, %v5864
  %v5905 = vpack.c.b16 %v5869, %v5865
  %v5906 = vpack.c.b16 %v5870, %v5866
  %v5907 = vpack.c.b16 %v5875, %v5871
  %v5908 = vpack.c.b16 %v5876, %v5872
  %v5909 = vpack.c.b16 %v5877, %v5873
  %v5910 = vpack.c.b16 %v5878, %v5874
  %5943 = vmatprep.subr.bf16.mxu0 %v5880
  %5944 = vmatpush1.bf16.msra.mxu0 %v5879
  %5945 = vmatprep.subr.bf16.mxu0 %v5884
  %5946 = vmatpush1.bf16.msra.mxu0 %v5883
  %5947 = vmatprep.subr.bf16.mxu0 %v5888
  %5948 = vmatpush1.bf16.msra.mxu0 %v5887
  %5949 = vmatprep.subr.bf16.mxu0 %v5892
  %5950 = vmatpush1.bf16.msra.mxu0 %v5891
  %5951 = vmatprep.subr.bf16.mxu0 %v5896
  %5952 = vmatpush1.bf16.msra.mxu0 %v5895
  %5953 = vmatprep.subr.bf16.mxu0 %v5900
  %5954 = vmatpush1.bf16.msra.mxu0 %v5899
  %5955 = vmatprep.subr.bf16.mxu0 %v5904
  %5956 = vmatpush1.bf16.msra.mxu0 %v5903
  %5957 = vmatprep.subr.bf16.mxu0 %v5908
  %5958 = vmatpush1.bf16.msra.mxu0 %v5907
  %5959 = vmatprep.subr.bf16.mxu0 0
  %5960 = vmatpush1.bf16.msra.mxu0 0
  %5961 = vmatprep.subr.bf16.mxu0 0
  %5962 = vmatpush1.bf16.msra.mxu0 0
  %5963 = vmatprep.subr.bf16.mxu0 0
  %5964 = vmatpush1.bf16.msra.mxu0 0
  %5965 = vmatprep.subr.bf16.mxu0 0
  %5966 = vmatpush1.bf16.msra.mxu0 0
  %5967 = vmatprep.subr.bf16.mxu0 0
  %5968 = vmatpush1.bf16.msra.mxu0 0
  %5969 = vmatprep.subr.bf16.mxu0 0
  %5970 = vmatpush1.bf16.msra.mxu0 0
  %5971 = vmatprep.subr.bf16.mxu0 0
  %5972 = vmatpush1.bf16.msra.mxu0 0
  %5973 = vmatprep.subr.bf16.mxu0 0
  %5974 = vmatpush1.bf16.msra.mxu0 0
  %5975 = vmatprep.mubr.bf16.mxu0 0
  %5976 = vmatmul.mubr.bf16.gmra.mrb[0].mxu0 %v5743
  %v5977 = vpop.f32.mrb[0].mxu0
  %v5978 = vadd.f32 %v5779, %v5977
  %v5979 = vpop.f32.mrb[0].mxu0
  %v5980 = vadd.f32 %v5780, %v5979
  %v5981 = vpop.f32.mrb[0].mxu0
  %v5982 = vpop.f32.mrb[0].mxu0
  %5983 = vdwg.mxu0
  %5984 = vmatprep.subr.bf16.mxu0 %v5882
  %5985 = vmatpush1.bf16.msra.mxu0 %v5881
  %5986 = vmatprep.subr.bf16.mxu0 %v5886
  %5987 = vmatpush1.bf16.msra.mxu0 %v5885
  %5988 = vmatprep.subr.bf16.mxu0 %v5890
  %5989 = vmatpush1.bf16.msra.mxu0 %v5889
  %5990 = vmatprep.subr.bf16.mxu0 %v5894
  %5991 = vmatpush1.bf16.msra.mxu0 %v5893
  %5992 = vmatprep.subr.bf16.mxu0 %v5898
  %5993 = vmatpush1.bf16.msra.mxu0 %v5897
  %5994 = vmatprep.subr.bf16.mxu0 %v5902
  %5995 = vmatpush1.bf16.msra.mxu0 %v5901
  %5996 = vmatprep.subr.bf16.mxu0 %v5906
  %5997 = vmatpush1.bf16.msra.mxu0 %v5905
  %5998 = vmatprep.subr.bf16.mxu0 %v5910
  %5999 = vmatpush1.bf16.msra.mxu0 %v5909
  %6000 = vmatprep.subr.bf16.mxu0 0
  %6001 = vmatpush1.bf16.msra.mxu0 0
  %6002 = vmatprep.subr.bf16.mxu0 0
  %6003 = vmatpush1.bf16.msra.mxu0 0
  %6004 = vmatprep.subr.bf16.mxu0 0
  %6005 = vmatpush1.bf16.msra.mxu0 0
  %6006 = vmatprep.subr.bf16.mxu0 0
  %6007 = vmatpush1.bf16.msra.mxu0 0
  %6008 = vmatprep.subr.bf16.mxu0 0
  %6009 = vmatpush1.bf16.msra.mxu0 0
  %6010 = vmatprep.subr.bf16.mxu0 0
  %6011 = vmatpush1.bf16.msra.mxu0 0
  %6012 = vmatprep.subr.bf16.mxu0 0
  %6013 = vmatpush1.bf16.msra.mxu0 0
  %6014 = vmatprep.subr.bf16.mxu0 0
  %6015 = vmatpush1.bf16.msra.mxu0 0
  %6016 = vmatprep.mubr.bf16.mxu0 0
  %6017 = vmatmul.mubr.bf16.gmra.mrb[0].mxu0 %v5743
  %v6018 = vpop.f32.mrb[0].mxu0
  %v6019 = vadd.f32 %v5781, %v6018
  %v6020 = vpop.f32.mrb[0].mxu0
  %v6021 = vadd.f32 %v5782, %v6020
  %v6022 = vpop.f32.mrb[0].mxu0
  %v6023 = vpop.f32.mrb[0].mxu0
  %6024 = vdwg.mxu0
  %v6025 = vld [vmem:[#allocation3] sm:$0xff]
  %v6026 = vxor.u32 %v5978, 2147483648
  %v6027 = vmul.f32 %v6026, 1.442695
  %v6028 = vpow.pop %v6027
  %v6029 = vadd.f32 %v6028, 1.0
  %v6030 = vrcp.pop %v6029
  %v6031 = vmul.f32 1.0, %v6030
  %v6032 = vxor.u32 %v5980, 2147483648
  %v6033 = vmul.f32 %v6032, 1.442695
  %v6034 = vpow.pop %v6033
  %v6035 = vadd.f32 %v6034, 1.0
  %v6036 = vrcp.pop %v6035
  %v6037 = vmul.f32 1.0, %v6036
  %v6038 = vtanh.pop %v6019
  %v6039 = vxor.u32 %v6021, 2147483648
  %v6040 = vmul.f32 %v6039, 1.442695
  %v6041 = vpow.pop %v6040
  %v6042 = vadd.f32 %v6041, 1.0
  %v6043 = vrcp.pop %v6042
  %v6044 = vmul.f32 1.0, %v6043
  %v6045 = vmul.f32 %v6037, %v6025
  %v6046 = vmul.f32 %v6031, %v6038
  %v6047 = vadd.f32 %v6045, %v6046
  %v6048 = vtanh.pop %v6047
  %v6049 = vmul.f32 %v6044, %v6048
  %6050 = vst [vmem:[#allocation3] sm:$0xff] %v6047
  %v6051 = vpack.c.bf16 %v6049, %v6049
  %6052 = vst [vmem:[#allocation2] sm:$0xf] %v6051
  %v6053 = vld [vmem:[#allocation2] sm:$0xff]
  %v6054 = vld [vmem:[%s2] sm:$0xff]
  %v6055 = vld [vmem:[%s2 + $0x8] sm:$0xff]
  %v6056 = vld [vmem:[%s2 + $0x10] sm:$0xff]
  %v6057 = vld [vmem:[%s2 + $0x18] sm:$0xff]
  %v6058 = vld [vmem:[%s2 + $0x20] sm:$0xff]
  %v6059 = vld [vmem:[%s2 + $0x28] sm:$0xff]
  %v6060 = vld [vmem:[%s2 + $0x30] sm:$0xff]
  %v6061 = vld [vmem:[%s2 + $0x38] sm:$0xff]
  %v6062 = vld [vmem:[%s2 + $0x40] sm:$0xff]
  %v6063 = vld [vmem:[%s2 + $0x48] sm:$0xff]
  %v6064 = vld [vmem:[%s2 + $0x50] sm:$0xff]
  %v6065 = vld [vmem:[%s2 + $0x58] sm:$0xff]
  %v6066 = vld [vmem:[%s2 + $0x60] sm:$0xff]
  %v6067 = vld [vmem:[%s2 + $0x68] sm:$0xff]
  %v6068 = vld [vmem:[%s2 + $0x70] sm:$0xff]
  %v6069 = vld [vmem:[%s2 + $0x78] sm:$0xff]
  %v6070 = vld [vmem:[%s2 + $0x80] sm:$0xff]
  %v6071 = vld [vmem:[%s2 + $0x88] sm:$0xff]
  %v6072 = vld [vmem:[%s2 + $0x90] sm:$0xff]
  %v6073 = vld [vmem:[%s2 + $0x98] sm:$0xff]
  %v6074 = vld [vmem:[%s2 + $0xa0] sm:$0xff]
  %v6075 = vld [vmem:[%s2 + $0xa8] sm:$0xff]
  %v6076 = vld [vmem:[%s2 + $0xb0] sm:$0xff]
  %v6077 = vld [vmem:[%s2 + $0xb8] sm:$0xff]
  %v6078 = vld [vmem:[%s2 + $0xc0] sm:$0xff]
  %v6079 = vld [vmem:[%s2 + $0xc8] sm:$0xff]
  %v6080 = vld [vmem:[%s2 + $0xd0] sm:$0xff]
  %v6081 = vld [vmem:[%s2 + $0xd8] sm:$0xff]
  %v6082 = vld [vmem:[%s2 + $0xe0] sm:$0xff]
  %v6083 = vld [vmem:[%s2 + $0xe8] sm:$0xff]
  %v6084 = vld [vmem:[%s2 + $0xf0] sm:$0xff]
  %v6085 = vld [vmem:[%s2 + $0xf8] sm:$0xff]
  %v6086 = vld [vmem:[%s2 + $0x100] sm:$0xff]
  %v6087 = vld [vmem:[%s2 + $0x108] sm:$0xff]
  %v6088 = vld [vmem:[%s2 + $0x110] sm:$0xff]
  %v6089 = vld [vmem:[%s2 + $0x118] sm:$0xff]
  %v6090 = vld [vmem:[%s2 + $0x120] sm:$0xff]
  %v6091 = vld [vmem:[%s2 + $0x128] sm:$0xff]
  %v6092 = vld [vmem:[%s2 + $0x130] sm:$0xff]
  %v6093 = vld [vmem:[%s2 + $0x138] sm:$0xff]
  %v6094 = vld [vmem:[%s2 + $0x140] sm:$0xff]
  %v6095 = vld [vmem:[%s2 + $0x148] sm:$0xff]
  %v6096 = vld [vmem:[%s2 + $0x150] sm:$0xff]
  %v6097 = vld [vmem:[%s2 + $0x158] sm:$0xff]
  %v6098 = vld [vmem:[%s2 + $0x160] sm:$0xff]
  %v6099 = vld [vmem:[%s2 + $0x168] sm:$0xff]
  %v6100 = vld [vmem:[%s2 + $0x170] sm:$0xff]
  %v6101 = vld [vmem:[%s2 + $0x178] sm:$0xff]
  %v6102 = vld [vmem:[%s2 + $0x180] sm:$0xff]
  %v6103 = vld [vmem:[%s2 + $0x188] sm:$0xff]
  %v6104 = vld [vmem:[%s2 + $0x190] sm:$0xff]
  %v6105 = vld [vmem:[%s2 + $0x198] sm:$0xff]
  %v6106 = vld [vmem:[%s2 + $0x1a0] sm:$0xff]
  %v6107 = vld [vmem:[%s2 + $0x1a8] sm:$0xff]
  %v6108 = vld [vmem:[%s2 + $0x1b0] sm:$0xff]
  %v6109 = vld [vmem:[%s2 + $0x1b8] sm:$0xff]
  %v6110 = vld [vmem:[%s2 + $0x1c0] sm:$0xff]
  %v6111 = vld [vmem:[%s2 + $0x1c8] sm:$0xff]
  %v6112 = vld [vmem:[%s2 + $0x1d0] sm:$0xff]
  %v6113 = vld [vmem:[%s2 + $0x1d8] sm:$0xff]
  %v6114 = vld [vmem:[%s2 + $0x1e0] sm:$0xff]
  %v6115 = vld [vmem:[%s2 + $0x1e8] sm:$0xff]
  %v6116 = vld [vmem:[%s2 + $0x1f0] sm:$0xff]
  %v6117 = vld [vmem:[%s2 + $0x1f8] sm:$0xff]
  %v6119 = vunpack.c.l.b16 %v6053
  %v6120 = vunpack.c.h.b16 %v6053
  %v6121 = vpack.c.b16 %v6119, %v6119
  %v6122 = vpack.c.b16 %v6120, %v6120
  %v6189 = vunpack.c.l.b16 %v6054
  %v6190 = vunpack.c.h.b16 %v6054
  %v6191 = vunpack.c.l.b16 %v6055
  %v6192 = vunpack.c.h.b16 %v6055
  %v6193 = vunpack.c.l.b16 %v6056
  %v6194 = vunpack.c.h.b16 %v6056
  %v6195 = vunpack.c.l.b16 %v6057
  %v6196 = vunpack.c.h.b16 %v6057
  %v6197 = vunpack.c.l.b16 %v6058
  %v6198 = vunpack.c.h.b16 %v6058
  %v6199 = vunpack.c.l.b16 %v6059
  %v6200 = vunpack.c.h.b16 %v6059
  %v6201 = vunpack.c.l.b16 %v6060
  %v6202 = vunpack.c.h.b16 %v6060
  %v6203 = vunpack.c.l.b16 %v6061
  %v6204 = vunpack.c.h.b16 %v6061
  %v6205 = vunpack.c.l.b16 %v6062
  %v6206 = vunpack.c.h.b16 %v6062
  %v6207 = vunpack.c.l.b16 %v6063
  %v6208 = vunpack.c.h.b16 %v6063
  %v6209 = vunpack.c.l.b16 %v6064
  %v6210 = vunpack.c.h.b16 %v6064
  %v6211 = vunpack.c.l.b16 %v6065
  %v6212 = vunpack.c.h.b16 %v6065
  %v6213 = vunpack.c.l.b16 %v6066
  %v6214 = vunpack.c.h.b16 %v6066
  %v6215 = vunpack.c.l.b16 %v6067
  %v6216 = vunpack.c.h.b16 %v6067
  %v6217 = vunpack.c.l.b16 %v6068
  %v6218 = vunpack.c.h.b16 %v6068
  %v6219 = vunpack.c.l.b16 %v6069
  %v6220 = vunpack.c.h.b16 %v6069
  %v6221 = vunpack.c.l.b16 %v6070
  %v6222 = vunpack.c.h.b16 %v6070
  %v6223 = vunpack.c.l.b16 %v6071
  %v6224 = vunpack.c.h.b16 %v6071
  %v6225 = vunpack.c.l.b16 %v6072
  %v6226 = vunpack.c.h.b16 %v6072
  %v6227 = vunpack.c.l.b16 %v6073
  %v6228 = vunpack.c.h.b16 %v6073
  %v6229 = vunpack.c.l.b16 %v6074
  %v6230 = vunpack.c.h.b16 %v6074
  %v6231 = vunpack.c.l.b16 %v6075
  %v6232 = vunpack.c.h.b16 %v6075
  %v6233 = vunpack.c.l.b16 %v6076
  %v6234 = vunpack.c.h.b16 %v6076
  %v6235 = vunpack.c.l.b16 %v6077
  %v6236 = vunpack.c.h.b16 %v6077
  %v6237 = vunpack.c.l.b16 %v6078
  %v6238 = vunpack.c.h.b16 %v6078
  %v6239 = vunpack.c.l.b16 %v6079
  %v6240 = vunpack.c.h.b16 %v6079
  %v6241 = vunpack.c.l.b16 %v6080
  %v6242 = vunpack.c.h.b16 %v6080
  %v6243 = vunpack.c.l.b16 %v6081
  %v6244 = vunpack.c.h.b16 %v6081
  %v6245 = vunpack.c.l.b16 %v6082
  %v6246 = vunpack.c.h.b16 %v6082
  %v6247 = vunpack.c.l.b16 %v6083
  %v6248 = vunpack.c.h.b16 %v6083
  %v6249 = vunpack.c.l.b16 %v6084
  %v6250 = vunpack.c.h.b16 %v6084
  %v6251 = vunpack.c.l.b16 %v6085
  %v6252 = vunpack.c.h.b16 %v6085
  %v6253 = vunpack.c.l.b16 %v6086
  %v6254 = vunpack.c.h.b16 %v6086
  %v6255 = vunpack.c.l.b16 %v6087
  %v6256 = vunpack.c.h.b16 %v6087
  %v6257 = vunpack.c.l.b16 %v6088
  %v6258 = vunpack.c.h.b16 %v6088
  %v6259 = vunpack.c.l.b16 %v6089
  %v6260 = vunpack.c.h.b16 %v6089
  %v6261 = vunpack.c.l.b16 %v6090
  %v6262 = vunpack.c.h.b16 %v6090
  %v6263 = vunpack.c.l.b16 %v6091
  %v6264 = vunpack.c.h.b16 %v6091
  %v6265 = vunpack.c.l.b16 %v6092
  %v6266 = vunpack.c.h.b16 %v6092
  %v6267 = vunpack.c.l.b16 %v6093
  %v6268 = vunpack.c.h.b16 %v6093
  %v6269 = vunpack.c.l.b16 %v6094
  %v6270 = vunpack.c.h.b16 %v6094
  %v6271 = vunpack.c.l.b16 %v6095
  %v6272 = vunpack.c.h.b16 %v6095
  %v6273 = vunpack.c.l.b16 %v6096
  %v6274 = vunpack.c.h.b16 %v6096
  %v6275 = vunpack.c.l.b16 %v6097
  %v6276 = vunpack.c.h.b16 %v6097
  %v6277 = vunpack.c.l.b16 %v6098
  %v6278 = vunpack.c.h.b16 %v6098
  %v6279 = vunpack.c.l.b16 %v6099
  %v6280 = vunpack.c.h.b16 %v6099
  %v6281 = vunpack.c.l.b16 %v6100
  %v6282 = vunpack.c.h.b16 %v6100
  %v6283 = vunpack.c.l.b16 %v6101
  %v6284 = vunpack.c.h.b16 %v6101
  %v6285 = vunpack.c.l.b16 %v6102
  %v6286 = vunpack.c.h.b16 %v6102
  %v6287 = vunpack.c.l.b16 %v6103
  %v6288 = vunpack.c.h.b16 %v6103
  %v6289 = vunpack.c.l.b16 %v6104
  %v6290 = vunpack.c.h.b16 %v6104
  %v6291 = vunpack.c.l.b16 %v6105
  %v6292 = vunpack.c.h.b16 %v6105
  %v6293 = vunpack.c.l.b16 %v6106
  %v6294 = vunpack.c.h.b16 %v6106
  %v6295 = vunpack.c.l.b16 %v6107
  %v6296 = vunpack.c.h.b16 %v6107
  %v6297 = vunpack.c.l.b16 %v6108
  %v6298 = vunpack.c.h.b16 %v6108
  %v6299 = vunpack.c.l.b16 %v6109
  %v6300 = vunpack.c.h.b16 %v6109
  %v6301 = vunpack.c.l.b16 %v6110
  %v6302 = vunpack.c.h.b16 %v6110
  %v6303 = vunpack.c.l.b16 %v6111
  %v6304 = vunpack.c.h.b16 %v6111
  %v6305 = vunpack.c.l.b16 %v6112
  %v6306 = vunpack.c.h.b16 %v6112
  %v6307 = vunpack.c.l.b16 %v6113
  %v6308 = vunpack.c.h.b16 %v6113
  %v6309 = vunpack.c.l.b16 %v6114
  %v6310 = vunpack.c.h.b16 %v6114
  %v6311 = vunpack.c.l.b16 %v6115
  %v6312 = vunpack.c.h.b16 %v6115
  %v6313 = vunpack.c.l.b16 %v6116
  %v6314 = vunpack.c.h.b16 %v6116
  %v6315 = vunpack.c.l.b16 %v6117
  %v6316 = vunpack.c.h.b16 %v6117
  %v6317 = vpack.c.b16 %v6193, %v6189
  %v6318 = vpack.c.b16 %v6194, %v6190
  %v6319 = vpack.c.b16 %v6195, %v6191
  %v6320 = vpack.c.b16 %v6196, %v6192
  %v6321 = vpack.c.b16 %v6201, %v6197
  %v6322 = vpack.c.b16 %v6202, %v6198
  %v6323 = vpack.c.b16 %v6203, %v6199
  %v6324 = vpack.c.b16 %v6204, %v6200
  %v6325 = vpack.c.b16 %v6209, %v6205
  %v6326 = vpack.c.b16 %v6210, %v6206
  %v6327 = vpack.c.b16 %v6211, %v6207
  %v6328 = vpack.c.b16 %v6212, %v6208
  %v6329 = vpack.c.b16 %v6217, %v6213
  %v6330 = vpack.c.b16 %v6218, %v6214
  %v6331 = vpack.c.b16 %v6219, %v6215
  %v6332 = vpack.c.b16 %v6220, %v6216
  %v6333 = vpack.c.b16 %v6225, %v6221
  %v6334 = vpack.c.b16 %v6226, %v6222
  %v6335 = vpack.c.b16 %v6227, %v6223
  %v6336 = vpack.c.b16 %v6228, %v6224
  %v6337 = vpack.c.b16 %v6233, %v6229
  %v6338 = vpack.c.b16 %v6234, %v6230
  %v6339 = vpack.c.b16 %v6235, %v6231
  %v6340 = vpack.c.b16 %v6236, %v6232
  %v6341 = vpack.c.b16 %v6241, %v6237
  %v6342 = vpack.c.b16 %v6242, %v6238
  %v6343 = vpack.c.b16 %v6243, %v6239
  %v6344 = vpack.c.b16 %v6244, %v6240
  %v6345 = vpack.c.b16 %v6249, %v6245
  %v6346 = vpack.c.b16 %v6250, %v6246
  %v6347 = vpack.c.b16 %v6251, %v6247
  %v6348 = vpack.c.b16 %v6252, %v6248
  %v6349 = vpack.c.b16 %v6257, %v6253
  %v6350 = vpack.c.b16 %v6258, %v6254
  %v6351 = vpack.c.b16 %v6259, %v6255
  %v6352 = vpack.c.b16 %v6260, %v6256
  %v6353 = vpack.c.b16 %v6265, %v6261
  %v6354 = vpack.c.b16 %v6266, %v6262
  %v6355 = vpack.c.b16 %v6267, %v6263
  %v6356 = vpack.c.b16 %v6268, %v6264
  %v6357 = vpack.c.b16 %v6273, %v6269
  %v6358 = vpack.c.b16 %v6274, %v6270
  %v6359 = vpack.c.b16 %v6275, %v6271
  %v6360 = vpack.c.b16 %v6276, %v6272
  %v6361 = vpack.c.b16 %v6281, %v6277
  %v6362 = vpack.c.b16 %v6282, %v6278
  %v6363 = vpack.c.b16 %v6283, %v6279
  %v6364 = vpack.c.b16 %v6284, %v6280
  %v6365 = vpack.c.b16 %v6289, %v6285
  %v6366 = vpack.c.b16 %v6290, %v6286
  %v6367 = vpack.c.b16 %v6291, %v6287
  %v6368 = vpack.c.b16 %v6292, %v6288
  %v6369 = vpack.c.b16 %v6297, %v6293
  %v6370 = vpack.c.b16 %v6298, %v6294
  %v6371 = vpack.c.b16 %v6299, %v6295
  %v6372 = vpack.c.b16 %v6300, %v6296
  %v6373 = vpack.c.b16 %v6305, %v6301
  %v6374 = vpack.c.b16 %v6306, %v6302
  %v6375 = vpack.c.b16 %v6307, %v6303
  %v6376 = vpack.c.b16 %v6308, %v6304
  %v6377 = vpack.c.b16 %v6313, %v6309
  %v6378 = vpack.c.b16 %v6314, %v6310
  %v6379 = vpack.c.b16 %v6315, %v6311
  %v6380 = vpack.c.b16 %v6316, %v6312
  %6445 = vmatprep.subr.bf16.mxu0 %v6318
  %6446 = vmatpush1.bf16.msra.mxu0 %v6317
  %6447 = vmatprep.subr.bf16.mxu0 %v6322
  %6448 = vmatpush1.bf16.msra.mxu0 %v6321
  %6449 = vmatprep.subr.bf16.mxu0 %v6326
  %6450 = vmatpush1.bf16.msra.mxu0 %v6325
  %6451 = vmatprep.subr.bf16.mxu0 %v6330
  %6452 = vmatpush1.bf16.msra.mxu0 %v6329
  %6453 = vmatprep.subr.bf16.mxu0 %v6334
  %6454 = vmatpush1.bf16.msra.mxu0 %v6333
  %6455 = vmatprep.subr.bf16.mxu0 %v6338
  %6456 = vmatpush1.bf16.msra.mxu0 %v6337
  %6457 = vmatprep.subr.bf16.mxu0 %v6342
  %6458 = vmatpush1.bf16.msra.mxu0 %v6341
  %6459 = vmatprep.subr.bf16.mxu0 %v6346
  %6460 = vmatpush1.bf16.msra.mxu0 %v6345
  %6461 = vmatprep.subr.bf16.mxu0 %v6350
  %6462 = vmatpush1.bf16.msra.mxu0 %v6349
  %6463 = vmatprep.subr.bf16.mxu0 %v6354
  %6464 = vmatpush1.bf16.msra.mxu0 %v6353
  %6465 = vmatprep.subr.bf16.mxu0 %v6358
  %6466 = vmatpush1.bf16.msra.mxu0 %v6357
  %6467 = vmatprep.subr.bf16.mxu0 %v6362
  %6468 = vmatpush1.bf16.msra.mxu0 %v6361
  %6469 = vmatprep.subr.bf16.mxu0 %v6366
  %6470 = vmatpush1.bf16.msra.mxu0 %v6365
  %6471 = vmatprep.subr.bf16.mxu0 %v6370
  %6472 = vmatpush1.bf16.msra.mxu0 %v6369
  %6473 = vmatprep.subr.bf16.mxu0 %v6374
  %6474 = vmatpush1.bf16.msra.mxu0 %v6373
  %6475 = vmatprep.subr.bf16.mxu0 %v6378
  %6476 = vmatpush1.bf16.msra.mxu0 %v6377
  %6477 = vmatprep.mubr.bf16.mxu0 %v6122
  %6478 = vmatmul.mubr.bf16.gmra.mrb[0].mxu0 %v6121
  %v6479 = vpop.f32.mrb[0].mxu0
  %v6480 = vadd.f32 %v30, %v6479
  %v6481 = vpop.f32.mrb[0].mxu0
  %v6482 = vadd.f32 %v34, %v6481
  %v6483 = vpop.f32.mrb[0].mxu0
  %v6484 = vpop.f32.mrb[0].mxu0
  %6485 = vdwg.mxu0
  %6486 = vmatprep.subr.bf16.mxu0 %v6320
  %6487 = vmatpush1.bf16.msra.mxu0 %v6319
  %6488 = vmatprep.subr.bf16.mxu0 %v6324
  %6489 = vmatpush1.bf16.msra.mxu0 %v6323
  %6490 = vmatprep.subr.bf16.mxu0 %v6328
  %6491 = vmatpush1.bf16.msra.mxu0 %v6327
  %6492 = vmatprep.subr.bf16.mxu0 %v6332
  %6493 = vmatpush1.bf16.msra.mxu0 %v6331
  %6494 = vmatprep.subr.bf16.mxu0 %v6336
  %6495 = vmatpush1.bf16.msra.mxu0 %v6335
  %6496 = vmatprep.subr.bf16.mxu0 %v6340
  %6497 = vmatpush1.bf16.msra.mxu0 %v6339
  %6498 = vmatprep.subr.bf16.mxu0 %v6344
  %6499 = vmatpush1.bf16.msra.mxu0 %v6343
  %6500 = vmatprep.subr.bf16.mxu0 %v6348
  %6501 = vmatpush1.bf16.msra.mxu0 %v6347
  %6502 = vmatprep.subr.bf16.mxu0 %v6352
  %6503 = vmatpush1.bf16.msra.mxu0 %v6351
  %6504 = vmatprep.subr.bf16.mxu0 %v6356
  %6505 = vmatpush1.bf16.msra.mxu0 %v6355
  %6506 = vmatprep.subr.bf16.mxu0 %v6360
  %6507 = vmatpush1.bf16.msra.mxu0 %v6359
  %6508 = vmatprep.subr.bf16.mxu0 %v6364
  %6509 = vmatpush1.bf16.msra.mxu0 %v6363
  %6510 = vmatprep.subr.bf16.mxu0 %v6368
  %6511 = vmatpush1.bf16.msra.mxu0 %v6367
  %6512 = vmatprep.subr.bf16.mxu0 %v6372
  %6513 = vmatpush1.bf16.msra.mxu0 %v6371
  %6514 = vmatprep.subr.bf16.mxu0 %v6376
  %6515 = vmatpush1.bf16.msra.mxu0 %v6375
  %6516 = vmatprep.subr.bf16.mxu0 %v6380
  %6517 = vmatpush1.bf16.msra.mxu0 %v6379
  %6518 = vmatprep.mubr.bf16.mxu0 %v6122
  %6519 = vmatmul.mubr.bf16.gmra.mrb[0].mxu0 %v6121
  %v6520 = vpop.f32.mrb[0].mxu0
  %v6521 = vadd.f32 %v38, %v6520
  %v6522 = vpop.f32.mrb[0].mxu0
  %v6523 = vadd.f32 %v42, %v6522
  %v6524 = vpop.f32.mrb[0].mxu0
  %v6525 = vpop.f32.mrb[0].mxu0
  %6526 = vdwg.mxu0
  %v6527 = vld [vmem:[#allocation4] sm:$0xff]
  %v6528 = vxor.u32 %v6480, 2147483648
  %v6529 = vmul.f32 %v6528, 1.442695
  %v6530 = vpow.pop %v6529
  %v6531 = vadd.f32 %v6530, 1.0
  %v6532 = vrcp.pop %v6531
  %v6533 = vmul.f32 1.0, %v6532
  %v6534 = vxor.u32 %v6482, 2147483648
  %v6535 = vmul.f32 %v6534, 1.442695
  %v6536 = vpow.pop %v6535
  %v6537 = vadd.f32 %v6536, 1.0
  %v6538 = vrcp.pop %v6537
  %v6539 = vmul.f32 1.0, %v6538
  %v6540 = vtanh.pop %v6521
  %v6541 = vxor.u32 %v6523, 2147483648
  %v6542 = vmul.f32 %v6541, 1.442695
  %v6543 = vpow.pop %v6542
  %v6544 = vadd.f32 %v6543, 1.0
  %v6545 = vrcp.pop %v6544
  %v6546 = vmul.f32 1.0, %v6545
  %v6547 = vmul.f32 %v6539, %v6527
  %v6548 = vmul.f32 %v6533, %v6540
  %v6549 = vadd.f32 %v6547, %v6548
  %v6550 = vtanh.pop %v6549
  %v6551 = vmul.f32 %v6546, %v6550
  %6552 = vst [vmem:[#allocation4] sm:$0xff] %v6549
  %v6553 = vpack.c.bf16 %v6551, %v6551
  %6554 = vst [vmem:[#allocation2 + $0x4] sm:$0xf] %v6553
  %s6555 = scalar_lea.vmem %s4, 28
  %6556 = vst [vmem:[%s6555] sm:$0xf] %v6553
  // Predicated region
  $region22: #{lstm_try_forward.4} parent=0 // pred_check
    _
  $region23: #{lstm_try_forward.4} parent=0 // pred_check_branch
    %6558 = sbr.rel (0) target = $region25
  $region24: #{lstm_try_forward.4} parent=0 // pred_region
    _
  $region25: #{lstm_try_forward.4} parent=0 // pred_fallthru
    _
  // Predicated region
  $region26: #{lstm_try_forward.4} parent=0 // pred_check
    _
  $region27: #{lstm_try_forward.4} parent=0 // pred_check_branch
    %6560 = sbr.rel (0) target = $region29
  $region28: #{lstm_try_forward.4} parent=0 // pred_region
    _
  $region29: #{lstm_try_forward.4} parent=0 // pred_fallthru
    _

</llo_original>
